<compile_context>
chip_gen: v7x
topology: tpu7x:2x2x1
jax: 0.10.0
libtpu: 0.0.40
codegen_flags: <defaults>
</compile_context>

<pallas_src>
import jax
import jax.numpy as jnp
from jax import lax
from jax.experimental import pallas as pl
from jax.experimental.pallas import tpu as pltpu

EPS = 1e-5                     # nn.BatchNorm2d default eps
ACT_DTYPE = jnp.bfloat16       # activation storage dtype in VMEM
CIN_PACK = 16                  # bf16 sublane tile: pad conv1 input channels to this


def _round_up(x, m):
    return ((x + m - 1) // m) * m


def _make_kernel(C, wpad, nwin, win_start, nbuf, p_valid):
    """Builds the fused forward kernel for the given static geometry."""
    inv_p = 1.0 / float(p_valid)
    right_margin = nbuf - win_start - nwin

    def kernel(mask_ref, maskc_ref, x_ref,
               w1, g1, t1, w2, g2, t2, w3, g3, t3, w4, g4, t4,
               w5, b5, out_ref, act_ref):
        mask = mask_ref[...]                               # (1, nwin)   f32
        maskc = maskc_ref[...]                             # (nwin, 128) f32 (replicated cols)

        # Zero only the never-written lane margins of the activation scratch
        # (the interior window is fully overwritten by every layer's store).
        act_ref[:, 0:win_start] = jnp.zeros((C, win_start), ACT_DTYPE)
        act_ref[:, win_start + nwin:nbuf] = jnp.zeros((C, right_margin), ACT_DTYPE)

        def conv3x3_bn_relu(src_ref, w_ref, g_ref, t_ref):
            # Load the padded bf16 slab once; all 9 taps below are in-register
            # lane relayouts of this value (no f32 round trip, no re-loads).
            f = src_ref[...]                               # (src_C, nbuf) bf16
            taps = []
            for kh in range(3):
                base = win_start + (kh - 1) * wpad
                for kw in range(3):
                    off = base + (kw - 1)
                    taps.append(f[:, off:off + nwin])
            xk = jnp.concatenate(taps, axis=0)             # (9*src_C, nwin) bf16

            # Single MXU matmul per layer (K = 9*src_C), f32 accumulation in regs.
            a = jnp.dot(w_ref[...], xk,
                        preferred_element_type=jnp.float32)  # (C, nwin) f32

            # NOTE: conv bias is intentionally omitted — a per-channel bias
            # before train-mode BatchNorm is cancelled by the mean subtraction.
            # BN reductions on the MXU (dot against the mask column) instead of
            # cross-lane XLU reduces; mask excludes zero padding / junk lanes.
            mu = jnp.dot(a, maskc,
                         preferred_element_type=jnp.float32)[:, 0:1] * inv_p
            cd = (a - mu) * mask
            var = jnp.dot(cd * cd, maskc,
                          preferred_element_type=jnp.float32)[:, 0:1] * inv_p
            y = cd * lax.rsqrt(var + EPS) * g_ref[...] + t_ref[...]
            y = jnp.maximum(y, 0.0) * mask                 # ReLU + re-zero pads
            act_ref[:, win_start:win_start + nwin] = y.astype(ACT_DTYPE)

        conv3x3_bn_relu(x_ref, w1, g1, t1)      # conv1 reads the input directly
        conv3x3_bn_relu(act_ref, w2, g2, t2)
        conv3x3_bn_relu(act_ref, w3, g3, t3)
        conv3x3_bn_relu(act_ref, w4, g4, t4)

        # conv5_mask: 1x1 conv == channel matmul + bias; lane-dense (8,128)-tiled store.
        h = act_ref[:, win_start:win_start + nwin]          # (C, nwin) bf16
        out = jnp.dot(w5[...], h, preferred_element_type=jnp.float32) + b5[...]
        out_ref[...] = out

    return kernel


def pack_params(params, hidden):
    """One-time conversion of PyTorch-layout params into kernel layouts."""
    packed = {}
    cin = params["w1"].shape[1]
    cin_pad = _round_up(cin, CIN_PACK)
    cins_pad = [cin_pad, hidden, hidden, hidden]
    for i in range(1, 5):
        w = params[f"w{i}"]                                 # (O, I, 3, 3)
        o, ci = w.shape[0], w.shape[1]
        cp = cins_pad[i - 1]
        w = jnp.transpose(w, (0, 2, 3, 1))                  # (O, kh, kw, I)
        w = jnp.pad(w, ((0, 0), (0, 0), (0, 0), (0, cp - ci)))
        # K index = (kh*3 + kw)*cp + i  — must match the kernel's tap concat order.
        packed[f"w{i}"] = w.reshape(o, 9 * cp).astype(jnp.bfloat16)
        packed[f"g{i}"] = params[f"g{i}"].reshape(hidden, 1).astype(jnp.float32)
        packed[f"t{i}"] = params[f"t{i}"].reshape(hidden, 1).astype(jnp.float32)
        # b{i} intentionally dropped: bias before train-mode BN cancels exactly.
    w5 = params["w5"][:, :, 0, 0]                           # (nc, hidden)
    nc = w5.shape[0]
    nc_pad = _round_up(max(nc, 8), 8)                       # full (8,128) epilogue tiles
    packed["w5"] = jnp.pad(w5, ((0, nc_pad - nc), (0, 0))).astype(jnp.bfloat16)
    packed["b5"] = jnp.pad(params["b5"], (0, nc_pad - nc)).reshape(nc_pad, 1).astype(jnp.float32)
    return packed


def enhanced_mask_predictor(x_nchw, packed, *, num_classes):
    """NCHW in, NCHW out (matches the PyTorch module's forward)."""
    N, cin, H, W = x_nchw.shape
    hidden = packed["g1"].shape[0]
    cin_pad = packed["w1"].shape[1] // 9
    nc_pad = packed["w5"].shape[0]

    # Geometry of the flat spatial layout:
    #   wpad      : one shared zero column between consecutive rows (W + 1)
    #   nflat     : flattened (n, h_padded, w_padded) index length
    #   nwin      : compute window (lane-dense, multiple of 128)
    #   win_start : left lane margin so all +-(wpad+1) tap shifts stay in-bounds
    wpad = W + 1
    nflat = N * (H + 2) * wpad
    nwin = _round_up(nflat, 128)
    margin = _round_up(wpad + 1, 128)
    win_start = margin
    nbuf = win_start + nwin + margin
    p_valid = N * H * W

    # Input -> (cin_pad, nbuf) slab: channels on sublanes, padded flat spatial
    # on lanes.  Zero padding supplies the conv "SAME" halo; channels are
    # padded only to the bf16 sublane tile (16), not to `hidden`.
    x = x_nchw.astype(jnp.float32)
    x = jnp.pad(x, ((0, 0), (0, cin_pad - cin), (1, 1), (0, wpad - W)))
    x = jnp.transpose(x, (1, 0, 2, 3)).reshape(cin_pad, nflat)
    x = jnp.pad(x, ((0, 0), (win_start, nbuf - win_start - nflat)))
    x = x.astype(ACT_DTYPE)

    # Valid-position mask over the compute window (BN statistics + pad re-zero),
    # plus its lane-replicated column form for the MXU reductions.
    m = jnp.zeros((N, H + 2, wpad), jnp.float32)
    m = m.at[:, 1:1 + H, :W].set(1.0)
    mask = jnp.pad(m.reshape(nflat), (0, nwin - nflat)).reshape(1, nwin)
    maskc = jnp.broadcast_to(mask.reshape(nwin, 1), (nwin, 128))

    args = [mask, maskc, x]
    for i in range(1, 5):
        args += [packed[f"w{i}"], packed[f"g{i}"], packed[f"t{i}"]]
    args += [packed["w5"], packed["b5"]]

    vmem = pl.BlockSpec(memory_space=pltpu.MemorySpace.VMEM)
    kernel = _make_kernel(hidden, wpad, nwin, win_start, nbuf, p_valid)
    out_win = pl.pallas_call(
        kernel,
        out_shape=jax.ShapeDtypeStruct((nc_pad, nwin), jnp.float32),
        in_specs=[vmem] * len(args),
        out_specs=vmem,
        scratch_shapes=[pltpu.VMEM((hidden, nbuf), ACT_DTYPE)],   # bf16 activation slab
    )(*args)

    # Unpack: window -> (nc, N, H+2, wpad) -> valid interior -> NCHW.
    out = out_win[:num_classes, :nflat].reshape(num_classes, N, H + 2, wpad)
    out = out[:, :, 1:1 + H, :W]
    return jnp.transpose(out, (1, 0, 2, 3))


def init_params(key, in_ch, hidden, num_classes):
    """Deterministic synthetic parameters, stored in PyTorch layouts."""
    ks = jax.random.split(key, 14)
    p = {}
    cins = [in_ch, hidden, hidden, hidden]
    for i in range(4):
        p[f"w{i + 1}"] = 0.1 * jax.random.normal(ks[3 * i], (hidden, cins[i], 3, 3), jnp.float32)
        p[f"b{i + 1}"] = 0.05 * jax.random.normal(ks[3 * i + 1], (hidden,), jnp.float32)
        gt = jax.random.normal(ks[3 * i + 2], (2, hidden), jnp.float32)
        p[f"g{i + 1}"] = 1.0 + 0.1 * gt[0]   # BN gamma
        p[f"t{i + 1}"] = 0.1 * gt[1]         # BN beta
    p["w5"] = 0.1 * jax.random.normal(ks[12], (num_classes, hidden, 1, 1), jnp.float32)
    p["b5"] = 0.05 * jax.random.normal(ks[13], (num_classes,), jnp.float32)
    return p


def reference(x, params):
    """Pure-JAX reference matching the PyTorch forward (train-mode BN)."""
    dn = ("NCHW", "OIHW", "NCHW")
    a = x
    for i in range(1, 5):
        a = lax.conv_general_dilated(a, params[f"w{i}"], (1, 1), "SAME",
                                     dimension_numbers=dn,
                                     precision=lax.Precision.HIGHEST)
        a = a + params[f"b{i}"][None, :, None, None]
        mu = a.mean(axis=(0, 2, 3), keepdims=True)
        var = ((a - mu) ** 2).mean(axis=(0, 2, 3), keepdims=True)
        a = (a - mu) * lax.rsqrt(var + EPS)
        a = a * params[f"g{i}"][None, :, None, None] + params[f"t{i}"][None, :, None, None]
        a = jnp.maximum(a, 0.0)
    out = lax.conv_general_dilated(a, params["w5"], (1, 1), "SAME",
                                   dimension_numbers=dn,
                                   precision=lax.Precision.HIGHEST)
    return out + params["b5"][None, :, None, None]


if __name__ == "__main__":
    key = jax.random.PRNGKey(0)
    kx, kp = jax.random.split(key)

    N, Cin, H, W = 2, 4, 16, 16
    hidden, num_classes = 32, 4

    x = jax.random.normal(kx, (N, Cin, H, W), jnp.float32)
    params = init_params(kp, Cin, hidden, num_classes)

    packed = pack_params(params, hidden)          # weight repack hoisted (once)
    fwd = jax.jit(enhanced_mask_predictor, static_argnames=("num_classes",))

    out = jax.block_until_ready(fwd(x, packed, num_classes=num_classes))
    if out.shape != (N, num_classes, H, W):
        raise AssertionError(f"unexpected output shape {out.shape}")

    ref = reference(x, params)
    # Tolerance: the kernel stores activations in bf16 and feeds bf16 operands
    # to the MXU (single pass), while the reference is f32 at HIGHEST
    # precision; drift after 5 layers stays well below these bounds.
    if not jnp.allclose(out, ref, rtol=3e-2, atol=5e-2):
        err = float(jnp.max(jnp.abs(out - ref)))
        raise AssertionError(f"Pallas kernel does not match JAX reference (max abs err {err:.3e})")
    print("KERNEL_OK")
</pallas_src>

<mosaic_0001>
module attributes {stable_mosaic.version = 11 : i64} {
  func.func @kernel(%arg0: memref<1x640xf32, #tpu.memory_space<vmem>>, %arg1: memref<640x128xf32, #tpu.memory_space<vmem>>, %arg2: memref<16x896xbf16, #tpu.memory_space<vmem>>, %arg3: memref<32x144xbf16, #tpu.memory_space<vmem>>, %arg4: memref<32x1xf32, #tpu.memory_space<vmem>>, %arg5: memref<32x1xf32, #tpu.memory_space<vmem>>, %arg6: memref<32x288xbf16, #tpu.memory_space<vmem>>, %arg7: memref<32x1xf32, #tpu.memory_space<vmem>>, %arg8: memref<32x1xf32, #tpu.memory_space<vmem>>, %arg9: memref<32x288xbf16, #tpu.memory_space<vmem>>, %arg10: memref<32x1xf32, #tpu.memory_space<vmem>>, %arg11: memref<32x1xf32, #tpu.memory_space<vmem>>, %arg12: memref<32x288xbf16, #tpu.memory_space<vmem>>, %arg13: memref<32x1xf32, #tpu.memory_space<vmem>>, %arg14: memref<32x1xf32, #tpu.memory_space<vmem>>, %arg15: memref<8x32xbf16, #tpu.memory_space<vmem>>, %arg16: memref<8x1xf32, #tpu.memory_space<vmem>>, %arg17: memref<8x640xf32, #tpu.memory_space<vmem>>, %arg18: memref<32x896xbf16, #tpu.memory_space<vmem>>) attributes {dimension_semantics = [], scalar_prefetch = 0 : i64, scratch_operands = 1 : i64, tpu.core_type = #tpu.core_type<tc>} {
    %c0 = arith.constant 0 : index
    %c0_0 = arith.constant 0 : index
    %0 = vector.load %arg0[%c0, %c0_0] : memref<1x640xf32, #tpu.memory_space<vmem>>, vector<1x640xf32>
    %c0_1 = arith.constant 0 : index
    %c0_2 = arith.constant 0 : index
    %1 = vector.load %arg1[%c0_1, %c0_2] : memref<640x128xf32, #tpu.memory_space<vmem>>, vector<640x128xf32>
    %cst = arith.constant 0.000000e+00 : bf16
    %2 = vector.broadcast %cst : bf16 to vector<32x128xbf16>
    %c0_3 = arith.constant 0 : index
    %c0_4 = arith.constant 0 : index
    %3 = vector.load %arg18[%c0_3, %c0_4] : memref<32x896xbf16, #tpu.memory_space<vmem>>, vector<32x128xbf16>
    tpu.vector_store %arg18[%c0_3, %c0_4], %2 {strides = array<i32>} : memref<32x896xbf16, #tpu.memory_space<vmem>>, vector<32x128xbf16>,
    %cst_5 = arith.constant 0.000000e+00 : bf16
    %4 = vector.broadcast %cst_5 : bf16 to vector<32x128xbf16>
    %c0_6 = arith.constant 0 : index
    %c768 = arith.constant 768 : index
    %5 = vector.load %arg18[%c0_6, %c768] : memref<32x896xbf16, #tpu.memory_space<vmem>>, vector<32x128xbf16>
    tpu.vector_store %arg18[%c0_6, %c768], %4 {strides = array<i32>} : memref<32x896xbf16, #tpu.memory_space<vmem>>, vector<32x128xbf16>,
    %c0_7 = arith.constant 0 : index
    %c0_8 = arith.constant 0 : index
    %6 = vector.load %arg2[%c0_7, %c0_8] : memref<16x896xbf16, #tpu.memory_space<vmem>>, vector<16x896xbf16>
    %7 = vector.extract_strided_slice %6 {offsets = [0, 110], sizes = [16, 640], strides = [1, 1]} : vector<16x896xbf16> to vector<16x640xbf16>
    %8 = vector.extract_strided_slice %6 {offsets = [0, 111], sizes = [16, 640], strides = [1, 1]} : vector<16x896xbf16> to vector<16x640xbf16>
    %9 = vector.extract_strided_slice %6 {offsets = [0, 112], sizes = [16, 640], strides = [1, 1]} : vector<16x896xbf16> to vector<16x640xbf16>
    %10 = vector.extract_strided_slice %6 {offsets = [0, 127], sizes = [16, 640], strides = [1, 1]} : vector<16x896xbf16> to vector<16x640xbf16>
    %11 = vector.extract_strided_slice %6 {offsets = [0, 128], sizes = [16, 640], strides = [1, 1]} : vector<16x896xbf16> to vector<16x640xbf16>
    %12 = vector.extract_strided_slice %6 {offsets = [0, 129], sizes = [16, 640], strides = [1, 1]} : vector<16x896xbf16> to vector<16x640xbf16>
    %13 = vector.extract_strided_slice %6 {offsets = [0, 144], sizes = [16, 640], strides = [1, 1]} : vector<16x896xbf16> to vector<16x640xbf16>
    %14 = vector.extract_strided_slice %6 {offsets = [0, 145], sizes = [16, 640], strides = [1, 1]} : vector<16x896xbf16> to vector<16x640xbf16>
    %15 = vector.extract_strided_slice %6 {offsets = [0, 146], sizes = [16, 640], strides = [1, 1]} : vector<16x896xbf16> to vector<16x640xbf16>
    %16 = tpu.concatenate %7, %8, %9, %10, %11, %12, %13, %14, %15 in 0 : vector<16x640xbf16>, vector<16x640xbf16>, vector<16x640xbf16>, vector<16x640xbf16>, vector<16x640xbf16>, vector<16x640xbf16>, vector<16x640xbf16>, vector<16x640xbf16>, vector<16x640xbf16> -> vector<144x640xbf16>
    %c0_9 = arith.constant 0 : index
    %c0_10 = arith.constant 0 : index
    %17 = vector.load %arg3[%c0_9, %c0_10] : memref<32x144xbf16, #tpu.memory_space<vmem>>, vector<32x144xbf16>
    %cst_11 = arith.constant dense<0.000000e+00> : vector<32x640xf32>
    %18 = tpu.matmul %17, %16, %cst_11 {dimension_numbers = #tpu.dot_dimension_numbers<[1], [0], [0], [1], [0, 0, 1, 1], [], []>} : vector<32x144xbf16>, vector<144x640xbf16>, vector<32x640xf32> -> vector<32x640xf32>
    %cst_12 = arith.constant dense<0.000000e+00> : vector<32x128xf32>
    %19 = tpu.matmul %18, %1, %cst_12 {dimension_numbers = #tpu.dot_dimension_numbers<[1], [0], [0], [1], [0, 0, 1, 1], [], []>} : vector<32x640xf32>, vector<640x128xf32>, vector<32x128xf32> -> vector<32x128xf32>
    %20 = vector.extract_strided_slice %19 {offsets = [0, 0], sizes = [32, 1], strides = [1, 1]} : vector<32x128xf32> to vector<32x1xf32>
    %cst_13 = arith.constant 0.001953125 : f32
    %21 = vector.broadcast %cst_13 : f32 to vector<32x1xf32>
    %22 = arith.mulf %20, %21 : vector<32x1xf32>
    %23 = vector.broadcast %22 : vector<32x1xf32> to vector<32x640xf32>
    %24 = arith.subf %18, %23 : vector<32x640xf32>
    %25 = vector.broadcast %0 : vector<1x640xf32> to vector<32x640xf32>
    %26 = arith.mulf %24, %25 : vector<32x640xf32>
    %27 = arith.mulf %26, %26 : vector<32x640xf32>
    %cst_14 = arith.constant dense<0.000000e+00> : vector<32x128xf32>
    %28 = tpu.matmul %27, %1, %cst_14 {dimension_numbers = #tpu.dot_dimension_numbers<[1], [0], [0], [1], [0, 0, 1, 1], [], []>} : vector<32x640xf32>, vector<640x128xf32>, vector<32x128xf32> -> vector<32x128xf32>
    %29 = vector.extract_strided_slice %28 {offsets = [0, 0], sizes = [32, 1], strides = [1, 1]} : vector<32x128xf32> to vector<32x1xf32>
    %cst_15 = arith.constant 0.001953125 : f32
    %30 = vector.broadcast %cst_15 : f32 to vector<32x1xf32>
    %31 = arith.mulf %29, %30 : vector<32x1xf32>
    %cst_16 = arith.constant 9.99999974E-6 : f32
    %32 = vector.broadcast %cst_16 : f32 to vector<32x1xf32>
    %33 = arith.addf %31, %32 : vector<32x1xf32>
    %34 = math.rsqrt %33 : vector<32x1xf32>
    %35 = vector.broadcast %34 : vector<32x1xf32> to vector<32x640xf32>
    %36 = arith.mulf %26, %35 : vector<32x640xf32>
    %c0_17 = arith.constant 0 : index
    %c0_18 = arith.constant 0 : index
    %37 = vector.load %arg4[%c0_17, %c0_18] : memref<32x1xf32, #tpu.memory_space<vmem>>, vector<32x1xf32>
    %38 = vector.broadcast %37 : vector<32x1xf32> to vector<32x640xf32>
    %39 = arith.mulf %36, %38 : vector<32x640xf32>
    %c0_19 = arith.constant 0 : index
    %c0_20 = arith.constant 0 : index
    %40 = vector.load %arg5[%c0_19, %c0_20] : memref<32x1xf32, #tpu.memory_space<vmem>>, vector<32x1xf32>
    %41 = vector.broadcast %40 : vector<32x1xf32> to vector<32x640xf32>
    %42 = arith.addf %39, %41 : vector<32x640xf32>
    %cst_21 = arith.constant 0.000000e+00 : f32
    %43 = vector.broadcast %cst_21 : f32 to vector<32x640xf32>
    %44 = arith.maximumf %42, %43 : vector<32x640xf32>
    %45 = vector.broadcast %0 : vector<1x640xf32> to vector<32x640xf32>
    %46 = arith.mulf %44, %45 : vector<32x640xf32>
    %47 = arith.truncf %46 : vector<32x640xf32> to vector<32x640xbf16>
    %c0_22 = arith.constant 0 : index
    %c128 = arith.constant 128 : index
    %48 = vector.load %arg18[%c0_22, %c128] : memref<32x896xbf16, #tpu.memory_space<vmem>>, vector<32x640xbf16>
    tpu.vector_store %arg18[%c0_22, %c128], %47 {strides = array<i32>} : memref<32x896xbf16, #tpu.memory_space<vmem>>, vector<32x640xbf16>,
    %c0_23 = arith.constant 0 : index
    %c0_24 = arith.constant 0 : index
    %49 = vector.load %arg18[%c0_23, %c0_24] : memref<32x896xbf16, #tpu.memory_space<vmem>>, vector<32x896xbf16>
    %50 = vector.extract_strided_slice %49 {offsets = [0, 110], sizes = [32, 640], strides = [1, 1]} : vector<32x896xbf16> to vector<32x640xbf16>
    %51 = vector.extract_strided_slice %49 {offsets = [0, 111], sizes = [32, 640], strides = [1, 1]} : vector<32x896xbf16> to vector<32x640xbf16>
    %52 = vector.extract_strided_slice %49 {offsets = [0, 112], sizes = [32, 640], strides = [1, 1]} : vector<32x896xbf16> to vector<32x640xbf16>
    %53 = vector.extract_strided_slice %49 {offsets = [0, 127], sizes = [32, 640], strides = [1, 1]} : vector<32x896xbf16> to vector<32x640xbf16>
    %54 = vector.extract_strided_slice %49 {offsets = [0, 128], sizes = [32, 640], strides = [1, 1]} : vector<32x896xbf16> to vector<32x640xbf16>
    %55 = vector.extract_strided_slice %49 {offsets = [0, 129], sizes = [32, 640], strides = [1, 1]} : vector<32x896xbf16> to vector<32x640xbf16>
    %56 = vector.extract_strided_slice %49 {offsets = [0, 144], sizes = [32, 640], strides = [1, 1]} : vector<32x896xbf16> to vector<32x640xbf16>
    %57 = vector.extract_strided_slice %49 {offsets = [0, 145], sizes = [32, 640], strides = [1, 1]} : vector<32x896xbf16> to vector<32x640xbf16>
    %58 = vector.extract_strided_slice %49 {offsets = [0, 146], sizes = [32, 640], strides = [1, 1]} : vector<32x896xbf16> to vector<32x640xbf16>
    %59 = tpu.concatenate %50, %51, %52, %53, %54, %55, %56, %57, %58 in 0 : vector<32x640xbf16>, vector<32x640xbf16>, vector<32x640xbf16>, vector<32x640xbf16>, vector<32x640xbf16>, vector<32x640xbf16>, vector<32x640xbf16>, vector<32x640xbf16>, vector<32x640xbf16> -> vector<288x640xbf16>
    %c0_25 = arith.constant 0 : index
    %c0_26 = arith.constant 0 : index
    %60 = vector.load %arg6[%c0_25, %c0_26] : memref<32x288xbf16, #tpu.memory_space<vmem>>, vector<32x288xbf16>
    %cst_27 = arith.constant dense<0.000000e+00> : vector<32x640xf32>
    %61 = tpu.matmul %60, %59, %cst_27 {dimension_numbers = #tpu.dot_dimension_numbers<[1], [0], [0], [1], [0, 0, 1, 1], [], []>} : vector<32x288xbf16>, vector<288x640xbf16>, vector<32x640xf32> -> vector<32x640xf32>
    %cst_28 = arith.constant dense<0.000000e+00> : vector<32x128xf32>
    %62 = tpu.matmul %61, %1, %cst_28 {dimension_numbers = #tpu.dot_dimension_numbers<[1], [0], [0], [1], [0, 0, 1, 1], [], []>} : vector<32x640xf32>, vector<640x128xf32>, vector<32x128xf32> -> vector<32x128xf32>
    %63 = vector.extract_strided_slice %62 {offsets = [0, 0], sizes = [32, 1], strides = [1, 1]} : vector<32x128xf32> to vector<32x1xf32>
    %cst_29 = arith.constant 0.001953125 : f32
    %64 = vector.broadcast %cst_29 : f32 to vector<32x1xf32>
    %65 = arith.mulf %63, %64 : vector<32x1xf32>
    %66 = vector.broadcast %65 : vector<32x1xf32> to vector<32x640xf32>
    %67 = arith.subf %61, %66 : vector<32x640xf32>
    %68 = vector.broadcast %0 : vector<1x640xf32> to vector<32x640xf32>
    %69 = arith.mulf %67, %68 : vector<32x640xf32>
    %70 = arith.mulf %69, %69 : vector<32x640xf32>
    %cst_30 = arith.constant dense<0.000000e+00> : vector<32x128xf32>
    %71 = tpu.matmul %70, %1, %cst_30 {dimension_numbers = #tpu.dot_dimension_numbers<[1], [0], [0], [1], [0, 0, 1, 1], [], []>} : vector<32x640xf32>, vector<640x128xf32>, vector<32x128xf32> -> vector<32x128xf32>
    %72 = vector.extract_strided_slice %71 {offsets = [0, 0], sizes = [32, 1], strides = [1, 1]} : vector<32x128xf32> to vector<32x1xf32>
    %cst_31 = arith.constant 0.001953125 : f32
    %73 = vector.broadcast %cst_31 : f32 to vector<32x1xf32>
    %74 = arith.mulf %72, %73 : vector<32x1xf32>
    %cst_32 = arith.constant 9.99999974E-6 : f32
    %75 = vector.broadcast %cst_32 : f32 to vector<32x1xf32>
    %76 = arith.addf %74, %75 : vector<32x1xf32>
    %77 = math.rsqrt %76 : vector<32x1xf32>
    %78 = vector.broadcast %77 : vector<32x1xf32> to vector<32x640xf32>
    %79 = arith.mulf %69, %78 : vector<32x640xf32>
    %c0_33 = arith.constant 0 : index
    %c0_34 = arith.constant 0 : index
    %80 = vector.load %arg7[%c0_33, %c0_34] : memref<32x1xf32, #tpu.memory_space<vmem>>, vector<32x1xf32>
    %81 = vector.broadcast %80 : vector<32x1xf32> to vector<32x640xf32>
    %82 = arith.mulf %79, %81 : vector<32x640xf32>
    %c0_35 = arith.constant 0 : index
    %c0_36 = arith.constant 0 : index
    %83 = vector.load %arg8[%c0_35, %c0_36] : memref<32x1xf32, #tpu.memory_space<vmem>>, vector<32x1xf32>
    %84 = vector.broadcast %83 : vector<32x1xf32> to vector<32x640xf32>
    %85 = arith.addf %82, %84 : vector<32x640xf32>
    %cst_37 = arith.constant 0.000000e+00 : f32
    %86 = vector.broadcast %cst_37 : f32 to vector<32x640xf32>
    %87 = arith.maximumf %85, %86 : vector<32x640xf32>
    %88 = vector.broadcast %0 : vector<1x640xf32> to vector<32x640xf32>
    %89 = arith.mulf %87, %88 : vector<32x640xf32>
    %90 = arith.truncf %89 : vector<32x640xf32> to vector<32x640xbf16>
    %c0_38 = arith.constant 0 : index
    %c128_39 = arith.constant 128 : index
    %91 = vector.load %arg18[%c0_38, %c128_39] : memref<32x896xbf16, #tpu.memory_space<vmem>>, vector<32x640xbf16>
    tpu.vector_store %arg18[%c0_38, %c128_39], %90 {strides = array<i32>} : memref<32x896xbf16, #tpu.memory_space<vmem>>, vector<32x640xbf16>,
    %c0_40 = arith.constant 0 : index
    %c0_41 = arith.constant 0 : index
    %92 = vector.load %arg18[%c0_40, %c0_41] : memref<32x896xbf16, #tpu.memory_space<vmem>>, vector<32x896xbf16>
    %93 = vector.extract_strided_slice %92 {offsets = [0, 110], sizes = [32, 640], strides = [1, 1]} : vector<32x896xbf16> to vector<32x640xbf16>
    %94 = vector.extract_strided_slice %92 {offsets = [0, 111], sizes = [32, 640], strides = [1, 1]} : vector<32x896xbf16> to vector<32x640xbf16>
    %95 = vector.extract_strided_slice %92 {offsets = [0, 112], sizes = [32, 640], strides = [1, 1]} : vector<32x896xbf16> to vector<32x640xbf16>
    %96 = vector.extract_strided_slice %92 {offsets = [0, 127], sizes = [32, 640], strides = [1, 1]} : vector<32x896xbf16> to vector<32x640xbf16>
    %97 = vector.extract_strided_slice %92 {offsets = [0, 128], sizes = [32, 640], strides = [1, 1]} : vector<32x896xbf16> to vector<32x640xbf16>
    %98 = vector.extract_strided_slice %92 {offsets = [0, 129], sizes = [32, 640], strides = [1, 1]} : vector<32x896xbf16> to vector<32x640xbf16>
    %99 = vector.extract_strided_slice %92 {offsets = [0, 144], sizes = [32, 640], strides = [1, 1]} : vector<32x896xbf16> to vector<32x640xbf16>
    %100 = vector.extract_strided_slice %92 {offsets = [0, 145], sizes = [32, 640], strides = [1, 1]} : vector<32x896xbf16> to vector<32x640xbf16>
    %101 = vector.extract_strided_slice %92 {offsets = [0, 146], sizes = [32, 640], strides = [1, 1]} : vector<32x896xbf16> to vector<32x640xbf16>
    %102 = tpu.concatenate %93, %94, %95, %96, %97, %98, %99, %100, %101 in 0 : vector<32x640xbf16>, vector<32x640xbf16>, vector<32x640xbf16>, vector<32x640xbf16>, vector<32x640xbf16>, vector<32x640xbf16>, vector<32x640xbf16>, vector<32x640xbf16>, vector<32x640xbf16> -> vector<288x640xbf16>
    %c0_42 = arith.constant 0 : index
    %c0_43 = arith.constant 0 : index
    %103 = vector.load %arg9[%c0_42, %c0_43] : memref<32x288xbf16, #tpu.memory_space<vmem>>, vector<32x288xbf16>
    %cst_44 = arith.constant dense<0.000000e+00> : vector<32x640xf32>
    %104 = tpu.matmul %103, %102, %cst_44 {dimension_numbers = #tpu.dot_dimension_numbers<[1], [0], [0], [1], [0, 0, 1, 1], [], []>} : vector<32x288xbf16>, vector<288x640xbf16>, vector<32x640xf32> -> vector<32x640xf32>
    %cst_45 = arith.constant dense<0.000000e+00> : vector<32x128xf32>
    %105 = tpu.matmul %104, %1, %cst_45 {dimension_numbers = #tpu.dot_dimension_numbers<[1], [0], [0], [1], [0, 0, 1, 1], [], []>} : vector<32x640xf32>, vector<640x128xf32>, vector<32x128xf32> -> vector<32x128xf32>
    %106 = vector.extract_strided_slice %105 {offsets = [0, 0], sizes = [32, 1], strides = [1, 1]} : vector<32x128xf32> to vector<32x1xf32>
    %cst_46 = arith.constant 0.001953125 : f32
    %107 = vector.broadcast %cst_46 : f32 to vector<32x1xf32>
    %108 = arith.mulf %106, %107 : vector<32x1xf32>
    %109 = vector.broadcast %108 : vector<32x1xf32> to vector<32x640xf32>
    %110 = arith.subf %104, %109 : vector<32x640xf32>
    %111 = vector.broadcast %0 : vector<1x640xf32> to vector<32x640xf32>
    %112 = arith.mulf %110, %111 : vector<32x640xf32>
    %113 = arith.mulf %112, %112 : vector<32x640xf32>
    %cst_47 = arith.constant dense<0.000000e+00> : vector<32x128xf32>
    %114 = tpu.matmul %113, %1, %cst_47 {dimension_numbers = #tpu.dot_dimension_numbers<[1], [0], [0], [1], [0, 0, 1, 1], [], []>} : vector<32x640xf32>, vector<640x128xf32>, vector<32x128xf32> -> vector<32x128xf32>
    %115 = vector.extract_strided_slice %114 {offsets = [0, 0], sizes = [32, 1], strides = [1, 1]} : vector<32x128xf32> to vector<32x1xf32>
    %cst_48 = arith.constant 0.001953125 : f32
    %116 = vector.broadcast %cst_48 : f32 to vector<32x1xf32>
    %117 = arith.mulf %115, %116 : vector<32x1xf32>
    %cst_49 = arith.constant 9.99999974E-6 : f32
    %118 = vector.broadcast %cst_49 : f32 to vector<32x1xf32>
    %119 = arith.addf %117, %118 : vector<32x1xf32>
    %120 = math.rsqrt %119 : vector<32x1xf32>
    %121 = vector.broadcast %120 : vector<32x1xf32> to vector<32x640xf32>
    %122 = arith.mulf %112, %121 : vector<32x640xf32>
    %c0_50 = arith.constant 0 : index
    %c0_51 = arith.constant 0 : index
    %123 = vector.load %arg10[%c0_50, %c0_51] : memref<32x1xf32, #tpu.memory_space<vmem>>, vector<32x1xf32>
    %124 = vector.broadcast %123 : vector<32x1xf32> to vector<32x640xf32>
    %125 = arith.mulf %122, %124 : vector<32x640xf32>
    %c0_52 = arith.constant 0 : index
    %c0_53 = arith.constant 0 : index
    %126 = vector.load %arg11[%c0_52, %c0_53] : memref<32x1xf32, #tpu.memory_space<vmem>>, vector<32x1xf32>
    %127 = vector.broadcast %126 : vector<32x1xf32> to vector<32x640xf32>
    %128 = arith.addf %125, %127 : vector<32x640xf32>
    %cst_54 = arith.constant 0.000000e+00 : f32
    %129 = vector.broadcast %cst_54 : f32 to vector<32x640xf32>
    %130 = arith.maximumf %128, %129 : vector<32x640xf32>
    %131 = vector.broadcast %0 : vector<1x640xf32> to vector<32x640xf32>
    %132 = arith.mulf %130, %131 : vector<32x640xf32>
    %133 = arith.truncf %132 : vector<32x640xf32> to vector<32x640xbf16>
    %c0_55 = arith.constant 0 : index
    %c128_56 = arith.constant 128 : index
    %134 = vector.load %arg18[%c0_55, %c128_56] : memref<32x896xbf16, #tpu.memory_space<vmem>>, vector<32x640xbf16>
    tpu.vector_store %arg18[%c0_55, %c128_56], %133 {strides = array<i32>} : memref<32x896xbf16, #tpu.memory_space<vmem>>, vector<32x640xbf16>,
    %c0_57 = arith.constant 0 : index
    %c0_58 = arith.constant 0 : index
    %135 = vector.load %arg18[%c0_57, %c0_58] : memref<32x896xbf16, #tpu.memory_space<vmem>>, vector<32x896xbf16>
    %136 = vector.extract_strided_slice %135 {offsets = [0, 110], sizes = [32, 640], strides = [1, 1]} : vector<32x896xbf16> to vector<32x640xbf16>
    %137 = vector.extract_strided_slice %135 {offsets = [0, 111], sizes = [32, 640], strides = [1, 1]} : vector<32x896xbf16> to vector<32x640xbf16>
    %138 = vector.extract_strided_slice %135 {offsets = [0, 112], sizes = [32, 640], strides = [1, 1]} : vector<32x896xbf16> to vector<32x640xbf16>
    %139 = vector.extract_strided_slice %135 {offsets = [0, 127], sizes = [32, 640], strides = [1, 1]} : vector<32x896xbf16> to vector<32x640xbf16>
    %140 = vector.extract_strided_slice %135 {offsets = [0, 128], sizes = [32, 640], strides = [1, 1]} : vector<32x896xbf16> to vector<32x640xbf16>
    %141 = vector.extract_strided_slice %135 {offsets = [0, 129], sizes = [32, 640], strides = [1, 1]} : vector<32x896xbf16> to vector<32x640xbf16>
    %142 = vector.extract_strided_slice %135 {offsets = [0, 144], sizes = [32, 640], strides = [1, 1]} : vector<32x896xbf16> to vector<32x640xbf16>
    %143 = vector.extract_strided_slice %135 {offsets = [0, 145], sizes = [32, 640], strides = [1, 1]} : vector<32x896xbf16> to vector<32x640xbf16>
    %144 = vector.extract_strided_slice %135 {offsets = [0, 146], sizes = [32, 640], strides = [1, 1]} : vector<32x896xbf16> to vector<32x640xbf16>
    %145 = tpu.concatenate %136, %137, %138, %139, %140, %141, %142, %143, %144 in 0 : vector<32x640xbf16>, vector<32x640xbf16>, vector<32x640xbf16>, vector<32x640xbf16>, vector<32x640xbf16>, vector<32x640xbf16>, vector<32x640xbf16>, vector<32x640xbf16>, vector<32x640xbf16> -> vector<288x640xbf16>
    %c0_59 = arith.constant 0 : index
    %c0_60 = arith.constant 0 : index
    %146 = vector.load %arg12[%c0_59, %c0_60] : memref<32x288xbf16, #tpu.memory_space<vmem>>, vector<32x288xbf16>
    %cst_61 = arith.constant dense<0.000000e+00> : vector<32x640xf32>
    %147 = tpu.matmul %146, %145, %cst_61 {dimension_numbers = #tpu.dot_dimension_numbers<[1], [0], [0], [1], [0, 0, 1, 1], [], []>} : vector<32x288xbf16>, vector<288x640xbf16>, vector<32x640xf32> -> vector<32x640xf32>
    %cst_62 = arith.constant dense<0.000000e+00> : vector<32x128xf32>
    %148 = tpu.matmul %147, %1, %cst_62 {dimension_numbers = #tpu.dot_dimension_numbers<[1], [0], [0], [1], [0, 0, 1, 1], [], []>} : vector<32x640xf32>, vector<640x128xf32>, vector<32x128xf32> -> vector<32x128xf32>
    %149 = vector.extract_strided_slice %148 {offsets = [0, 0], sizes = [32, 1], strides = [1, 1]} : vector<32x128xf32> to vector<32x1xf32>
    %cst_63 = arith.constant 0.001953125 : f32
    %150 = vector.broadcast %cst_63 : f32 to vector<32x1xf32>
    %151 = arith.mulf %149, %150 : vector<32x1xf32>
    %152 = vector.broadcast %151 : vector<32x1xf32> to vector<32x640xf32>
    %153 = arith.subf %147, %152 : vector<32x640xf32>
    %154 = vector.broadcast %0 : vector<1x640xf32> to vector<32x640xf32>
    %155 = arith.mulf %153, %154 : vector<32x640xf32>
    %156 = arith.mulf %155, %155 : vector<32x640xf32>
    %cst_64 = arith.constant dense<0.000000e+00> : vector<32x128xf32>
    %157 = tpu.matmul %156, %1, %cst_64 {dimension_numbers = #tpu.dot_dimension_numbers<[1], [0], [0], [1], [0, 0, 1, 1], [], []>} : vector<32x640xf32>, vector<640x128xf32>, vector<32x128xf32> -> vector<32x128xf32>
    %158 = vector.extract_strided_slice %157 {offsets = [0, 0], sizes = [32, 1], strides = [1, 1]} : vector<32x128xf32> to vector<32x1xf32>
    %cst_65 = arith.constant 0.001953125 : f32
    %159 = vector.broadcast %cst_65 : f32 to vector<32x1xf32>
    %160 = arith.mulf %158, %159 : vector<32x1xf32>
    %cst_66 = arith.constant 9.99999974E-6 : f32
    %161 = vector.broadcast %cst_66 : f32 to vector<32x1xf32>
    %162 = arith.addf %160, %161 : vector<32x1xf32>
    %163 = math.rsqrt %162 : vector<32x1xf32>
    %164 = vector.broadcast %163 : vector<32x1xf32> to vector<32x640xf32>
    %165 = arith.mulf %155, %164 : vector<32x640xf32>
    %c0_67 = arith.constant 0 : index
    %c0_68 = arith.constant 0 : index
    %166 = vector.load %arg13[%c0_67, %c0_68] : memref<32x1xf32, #tpu.memory_space<vmem>>, vector<32x1xf32>
    %167 = vector.broadcast %166 : vector<32x1xf32> to vector<32x640xf32>
    %168 = arith.mulf %165, %167 : vector<32x640xf32>
    %c0_69 = arith.constant 0 : index
    %c0_70 = arith.constant 0 : index
    %169 = vector.load %arg14[%c0_69, %c0_70] : memref<32x1xf32, #tpu.memory_space<vmem>>, vector<32x1xf32>
    %170 = vector.broadcast %169 : vector<32x1xf32> to vector<32x640xf32>
    %171 = arith.addf %168, %170 : vector<32x640xf32>
    %cst_71 = arith.constant 0.000000e+00 : f32
    %172 = vector.broadcast %cst_71 : f32 to vector<32x640xf32>
    %173 = arith.maximumf %171, %172 : vector<32x640xf32>
    %174 = vector.broadcast %0 : vector<1x640xf32> to vector<32x640xf32>
    %175 = arith.mulf %173, %174 : vector<32x640xf32>
    %176 = arith.truncf %175 : vector<32x640xf32> to vector<32x640xbf16>
    %c0_72 = arith.constant 0 : index
    %c128_73 = arith.constant 128 : index
    %177 = vector.load %arg18[%c0_72, %c128_73] : memref<32x896xbf16, #tpu.memory_space<vmem>>, vector<32x640xbf16>
    tpu.vector_store %arg18[%c0_72, %c128_73], %176 {strides = array<i32>} : memref<32x896xbf16, #tpu.memory_space<vmem>>, vector<32x640xbf16>,
    %c0_74 = arith.constant 0 : index
    %c128_75 = arith.constant 128 : index
    %178 = vector.load %arg18[%c0_74, %c128_75] : memref<32x896xbf16, #tpu.memory_space<vmem>>, vector<32x640xbf16>
    %c0_76 = arith.constant 0 : index
    %c0_77 = arith.constant 0 : index
    %179 = vector.load %arg15[%c0_76, %c0_77] : memref<8x32xbf16, #tpu.memory_space<vmem>>, vector<8x32xbf16>
    %cst_78 = arith.constant dense<0.000000e+00> : vector<8x640xf32>
    %180 = tpu.matmul %179, %178, %cst_78 {dimension_numbers = #tpu.dot_dimension_numbers<[1], [0], [0], [1], [0, 0, 1, 1], [], []>} : vector<8x32xbf16>, vector<32x640xbf16>, vector<8x640xf32> -> vector<8x640xf32>
    %c0_79 = arith.constant 0 : index
    %c0_80 = arith.constant 0 : index
    %181 = vector.load %arg16[%c0_79, %c0_80] : memref<8x1xf32, #tpu.memory_space<vmem>>, vector<8x1xf32>
    %182 = vector.broadcast %181 : vector<8x1xf32> to vector<8x640xf32>
    %183 = arith.addf %180, %182 : vector<8x640xf32>
    %c0_81 = arith.constant 0 : index
    %c0_82 = arith.constant 0 : index
    %184 = vector.load %arg17[%c0_81, %c0_82] : memref<8x640xf32, #tpu.memory_space<vmem>>, vector<8x640xf32>
    tpu.vector_store %arg17[%c0_81, %c0_82], %183 {strides = array<i32>} : memref<8x640xf32, #tpu.memory_space<vmem>>, vector<8x640xf32>,
    return
  }
}

</mosaic_0001>

<llo_original>
// kernel: enhanced_mask_predictor.1
$region0: #{enhanced_mask_predictor.1}
  #allocation0 [shape = 'u32[]', space=smem, size = 0x4, offset = 0x4, fixed_abs, tag = 'smem constant byte address 0x4 - core index']
  #allocation1 [shape = 'u32[144,128]{1,0:T(1,128)}', space=vmem, size = 0x12000, scoped, tag = 'internal scratch']
  #allocation2 [shape = 'bf16[32,896]{1,0:T(16,128)(2,1)}', space=vmem, size = 0xe000, scoped, tag = 'scratch operand']
  %s0 = inlined_call_operand.vmem [shape: f32[1,640], index: 0, kind: input, shape index: {}]
  %s1 = inlined_call_operand.vmem [shape: f32[640,128], index: 1, kind: input, shape index: {}]
  %s2 = inlined_call_operand.vmem [shape: bf16[16,896], index: 2, kind: input, shape index: {}]
  %s3 = inlined_call_operand.vmem [shape: bf16[32,144], index: 3, kind: input, shape index: {}]
  %s4 = inlined_call_operand.vmem [shape: f32[32,1], index: 4, kind: input, shape index: {}]
  %s5 = inlined_call_operand.vmem [shape: f32[32,1], index: 5, kind: input, shape index: {}]
  %s6 = inlined_call_operand.vmem [shape: bf16[32,288], index: 6, kind: input, shape index: {}]
  %s7 = inlined_call_operand.vmem [shape: f32[32,1], index: 7, kind: input, shape index: {}]
  %s8 = inlined_call_operand.vmem [shape: f32[32,1], index: 8, kind: input, shape index: {}]
  %s9 = inlined_call_operand.vmem [shape: bf16[32,288], index: 9, kind: input, shape index: {}]
  %s10 = inlined_call_operand.vmem [shape: f32[32,1], index: 10, kind: input, shape index: {}]
  %s11 = inlined_call_operand.vmem [shape: f32[32,1], index: 11, kind: input, shape index: {}]
  %s12 = inlined_call_operand.vmem [shape: bf16[32,288], index: 12, kind: input, shape index: {}]
  %s13 = inlined_call_operand.vmem [shape: f32[32,1], index: 13, kind: input, shape index: {}]
  %s14 = inlined_call_operand.vmem [shape: f32[32,1], index: 14, kind: input, shape index: {}]
  %s15 = inlined_call_operand.vmem [shape: bf16[8,32], index: 15, kind: input, shape index: {}]
  %s16 = inlined_call_operand.vmem [shape: f32[8,1], index: 16, kind: input, shape index: {}]
  %s17 = inlined_call_operand.vmem [shape: f32[8,640], index: 17, kind: output, shape index: {}]
  %s18 = sld [smem:[#allocation0]]
  $region78: #{enhanced_mask_predictor.1} parent=0
    _
  %s20 = ssub.s32 1, %s18
  %s21 = scalar_select 0, %s20, %s18
  // Predicated region
  $region2: #{enhanced_mask_predictor.1} parent=0 // pred_check
    _
  $region3: #{enhanced_mask_predictor.1} parent=0 // pred_check_branch
    %23 = sbr.rel (0) target = $region5
  $region4: #{enhanced_mask_predictor.1} parent=0 // pred_region
    _
  $region5: #{enhanced_mask_predictor.1} parent=0 // pred_fallthru
    _
  // Predicated region
  $region6: #{enhanced_mask_predictor.1} parent=0 // pred_check
    _
  $region7: #{enhanced_mask_predictor.1} parent=0 // pred_check_branch
    %25 = sbr.rel (0) target = $region9
  $region8: #{enhanced_mask_predictor.1} parent=0 // pred_region
    _
  $region9: #{enhanced_mask_predictor.1} parent=0 // pred_fallthru
    _
  // Predicated region
  $region10: #{enhanced_mask_predictor.1} parent=0 // pred_check
    _
  $region11: #{enhanced_mask_predictor.1} parent=0 // pred_check_branch
    %27 = sbr.rel (0) target = $region13
  $region12: #{enhanced_mask_predictor.1} parent=0 // pred_region
    _
  $region13: #{enhanced_mask_predictor.1} parent=0 // pred_fallthru
    _
  // Predicated region
  $region14: #{enhanced_mask_predictor.1} parent=0 // pred_check
    _
  $region15: #{enhanced_mask_predictor.1} parent=0 // pred_check_branch
    %29 = sbr.rel (0) target = $region17
  $region16: #{enhanced_mask_predictor.1} parent=0 // pred_region
    _
  $region17: #{enhanced_mask_predictor.1} parent=0 // pred_fallthru
    _
  // Predicated region
  $region18: #{enhanced_mask_predictor.1} parent=0 // pred_check
    _
  $region19: #{enhanced_mask_predictor.1} parent=0 // pred_check_branch
    %31 = sbr.rel (0) target = $region21
  $region20: #{enhanced_mask_predictor.1} parent=0 // pred_region
    _
  $region21: #{enhanced_mask_predictor.1} parent=0 // pred_fallthru
    _
  // Predicated region
  $region22: #{enhanced_mask_predictor.1} parent=0 // pred_check
    _
  $region23: #{enhanced_mask_predictor.1} parent=0 // pred_check_branch
    %33 = sbr.rel (0) target = $region25
  $region24: #{enhanced_mask_predictor.1} parent=0 // pred_region
    _
  $region25: #{enhanced_mask_predictor.1} parent=0 // pred_fallthru
    _
  // Predicated region
  $region26: #{enhanced_mask_predictor.1} parent=0 // pred_check
    _
  $region27: #{enhanced_mask_predictor.1} parent=0 // pred_check_branch
    %35 = sbr.rel (0) target = $region29
  $region28: #{enhanced_mask_predictor.1} parent=0 // pred_region
    _
  $region29: #{enhanced_mask_predictor.1} parent=0 // pred_fallthru
    _
  // Predicated region
  $region30: #{enhanced_mask_predictor.1} parent=0 // pred_check
    _
  $region31: #{enhanced_mask_predictor.1} parent=0 // pred_check_branch
    %37 = sbr.rel (0) target = $region33
  $region32: #{enhanced_mask_predictor.1} parent=0 // pred_region
    _
  $region33: #{enhanced_mask_predictor.1} parent=0 // pred_fallthru
    _
  // Predicated region
  $region34: #{enhanced_mask_predictor.1} parent=0 // pred_check
    _
  $region35: #{enhanced_mask_predictor.1} parent=0 // pred_check_branch
    %39 = sbr.rel (0) target = $region37
  $region36: #{enhanced_mask_predictor.1} parent=0 // pred_region
    _
  $region37: #{enhanced_mask_predictor.1} parent=0 // pred_fallthru
    _
  // Predicated region
  $region38: #{enhanced_mask_predictor.1} parent=0 // pred_check
    _
  $region39: #{enhanced_mask_predictor.1} parent=0 // pred_check_branch
    %41 = sbr.rel (0) target = $region41
  $region40: #{enhanced_mask_predictor.1} parent=0 // pred_region
    _
  $region41: #{enhanced_mask_predictor.1} parent=0 // pred_fallthru
    _
  // Predicated region
  $region42: #{enhanced_mask_predictor.1} parent=0 // pred_check
    _
  $region43: #{enhanced_mask_predictor.1} parent=0 // pred_check_branch
    %43 = sbr.rel (0) target = $region45
  $region44: #{enhanced_mask_predictor.1} parent=0 // pred_region
    _
  $region45: #{enhanced_mask_predictor.1} parent=0 // pred_fallthru
    _
  // Predicated region
  $region46: #{enhanced_mask_predictor.1} parent=0 // pred_check
    _
  $region47: #{enhanced_mask_predictor.1} parent=0 // pred_check_branch
    %45 = sbr.rel (0) target = $region49
  $region48: #{enhanced_mask_predictor.1} parent=0 // pred_region
    _
  $region49: #{enhanced_mask_predictor.1} parent=0 // pred_fallthru
    _
  // Predicated region
  $region50: #{enhanced_mask_predictor.1} parent=0 // pred_check
    _
  $region51: #{enhanced_mask_predictor.1} parent=0 // pred_check_branch
    %47 = sbr.rel (0) target = $region53
  $region52: #{enhanced_mask_predictor.1} parent=0 // pred_region
    _
  $region53: #{enhanced_mask_predictor.1} parent=0 // pred_fallthru
    _
  // Predicated region
  $region54: #{enhanced_mask_predictor.1} parent=0 // pred_check
    _
  $region55: #{enhanced_mask_predictor.1} parent=0 // pred_check_branch
    %49 = sbr.rel (0) target = $region57
  $region56: #{enhanced_mask_predictor.1} parent=0 // pred_region
    _
  $region57: #{enhanced_mask_predictor.1} parent=0 // pred_fallthru
    _
  // Predicated region
  $region58: #{enhanced_mask_predictor.1} parent=0 // pred_check
    _
  $region59: #{enhanced_mask_predictor.1} parent=0 // pred_check_branch
    %51 = sbr.rel (0) target = $region61
  $region60: #{enhanced_mask_predictor.1} parent=0 // pred_region
    _
  $region61: #{enhanced_mask_predictor.1} parent=0 // pred_fallthru
    _
  // Predicated region
  $region62: #{enhanced_mask_predictor.1} parent=0 // pred_check
    _
  $region63: #{enhanced_mask_predictor.1} parent=0 // pred_check_branch
    %53 = sbr.rel (0) target = $region65
  $region64: #{enhanced_mask_predictor.1} parent=0 // pred_region
    _
  $region65: #{enhanced_mask_predictor.1} parent=0 // pred_fallthru
    _
  // Predicated region
  $region66: #{enhanced_mask_predictor.1} parent=0 // pred_check
    _
  $region67: #{enhanced_mask_predictor.1} parent=0 // pred_check_branch
    %55 = sbr.rel (0) target = $region69
  $region68: #{enhanced_mask_predictor.1} parent=0 // pred_region
    _
  $region69: #{enhanced_mask_predictor.1} parent=0 // pred_fallthru
    _
  %v57 = vld [vmem:[%s0] sm:$0x1f]
  %v58 = vld [vmem:[%s1] sm:$0xff]
  %v59 = vld [vmem:[%s1 + $0x8] sm:$0xff]
  %v60 = vld [vmem:[%s1 + $0x10] sm:$0xff]
  %v61 = vld [vmem:[%s1 + $0x18] sm:$0xff]
  %v62 = vld [vmem:[%s1 + $0x20] sm:$0xff]
  %v63 = vld [vmem:[%s1 + $0x28] sm:$0xff]
  %v64 = vld [vmem:[%s1 + $0x30] sm:$0xff]
  %v65 = vld [vmem:[%s1 + $0x38] sm:$0xff]
  %v66 = vld [vmem:[%s1 + $0x40] sm:$0xff]
  %v67 = vld [vmem:[%s1 + $0x48] sm:$0xff]
  %v68 = vld [vmem:[%s1 + $0x50] sm:$0xff]
  %v69 = vld [vmem:[%s1 + $0x58] sm:$0xff]
  %v70 = vld [vmem:[%s1 + $0x60] sm:$0xff]
  %v71 = vld [vmem:[%s1 + $0x68] sm:$0xff]
  %v72 = vld [vmem:[%s1 + $0x70] sm:$0xff]
  %v73 = vld [vmem:[%s1 + $0x78] sm:$0xff]
  %v74 = vld [vmem:[%s1 + $0x80] sm:$0xff]
  %v75 = vld [vmem:[%s1 + $0x88] sm:$0xff]
  %v76 = vld [vmem:[%s1 + $0x90] sm:$0xff]
  %v77 = vld [vmem:[%s1 + $0x98] sm:$0xff]
  %v78 = vld [vmem:[%s1 + $0xa0] sm:$0xff]
  %v79 = vld [vmem:[%s1 + $0xa8] sm:$0xff]
  %v80 = vld [vmem:[%s1 + $0xb0] sm:$0xff]
  %v81 = vld [vmem:[%s1 + $0xb8] sm:$0xff]
  %v82 = vld [vmem:[%s1 + $0xc0] sm:$0xff]
  %v83 = vld [vmem:[%s1 + $0xc8] sm:$0xff]
  %v84 = vld [vmem:[%s1 + $0xd0] sm:$0xff]
  %v85 = vld [vmem:[%s1 + $0xd8] sm:$0xff]
  %v86 = vld [vmem:[%s1 + $0xe0] sm:$0xff]
  %v87 = vld [vmem:[%s1 + $0xe8] sm:$0xff]
  %v88 = vld [vmem:[%s1 + $0xf0] sm:$0xff]
  %v89 = vld [vmem:[%s1 + $0xf8] sm:$0xff]
  %v90 = vld [vmem:[%s1 + $0x100] sm:$0xff]
  %v91 = vld [vmem:[%s1 + $0x108] sm:$0xff]
  %v92 = vld [vmem:[%s1 + $0x110] sm:$0xff]
  %v93 = vld [vmem:[%s1 + $0x118] sm:$0xff]
  %v94 = vld [vmem:[%s1 + $0x120] sm:$0xff]
  %v95 = vld [vmem:[%s1 + $0x128] sm:$0xff]
  %v96 = vld [vmem:[%s1 + $0x130] sm:$0xff]
  %v97 = vld [vmem:[%s1 + $0x138] sm:$0xff]
  %v98 = vld [vmem:[%s1 + $0x140] sm:$0xff]
  %v99 = vld [vmem:[%s1 + $0x148] sm:$0xff]
  %v100 = vld [vmem:[%s1 + $0x150] sm:$0xff]
  %v101 = vld [vmem:[%s1 + $0x158] sm:$0xff]
  %v102 = vld [vmem:[%s1 + $0x160] sm:$0xff]
  %v103 = vld [vmem:[%s1 + $0x168] sm:$0xff]
  %v104 = vld [vmem:[%s1 + $0x170] sm:$0xff]
  %v105 = vld [vmem:[%s1 + $0x178] sm:$0xff]
  %v106 = vld [vmem:[%s1 + $0x180] sm:$0xff]
  %v107 = vld [vmem:[%s1 + $0x188] sm:$0xff]
  %v108 = vld [vmem:[%s1 + $0x190] sm:$0xff]
  %v109 = vld [vmem:[%s1 + $0x198] sm:$0xff]
  %v110 = vld [vmem:[%s1 + $0x1a0] sm:$0xff]
  %v111 = vld [vmem:[%s1 + $0x1a8] sm:$0xff]
  %v112 = vld [vmem:[%s1 + $0x1b0] sm:$0xff]
  %v113 = vld [vmem:[%s1 + $0x1b8] sm:$0xff]
  %v114 = vld [vmem:[%s1 + $0x1c0] sm:$0xff]
  %v115 = vld [vmem:[%s1 + $0x1c8] sm:$0xff]
  %v116 = vld [vmem:[%s1 + $0x1d0] sm:$0xff]
  %v117 = vld [vmem:[%s1 + $0x1d8] sm:$0xff]
  %v118 = vld [vmem:[%s1 + $0x1e0] sm:$0xff]
  %v119 = vld [vmem:[%s1 + $0x1e8] sm:$0xff]
  %v120 = vld [vmem:[%s1 + $0x1f0] sm:$0xff]
  %v121 = vld [vmem:[%s1 + $0x1f8] sm:$0xff]
  %v122 = vld [vmem:[%s1 + $0x200] sm:$0xff]
  %v123 = vld [vmem:[%s1 + $0x208] sm:$0xff]
  %v124 = vld [vmem:[%s1 + $0x210] sm:$0xff]
  %v125 = vld [vmem:[%s1 + $0x218] sm:$0xff]
  %v126 = vld [vmem:[%s1 + $0x220] sm:$0xff]
  %v127 = vld [vmem:[%s1 + $0x228] sm:$0xff]
  %v128 = vld [vmem:[%s1 + $0x230] sm:$0xff]
  %v129 = vld [vmem:[%s1 + $0x238] sm:$0xff]
  %v130 = vld [vmem:[%s1 + $0x240] sm:$0xff]
  %v131 = vld [vmem:[%s1 + $0x248] sm:$0xff]
  %v132 = vld [vmem:[%s1 + $0x250] sm:$0xff]
  %v133 = vld [vmem:[%s1 + $0x258] sm:$0xff]
  %v134 = vld [vmem:[%s1 + $0x260] sm:$0xff]
  %v135 = vld [vmem:[%s1 + $0x268] sm:$0xff]
  %v136 = vld [vmem:[%s1 + $0x270] sm:$0xff]
  %v137 = vld [vmem:[%s1 + $0x278] sm:$0xff]
  %138 = vst [vmem:[#allocation2] sm:$0xff] 0
  %139 = vst [vmem:[#allocation2 + $0x38] sm:$0xff] 0
  %140 = vst [vmem:[#allocation2 + $0x30] sm:$0xff] 0
  %141 = vst [vmem:[#allocation2 + $0x68] sm:$0xff] 0
  %v142 = vld [vmem:[%s2] sm:$0xff]
  %v143 = vld [vmem:[%s2 + $0x8] sm:$0xff]
  %v144 = vld [vmem:[%s2 + $0x10] sm:$0xff]
  %v145 = vld [vmem:[%s2 + $0x18] sm:$0xf]
  %v146 = vld [vmem:[%s2 + $0x1c] sm:$0xff]
  %v147 = vld [vmem:[%s2 + $0x24] sm:$0xff]
  %v148 = vld [vmem:[%s2 + $0x2c] sm:$0xff]
  %v149 = vld [vmem:[%s2 + $0x34] sm:$0xf]
  %v156 = vunpack.c.l.b16 %v142
  %v157 = vunpack.c.h.b16 %v142
  %v158 = vunpack.c.l.b16 %v143
  %v159 = vunpack.c.h.b16 %v143
  %v160 = vunpack.c.l.b16 %v144
  %v161 = vunpack.c.h.b16 %v144
  %v162 = vunpack.c.l.b16 %v146
  %v163 = vunpack.c.h.b16 %v146
  %v164 = vunpack.c.l.b16 %v147
  %v165 = vunpack.c.h.b16 %v147
  %v166 = vunpack.c.l.b16 %v148
  %v167 = vunpack.c.h.b16 %v148
  %v168 = vpack.c.b16 %v162, %v156
  %v169 = vpack.c.b16 %v163, %v157
  %v170 = vpack.c.b16 %v164, %v158
  %v171 = vpack.c.b16 %v165, %v159
  %v172 = vpack.c.b16 %v166, %v160
  %v173 = vpack.c.b16 %v167, %v161
  %174 = vrot.lane.b32.xlu0 %v168, 127
  %v175 = vpop.permute.xlu0 %174
  %176 = vrot.lane.b32.xlu0 %v169, 127
  %v177 = vpop.permute.xlu0 %176
  %178 = vrot.lane.b32.xlu0 %v170, 127
  %v179 = vpop.permute.xlu0 %178
  %180 = vrot.lane.b32.xlu0 %v171, 127
  %v181 = vpop.permute.xlu0 %180
  %182 = vrot.lane.b32.xlu0 %v172, 127
  %v183 = vpop.permute.xlu0 %182
  %184 = vrot.lane.b32.xlu0 %v173, 127
  %v185 = vpop.permute.xlu0 %184
  %vm186 = vcmask 1039360
  %v187 = vsel %vm186, %v175, %v177
  %v188 = vsel %vm186, %v177, %v179
  %v189 = vsel %vm186, %v179, %v181
  %v190 = vsel %vm186, %v181, %v183
  %v191 = vsel %vm186, %v183, %v185
  %192 = vrot.lane.b32.xlu0 %v168, 126
  %v193 = vpop.permute.xlu0 %192
  %194 = vrot.lane.b32.xlu0 %v169, 126
  %v195 = vpop.permute.xlu0 %194
  %196 = vrot.lane.b32.xlu0 %v170, 126
  %v197 = vpop.permute.xlu0 %196
  %198 = vrot.lane.b32.xlu0 %v171, 126
  %v199 = vpop.permute.xlu0 %198
  %200 = vrot.lane.b32.xlu0 %v172, 126
  %v201 = vpop.permute.xlu0 %200
  %202 = vrot.lane.b32.xlu0 %v173, 126
  %v203 = vpop.permute.xlu0 %202
  %vm204 = vcmask 1031168
  %v205 = vsel %vm204, %v193, %v195
  %v206 = vsel %vm204, %v195, %v197
  %v207 = vsel %vm204, %v197, %v199
  %v208 = vsel %vm204, %v199, %v201
  %v209 = vsel %vm204, %v201, %v203
  %210 = vrot.lane.b32.xlu0 %v168, 111
  %v211 = vpop.permute.xlu0 %210
  %212 = vrot.lane.b32.xlu0 %v169, 111
  %v213 = vpop.permute.xlu0 %212
  %214 = vrot.lane.b32.xlu0 %v170, 111
  %v215 = vpop.permute.xlu0 %214
  %216 = vrot.lane.b32.xlu0 %v171, 111
  %v217 = vpop.permute.xlu0 %216
  %218 = vrot.lane.b32.xlu0 %v172, 111
  %v219 = vpop.permute.xlu0 %218
  %220 = vrot.lane.b32.xlu0 %v173, 111
  %v221 = vpop.permute.xlu0 %220
  %vm222 = vcmask 908288
  %v223 = vsel %vm222, %v211, %v213
  %v224 = vsel %vm222, %v213, %v215
  %v225 = vsel %vm222, %v215, %v217
  %v226 = vsel %vm222, %v217, %v219
  %v227 = vsel %vm222, %v219, %v221
  %228 = vrot.lane.b32.xlu0 %v169, 110
  %v229 = vpop.permute.xlu0 %228
  %230 = vrot.lane.b32.xlu0 %v170, 110
  %v231 = vpop.permute.xlu0 %230
  %232 = vrot.lane.b32.xlu0 %v171, 110
  %v233 = vpop.permute.xlu0 %232
  %234 = vrot.lane.b32.xlu0 %v172, 110
  %v235 = vpop.permute.xlu0 %234
  %236 = vrot.lane.b32.xlu0 %v173, 110
  %v237 = vpop.permute.xlu0 %236
  %vm238 = vcmask 900096
  %v239 = vsel %vm238, %v229, %v231
  %v240 = vsel %vm238, %v231, %v233
  %v241 = vsel %vm238, %v233, %v235
  %v242 = vsel %vm238, %v235, %v237
  %v245 = vunpack.c.l.b16 %v145
  %v246 = vunpack.c.l.b16 %v149
  %v247 = vpack.c.b16 %v246, %v245
  %248 = vrot.lane.b32.xlu0 %v169, 109
  %v249 = vpop.permute.xlu0 %248
  %250 = vrot.lane.b32.xlu0 %v170, 109
  %v251 = vpop.permute.xlu0 %250
  %252 = vrot.lane.b32.xlu0 %v171, 109
  %v253 = vpop.permute.xlu0 %252
  %254 = vrot.lane.b32.xlu0 %v172, 109
  %v255 = vpop.permute.xlu0 %254
  %256 = vrot.lane.b32.xlu0 %v173, 109
  %v257 = vpop.permute.xlu0 %256
  %258 = vrot.lane.b32.xlu0 %v247, 109
  %v259 = vpop.permute.xlu0 %258
  %vm260 = vcmask 891904
  %v261 = vsel %vm260, %v249, %v251
  %v262 = vsel %vm260, %v251, %v253
  %v263 = vsel %vm260, %v253, %v255
  %v264 = vsel %vm260, %v255, %v257
  %v265 = vsel %vm260, %v257, %v259
  %266 = vrot.lane.b32.xlu0 %v169, 94
  %v267 = vpop.permute.xlu0 %266
  %268 = vrot.lane.b32.xlu0 %v170, 94
  %v269 = vpop.permute.xlu0 %268
  %270 = vrot.lane.b32.xlu0 %v171, 94
  %v271 = vpop.permute.xlu0 %270
  %272 = vrot.lane.b32.xlu0 %v172, 94
  %v273 = vpop.permute.xlu0 %272
  %274 = vrot.lane.b32.xlu0 %v173, 94
  %v275 = vpop.permute.xlu0 %274
  %276 = vrot.lane.b32.xlu0 %v247, 94
  %v277 = vpop.permute.xlu0 %276
  %vm278 = vcmask 769024
  %v279 = vsel %vm278, %v267, %v269
  %v280 = vsel %vm278, %v269, %v271
  %v281 = vsel %vm278, %v271, %v273
  %v282 = vsel %vm278, %v273, %v275
  %v283 = vsel %vm278, %v275, %v277
  %284 = vrot.lane.b32.xlu0 %v169, 93
  %v285 = vpop.permute.xlu0 %284
  %286 = vrot.lane.b32.xlu0 %v170, 93
  %v287 = vpop.permute.xlu0 %286
  %288 = vrot.lane.b32.xlu0 %v171, 93
  %v289 = vpop.permute.xlu0 %288
  %290 = vrot.lane.b32.xlu0 %v172, 93
  %v291 = vpop.permute.xlu0 %290
  %292 = vrot.lane.b32.xlu0 %v173, 93
  %v293 = vpop.permute.xlu0 %292
  %294 = vrot.lane.b32.xlu0 %v247, 93
  %v295 = vpop.permute.xlu0 %294
  %vm296 = vcmask 760832
  %v297 = vsel %vm296, %v285, %v287
  %v298 = vsel %vm296, %v287, %v289
  %v299 = vsel %vm296, %v289, %v291
  %v300 = vsel %vm296, %v291, %v293
  %v301 = vsel %vm296, %v293, %v295
  %302 = vrot.lane.b32.xlu0 %v169, 92
  %v303 = vpop.permute.xlu0 %302
  %304 = vrot.lane.b32.xlu0 %v170, 92
  %v305 = vpop.permute.xlu0 %304
  %306 = vrot.lane.b32.xlu0 %v171, 92
  %v307 = vpop.permute.xlu0 %306
  %308 = vrot.lane.b32.xlu0 %v172, 92
  %v309 = vpop.permute.xlu0 %308
  %310 = vrot.lane.b32.xlu0 %v173, 92
  %v311 = vpop.permute.xlu0 %310
  %312 = vrot.lane.b32.xlu0 %v247, 92
  %v313 = vpop.permute.xlu0 %312
  %vm314 = vcmask 752640
  %v315 = vsel %vm314, %v303, %v305
  %v316 = vsel %vm314, %v305, %v307
  %v317 = vsel %vm314, %v307, %v309
  %v318 = vsel %vm314, %v309, %v311
  %v319 = vsel %vm314, %v311, %v313
  %v320 = vld [vmem:[%s3] sm:$0xff]
  %v321 = vld [vmem:[%s3 + $0x8] sm:$0xff]
  %v322 = vld [vmem:[%s3 + $0x10] sm:$0xff]
  %v323 = vld [vmem:[%s3 + $0x18] sm:$0xff]
  %v328 = vunpack.c.l.b16 %v320
  %v329 = vunpack.c.h.b16 %v320
  %v330 = vunpack.c.l.b16 %v321
  %v331 = vunpack.c.h.b16 %v321
  %v332 = vunpack.c.l.b16 %v322
  %v333 = vunpack.c.h.b16 %v322
  %v334 = vunpack.c.l.b16 %v323
  %v335 = vunpack.c.h.b16 %v323
  %v336 = vpack.c.b16 %v330, %v328
  %v337 = vpack.c.b16 %v331, %v329
  %v338 = vpack.c.b16 %v334, %v332
  %v339 = vpack.c.b16 %v335, %v333
  %342 = vrot.lane.b32.xlu0 %v168, 18
  %v343 = vpop.permute.xlu0 %342
  %344 = vrot.lane.b32.xlu0 %v169, 18
  %v345 = vpop.permute.xlu0 %344
  %346 = vrot.lane.b32.xlu0 %v170, 18
  %v347 = vpop.permute.xlu0 %346
  %348 = vrot.lane.b32.xlu0 %v171, 18
  %v349 = vpop.permute.xlu0 %348
  %350 = vrot.lane.b32.xlu0 %v172, 18
  %v351 = vpop.permute.xlu0 %350
  %352 = vrot.lane.b32.xlu0 %v173, 18
  %v353 = vpop.permute.xlu0 %352
  %354 = vrot.lane.b32.xlu0 %v187, 18
  %v355 = vpop.permute.xlu0 %354
  %356 = vrot.lane.b32.xlu0 %v188, 18
  %v357 = vpop.permute.xlu0 %356
  %358 = vrot.lane.b32.xlu0 %v189, 18
  %v359 = vpop.permute.xlu0 %358
  %360 = vrot.lane.b32.xlu0 %v190, 18
  %v361 = vpop.permute.xlu0 %360
  %362 = vrot.lane.b32.xlu0 %v191, 18
  %v363 = vpop.permute.xlu0 %362
  %364 = vrot.lane.b32.xlu0 %v185, 18
  %v365 = vpop.permute.xlu0 %364
  %366 = vrot.lane.b32.xlu0 %v205, 18
  %v367 = vpop.permute.xlu0 %366
  %368 = vrot.lane.b32.xlu0 %v206, 18
  %v369 = vpop.permute.xlu0 %368
  %370 = vrot.lane.b32.xlu0 %v207, 18
  %v371 = vpop.permute.xlu0 %370
  %372 = vrot.lane.b32.xlu0 %v208, 18
  %v373 = vpop.permute.xlu0 %372
  %374 = vrot.lane.b32.xlu0 %v209, 18
  %v375 = vpop.permute.xlu0 %374
  %376 = vrot.lane.b32.xlu0 %v203, 18
  %v377 = vpop.permute.xlu0 %376
  %378 = vrot.lane.b32.xlu0 %v223, 18
  %v379 = vpop.permute.xlu0 %378
  %380 = vrot.lane.b32.xlu0 %v224, 18
  %v381 = vpop.permute.xlu0 %380
  %382 = vrot.lane.b32.xlu0 %v225, 18
  %v383 = vpop.permute.xlu0 %382
  %384 = vrot.lane.b32.xlu0 %v226, 18
  %v385 = vpop.permute.xlu0 %384
  %386 = vrot.lane.b32.xlu0 %v227, 18
  %v387 = vpop.permute.xlu0 %386
  %388 = vrot.lane.b32.xlu0 %v221, 18
  %v389 = vpop.permute.xlu0 %388
  %390 = vrot.lane.b32.xlu0 %v229, 18
  %v391 = vpop.permute.xlu0 %390
  %392 = vrot.lane.b32.xlu0 %v239, 18
  %v393 = vpop.permute.xlu0 %392
  %394 = vrot.lane.b32.xlu0 %v240, 18
  %v395 = vpop.permute.xlu0 %394
  %396 = vrot.lane.b32.xlu0 %v241, 18
  %v397 = vpop.permute.xlu0 %396
  %398 = vrot.lane.b32.xlu0 %v242, 18
  %v399 = vpop.permute.xlu0 %398
  %400 = vrot.lane.b32.xlu0 %v237, 18
  %v401 = vpop.permute.xlu0 %400
  %402 = vrot.lane.b32.xlu0 %v249, 18
  %v403 = vpop.permute.xlu0 %402
  %404 = vrot.lane.b32.xlu0 %v261, 18
  %v405 = vpop.permute.xlu0 %404
  %406 = vrot.lane.b32.xlu0 %v262, 18
  %v407 = vpop.permute.xlu0 %406
  %408 = vrot.lane.b32.xlu0 %v263, 18
  %v409 = vpop.permute.xlu0 %408
  %410 = vrot.lane.b32.xlu0 %v264, 18
  %v411 = vpop.permute.xlu0 %410
  %412 = vrot.lane.b32.xlu0 %v265, 18
  %v413 = vpop.permute.xlu0 %412
  %414 = vrot.lane.b32.xlu0 %v267, 18
  %v415 = vpop.permute.xlu0 %414
  %416 = vrot.lane.b32.xlu0 %v279, 18
  %v417 = vpop.permute.xlu0 %416
  %418 = vrot.lane.b32.xlu0 %v280, 18
  %v419 = vpop.permute.xlu0 %418
  %420 = vrot.lane.b32.xlu0 %v281, 18
  %v421 = vpop.permute.xlu0 %420
  %422 = vrot.lane.b32.xlu0 %v282, 18
  %v423 = vpop.permute.xlu0 %422
  %424 = vrot.lane.b32.xlu0 %v283, 18
  %v425 = vpop.permute.xlu0 %424
  %426 = vrot.lane.b32.xlu0 %v285, 18
  %v427 = vpop.permute.xlu0 %426
  %428 = vrot.lane.b32.xlu0 %v297, 18
  %v429 = vpop.permute.xlu0 %428
  %430 = vrot.lane.b32.xlu0 %v298, 18
  %v431 = vpop.permute.xlu0 %430
  %432 = vrot.lane.b32.xlu0 %v299, 18
  %v433 = vpop.permute.xlu0 %432
  %434 = vrot.lane.b32.xlu0 %v300, 18
  %v435 = vpop.permute.xlu0 %434
  %436 = vrot.lane.b32.xlu0 %v301, 18
  %v437 = vpop.permute.xlu0 %436
  %438 = vrot.lane.b32.xlu0 %v303, 18
  %v439 = vpop.permute.xlu0 %438
  %440 = vrot.lane.b32.xlu0 %v315, 18
  %v441 = vpop.permute.xlu0 %440
  %442 = vrot.lane.b32.xlu0 %v316, 18
  %v443 = vpop.permute.xlu0 %442
  %444 = vrot.lane.b32.xlu0 %v317, 18
  %v445 = vpop.permute.xlu0 %444
  %446 = vrot.lane.b32.xlu0 %v318, 18
  %v447 = vpop.permute.xlu0 %446
  %448 = vrot.lane.b32.xlu0 %v319, 18
  %v449 = vpop.permute.xlu0 %448
  %vm450 = vcmask 146432
  %v451 = vsel %vm450, %v343, %v345
  %v452 = vsel %vm450, %v345, %v347
  %v453 = vsel %vm450, %v347, %v349
  %v454 = vsel %vm450, %v349, %v351
  %v455 = vsel %vm450, %v351, %v353
  %v456 = vsel %vm450, %v355, %v357
  %v457 = vsel %vm450, %v357, %v359
  %v458 = vsel %vm450, %v359, %v361
  %v459 = vsel %vm450, %v361, %v363
  %v460 = vsel %vm450, %v363, %v365
  %v461 = vsel %vm450, %v367, %v369
  %v462 = vsel %vm450, %v369, %v371
  %v463 = vsel %vm450, %v371, %v373
  %v464 = vsel %vm450, %v373, %v375
  %v465 = vsel %vm450, %v375, %v377
  %v466 = vsel %vm450, %v379, %v381
  %v467 = vsel %vm450, %v381, %v383
  %v468 = vsel %vm450, %v383, %v385
  %v469 = vsel %vm450, %v385, %v387
  %v470 = vsel %vm450, %v387, %v389
  %v471 = vsel %vm450, %v391, %v393
  %v472 = vsel %vm450, %v393, %v395
  %v473 = vsel %vm450, %v395, %v397
  %v474 = vsel %vm450, %v397, %v399
  %v475 = vsel %vm450, %v399, %v401
  %v476 = vsel %vm450, %v403, %v405
  %v477 = vsel %vm450, %v405, %v407
  %v478 = vsel %vm450, %v407, %v409
  %v479 = vsel %vm450, %v409, %v411
  %v480 = vsel %vm450, %v411, %v413
  %v481 = vsel %vm450, %v415, %v417
  %v482 = vsel %vm450, %v417, %v419
  %v483 = vsel %vm450, %v419, %v421
  %v484 = vsel %vm450, %v421, %v423
  %v485 = vsel %vm450, %v423, %v425
  %v486 = vsel %vm450, %v427, %v429
  %v487 = vsel %vm450, %v429, %v431
  %v488 = vsel %vm450, %v431, %v433
  %v489 = vsel %vm450, %v433, %v435
  %v490 = vsel %vm450, %v435, %v437
  %v491 = vsel %vm450, %v439, %v441
  %v492 = vsel %vm450, %v441, %v443
  %v493 = vsel %vm450, %v443, %v445
  %v494 = vsel %vm450, %v445, %v447
  %v495 = vsel %vm450, %v447, %v449
  %vm541 = vcmask 130048
  %v543 = vsel %vm541, %v337, 0
  %v546 = vsel %vm541, %v339, 0
  %548 = vmatprep.subr.bf16.mxu0 %v452
  %549 = vmatpush1.bf16.msra.mxu0 %v451
  %550 = vmatprep.subr.bf16.mxu0 %v457
  %551 = vmatpush1.bf16.msra.mxu0 %v456
  %552 = vmatprep.subr.bf16.mxu0 %v462
  %553 = vmatpush1.bf16.msra.mxu0 %v461
  %554 = vmatprep.subr.bf16.mxu0 %v467
  %555 = vmatpush1.bf16.msra.mxu0 %v466
  %556 = vmatprep.subr.bf16.mxu0 %v472
  %557 = vmatpush1.bf16.msra.mxu0 %v471
  %558 = vmatprep.subr.bf16.mxu0 %v477
  %559 = vmatpush1.bf16.msra.mxu0 %v476
  %560 = vmatprep.subr.bf16.mxu0 %v482
  %561 = vmatpush1.bf16.msra.mxu0 %v481
  %562 = vmatprep.subr.bf16.mxu0 %v487
  %563 = vmatpush1.bf16.msra.mxu0 %v486
  %564 = vmatprep.subr.bf16.mxu0 %v492
  %565 = vmatpush1.bf16.msra.mxu0 %v491
  %566 = vmatprep.subr.bf16.mxu0 0
  %567 = vmatpush1.bf16.msra.mxu0 0
  %568 = vmatprep.subr.bf16.mxu0 0
  %569 = vmatpush1.bf16.msra.mxu0 0
  %570 = vmatprep.subr.bf16.mxu0 0
  %571 = vmatpush1.bf16.msra.mxu0 0
  %572 = vmatprep.subr.bf16.mxu0 0
  %573 = vmatpush1.bf16.msra.mxu0 0
  %574 = vmatprep.subr.bf16.mxu0 0
  %575 = vmatpush1.bf16.msra.mxu0 0
  %576 = vmatprep.subr.bf16.mxu0 0
  %577 = vmatpush1.bf16.msra.mxu0 0
  %578 = vmatprep.subr.bf16.mxu0 0
  %579 = vmatpush1.bf16.msra.mxu0 0
  %580 = vmatprep.mubr.bf16.mxu0 %v543
  %581 = vmatmul.mubr.bf16.gmra.mrb[0].mxu0 %v336
  %v582 = vpop.f32.mrb[0].mxu0
  %v583 = vadd.f32 0.0, %v582
  %v584 = vpop.f32.mrb[0].mxu0
  %v585 = vadd.f32 0.0, %v584
  %v586 = vpop.f32.mrb[0].mxu0
  %v587 = vadd.f32 0.0, %v586
  %v588 = vpop.f32.mrb[0].mxu0
  %v589 = vadd.f32 0.0, %v588
  %590 = vmatprep.mubr.bf16.mxu0 %v546
  %591 = vmatmul.mubr.bf16.gmra.mrb[0].mxu0 %v338
  %v592 = vpop.f32.mrb[0].mxu0
  %v593 = vadd.f32 0.0, %v592
  %v594 = vpop.f32.mrb[0].mxu0
  %v595 = vadd.f32 0.0, %v594
  %v596 = vpop.f32.mrb[0].mxu0
  %v597 = vadd.f32 0.0, %v596
  %v598 = vpop.f32.mrb[0].mxu0
  %v599 = vadd.f32 0.0, %v598
  %600 = vdwg.mxu0
  %601 = vmatprep.subr.bf16.mxu0 %v454
  %602 = vmatpush1.bf16.msra.mxu0 %v453
  %603 = vmatprep.subr.bf16.mxu0 %v459
  %604 = vmatpush1.bf16.msra.mxu0 %v458
  %605 = vmatprep.subr.bf16.mxu0 %v464
  %606 = vmatpush1.bf16.msra.mxu0 %v463
  %607 = vmatprep.subr.bf16.mxu0 %v469
  %608 = vmatpush1.bf16.msra.mxu0 %v468
  %609 = vmatprep.subr.bf16.mxu0 %v474
  %610 = vmatpush1.bf16.msra.mxu0 %v473
  %611 = vmatprep.subr.bf16.mxu0 %v479
  %612 = vmatpush1.bf16.msra.mxu0 %v478
  %613 = vmatprep.subr.bf16.mxu0 %v484
  %614 = vmatpush1.bf16.msra.mxu0 %v483
  %615 = vmatprep.subr.bf16.mxu0 %v489
  %616 = vmatpush1.bf16.msra.mxu0 %v488
  %617 = vmatprep.subr.bf16.mxu0 %v494
  %618 = vmatpush1.bf16.msra.mxu0 %v493
  %619 = vmatprep.subr.bf16.mxu0 0
  %620 = vmatpush1.bf16.msra.mxu0 0
  %621 = vmatprep.subr.bf16.mxu0 0
  %622 = vmatpush1.bf16.msra.mxu0 0
  %623 = vmatprep.subr.bf16.mxu0 0
  %624 = vmatpush1.bf16.msra.mxu0 0
  %625 = vmatprep.subr.bf16.mxu0 0
  %626 = vmatpush1.bf16.msra.mxu0 0
  %627 = vmatprep.subr.bf16.mxu0 0
  %628 = vmatpush1.bf16.msra.mxu0 0
  %629 = vmatprep.subr.bf16.mxu0 0
  %630 = vmatpush1.bf16.msra.mxu0 0
  %631 = vmatprep.subr.bf16.mxu0 0
  %632 = vmatpush1.bf16.msra.mxu0 0
  %633 = vmatprep.mubr.bf16.mxu0 %v543
  %634 = vmatmul.mubr.bf16.gmra.mrb[0].mxu0 %v336
  %v635 = vpop.f32.mrb[0].mxu0
  %v636 = vadd.f32 0.0, %v635
  %v637 = vpop.f32.mrb[0].mxu0
  %v638 = vadd.f32 0.0, %v637
  %v639 = vpop.f32.mrb[0].mxu0
  %v640 = vadd.f32 0.0, %v639
  %v641 = vpop.f32.mrb[0].mxu0
  %v642 = vadd.f32 0.0, %v641
  %643 = vmatprep.mubr.bf16.mxu0 %v546
  %644 = vmatmul.mubr.bf16.gmra.mrb[0].mxu0 %v338
  %v645 = vpop.f32.mrb[0].mxu0
  %v646 = vadd.f32 0.0, %v645
  %v647 = vpop.f32.mrb[0].mxu0
  %v648 = vadd.f32 0.0, %v647
  %v649 = vpop.f32.mrb[0].mxu0
  %v650 = vadd.f32 0.0, %v649
  %v651 = vpop.f32.mrb[0].mxu0
  %v652 = vadd.f32 0.0, %v651
  %653 = vdwg.mxu0
  %654 = vmatprep.subr.bf16.mxu0 0
  %655 = vmatpush1.bf16.msra.mxu0 %v455
  %656 = vmatprep.subr.bf16.mxu0 0
  %657 = vmatpush1.bf16.msra.mxu0 %v460
  %658 = vmatprep.subr.bf16.mxu0 0
  %659 = vmatpush1.bf16.msra.mxu0 %v465
  %660 = vmatprep.subr.bf16.mxu0 0
  %661 = vmatpush1.bf16.msra.mxu0 %v470
  %662 = vmatprep.subr.bf16.mxu0 0
  %663 = vmatpush1.bf16.msra.mxu0 %v475
  %664 = vmatprep.subr.bf16.mxu0 0
  %665 = vmatpush1.bf16.msra.mxu0 %v480
  %666 = vmatprep.subr.bf16.mxu0 0
  %667 = vmatpush1.bf16.msra.mxu0 %v485
  %668 = vmatprep.subr.bf16.mxu0 0
  %669 = vmatpush1.bf16.msra.mxu0 %v490
  %670 = vmatprep.subr.bf16.mxu0 0
  %671 = vmatpush1.bf16.msra.mxu0 %v495
  %672 = vmatprep.subr.bf16.mxu0 0
  %673 = vmatpush1.bf16.msra.mxu0 0
  %674 = vmatprep.subr.bf16.mxu0 0
  %675 = vmatpush1.bf16.msra.mxu0 0
  %676 = vmatprep.subr.bf16.mxu0 0
  %677 = vmatpush1.bf16.msra.mxu0 0
  %678 = vmatprep.subr.bf16.mxu0 0
  %679 = vmatpush1.bf16.msra.mxu0 0
  %680 = vmatprep.subr.bf16.mxu0 0
  %681 = vmatpush1.bf16.msra.mxu0 0
  %682 = vmatprep.subr.bf16.mxu0 0
  %683 = vmatpush1.bf16.msra.mxu0 0
  %684 = vmatprep.subr.bf16.mxu0 0
  %685 = vmatpush1.bf16.msra.mxu0 0
  %686 = vmatprep.mubr.bf16.mxu0 %v543
  %687 = vmatmul.mubr.bf16.gmra.mrb[0].mxu0 %v336
  %v688 = vpop.f32.mrb[0].mxu0
  %v689 = vadd.f32 0.0, %v688
  %v690 = vpop.f32.mrb[0].mxu0
  %v691 = vpop.f32.mrb[0].mxu0
  %v692 = vadd.f32 0.0, %v691
  %v693 = vpop.f32.mrb[0].mxu0
  %694 = vmatprep.mubr.bf16.mxu0 %v546
  %695 = vmatmul.mubr.bf16.gmra.mrb[0].mxu0 %v338
  %v696 = vpop.f32.mrb[0].mxu0
  %v697 = vadd.f32 0.0, %v696
  %v698 = vpop.f32.mrb[0].mxu0
  %v699 = vpop.f32.mrb[0].mxu0
  %v700 = vadd.f32 0.0, %v699
  %v701 = vpop.f32.mrb[0].mxu0
  %702 = vdwg.mxu0
  %703 = vmatprep.subr.mxu0 0.0
  %704 = vmatpush1.msra.mxu0 %v58
  %705 = vmatprep.subr.mxu0 0.0
  %706 = vmatpush1.msra.mxu0 %v59
  %707 = vmatprep.subr.mxu0 0.0
  %708 = vmatpush1.msra.mxu0 %v60
  %709 = vmatprep.subr.mxu0 0.0
  %710 = vmatpush1.msra.mxu0 %v61
  %711 = vmatprep.subr.mxu0 0.0
  %712 = vmatpush1.msra.mxu0 %v62
  %713 = vmatprep.subr.mxu0 0.0
  %714 = vmatpush1.msra.mxu0 %v63
  %715 = vmatprep.subr.mxu0 0.0
  %716 = vmatpush1.msra.mxu0 %v64
  %717 = vmatprep.subr.mxu0 0.0
  %718 = vmatpush1.msra.mxu0 %v65
  %719 = vmatprep.subr.mxu0 0.0
  %720 = vmatpush1.msra.mxu0 %v66
  %721 = vmatprep.subr.mxu0 0.0
  %722 = vmatpush1.msra.mxu0 %v67
  %723 = vmatprep.subr.mxu0 0.0
  %724 = vmatpush1.msra.mxu0 %v68
  %725 = vmatprep.subr.mxu0 0.0
  %726 = vmatpush1.msra.mxu0 %v69
  %727 = vmatprep.subr.mxu0 0.0
  %728 = vmatpush1.msra.mxu0 %v70
  %729 = vmatprep.subr.mxu0 0.0
  %730 = vmatpush1.msra.mxu0 %v71
  %731 = vmatprep.subr.mxu0 0.0
  %732 = vmatpush1.msra.mxu0 %v72
  %733 = vmatprep.subr.mxu0 0.0
  %734 = vmatpush1.msra.mxu0 %v73
  %735 = vmatprep.subr.mxu0 0.0
  %736 = vmatpush1.msra.mxu0 %v74
  %737 = vmatprep.subr.mxu0 0.0
  %738 = vmatpush1.msra.mxu0 %v75
  %739 = vmatprep.subr.mxu0 0.0
  %740 = vmatpush1.msra.mxu0 %v76
  %741 = vmatprep.subr.mxu0 0.0
  %742 = vmatpush1.msra.mxu0 %v77
  %743 = vmatprep.subr.mxu0 0.0
  %744 = vmatpush1.msra.mxu0 %v78
  %745 = vmatprep.subr.mxu0 0.0
  %746 = vmatpush1.msra.mxu0 %v79
  %747 = vmatprep.subr.mxu0 0.0
  %748 = vmatpush1.msra.mxu0 %v80
  %749 = vmatprep.subr.mxu0 0.0
  %750 = vmatpush1.msra.mxu0 %v81
  %751 = vmatprep.subr.mxu0 0.0
  %752 = vmatpush1.msra.mxu0 %v82
  %753 = vmatprep.subr.mxu0 0.0
  %754 = vmatpush1.msra.mxu0 %v83
  %755 = vmatprep.subr.mxu0 0.0
  %756 = vmatpush1.msra.mxu0 %v84
  %757 = vmatprep.subr.mxu0 0.0
  %758 = vmatpush1.msra.mxu0 %v85
  %759 = vmatprep.subr.mxu0 0.0
  %760 = vmatpush1.msra.mxu0 %v86
  %761 = vmatprep.subr.mxu0 0.0
  %762 = vmatpush1.msra.mxu0 %v87
  %763 = vmatprep.subr.mxu0 0.0
  %764 = vmatpush1.msra.mxu0 %v88
  %765 = vmatprep.subr.mxu0 0.0
  %766 = vmatpush1.msra.mxu0 %v89
  %767 = vmatprep.mubr.f32.mxu0 %v585
  %768 = vmatmul.mubr.f32.gmra.mrb[0].mxu0 %v583
  %v769 = vpop.f32.mrb[0].mxu0
  %v770 = vadd.f32 0.0, %v769
  %v771 = vpop.f32.mrb[0].mxu0
  %772 = vmatprep.mubr.f32.mxu0 %v589
  %773 = vmatmul.mubr.f32.gmra.mrb[0].mxu0 %v587
  %v774 = vpop.f32.mrb[0].mxu0
  %v775 = vadd.f32 0.0, %v774
  %v776 = vpop.f32.mrb[0].mxu0
  %777 = vmatprep.mubr.f32.mxu0 %v595
  %778 = vmatmul.mubr.f32.gmra.mrb[0].mxu0 %v593
  %v779 = vpop.f32.mrb[0].mxu0
  %v780 = vadd.f32 0.0, %v779
  %v781 = vpop.f32.mrb[0].mxu0
  %782 = vmatprep.mubr.f32.mxu0 %v599
  %783 = vmatmul.mubr.f32.gmra.mrb[0].mxu0 %v597
  %v784 = vpop.f32.mrb[0].mxu0
  %v785 = vadd.f32 0.0, %v784
  %v786 = vpop.f32.mrb[0].mxu0
  %787 = vdwg.mxu0
  %788 = vmatprep.subr.mxu0 0.0
  %789 = vmatpush1.msra.mxu0 %v90
  %790 = vmatprep.subr.mxu0 0.0
  %791 = vmatpush1.msra.mxu0 %v91
  %792 = vmatprep.subr.mxu0 0.0
  %793 = vmatpush1.msra.mxu0 %v92
  %794 = vmatprep.subr.mxu0 0.0
  %795 = vmatpush1.msra.mxu0 %v93
  %796 = vmatprep.subr.mxu0 0.0
  %797 = vmatpush1.msra.mxu0 %v94
  %798 = vmatprep.subr.mxu0 0.0
  %799 = vmatpush1.msra.mxu0 %v95
  %800 = vmatprep.subr.mxu0 0.0
  %801 = vmatpush1.msra.mxu0 %v96
  %802 = vmatprep.subr.mxu0 0.0
  %803 = vmatpush1.msra.mxu0 %v97
  %804 = vmatprep.subr.mxu0 0.0
  %805 = vmatpush1.msra.mxu0 %v98
  %806 = vmatprep.subr.mxu0 0.0
  %807 = vmatpush1.msra.mxu0 %v99
  %808 = vmatprep.subr.mxu0 0.0
  %809 = vmatpush1.msra.mxu0 %v100
  %810 = vmatprep.subr.mxu0 0.0
  %811 = vmatpush1.msra.mxu0 %v101
  %812 = vmatprep.subr.mxu0 0.0
  %813 = vmatpush1.msra.mxu0 %v102
  %814 = vmatprep.subr.mxu0 0.0
  %815 = vmatpush1.msra.mxu0 %v103
  %816 = vmatprep.subr.mxu0 0.0
  %817 = vmatpush1.msra.mxu0 %v104
  %818 = vmatprep.subr.mxu0 0.0
  %819 = vmatpush1.msra.mxu0 %v105
  %820 = vmatprep.subr.mxu0 0.0
  %821 = vmatpush1.msra.mxu0 %v106
  %822 = vmatprep.subr.mxu0 0.0
  %823 = vmatpush1.msra.mxu0 %v107
  %824 = vmatprep.subr.mxu0 0.0
  %825 = vmatpush1.msra.mxu0 %v108
  %826 = vmatprep.subr.mxu0 0.0
  %827 = vmatpush1.msra.mxu0 %v109
  %828 = vmatprep.subr.mxu0 0.0
  %829 = vmatpush1.msra.mxu0 %v110
  %830 = vmatprep.subr.mxu0 0.0
  %831 = vmatpush1.msra.mxu0 %v111
  %832 = vmatprep.subr.mxu0 0.0
  %833 = vmatpush1.msra.mxu0 %v112
  %834 = vmatprep.subr.mxu0 0.0
  %835 = vmatpush1.msra.mxu0 %v113
  %836 = vmatprep.subr.mxu0 0.0
  %837 = vmatpush1.msra.mxu0 %v114
  %838 = vmatprep.subr.mxu0 0.0
  %839 = vmatpush1.msra.mxu0 %v115
  %840 = vmatprep.subr.mxu0 0.0
  %841 = vmatpush1.msra.mxu0 %v116
  %842 = vmatprep.subr.mxu0 0.0
  %843 = vmatpush1.msra.mxu0 %v117
  %844 = vmatprep.subr.mxu0 0.0
  %845 = vmatpush1.msra.mxu0 %v118
  %846 = vmatprep.subr.mxu0 0.0
  %847 = vmatpush1.msra.mxu0 %v119
  %848 = vmatprep.subr.mxu0 0.0
  %849 = vmatpush1.msra.mxu0 %v120
  %850 = vmatprep.subr.mxu0 0.0
  %851 = vmatpush1.msra.mxu0 %v121
  %852 = vmatprep.mubr.f32.mxu0 %v638
  %853 = vmatmul.mubr.f32.gmra.mrb[0].mxu0 %v636
  %v854 = vpop.f32.mrb[0].mxu0
  %v855 = vadd.f32 %v770, %v854
  %v856 = vpop.f32.mrb[0].mxu0
  %857 = vmatprep.mubr.f32.mxu0 %v642
  %858 = vmatmul.mubr.f32.gmra.mrb[0].mxu0 %v640
  %v859 = vpop.f32.mrb[0].mxu0
  %v860 = vadd.f32 %v775, %v859
  %v861 = vpop.f32.mrb[0].mxu0
  %862 = vmatprep.mubr.f32.mxu0 %v648
  %863 = vmatmul.mubr.f32.gmra.mrb[0].mxu0 %v646
  %v864 = vpop.f32.mrb[0].mxu0
  %v865 = vadd.f32 %v780, %v864
  %v866 = vpop.f32.mrb[0].mxu0
  %867 = vmatprep.mubr.f32.mxu0 %v652
  %868 = vmatmul.mubr.f32.gmra.mrb[0].mxu0 %v650
  %v869 = vpop.f32.mrb[0].mxu0
  %v870 = vadd.f32 %v785, %v869
  %v871 = vpop.f32.mrb[0].mxu0
  %872 = vdwg.mxu0
  %873 = vmatprep.subr.mxu0 0.0
  %874 = vmatpush1.msra.mxu0 %v122
  %875 = vmatprep.subr.mxu0 0.0
  %876 = vmatpush1.msra.mxu0 %v123
  %877 = vmatprep.subr.mxu0 0.0
  %878 = vmatpush1.msra.mxu0 %v124
  %879 = vmatprep.subr.mxu0 0.0
  %880 = vmatpush1.msra.mxu0 %v125
  %881 = vmatprep.subr.mxu0 0.0
  %882 = vmatpush1.msra.mxu0 %v126
  %883 = vmatprep.subr.mxu0 0.0
  %884 = vmatpush1.msra.mxu0 %v127
  %885 = vmatprep.subr.mxu0 0.0
  %886 = vmatpush1.msra.mxu0 %v128
  %887 = vmatprep.subr.mxu0 0.0
  %888 = vmatpush1.msra.mxu0 %v129
  %889 = vmatprep.subr.mxu0 0.0
  %890 = vmatpush1.msra.mxu0 %v130
  %891 = vmatprep.subr.mxu0 0.0
  %892 = vmatpush1.msra.mxu0 %v131
  %893 = vmatprep.subr.mxu0 0.0
  %894 = vmatpush1.msra.mxu0 %v132
  %895 = vmatprep.subr.mxu0 0.0
  %896 = vmatpush1.msra.mxu0 %v133
  %897 = vmatprep.subr.mxu0 0.0
  %898 = vmatpush1.msra.mxu0 %v134
  %899 = vmatprep.subr.mxu0 0.0
  %900 = vmatpush1.msra.mxu0 %v135
  %901 = vmatprep.subr.mxu0 0.0
  %902 = vmatpush1.msra.mxu0 %v136
  %903 = vmatprep.subr.mxu0 0.0
  %904 = vmatpush1.msra.mxu0 %v137
  %905 = vmatprep.subr.mxu0 0.0
  %906 = vmatpush1.msra.mxu0 0.0
  %907 = vmatprep.subr.mxu0 0.0
  %908 = vmatpush1.msra.mxu0 0.0
  %909 = vmatprep.subr.mxu0 0.0
  %910 = vmatpush1.msra.mxu0 0.0
  %911 = vmatprep.subr.mxu0 0.0
  %912 = vmatpush1.msra.mxu0 0.0
  %913 = vmatprep.subr.mxu0 0.0
  %914 = vmatpush1.msra.mxu0 0.0
  %915 = vmatprep.subr.mxu0 0.0
  %916 = vmatpush1.msra.mxu0 0.0
  %917 = vmatprep.subr.mxu0 0.0
  %918 = vmatpush1.msra.mxu0 0.0
  %919 = vmatprep.subr.mxu0 0.0
  %920 = vmatpush1.msra.mxu0 0.0
  %921 = vmatprep.subr.mxu0 0.0
  %922 = vmatpush1.msra.mxu0 0.0
  %923 = vmatprep.subr.mxu0 0.0
  %924 = vmatpush1.msra.mxu0 0.0
  %925 = vmatprep.subr.mxu0 0.0
  %926 = vmatpush1.msra.mxu0 0.0
  %927 = vmatprep.subr.mxu0 0.0
  %928 = vmatpush1.msra.mxu0 0.0
  %929 = vmatprep.subr.mxu0 0.0
  %930 = vmatpush1.msra.mxu0 0.0
  %931 = vmatprep.subr.mxu0 0.0
  %932 = vmatpush1.msra.mxu0 0.0
  %933 = vmatprep.subr.mxu0 0.0
  %934 = vmatpush1.msra.mxu0 0.0
  %935 = vmatprep.subr.mxu0 0.0
  %936 = vmatpush1.msra.mxu0 0.0
  %937 = vmatprep.mubr.f32.mxu0 0.0
  %938 = vmatmul.mubr.f32.gmra.mrb[0].mxu0 %v689
  %v939 = vpop.f32.mrb[0].mxu0
  %v940 = vadd.f32 %v855, %v939
  %v941 = vpop.f32.mrb[0].mxu0
  %942 = vmatprep.mubr.f32.mxu0 0.0
  %943 = vmatmul.mubr.f32.gmra.mrb[0].mxu0 %v692
  %v944 = vpop.f32.mrb[0].mxu0
  %v945 = vadd.f32 %v860, %v944
  %v946 = vpop.f32.mrb[0].mxu0
  %947 = vmatprep.mubr.f32.mxu0 0.0
  %948 = vmatmul.mubr.f32.gmra.mrb[0].mxu0 %v697
  %v949 = vpop.f32.mrb[0].mxu0
  %v950 = vadd.f32 %v865, %v949
  %v951 = vpop.f32.mrb[0].mxu0
  %952 = vmatprep.mubr.f32.mxu0 0.0
  %953 = vmatmul.mubr.f32.gmra.mrb[0].mxu0 %v700
  %v954 = vpop.f32.mrb[0].mxu0
  %v955 = vadd.f32 %v870, %v954
  %v956 = vpop.f32.mrb[0].mxu0
  %957 = vdwg.mxu0
  %v958 = vmul.f32 %v940, 0.001953125
  %v959 = vmul.f32 %v945, 0.001953125
  %v960 = vmul.f32 %v950, 0.001953125
  %v961 = vmul.f32 %v955, 0.001953125
  %963 = vset.pattern.permute.xlu0 0
  %964 = vperm.xlu0 %963, %v958
  %v965 = vpop.permute.xlu0 %964
  %968 = vset.pattern.permute.xlu0 0
  %969 = vperm.xlu0 %968, %v959
  %v970 = vpop.permute.xlu0 %969
  %973 = vset.pattern.permute.xlu0 0
  %974 = vperm.xlu0 %973, %v960
  %v975 = vpop.permute.xlu0 %974
  %978 = vset.pattern.permute.xlu0 0
  %979 = vperm.xlu0 %978, %v961
  %v980 = vpop.permute.xlu0 %979
  %v982 = vsub.f32 %v583, %v965
  %v983 = vsub.f32 %v585, %v965
  %v984 = vsub.f32 %v636, %v965
  %v985 = vsub.f32 %v638, %v965
  %v986 = vsub.f32 %v689, %v965
  %v987 = vsub.f32 %v587, %v970
  %v988 = vsub.f32 %v589, %v970
  %v989 = vsub.f32 %v640, %v970
  %v990 = vsub.f32 %v642, %v970
  %v991 = vsub.f32 %v692, %v970
  %v992 = vsub.f32 %v593, %v975
  %v993 = vsub.f32 %v595, %v975
  %v994 = vsub.f32 %v646, %v975
  %v995 = vsub.f32 %v648, %v975
  %v996 = vsub.f32 %v697, %v975
  %v997 = vsub.f32 %v597, %v980
  %v998 = vsub.f32 %v599, %v980
  %v999 = vsub.f32 %v650, %v980
  %v1000 = vsub.f32 %v652, %v980
  %v1001 = vsub.f32 %v700, %v980
  %v1003 = vlaneseq
  %v1004 = vshrl.u32 %v1003, 7
  %v1005 = vsub.s32 0, %v1004
  %v1006 = vrot.slane %v57, %v1005
  %v1007 = vlaneseq
  %v1008 = vshrl.u32 %v1007, 7
  %v1009 = vsub.s32 1, %v1008
  %v1010 = vrot.slane %v57, %v1009
  %v1011 = vlaneseq
  %v1012 = vshrl.u32 %v1011, 7
  %v1013 = vsub.s32 2, %v1012
  %v1014 = vrot.slane %v57, %v1013
  %v1015 = vlaneseq
  %v1016 = vshrl.u32 %v1015, 7
  %v1017 = vsub.s32 3, %v1016
  %v1018 = vrot.slane %v57, %v1017
  %v1019 = vlaneseq
  %v1020 = vshrl.u32 %v1019, 7
  %v1021 = vsub.s32 4, %v1020
  %v1022 = vrot.slane %v57, %v1021
  %v1028 = vmul.f32 %v982, %v1006
  %v1029 = vmul.f32 %v983, %v1010
  %v1030 = vmul.f32 %v984, %v1014
  %v1031 = vmul.f32 %v985, %v1018
  %v1032 = vmul.f32 %v986, %v1022
  %v1033 = vmul.f32 %v987, %v1006
  %v1034 = vmul.f32 %v988, %v1010
  %v1035 = vmul.f32 %v989, %v1014
  %v1036 = vmul.f32 %v990, %v1018
  %v1037 = vmul.f32 %v991, %v1022
  %v1038 = vmul.f32 %v992, %v1006
  %v1039 = vmul.f32 %v993, %v1010
  %v1040 = vmul.f32 %v994, %v1014
  %v1041 = vmul.f32 %v995, %v1018
  %v1042 = vmul.f32 %v996, %v1022
  %v1043 = vmul.f32 %v997, %v1006
  %v1044 = vmul.f32 %v998, %v1010
  %v1045 = vmul.f32 %v999, %v1014
  %v1046 = vmul.f32 %v1000, %v1018
  %v1047 = vmul.f32 %v1001, %v1022
  %v1048 = vmul.f32 %v1028, %v1028
  %v1049 = vmul.f32 %v1029, %v1029
  %v1050 = vmul.f32 %v1030, %v1030
  %v1051 = vmul.f32 %v1031, %v1031
  %v1052 = vmul.f32 %v1032, %v1032
  %v1053 = vmul.f32 %v1033, %v1033
  %v1054 = vmul.f32 %v1034, %v1034
  %v1055 = vmul.f32 %v1035, %v1035
  %v1056 = vmul.f32 %v1036, %v1036
  %v1057 = vmul.f32 %v1037, %v1037
  %v1058 = vmul.f32 %v1038, %v1038
  %v1059 = vmul.f32 %v1039, %v1039
  %v1060 = vmul.f32 %v1040, %v1040
  %v1061 = vmul.f32 %v1041, %v1041
  %v1062 = vmul.f32 %v1042, %v1042
  %v1063 = vmul.f32 %v1043, %v1043
  %v1064 = vmul.f32 %v1044, %v1044
  %v1065 = vmul.f32 %v1045, %v1045
  %v1066 = vmul.f32 %v1046, %v1046
  %v1067 = vmul.f32 %v1047, %v1047
  %1068 = vmatprep.subr.mxu0 0.0
  %1069 = vmatpush1.msra.mxu0 %v58
  %1070 = vmatprep.subr.mxu0 0.0
  %1071 = vmatpush1.msra.mxu0 %v59
  %1072 = vmatprep.subr.mxu0 0.0
  %1073 = vmatpush1.msra.mxu0 %v60
  %1074 = vmatprep.subr.mxu0 0.0
  %1075 = vmatpush1.msra.mxu0 %v61
  %1076 = vmatprep.subr.mxu0 0.0
  %1077 = vmatpush1.msra.mxu0 %v62
  %1078 = vmatprep.subr.mxu0 0.0
  %1079 = vmatpush1.msra.mxu0 %v63
  %1080 = vmatprep.subr.mxu0 0.0
  %1081 = vmatpush1.msra.mxu0 %v64
  %1082 = vmatprep.subr.mxu0 0.0
  %1083 = vmatpush1.msra.mxu0 %v65
  %1084 = vmatprep.subr.mxu0 0.0
  %1085 = vmatpush1.msra.mxu0 %v66
  %1086 = vmatprep.subr.mxu0 0.0
  %1087 = vmatpush1.msra.mxu0 %v67
  %1088 = vmatprep.subr.mxu0 0.0
  %1089 = vmatpush1.msra.mxu0 %v68
  %1090 = vmatprep.subr.mxu0 0.0
  %1091 = vmatpush1.msra.mxu0 %v69
  %1092 = vmatprep.subr.mxu0 0.0
  %1093 = vmatpush1.msra.mxu0 %v70
  %1094 = vmatprep.subr.mxu0 0.0
  %1095 = vmatpush1.msra.mxu0 %v71
  %1096 = vmatprep.subr.mxu0 0.0
  %1097 = vmatpush1.msra.mxu0 %v72
  %1098 = vmatprep.subr.mxu0 0.0
  %1099 = vmatpush1.msra.mxu0 %v73
  %1100 = vmatprep.subr.mxu0 0.0
  %1101 = vmatpush1.msra.mxu0 %v74
  %1102 = vmatprep.subr.mxu0 0.0
  %1103 = vmatpush1.msra.mxu0 %v75
  %1104 = vmatprep.subr.mxu0 0.0
  %1105 = vmatpush1.msra.mxu0 %v76
  %1106 = vmatprep.subr.mxu0 0.0
  %1107 = vmatpush1.msra.mxu0 %v77
  %1108 = vmatprep.subr.mxu0 0.0
  %1109 = vmatpush1.msra.mxu0 %v78
  %1110 = vmatprep.subr.mxu0 0.0
  %1111 = vmatpush1.msra.mxu0 %v79
  %1112 = vmatprep.subr.mxu0 0.0
  %1113 = vmatpush1.msra.mxu0 %v80
  %1114 = vmatprep.subr.mxu0 0.0
  %1115 = vmatpush1.msra.mxu0 %v81
  %1116 = vmatprep.subr.mxu0 0.0
  %1117 = vmatpush1.msra.mxu0 %v82
  %1118 = vmatprep.subr.mxu0 0.0
  %1119 = vmatpush1.msra.mxu0 %v83
  %1120 = vmatprep.subr.mxu0 0.0
  %1121 = vmatpush1.msra.mxu0 %v84
  %1122 = vmatprep.subr.mxu0 0.0
  %1123 = vmatpush1.msra.mxu0 %v85
  %1124 = vmatprep.subr.mxu0 0.0
  %1125 = vmatpush1.msra.mxu0 %v86
  %1126 = vmatprep.subr.mxu0 0.0
  %1127 = vmatpush1.msra.mxu0 %v87
  %1128 = vmatprep.subr.mxu0 0.0
  %1129 = vmatpush1.msra.mxu0 %v88
  %1130 = vmatprep.subr.mxu0 0.0
  %1131 = vmatpush1.msra.mxu0 %v89
  %1132 = vmatprep.mubr.f32.mxu0 %v1049
  %1133 = vmatmul.mubr.f32.gmra.mrb[0].mxu0 %v1048
  %v1134 = vpop.f32.mrb[0].mxu0
  %v1135 = vadd.f32 0.0, %v1134
  %v1136 = vpop.f32.mrb[0].mxu0
  %1137 = vmatprep.mubr.f32.mxu0 %v1054
  %1138 = vmatmul.mubr.f32.gmra.mrb[0].mxu0 %v1053
  %v1139 = vpop.f32.mrb[0].mxu0
  %v1140 = vadd.f32 0.0, %v1139
  %v1141 = vpop.f32.mrb[0].mxu0
  %1142 = vmatprep.mubr.f32.mxu0 %v1059
  %1143 = vmatmul.mubr.f32.gmra.mrb[0].mxu0 %v1058
  %v1144 = vpop.f32.mrb[0].mxu0
  %v1145 = vadd.f32 0.0, %v1144
  %v1146 = vpop.f32.mrb[0].mxu0
  %1147 = vmatprep.mubr.f32.mxu0 %v1064
  %1148 = vmatmul.mubr.f32.gmra.mrb[0].mxu0 %v1063
  %v1149 = vpop.f32.mrb[0].mxu0
  %v1150 = vadd.f32 0.0, %v1149
  %v1151 = vpop.f32.mrb[0].mxu0
  %1152 = vdwg.mxu0
  %1153 = vmatprep.subr.mxu0 0.0
  %1154 = vmatpush1.msra.mxu0 %v90
  %1155 = vmatprep.subr.mxu0 0.0
  %1156 = vmatpush1.msra.mxu0 %v91
  %1157 = vmatprep.subr.mxu0 0.0
  %1158 = vmatpush1.msra.mxu0 %v92
  %1159 = vmatprep.subr.mxu0 0.0
  %1160 = vmatpush1.msra.mxu0 %v93
  %1161 = vmatprep.subr.mxu0 0.0
  %1162 = vmatpush1.msra.mxu0 %v94
  %1163 = vmatprep.subr.mxu0 0.0
  %1164 = vmatpush1.msra.mxu0 %v95
  %1165 = vmatprep.subr.mxu0 0.0
  %1166 = vmatpush1.msra.mxu0 %v96
  %1167 = vmatprep.subr.mxu0 0.0
  %1168 = vmatpush1.msra.mxu0 %v97
  %1169 = vmatprep.subr.mxu0 0.0
  %1170 = vmatpush1.msra.mxu0 %v98
  %1171 = vmatprep.subr.mxu0 0.0
  %1172 = vmatpush1.msra.mxu0 %v99
  %1173 = vmatprep.subr.mxu0 0.0
  %1174 = vmatpush1.msra.mxu0 %v100
  %1175 = vmatprep.subr.mxu0 0.0
  %1176 = vmatpush1.msra.mxu0 %v101
  %1177 = vmatprep.subr.mxu0 0.0
  %1178 = vmatpush1.msra.mxu0 %v102
  %1179 = vmatprep.subr.mxu0 0.0
  %1180 = vmatpush1.msra.mxu0 %v103
  %1181 = vmatprep.subr.mxu0 0.0
  %1182 = vmatpush1.msra.mxu0 %v104
  %1183 = vmatprep.subr.mxu0 0.0
  %1184 = vmatpush1.msra.mxu0 %v105
  %1185 = vmatprep.subr.mxu0 0.0
  %1186 = vmatpush1.msra.mxu0 %v106
  %1187 = vmatprep.subr.mxu0 0.0
  %1188 = vmatpush1.msra.mxu0 %v107
  %1189 = vmatprep.subr.mxu0 0.0
  %1190 = vmatpush1.msra.mxu0 %v108
  %1191 = vmatprep.subr.mxu0 0.0
  %1192 = vmatpush1.msra.mxu0 %v109
  %1193 = vmatprep.subr.mxu0 0.0
  %1194 = vmatpush1.msra.mxu0 %v110
  %1195 = vmatprep.subr.mxu0 0.0
  %1196 = vmatpush1.msra.mxu0 %v111
  %1197 = vmatprep.subr.mxu0 0.0
  %1198 = vmatpush1.msra.mxu0 %v112
  %1199 = vmatprep.subr.mxu0 0.0
  %1200 = vmatpush1.msra.mxu0 %v113
  %1201 = vmatprep.subr.mxu0 0.0
  %1202 = vmatpush1.msra.mxu0 %v114
  %1203 = vmatprep.subr.mxu0 0.0
  %1204 = vmatpush1.msra.mxu0 %v115
  %1205 = vmatprep.subr.mxu0 0.0
  %1206 = vmatpush1.msra.mxu0 %v116
  %1207 = vmatprep.subr.mxu0 0.0
  %1208 = vmatpush1.msra.mxu0 %v117
  %1209 = vmatprep.subr.mxu0 0.0
  %1210 = vmatpush1.msra.mxu0 %v118
  %1211 = vmatprep.subr.mxu0 0.0
  %1212 = vmatpush1.msra.mxu0 %v119
  %1213 = vmatprep.subr.mxu0 0.0
  %1214 = vmatpush1.msra.mxu0 %v120
  %1215 = vmatprep.subr.mxu0 0.0
  %1216 = vmatpush1.msra.mxu0 %v121
  %1217 = vmatprep.mubr.f32.mxu0 %v1051
  %1218 = vmatmul.mubr.f32.gmra.mrb[0].mxu0 %v1050
  %v1219 = vpop.f32.mrb[0].mxu0
  %v1220 = vadd.f32 %v1135, %v1219
  %v1221 = vpop.f32.mrb[0].mxu0
  %1222 = vmatprep.mubr.f32.mxu0 %v1056
  %1223 = vmatmul.mubr.f32.gmra.mrb[0].mxu0 %v1055
  %v1224 = vpop.f32.mrb[0].mxu0
  %v1225 = vadd.f32 %v1140, %v1224
  %v1226 = vpop.f32.mrb[0].mxu0
  %1227 = vmatprep.mubr.f32.mxu0 %v1061
  %1228 = vmatmul.mubr.f32.gmra.mrb[0].mxu0 %v1060
  %v1229 = vpop.f32.mrb[0].mxu0
  %v1230 = vadd.f32 %v1145, %v1229
  %v1231 = vpop.f32.mrb[0].mxu0
  %1232 = vmatprep.mubr.f32.mxu0 %v1066
  %1233 = vmatmul.mubr.f32.gmra.mrb[0].mxu0 %v1065
  %v1234 = vpop.f32.mrb[0].mxu0
  %v1235 = vadd.f32 %v1150, %v1234
  %v1236 = vpop.f32.mrb[0].mxu0
  %1237 = vdwg.mxu0
  %1238 = vmatprep.subr.mxu0 0.0
  %1239 = vmatpush1.msra.mxu0 %v122
  %1240 = vmatprep.subr.mxu0 0.0
  %1241 = vmatpush1.msra.mxu0 %v123
  %1242 = vmatprep.subr.mxu0 0.0
  %1243 = vmatpush1.msra.mxu0 %v124
  %1244 = vmatprep.subr.mxu0 0.0
  %1245 = vmatpush1.msra.mxu0 %v125
  %1246 = vmatprep.subr.mxu0 0.0
  %1247 = vmatpush1.msra.mxu0 %v126
  %1248 = vmatprep.subr.mxu0 0.0
  %1249 = vmatpush1.msra.mxu0 %v127
  %1250 = vmatprep.subr.mxu0 0.0
  %1251 = vmatpush1.msra.mxu0 %v128
  %1252 = vmatprep.subr.mxu0 0.0
  %1253 = vmatpush1.msra.mxu0 %v129
  %1254 = vmatprep.subr.mxu0 0.0
  %1255 = vmatpush1.msra.mxu0 %v130
  %1256 = vmatprep.subr.mxu0 0.0
  %1257 = vmatpush1.msra.mxu0 %v131
  %1258 = vmatprep.subr.mxu0 0.0
  %1259 = vmatpush1.msra.mxu0 %v132
  %1260 = vmatprep.subr.mxu0 0.0
  %1261 = vmatpush1.msra.mxu0 %v133
  %1262 = vmatprep.subr.mxu0 0.0
  %1263 = vmatpush1.msra.mxu0 %v134
  %1264 = vmatprep.subr.mxu0 0.0
  %1265 = vmatpush1.msra.mxu0 %v135
  %1266 = vmatprep.subr.mxu0 0.0
  %1267 = vmatpush1.msra.mxu0 %v136
  %1268 = vmatprep.subr.mxu0 0.0
  %1269 = vmatpush1.msra.mxu0 %v137
  %1270 = vmatprep.subr.mxu0 0.0
  %1271 = vmatpush1.msra.mxu0 0.0
  %1272 = vmatprep.subr.mxu0 0.0
  %1273 = vmatpush1.msra.mxu0 0.0
  %1274 = vmatprep.subr.mxu0 0.0
  %1275 = vmatpush1.msra.mxu0 0.0
  %1276 = vmatprep.subr.mxu0 0.0
  %1277 = vmatpush1.msra.mxu0 0.0
  %1278 = vmatprep.subr.mxu0 0.0
  %1279 = vmatpush1.msra.mxu0 0.0
  %1280 = vmatprep.subr.mxu0 0.0
  %1281 = vmatpush1.msra.mxu0 0.0
  %1282 = vmatprep.subr.mxu0 0.0
  %1283 = vmatpush1.msra.mxu0 0.0
  %1284 = vmatprep.subr.mxu0 0.0
  %1285 = vmatpush1.msra.mxu0 0.0
  %1286 = vmatprep.subr.mxu0 0.0
  %1287 = vmatpush1.msra.mxu0 0.0
  %1288 = vmatprep.subr.mxu0 0.0
  %1289 = vmatpush1.msra.mxu0 0.0
  %1290 = vmatprep.subr.mxu0 0.0
  %1291 = vmatpush1.msra.mxu0 0.0
  %1292 = vmatprep.subr.mxu0 0.0
  %1293 = vmatpush1.msra.mxu0 0.0
  %1294 = vmatprep.subr.mxu0 0.0
  %1295 = vmatpush1.msra.mxu0 0.0
  %1296 = vmatprep.subr.mxu0 0.0
  %1297 = vmatpush1.msra.mxu0 0.0
  %1298 = vmatprep.subr.mxu0 0.0
  %1299 = vmatpush1.msra.mxu0 0.0
  %1300 = vmatprep.subr.mxu0 0.0
  %1301 = vmatpush1.msra.mxu0 0.0
  %1302 = vmatprep.mubr.f32.mxu0 0.0
  %1303 = vmatmul.mubr.f32.gmra.mrb[0].mxu0 %v1052
  %v1304 = vpop.f32.mrb[0].mxu0
  %v1305 = vadd.f32 %v1220, %v1304
  %v1306 = vpop.f32.mrb[0].mxu0
  %1307 = vmatprep.mubr.f32.mxu0 0.0
  %1308 = vmatmul.mubr.f32.gmra.mrb[0].mxu0 %v1057
  %v1309 = vpop.f32.mrb[0].mxu0
  %v1310 = vadd.f32 %v1225, %v1309
  %v1311 = vpop.f32.mrb[0].mxu0
  %1312 = vmatprep.mubr.f32.mxu0 0.0
  %1313 = vmatmul.mubr.f32.gmra.mrb[0].mxu0 %v1062
  %v1314 = vpop.f32.mrb[0].mxu0
  %v1315 = vadd.f32 %v1230, %v1314
  %v1316 = vpop.f32.mrb[0].mxu0
  %1317 = vmatprep.mubr.f32.mxu0 0.0
  %1318 = vmatmul.mubr.f32.gmra.mrb[0].mxu0 %v1067
  %v1319 = vpop.f32.mrb[0].mxu0
  %v1320 = vadd.f32 %v1235, %v1319
  %v1321 = vpop.f32.mrb[0].mxu0
  %1322 = vdwg.mxu0
  %v1323 = vmul.f32 %v1305, 0.001953125
  %v1324 = vmul.f32 %v1310, 0.001953125
  %v1325 = vmul.f32 %v1315, 0.001953125
  %v1326 = vmul.f32 %v1320, 0.001953125
  %v1327 = vadd.f32 %v1323, 1e-05
  %v1328 = vadd.f32 %v1324, 1e-05
  %v1329 = vadd.f32 %v1325, 1e-05
  %v1330 = vadd.f32 %v1326, 1e-05
  %v1331 = vrsqrt.pop %v1327
  %v1332 = vrsqrt.pop %v1328
  %v1333 = vrsqrt.pop %v1329
  %v1334 = vrsqrt.pop %v1330
  %1336 = vset.pattern.permute.xlu0 0
  %1337 = vperm.xlu0 %1336, %v1331
  %v1338 = vpop.permute.xlu0 %1337
  %1341 = vset.pattern.permute.xlu0 0
  %1342 = vperm.xlu0 %1341, %v1332
  %v1343 = vpop.permute.xlu0 %1342
  %1346 = vset.pattern.permute.xlu0 0
  %1347 = vperm.xlu0 %1346, %v1333
  %v1348 = vpop.permute.xlu0 %1347
  %1351 = vset.pattern.permute.xlu0 0
  %1352 = vperm.xlu0 %1351, %v1334
  %v1353 = vpop.permute.xlu0 %1352
  %v1355 = vmul.f32 %v1028, %v1338
  %v1356 = vmul.f32 %v1029, %v1338
  %v1357 = vmul.f32 %v1030, %v1338
  %v1358 = vmul.f32 %v1031, %v1338
  %v1359 = vmul.f32 %v1032, %v1338
  %v1360 = vmul.f32 %v1033, %v1343
  %v1361 = vmul.f32 %v1034, %v1343
  %v1362 = vmul.f32 %v1035, %v1343
  %v1363 = vmul.f32 %v1036, %v1343
  %v1364 = vmul.f32 %v1037, %v1343
  %v1365 = vmul.f32 %v1038, %v1348
  %v1366 = vmul.f32 %v1039, %v1348
  %v1367 = vmul.f32 %v1040, %v1348
  %v1368 = vmul.f32 %v1041, %v1348
  %v1369 = vmul.f32 %v1042, %v1348
  %v1370 = vmul.f32 %v1043, %v1353
  %v1371 = vmul.f32 %v1044, %v1353
  %v1372 = vmul.f32 %v1045, %v1353
  %v1373 = vmul.f32 %v1046, %v1353
  %v1374 = vmul.f32 %v1047, %v1353
  %v1375 = vld [vmem:[%s4] sm:$0xff]
  %v1376 = vld [vmem:[%s4 + $0x8] sm:$0xff]
  %v1377 = vld [vmem:[%s4 + $0x10] sm:$0xff]
  %v1378 = vld [vmem:[%s4 + $0x18] sm:$0xff]
  %1380 = vset.pattern.permute.xlu0 0
  %1381 = vperm.xlu0 %1380, %v1375
  %v1382 = vpop.permute.xlu0 %1381
  %1385 = vset.pattern.permute.xlu0 0
  %1386 = vperm.xlu0 %1385, %v1376
  %v1387 = vpop.permute.xlu0 %1386
  %1390 = vset.pattern.permute.xlu0 0
  %1391 = vperm.xlu0 %1390, %v1377
  %v1392 = vpop.permute.xlu0 %1391
  %1395 = vset.pattern.permute.xlu0 0
  %1396 = vperm.xlu0 %1395, %v1378
  %v1397 = vpop.permute.xlu0 %1396
  %v1399 = vmul.f32 %v1355, %v1382
  %v1400 = vmul.f32 %v1356, %v1382
  %v1401 = vmul.f32 %v1357, %v1382
  %v1402 = vmul.f32 %v1358, %v1382
  %v1403 = vmul.f32 %v1359, %v1382
  %v1404 = vmul.f32 %v1360, %v1387
  %v1405 = vmul.f32 %v1361, %v1387
  %v1406 = vmul.f32 %v1362, %v1387
  %v1407 = vmul.f32 %v1363, %v1387
  %v1408 = vmul.f32 %v1364, %v1387
  %v1409 = vmul.f32 %v1365, %v1392
  %v1410 = vmul.f32 %v1366, %v1392
  %v1411 = vmul.f32 %v1367, %v1392
  %v1412 = vmul.f32 %v1368, %v1392
  %v1413 = vmul.f32 %v1369, %v1392
  %v1414 = vmul.f32 %v1370, %v1397
  %v1415 = vmul.f32 %v1371, %v1397
  %v1416 = vmul.f32 %v1372, %v1397
  %v1417 = vmul.f32 %v1373, %v1397
  %v1418 = vmul.f32 %v1374, %v1397
  %v1419 = vld [vmem:[%s5] sm:$0xff]
  %v1420 = vld [vmem:[%s5 + $0x8] sm:$0xff]
  %v1421 = vld [vmem:[%s5 + $0x10] sm:$0xff]
  %v1422 = vld [vmem:[%s5 + $0x18] sm:$0xff]
  %1424 = vset.pattern.permute.xlu0 0
  %1425 = vperm.xlu0 %1424, %v1419
  %v1426 = vpop.permute.xlu0 %1425
  %1429 = vset.pattern.permute.xlu0 0
  %1430 = vperm.xlu0 %1429, %v1420
  %v1431 = vpop.permute.xlu0 %1430
  %1434 = vset.pattern.permute.xlu0 0
  %1435 = vperm.xlu0 %1434, %v1421
  %v1436 = vpop.permute.xlu0 %1435
  %1439 = vset.pattern.permute.xlu0 0
  %1440 = vperm.xlu0 %1439, %v1422
  %v1441 = vpop.permute.xlu0 %1440
  %v1443 = vadd.f32 %v1399, %v1426
  %v1444 = vadd.f32 %v1400, %v1426
  %v1445 = vadd.f32 %v1401, %v1426
  %v1446 = vadd.f32 %v1402, %v1426
  %v1447 = vadd.f32 %v1403, %v1426
  %v1448 = vadd.f32 %v1404, %v1431
  %v1449 = vadd.f32 %v1405, %v1431
  %v1450 = vadd.f32 %v1406, %v1431
  %v1451 = vadd.f32 %v1407, %v1431
  %v1452 = vadd.f32 %v1408, %v1431
  %v1453 = vadd.f32 %v1409, %v1436
  %v1454 = vadd.f32 %v1410, %v1436
  %v1455 = vadd.f32 %v1411, %v1436
  %v1456 = vadd.f32 %v1412, %v1436
  %v1457 = vadd.f32 %v1413, %v1436
  %v1458 = vadd.f32 %v1414, %v1441
  %v1459 = vadd.f32 %v1415, %v1441
  %v1460 = vadd.f32 %v1416, %v1441
  %v1461 = vadd.f32 %v1417, %v1441
  %v1462 = vadd.f32 %v1418, %v1441
  %v1463 = vmax.f32 %v1443, 0.0
  %v1464 = vmax.f32 %v1444, 0.0
  %v1465 = vmax.f32 %v1445, 0.0
  %v1466 = vmax.f32 %v1446, 0.0
  %v1467 = vmax.f32 %v1447, 0.0
  %v1468 = vmax.f32 %v1448, 0.0
  %v1469 = vmax.f32 %v1449, 0.0
  %v1470 = vmax.f32 %v1450, 0.0
  %v1471 = vmax.f32 %v1451, 0.0
  %v1472 = vmax.f32 %v1452, 0.0
  %v1473 = vmax.f32 %v1453, 0.0
  %v1474 = vmax.f32 %v1454, 0.0
  %v1475 = vmax.f32 %v1455, 0.0
  %v1476 = vmax.f32 %v1456, 0.0
  %v1477 = vmax.f32 %v1457, 0.0
  %v1478 = vmax.f32 %v1458, 0.0
  %v1479 = vmax.f32 %v1459, 0.0
  %v1480 = vmax.f32 %v1460, 0.0
  %v1481 = vmax.f32 %v1461, 0.0
  %v1482 = vmax.f32 %v1462, 0.0
  %v1483 = vmul.f32 %v1463, %v1006
  %v1484 = vmul.f32 %v1464, %v1010
  %v1485 = vmul.f32 %v1465, %v1014
  %v1486 = vmul.f32 %v1466, %v1018
  %v1487 = vmul.f32 %v1467, %v1022
  %v1488 = vmul.f32 %v1468, %v1006
  %v1489 = vmul.f32 %v1469, %v1010
  %v1490 = vmul.f32 %v1470, %v1014
  %v1491 = vmul.f32 %v1471, %v1018
  %v1492 = vmul.f32 %v1472, %v1022
  %v1493 = vmul.f32 %v1473, %v1006
  %v1494 = vmul.f32 %v1474, %v1010
  %v1495 = vmul.f32 %v1475, %v1014
  %v1496 = vmul.f32 %v1476, %v1018
  %v1497 = vmul.f32 %v1477, %v1022
  %v1498 = vmul.f32 %v1478, %v1006
  %v1499 = vmul.f32 %v1479, %v1010
  %v1500 = vmul.f32 %v1480, %v1014
  %v1501 = vmul.f32 %v1481, %v1018
  %v1502 = vmul.f32 %v1482, %v1022
  %v1503 = vpack.c.bf16 %v1488, %v1483
  %v1504 = vpack.c.bf16 %v1489, %v1484
  %v1505 = vpack.c.bf16 %v1490, %v1485
  %v1506 = vpack.c.bf16 %v1491, %v1486
  %v1507 = vpack.c.bf16 %v1492, %v1487
  %v1508 = vpack.c.bf16 %v1498, %v1493
  %v1509 = vpack.c.bf16 %v1499, %v1494
  %v1510 = vpack.c.bf16 %v1500, %v1495
  %v1511 = vpack.c.bf16 %v1501, %v1496
  %v1512 = vpack.c.bf16 %v1502, %v1497
  %1513 = vst [vmem:[#allocation2 + $0x8] sm:$0xff] %v1503
  %1514 = vst [vmem:[#allocation2 + $0x10] sm:$0xff] %v1504
  %1515 = vst [vmem:[#allocation2 + $0x18] sm:$0xff] %v1505
  %1516 = vst [vmem:[#allocation2 + $0x20] sm:$0xff] %v1506
  %1517 = vst [vmem:[#allocation2 + $0x28] sm:$0xff] %v1507
  %1518 = vst [vmem:[#allocation2 + $0x40] sm:$0xff] %v1508
  %1519 = vst [vmem:[#allocation2 + $0x48] sm:$0xff] %v1509
  %1520 = vst [vmem:[#allocation2 + $0x50] sm:$0xff] %v1510
  %1521 = vst [vmem:[#allocation2 + $0x58] sm:$0xff] %v1511
  %1522 = vst [vmem:[#allocation2 + $0x60] sm:$0xff] %v1512
  %v1523 = vld [vmem:[#allocation2] sm:$0xff]
  %v1524 = vld [vmem:[#allocation2 + $0x8] sm:$0xff]
  %v1525 = vld [vmem:[#allocation2 + $0x10] sm:$0xff]
  %v1526 = vld [vmem:[#allocation2 + $0x18] sm:$0xff]
  %v1527 = vld [vmem:[#allocation2 + $0x20] sm:$0xff]
  %v1528 = vld [vmem:[#allocation2 + $0x28] sm:$0xff]
  %v1529 = vld [vmem:[#allocation2 + $0x30] sm:$0xff]
  %v1530 = vld [vmem:[#allocation2 + $0x38] sm:$0xff]
  %v1531 = vld [vmem:[#allocation2 + $0x40] sm:$0xff]
  %v1532 = vld [vmem:[#allocation2 + $0x48] sm:$0xff]
  %v1533 = vld [vmem:[#allocation2 + $0x50] sm:$0xff]
  %v1534 = vld [vmem:[#allocation2 + $0x58] sm:$0xff]
  %v1535 = vld [vmem:[#allocation2 + $0x60] sm:$0xff]
  %v1536 = vld [vmem:[#allocation2 + $0x68] sm:$0xff]
  %1549 = vrot.lane.b32.xlu0 %v1523, 127
  %v1550 = vpop.permute.xlu0 %1549
  %1551 = vrot.lane.b32.xlu0 %v1524, 127
  %v1552 = vpop.permute.xlu0 %1551
  %1553 = vrot.lane.b32.xlu0 %v1525, 127
  %v1554 = vpop.permute.xlu0 %1553
  %1555 = vrot.lane.b32.xlu0 %v1526, 127
  %v1556 = vpop.permute.xlu0 %1555
  %1557 = vrot.lane.b32.xlu0 %v1527, 127
  %v1558 = vpop.permute.xlu0 %1557
  %1559 = vrot.lane.b32.xlu0 %v1528, 127
  %v1560 = vpop.permute.xlu0 %1559
  %1561 = vrot.lane.b32.xlu0 %v1530, 127
  %v1562 = vpop.permute.xlu0 %1561
  %1563 = vrot.lane.b32.xlu0 %v1531, 127
  %v1564 = vpop.permute.xlu0 %1563
  %1565 = vrot.lane.b32.xlu0 %v1532, 127
  %v1566 = vpop.permute.xlu0 %1565
  %1567 = vrot.lane.b32.xlu0 %v1533, 127
  %v1568 = vpop.permute.xlu0 %1567
  %1569 = vrot.lane.b32.xlu0 %v1534, 127
  %v1570 = vpop.permute.xlu0 %1569
  %1571 = vrot.lane.b32.xlu0 %v1535, 127
  %v1572 = vpop.permute.xlu0 %1571
  %v1573 = vsel %vm186, %v1550, %v1552
  %v1574 = vsel %vm186, %v1552, %v1554
  %v1575 = vsel %vm186, %v1554, %v1556
  %v1576 = vsel %vm186, %v1556, %v1558
  %v1577 = vsel %vm186, %v1558, %v1560
  %v1578 = vsel %vm186, %v1562, %v1564
  %v1579 = vsel %vm186, %v1564, %v1566
  %v1580 = vsel %vm186, %v1566, %v1568
  %v1581 = vsel %vm186, %v1568, %v1570
  %v1582 = vsel %vm186, %v1570, %v1572
  %1583 = vrot.lane.b32.xlu0 %v1523, 126
  %v1584 = vpop.permute.xlu0 %1583
  %1585 = vrot.lane.b32.xlu0 %v1524, 126
  %v1586 = vpop.permute.xlu0 %1585
  %1587 = vrot.lane.b32.xlu0 %v1525, 126
  %v1588 = vpop.permute.xlu0 %1587
  %1589 = vrot.lane.b32.xlu0 %v1526, 126
  %v1590 = vpop.permute.xlu0 %1589
  %1591 = vrot.lane.b32.xlu0 %v1527, 126
  %v1592 = vpop.permute.xlu0 %1591
  %1593 = vrot.lane.b32.xlu0 %v1528, 126
  %v1594 = vpop.permute.xlu0 %1593
  %1595 = vrot.lane.b32.xlu0 %v1530, 126
  %v1596 = vpop.permute.xlu0 %1595
  %1597 = vrot.lane.b32.xlu0 %v1531, 126
  %v1598 = vpop.permute.xlu0 %1597
  %1599 = vrot.lane.b32.xlu0 %v1532, 126
  %v1600 = vpop.permute.xlu0 %1599
  %1601 = vrot.lane.b32.xlu0 %v1533, 126
  %v1602 = vpop.permute.xlu0 %1601
  %1603 = vrot.lane.b32.xlu0 %v1534, 126
  %v1604 = vpop.permute.xlu0 %1603
  %1605 = vrot.lane.b32.xlu0 %v1535, 126
  %v1606 = vpop.permute.xlu0 %1605
  %v1607 = vsel %vm204, %v1584, %v1586
  %v1608 = vsel %vm204, %v1586, %v1588
  %v1609 = vsel %vm204, %v1588, %v1590
  %v1610 = vsel %vm204, %v1590, %v1592
  %v1611 = vsel %vm204, %v1592, %v1594
  %v1612 = vsel %vm204, %v1596, %v1598
  %v1613 = vsel %vm204, %v1598, %v1600
  %v1614 = vsel %vm204, %v1600, %v1602
  %v1615 = vsel %vm204, %v1602, %v1604
  %v1616 = vsel %vm204, %v1604, %v1606
  %1617 = vrot.lane.b32.xlu0 %v1523, 111
  %v1618 = vpop.permute.xlu0 %1617
  %1619 = vrot.lane.b32.xlu0 %v1524, 111
  %v1620 = vpop.permute.xlu0 %1619
  %1621 = vrot.lane.b32.xlu0 %v1525, 111
  %v1622 = vpop.permute.xlu0 %1621
  %1623 = vrot.lane.b32.xlu0 %v1526, 111
  %v1624 = vpop.permute.xlu0 %1623
  %1625 = vrot.lane.b32.xlu0 %v1527, 111
  %v1626 = vpop.permute.xlu0 %1625
  %1627 = vrot.lane.b32.xlu0 %v1528, 111
  %v1628 = vpop.permute.xlu0 %1627
  %1629 = vrot.lane.b32.xlu0 %v1530, 111
  %v1630 = vpop.permute.xlu0 %1629
  %1631 = vrot.lane.b32.xlu0 %v1531, 111
  %v1632 = vpop.permute.xlu0 %1631
  %1633 = vrot.lane.b32.xlu0 %v1532, 111
  %v1634 = vpop.permute.xlu0 %1633
  %1635 = vrot.lane.b32.xlu0 %v1533, 111
  %v1636 = vpop.permute.xlu0 %1635
  %1637 = vrot.lane.b32.xlu0 %v1534, 111
  %v1638 = vpop.permute.xlu0 %1637
  %1639 = vrot.lane.b32.xlu0 %v1535, 111
  %v1640 = vpop.permute.xlu0 %1639
  %v1641 = vsel %vm222, %v1618, %v1620
  %v1642 = vsel %vm222, %v1620, %v1622
  %v1643 = vsel %vm222, %v1622, %v1624
  %v1644 = vsel %vm222, %v1624, %v1626
  %v1645 = vsel %vm222, %v1626, %v1628
  %v1646 = vsel %vm222, %v1630, %v1632
  %v1647 = vsel %vm222, %v1632, %v1634
  %v1648 = vsel %vm222, %v1634, %v1636
  %v1649 = vsel %vm222, %v1636, %v1638
  %v1650 = vsel %vm222, %v1638, %v1640
  %1651 = vrot.lane.b32.xlu0 %v1524, 110
  %v1652 = vpop.permute.xlu0 %1651
  %1653 = vrot.lane.b32.xlu0 %v1525, 110
  %v1654 = vpop.permute.xlu0 %1653
  %1655 = vrot.lane.b32.xlu0 %v1526, 110
  %v1656 = vpop.permute.xlu0 %1655
  %1657 = vrot.lane.b32.xlu0 %v1527, 110
  %v1658 = vpop.permute.xlu0 %1657
  %1659 = vrot.lane.b32.xlu0 %v1528, 110
  %v1660 = vpop.permute.xlu0 %1659
  %1661 = vrot.lane.b32.xlu0 %v1531, 110
  %v1662 = vpop.permute.xlu0 %1661
  %1663 = vrot.lane.b32.xlu0 %v1532, 110
  %v1664 = vpop.permute.xlu0 %1663
  %1665 = vrot.lane.b32.xlu0 %v1533, 110
  %v1666 = vpop.permute.xlu0 %1665
  %1667 = vrot.lane.b32.xlu0 %v1534, 110
  %v1668 = vpop.permute.xlu0 %1667
  %1669 = vrot.lane.b32.xlu0 %v1535, 110
  %v1670 = vpop.permute.xlu0 %1669
  %v1671 = vsel %vm238, %v1652, %v1654
  %v1672 = vsel %vm238, %v1654, %v1656
  %v1673 = vsel %vm238, %v1656, %v1658
  %v1674 = vsel %vm238, %v1658, %v1660
  %v1675 = vsel %vm238, %v1662, %v1664
  %v1676 = vsel %vm238, %v1664, %v1666
  %v1677 = vsel %vm238, %v1666, %v1668
  %v1678 = vsel %vm238, %v1668, %v1670
  %1681 = vrot.lane.b32.xlu0 %v1524, 109
  %v1682 = vpop.permute.xlu0 %1681
  %1683 = vrot.lane.b32.xlu0 %v1525, 109
  %v1684 = vpop.permute.xlu0 %1683
  %1685 = vrot.lane.b32.xlu0 %v1526, 109
  %v1686 = vpop.permute.xlu0 %1685
  %1687 = vrot.lane.b32.xlu0 %v1527, 109
  %v1688 = vpop.permute.xlu0 %1687
  %1689 = vrot.lane.b32.xlu0 %v1528, 109
  %v1690 = vpop.permute.xlu0 %1689
  %1691 = vrot.lane.b32.xlu0 %v1529, 109
  %v1692 = vpop.permute.xlu0 %1691
  %1693 = vrot.lane.b32.xlu0 %v1531, 109
  %v1694 = vpop.permute.xlu0 %1693
  %1695 = vrot.lane.b32.xlu0 %v1532, 109
  %v1696 = vpop.permute.xlu0 %1695
  %1697 = vrot.lane.b32.xlu0 %v1533, 109
  %v1698 = vpop.permute.xlu0 %1697
  %1699 = vrot.lane.b32.xlu0 %v1534, 109
  %v1700 = vpop.permute.xlu0 %1699
  %1701 = vrot.lane.b32.xlu0 %v1535, 109
  %v1702 = vpop.permute.xlu0 %1701
  %1703 = vrot.lane.b32.xlu0 %v1536, 109
  %v1704 = vpop.permute.xlu0 %1703
  %v1705 = vsel %vm260, %v1682, %v1684
  %v1706 = vsel %vm260, %v1684, %v1686
  %v1707 = vsel %vm260, %v1686, %v1688
  %v1708 = vsel %vm260, %v1688, %v1690
  %v1709 = vsel %vm260, %v1690, %v1692
  %v1710 = vsel %vm260, %v1694, %v1696
  %v1711 = vsel %vm260, %v1696, %v1698
  %v1712 = vsel %vm260, %v1698, %v1700
  %v1713 = vsel %vm260, %v1700, %v1702
  %v1714 = vsel %vm260, %v1702, %v1704
  %1715 = vrot.lane.b32.xlu0 %v1524, 94
  %v1716 = vpop.permute.xlu0 %1715
  %1717 = vrot.lane.b32.xlu0 %v1525, 94
  %v1718 = vpop.permute.xlu0 %1717
  %1719 = vrot.lane.b32.xlu0 %v1526, 94
  %v1720 = vpop.permute.xlu0 %1719
  %1721 = vrot.lane.b32.xlu0 %v1527, 94
  %v1722 = vpop.permute.xlu0 %1721
  %1723 = vrot.lane.b32.xlu0 %v1528, 94
  %v1724 = vpop.permute.xlu0 %1723
  %1725 = vrot.lane.b32.xlu0 %v1529, 94
  %v1726 = vpop.permute.xlu0 %1725
  %1727 = vrot.lane.b32.xlu0 %v1531, 94
  %v1728 = vpop.permute.xlu0 %1727
  %1729 = vrot.lane.b32.xlu0 %v1532, 94
  %v1730 = vpop.permute.xlu0 %1729
  %1731 = vrot.lane.b32.xlu0 %v1533, 94
  %v1732 = vpop.permute.xlu0 %1731
  %1733 = vrot.lane.b32.xlu0 %v1534, 94
  %v1734 = vpop.permute.xlu0 %1733
  %1735 = vrot.lane.b32.xlu0 %v1535, 94
  %v1736 = vpop.permute.xlu0 %1735
  %1737 = vrot.lane.b32.xlu0 %v1536, 94
  %v1738 = vpop.permute.xlu0 %1737
  %v1739 = vsel %vm278, %v1716, %v1718
  %v1740 = vsel %vm278, %v1718, %v1720
  %v1741 = vsel %vm278, %v1720, %v1722
  %v1742 = vsel %vm278, %v1722, %v1724
  %v1743 = vsel %vm278, %v1724, %v1726
  %v1744 = vsel %vm278, %v1728, %v1730
  %v1745 = vsel %vm278, %v1730, %v1732
  %v1746 = vsel %vm278, %v1732, %v1734
  %v1747 = vsel %vm278, %v1734, %v1736
  %v1748 = vsel %vm278, %v1736, %v1738
  %1749 = vrot.lane.b32.xlu0 %v1524, 93
  %v1750 = vpop.permute.xlu0 %1749
  %1751 = vrot.lane.b32.xlu0 %v1525, 93
  %v1752 = vpop.permute.xlu0 %1751
  %1753 = vrot.lane.b32.xlu0 %v1526, 93
  %v1754 = vpop.permute.xlu0 %1753
  %1755 = vrot.lane.b32.xlu0 %v1527, 93
  %v1756 = vpop.permute.xlu0 %1755
  %1757 = vrot.lane.b32.xlu0 %v1528, 93
  %v1758 = vpop.permute.xlu0 %1757
  %1759 = vrot.lane.b32.xlu0 %v1529, 93
  %v1760 = vpop.permute.xlu0 %1759
  %1761 = vrot.lane.b32.xlu0 %v1531, 93
  %v1762 = vpop.permute.xlu0 %1761
  %1763 = vrot.lane.b32.xlu0 %v1532, 93
  %v1764 = vpop.permute.xlu0 %1763
  %1765 = vrot.lane.b32.xlu0 %v1533, 93
  %v1766 = vpop.permute.xlu0 %1765
  %1767 = vrot.lane.b32.xlu0 %v1534, 93
  %v1768 = vpop.permute.xlu0 %1767
  %1769 = vrot.lane.b32.xlu0 %v1535, 93
  %v1770 = vpop.permute.xlu0 %1769
  %1771 = vrot.lane.b32.xlu0 %v1536, 93
  %v1772 = vpop.permute.xlu0 %1771
  %v1773 = vsel %vm296, %v1750, %v1752
  %v1774 = vsel %vm296, %v1752, %v1754
  %v1775 = vsel %vm296, %v1754, %v1756
  %v1776 = vsel %vm296, %v1756, %v1758
  %v1777 = vsel %vm296, %v1758, %v1760
  %v1778 = vsel %vm296, %v1762, %v1764
  %v1779 = vsel %vm296, %v1764, %v1766
  %v1780 = vsel %vm296, %v1766, %v1768
  %v1781 = vsel %vm296, %v1768, %v1770
  %v1782 = vsel %vm296, %v1770, %v1772
  %1783 = vrot.lane.b32.xlu0 %v1524, 92
  %v1784 = vpop.permute.xlu0 %1783
  %1785 = vrot.lane.b32.xlu0 %v1525, 92
  %v1786 = vpop.permute.xlu0 %1785
  %1787 = vrot.lane.b32.xlu0 %v1526, 92
  %v1788 = vpop.permute.xlu0 %1787
  %1789 = vrot.lane.b32.xlu0 %v1527, 92
  %v1790 = vpop.permute.xlu0 %1789
  %1791 = vrot.lane.b32.xlu0 %v1528, 92
  %v1792 = vpop.permute.xlu0 %1791
  %1793 = vrot.lane.b32.xlu0 %v1529, 92
  %v1794 = vpop.permute.xlu0 %1793
  %1795 = vrot.lane.b32.xlu0 %v1531, 92
  %v1796 = vpop.permute.xlu0 %1795
  %1797 = vrot.lane.b32.xlu0 %v1532, 92
  %v1798 = vpop.permute.xlu0 %1797
  %1799 = vrot.lane.b32.xlu0 %v1533, 92
  %v1800 = vpop.permute.xlu0 %1799
  %1801 = vrot.lane.b32.xlu0 %v1534, 92
  %v1802 = vpop.permute.xlu0 %1801
  %1803 = vrot.lane.b32.xlu0 %v1535, 92
  %v1804 = vpop.permute.xlu0 %1803
  %1805 = vrot.lane.b32.xlu0 %v1536, 92
  %v1806 = vpop.permute.xlu0 %1805
  %v1807 = vsel %vm314, %v1784, %v1786
  %v1808 = vsel %vm314, %v1786, %v1788
  %v1809 = vsel %vm314, %v1788, %v1790
  %v1810 = vsel %vm314, %v1790, %v1792
  %v1811 = vsel %vm314, %v1792, %v1794
  %v1812 = vsel %vm314, %v1796, %v1798
  %v1813 = vsel %vm314, %v1798, %v1800
  %v1814 = vsel %vm314, %v1800, %v1802
  %v1815 = vsel %vm314, %v1802, %v1804
  %v1816 = vsel %vm314, %v1804, %v1806
  %v1817 = vld [vmem:[%s6] sm:$0xff]
  %v1818 = vld [vmem:[%s6 + $0x8] sm:$0xf]
  %v1819 = vld [vmem:[%s6 + $0xc] sm:$0xff]
  %v1820 = vld [vmem:[%s6 + $0x14] sm:$0xf]
  %v1821 = vld [vmem:[%s6 + $0x18] sm:$0xff]
  %v1822 = vld [vmem:[%s6 + $0x20] sm:$0xf]
  %v1823 = vld [vmem:[%s6 + $0x24] sm:$0xff]
  %v1824 = vld [vmem:[%s6 + $0x2c] sm:$0xf]
  %v1833 = vunpack.c.l.b16 %v1817
  %v1834 = vunpack.c.h.b16 %v1817
  %v1835 = vunpack.c.l.b16 %v1818
  %v1836 = vunpack.c.l.b16 %v1819
  %v1837 = vunpack.c.h.b16 %v1819
  %v1838 = vunpack.c.l.b16 %v1820
  %v1839 = vunpack.c.l.b16 %v1821
  %v1840 = vunpack.c.h.b16 %v1821
  %v1841 = vunpack.c.l.b16 %v1822
  %v1842 = vunpack.c.l.b16 %v1823
  %v1843 = vunpack.c.h.b16 %v1823
  %v1844 = vunpack.c.l.b16 %v1824
  %v1845 = vpack.c.b16 %v1836, %v1833
  %v1846 = vpack.c.b16 %v1837, %v1834
  %v1847 = vpack.c.b16 %v1838, %v1835
  %v1848 = vpack.c.b16 %v1842, %v1839
  %v1849 = vpack.c.b16 %v1843, %v1840
  %v1850 = vpack.c.b16 %v1844, %v1841
  %1855 = vrot.lane.b32.xlu0 %v1523, 18
  %v1856 = vpop.permute.xlu0 %1855
  %1857 = vrot.lane.b32.xlu0 %v1524, 18
  %v1858 = vpop.permute.xlu0 %1857
  %1859 = vrot.lane.b32.xlu0 %v1525, 18
  %v1860 = vpop.permute.xlu0 %1859
  %1861 = vrot.lane.b32.xlu0 %v1526, 18
  %v1862 = vpop.permute.xlu0 %1861
  %1863 = vrot.lane.b32.xlu0 %v1527, 18
  %v1864 = vpop.permute.xlu0 %1863
  %1865 = vrot.lane.b32.xlu0 %v1528, 18
  %v1866 = vpop.permute.xlu0 %1865
  %1867 = vrot.lane.b32.xlu0 %v1530, 18
  %v1868 = vpop.permute.xlu0 %1867
  %1869 = vrot.lane.b32.xlu0 %v1531, 18
  %v1870 = vpop.permute.xlu0 %1869
  %1871 = vrot.lane.b32.xlu0 %v1532, 18
  %v1872 = vpop.permute.xlu0 %1871
  %1873 = vrot.lane.b32.xlu0 %v1533, 18
  %v1874 = vpop.permute.xlu0 %1873
  %1875 = vrot.lane.b32.xlu0 %v1534, 18
  %v1876 = vpop.permute.xlu0 %1875
  %1877 = vrot.lane.b32.xlu0 %v1535, 18
  %v1878 = vpop.permute.xlu0 %1877
  %1879 = vrot.lane.b32.xlu0 %v1573, 18
  %v1880 = vpop.permute.xlu0 %1879
  %1881 = vrot.lane.b32.xlu0 %v1574, 18
  %v1882 = vpop.permute.xlu0 %1881
  %1883 = vrot.lane.b32.xlu0 %v1575, 18
  %v1884 = vpop.permute.xlu0 %1883
  %1885 = vrot.lane.b32.xlu0 %v1576, 18
  %v1886 = vpop.permute.xlu0 %1885
  %1887 = vrot.lane.b32.xlu0 %v1577, 18
  %v1888 = vpop.permute.xlu0 %1887
  %1889 = vrot.lane.b32.xlu0 %v1560, 18
  %v1890 = vpop.permute.xlu0 %1889
  %1891 = vrot.lane.b32.xlu0 %v1578, 18
  %v1892 = vpop.permute.xlu0 %1891
  %1893 = vrot.lane.b32.xlu0 %v1579, 18
  %v1894 = vpop.permute.xlu0 %1893
  %1895 = vrot.lane.b32.xlu0 %v1580, 18
  %v1896 = vpop.permute.xlu0 %1895
  %1897 = vrot.lane.b32.xlu0 %v1581, 18
  %v1898 = vpop.permute.xlu0 %1897
  %1899 = vrot.lane.b32.xlu0 %v1582, 18
  %v1900 = vpop.permute.xlu0 %1899
  %1901 = vrot.lane.b32.xlu0 %v1572, 18
  %v1902 = vpop.permute.xlu0 %1901
  %1903 = vrot.lane.b32.xlu0 %v1607, 18
  %v1904 = vpop.permute.xlu0 %1903
  %1905 = vrot.lane.b32.xlu0 %v1608, 18
  %v1906 = vpop.permute.xlu0 %1905
  %1907 = vrot.lane.b32.xlu0 %v1609, 18
  %v1908 = vpop.permute.xlu0 %1907
  %1909 = vrot.lane.b32.xlu0 %v1610, 18
  %v1910 = vpop.permute.xlu0 %1909
  %1911 = vrot.lane.b32.xlu0 %v1611, 18
  %v1912 = vpop.permute.xlu0 %1911
  %1913 = vrot.lane.b32.xlu0 %v1594, 18
  %v1914 = vpop.permute.xlu0 %1913
  %1915 = vrot.lane.b32.xlu0 %v1612, 18
  %v1916 = vpop.permute.xlu0 %1915
  %1917 = vrot.lane.b32.xlu0 %v1613, 18
  %v1918 = vpop.permute.xlu0 %1917
  %1919 = vrot.lane.b32.xlu0 %v1614, 18
  %v1920 = vpop.permute.xlu0 %1919
  %1921 = vrot.lane.b32.xlu0 %v1615, 18
  %v1922 = vpop.permute.xlu0 %1921
  %1923 = vrot.lane.b32.xlu0 %v1616, 18
  %v1924 = vpop.permute.xlu0 %1923
  %1925 = vrot.lane.b32.xlu0 %v1606, 18
  %v1926 = vpop.permute.xlu0 %1925
  %1927 = vrot.lane.b32.xlu0 %v1641, 18
  %v1928 = vpop.permute.xlu0 %1927
  %1929 = vrot.lane.b32.xlu0 %v1642, 18
  %v1930 = vpop.permute.xlu0 %1929
  %1931 = vrot.lane.b32.xlu0 %v1643, 18
  %v1932 = vpop.permute.xlu0 %1931
  %1933 = vrot.lane.b32.xlu0 %v1644, 18
  %v1934 = vpop.permute.xlu0 %1933
  %1935 = vrot.lane.b32.xlu0 %v1645, 18
  %v1936 = vpop.permute.xlu0 %1935
  %1937 = vrot.lane.b32.xlu0 %v1628, 18
  %v1938 = vpop.permute.xlu0 %1937
  %1939 = vrot.lane.b32.xlu0 %v1646, 18
  %v1940 = vpop.permute.xlu0 %1939
  %1941 = vrot.lane.b32.xlu0 %v1647, 18
  %v1942 = vpop.permute.xlu0 %1941
  %1943 = vrot.lane.b32.xlu0 %v1648, 18
  %v1944 = vpop.permute.xlu0 %1943
  %1945 = vrot.lane.b32.xlu0 %v1649, 18
  %v1946 = vpop.permute.xlu0 %1945
  %1947 = vrot.lane.b32.xlu0 %v1650, 18
  %v1948 = vpop.permute.xlu0 %1947
  %1949 = vrot.lane.b32.xlu0 %v1640, 18
  %v1950 = vpop.permute.xlu0 %1949
  %1951 = vrot.lane.b32.xlu0 %v1652, 18
  %v1952 = vpop.permute.xlu0 %1951
  %1953 = vrot.lane.b32.xlu0 %v1671, 18
  %v1954 = vpop.permute.xlu0 %1953
  %1955 = vrot.lane.b32.xlu0 %v1672, 18
  %v1956 = vpop.permute.xlu0 %1955
  %1957 = vrot.lane.b32.xlu0 %v1673, 18
  %v1958 = vpop.permute.xlu0 %1957
  %1959 = vrot.lane.b32.xlu0 %v1674, 18
  %v1960 = vpop.permute.xlu0 %1959
  %1961 = vrot.lane.b32.xlu0 %v1660, 18
  %v1962 = vpop.permute.xlu0 %1961
  %1963 = vrot.lane.b32.xlu0 %v1662, 18
  %v1964 = vpop.permute.xlu0 %1963
  %1965 = vrot.lane.b32.xlu0 %v1675, 18
  %v1966 = vpop.permute.xlu0 %1965
  %1967 = vrot.lane.b32.xlu0 %v1676, 18
  %v1968 = vpop.permute.xlu0 %1967
  %1969 = vrot.lane.b32.xlu0 %v1677, 18
  %v1970 = vpop.permute.xlu0 %1969
  %1971 = vrot.lane.b32.xlu0 %v1678, 18
  %v1972 = vpop.permute.xlu0 %1971
  %1973 = vrot.lane.b32.xlu0 %v1670, 18
  %v1974 = vpop.permute.xlu0 %1973
  %1975 = vrot.lane.b32.xlu0 %v1682, 18
  %v1976 = vpop.permute.xlu0 %1975
  %1977 = vrot.lane.b32.xlu0 %v1705, 18
  %v1978 = vpop.permute.xlu0 %1977
  %1979 = vrot.lane.b32.xlu0 %v1706, 18
  %v1980 = vpop.permute.xlu0 %1979
  %1981 = vrot.lane.b32.xlu0 %v1707, 18
  %v1982 = vpop.permute.xlu0 %1981
  %1983 = vrot.lane.b32.xlu0 %v1708, 18
  %v1984 = vpop.permute.xlu0 %1983
  %1985 = vrot.lane.b32.xlu0 %v1709, 18
  %v1986 = vpop.permute.xlu0 %1985
  %1987 = vrot.lane.b32.xlu0 %v1694, 18
  %v1988 = vpop.permute.xlu0 %1987
  %1989 = vrot.lane.b32.xlu0 %v1710, 18
  %v1990 = vpop.permute.xlu0 %1989
  %1991 = vrot.lane.b32.xlu0 %v1711, 18
  %v1992 = vpop.permute.xlu0 %1991
  %1993 = vrot.lane.b32.xlu0 %v1712, 18
  %v1994 = vpop.permute.xlu0 %1993
  %1995 = vrot.lane.b32.xlu0 %v1713, 18
  %v1996 = vpop.permute.xlu0 %1995
  %1997 = vrot.lane.b32.xlu0 %v1714, 18
  %v1998 = vpop.permute.xlu0 %1997
  %1999 = vrot.lane.b32.xlu0 %v1716, 18
  %v2000 = vpop.permute.xlu0 %1999
  %2001 = vrot.lane.b32.xlu0 %v1739, 18
  %v2002 = vpop.permute.xlu0 %2001
  %2003 = vrot.lane.b32.xlu0 %v1740, 18
  %v2004 = vpop.permute.xlu0 %2003
  %2005 = vrot.lane.b32.xlu0 %v1741, 18
  %v2006 = vpop.permute.xlu0 %2005
  %2007 = vrot.lane.b32.xlu0 %v1742, 18
  %v2008 = vpop.permute.xlu0 %2007
  %2009 = vrot.lane.b32.xlu0 %v1743, 18
  %v2010 = vpop.permute.xlu0 %2009
  %2011 = vrot.lane.b32.xlu0 %v1728, 18
  %v2012 = vpop.permute.xlu0 %2011
  %2013 = vrot.lane.b32.xlu0 %v1744, 18
  %v2014 = vpop.permute.xlu0 %2013
  %2015 = vrot.lane.b32.xlu0 %v1745, 18
  %v2016 = vpop.permute.xlu0 %2015
  %2017 = vrot.lane.b32.xlu0 %v1746, 18
  %v2018 = vpop.permute.xlu0 %2017
  %2019 = vrot.lane.b32.xlu0 %v1747, 18
  %v2020 = vpop.permute.xlu0 %2019
  %2021 = vrot.lane.b32.xlu0 %v1748, 18
  %v2022 = vpop.permute.xlu0 %2021
  %2023 = vrot.lane.b32.xlu0 %v1750, 18
  %v2024 = vpop.permute.xlu0 %2023
  %2025 = vrot.lane.b32.xlu0 %v1773, 18
  %v2026 = vpop.permute.xlu0 %2025
  %2027 = vrot.lane.b32.xlu0 %v1774, 18
  %v2028 = vpop.permute.xlu0 %2027
  %2029 = vrot.lane.b32.xlu0 %v1775, 18
  %v2030 = vpop.permute.xlu0 %2029
  %2031 = vrot.lane.b32.xlu0 %v1776, 18
  %v2032 = vpop.permute.xlu0 %2031
  %2033 = vrot.lane.b32.xlu0 %v1777, 18
  %v2034 = vpop.permute.xlu0 %2033
  %2035 = vrot.lane.b32.xlu0 %v1762, 18
  %v2036 = vpop.permute.xlu0 %2035
  %2037 = vrot.lane.b32.xlu0 %v1778, 18
  %v2038 = vpop.permute.xlu0 %2037
  %2039 = vrot.lane.b32.xlu0 %v1779, 18
  %v2040 = vpop.permute.xlu0 %2039
  %2041 = vrot.lane.b32.xlu0 %v1780, 18
  %v2042 = vpop.permute.xlu0 %2041
  %2043 = vrot.lane.b32.xlu0 %v1781, 18
  %v2044 = vpop.permute.xlu0 %2043
  %2045 = vrot.lane.b32.xlu0 %v1782, 18
  %v2046 = vpop.permute.xlu0 %2045
  %2047 = vrot.lane.b32.xlu0 %v1784, 18
  %v2048 = vpop.permute.xlu0 %2047
  %2049 = vrot.lane.b32.xlu0 %v1807, 18
  %v2050 = vpop.permute.xlu0 %2049
  %2051 = vrot.lane.b32.xlu0 %v1808, 18
  %v2052 = vpop.permute.xlu0 %2051
  %2053 = vrot.lane.b32.xlu0 %v1809, 18
  %v2054 = vpop.permute.xlu0 %2053
  %2055 = vrot.lane.b32.xlu0 %v1810, 18
  %v2056 = vpop.permute.xlu0 %2055
  %2057 = vrot.lane.b32.xlu0 %v1811, 18
  %v2058 = vpop.permute.xlu0 %2057
  %2059 = vrot.lane.b32.xlu0 %v1796, 18
  %v2060 = vpop.permute.xlu0 %2059
  %2061 = vrot.lane.b32.xlu0 %v1812, 18
  %v2062 = vpop.permute.xlu0 %2061
  %2063 = vrot.lane.b32.xlu0 %v1813, 18
  %v2064 = vpop.permute.xlu0 %2063
  %2065 = vrot.lane.b32.xlu0 %v1814, 18
  %v2066 = vpop.permute.xlu0 %2065
  %2067 = vrot.lane.b32.xlu0 %v1815, 18
  %v2068 = vpop.permute.xlu0 %2067
  %2069 = vrot.lane.b32.xlu0 %v1816, 18
  %v2070 = vpop.permute.xlu0 %2069
  %v2071 = vsel %vm450, %v1856, %v1858
  %v2072 = vsel %vm450, %v1858, %v1860
  %v2073 = vsel %vm450, %v1860, %v1862
  %v2074 = vsel %vm450, %v1862, %v1864
  %v2075 = vsel %vm450, %v1864, %v1866
  %v2076 = vsel %vm450, %v1868, %v1870
  %v2077 = vsel %vm450, %v1870, %v1872
  %v2078 = vsel %vm450, %v1872, %v1874
  %v2079 = vsel %vm450, %v1874, %v1876
  %v2080 = vsel %vm450, %v1876, %v1878
  %v2081 = vsel %vm450, %v1880, %v1882
  %v2082 = vsel %vm450, %v1882, %v1884
  %v2083 = vsel %vm450, %v1884, %v1886
  %v2084 = vsel %vm450, %v1886, %v1888
  %v2085 = vsel %vm450, %v1888, %v1890
  %v2086 = vsel %vm450, %v1892, %v1894
  %v2087 = vsel %vm450, %v1894, %v1896
  %v2088 = vsel %vm450, %v1896, %v1898
  %v2089 = vsel %vm450, %v1898, %v1900
  %v2090 = vsel %vm450, %v1900, %v1902
  %v2091 = vsel %vm450, %v1904, %v1906
  %v2092 = vsel %vm450, %v1906, %v1908
  %v2093 = vsel %vm450, %v1908, %v1910
  %v2094 = vsel %vm450, %v1910, %v1912
  %v2095 = vsel %vm450, %v1912, %v1914
  %v2096 = vsel %vm450, %v1916, %v1918
  %v2097 = vsel %vm450, %v1918, %v1920
  %v2098 = vsel %vm450, %v1920, %v1922
  %v2099 = vsel %vm450, %v1922, %v1924
  %v2100 = vsel %vm450, %v1924, %v1926
  %v2101 = vsel %vm450, %v1928, %v1930
  %v2102 = vsel %vm450, %v1930, %v1932
  %v2103 = vsel %vm450, %v1932, %v1934
  %v2104 = vsel %vm450, %v1934, %v1936
  %v2105 = vsel %vm450, %v1936, %v1938
  %v2106 = vsel %vm450, %v1940, %v1942
  %v2107 = vsel %vm450, %v1942, %v1944
  %v2108 = vsel %vm450, %v1944, %v1946
  %v2109 = vsel %vm450, %v1946, %v1948
  %v2110 = vsel %vm450, %v1948, %v1950
  %v2111 = vsel %vm450, %v1952, %v1954
  %v2112 = vsel %vm450, %v1954, %v1956
  %v2113 = vsel %vm450, %v1956, %v1958
  %v2114 = vsel %vm450, %v1958, %v1960
  %v2115 = vsel %vm450, %v1960, %v1962
  %v2116 = vsel %vm450, %v1964, %v1966
  %v2117 = vsel %vm450, %v1966, %v1968
  %v2118 = vsel %vm450, %v1968, %v1970
  %v2119 = vsel %vm450, %v1970, %v1972
  %v2120 = vsel %vm450, %v1972, %v1974
  %v2121 = vsel %vm450, %v1976, %v1978
  %v2122 = vsel %vm450, %v1978, %v1980
  %v2123 = vsel %vm450, %v1980, %v1982
  %v2124 = vsel %vm450, %v1982, %v1984
  %v2125 = vsel %vm450, %v1984, %v1986
  %v2126 = vsel %vm450, %v1988, %v1990
  %v2127 = vsel %vm450, %v1990, %v1992
  %v2128 = vsel %vm450, %v1992, %v1994
  %v2129 = vsel %vm450, %v1994, %v1996
  %v2130 = vsel %vm450, %v1996, %v1998
  %v2131 = vsel %vm450, %v2000, %v2002
  %v2132 = vsel %vm450, %v2002, %v2004
  %v2133 = vsel %vm450, %v2004, %v2006
  %v2134 = vsel %vm450, %v2006, %v2008
  %v2135 = vsel %vm450, %v2008, %v2010
  %v2136 = vsel %vm450, %v2012, %v2014
  %v2137 = vsel %vm450, %v2014, %v2016
  %v2138 = vsel %vm450, %v2016, %v2018
  %v2139 = vsel %vm450, %v2018, %v2020
  %v2140 = vsel %vm450, %v2020, %v2022
  %v2141 = vsel %vm450, %v2024, %v2026
  %v2142 = vsel %vm450, %v2026, %v2028
  %v2143 = vsel %vm450, %v2028, %v2030
  %v2144 = vsel %vm450, %v2030, %v2032
  %v2145 = vsel %vm450, %v2032, %v2034
  %v2146 = vsel %vm450, %v2036, %v2038
  %v2147 = vsel %vm450, %v2038, %v2040
  %v2148 = vsel %vm450, %v2040, %v2042
  %v2149 = vsel %vm450, %v2042, %v2044
  %v2150 = vsel %vm450, %v2044, %v2046
  %v2151 = vsel %vm450, %v2048, %v2050
  %v2152 = vsel %vm450, %v2050, %v2052
  %v2153 = vsel %vm450, %v2052, %v2054
  %v2154 = vsel %vm450, %v2054, %v2056
  %v2155 = vsel %vm450, %v2056, %v2058
  %v2156 = vsel %vm450, %v2060, %v2062
  %v2157 = vsel %vm450, %v2062, %v2064
  %v2158 = vsel %vm450, %v2064, %v2066
  %v2159 = vsel %vm450, %v2066, %v2068
  %v2160 = vsel %vm450, %v2068, %v2070
  %vm2251 = vcmask 261120
  %v2253 = vsel %vm2251, %v1847, 0
  %v2256 = vsel %vm2251, %v1850, 0
  %2258 = vmatprep.subr.bf16.mxu0 %v2072
  %2259 = vmatpush1.bf16.msra.mxu0 %v2071
  %2260 = vmatprep.subr.bf16.mxu0 %v2077
  %2261 = vmatpush1.bf16.msra.mxu0 %v2076
  %2262 = vmatprep.subr.bf16.mxu0 %v2082
  %2263 = vmatpush1.bf16.msra.mxu0 %v2081
  %2264 = vmatprep.subr.bf16.mxu0 %v2087
  %2265 = vmatpush1.bf16.msra.mxu0 %v2086
  %2266 = vmatprep.subr.bf16.mxu0 %v2092
  %2267 = vmatpush1.bf16.msra.mxu0 %v2091
  %2268 = vmatprep.subr.bf16.mxu0 %v2097
  %2269 = vmatpush1.bf16.msra.mxu0 %v2096
  %2270 = vmatprep.subr.bf16.mxu0 %v2102
  %2271 = vmatpush1.bf16.msra.mxu0 %v2101
  %2272 = vmatprep.subr.bf16.mxu0 %v2107
  %2273 = vmatpush1.bf16.msra.mxu0 %v2106
  %2274 = vmatprep.subr.bf16.mxu0 %v2112
  %2275 = vmatpush1.bf16.msra.mxu0 %v2111
  %2276 = vmatprep.subr.bf16.mxu0 %v2117
  %2277 = vmatpush1.bf16.msra.mxu0 %v2116
  %2278 = vmatprep.subr.bf16.mxu0 %v2122
  %2279 = vmatpush1.bf16.msra.mxu0 %v2121
  %2280 = vmatprep.subr.bf16.mxu0 %v2127
  %2281 = vmatpush1.bf16.msra.mxu0 %v2126
  %2282 = vmatprep.subr.bf16.mxu0 %v2132
  %2283 = vmatpush1.bf16.msra.mxu0 %v2131
  %2284 = vmatprep.subr.bf16.mxu0 %v2137
  %2285 = vmatpush1.bf16.msra.mxu0 %v2136
  %2286 = vmatprep.subr.bf16.mxu0 %v2142
  %2287 = vmatpush1.bf16.msra.mxu0 %v2141
  %2288 = vmatprep.subr.bf16.mxu0 %v2147
  %2289 = vmatpush1.bf16.msra.mxu0 %v2146
  %2290 = vmatprep.mubr.bf16.mxu0 %v1846
  %2291 = vmatmul.mubr.bf16.gmra.mrb[0].mxu0 %v1845
  %v2292 = vpop.f32.mrb[0].mxu0
  %v2293 = vadd.f32 0.0, %v2292
  %v2294 = vpop.f32.mrb[0].mxu0
  %v2295 = vadd.f32 0.0, %v2294
  %v2296 = vpop.f32.mrb[0].mxu0
  %v2297 = vadd.f32 0.0, %v2296
  %v2298 = vpop.f32.mrb[0].mxu0
  %v2299 = vadd.f32 0.0, %v2298
  %2300 = vmatprep.mubr.bf16.mxu0 %v1849
  %2301 = vmatmul.mubr.bf16.gmra.mrb[0].mxu0 %v1848
  %v2302 = vpop.f32.mrb[0].mxu0
  %v2303 = vadd.f32 0.0, %v2302
  %v2304 = vpop.f32.mrb[0].mxu0
  %v2305 = vadd.f32 0.0, %v2304
  %v2306 = vpop.f32.mrb[0].mxu0
  %v2307 = vadd.f32 0.0, %v2306
  %v2308 = vpop.f32.mrb[0].mxu0
  %v2309 = vadd.f32 0.0, %v2308
  %2310 = vdwg.mxu0
  %2311 = vmatprep.subr.bf16.mxu0 %v2152
  %2312 = vmatpush1.bf16.msra.mxu0 %v2151
  %2313 = vmatprep.subr.bf16.mxu0 %v2157
  %2314 = vmatpush1.bf16.msra.mxu0 %v2156
  %2315 = vmatprep.subr.bf16.mxu0 0
  %2316 = vmatpush1.bf16.msra.mxu0 0
  %2317 = vmatprep.subr.bf16.mxu0 0
  %2318 = vmatpush1.bf16.msra.mxu0 0
  %2319 = vmatprep.subr.bf16.mxu0 0
  %2320 = vmatpush1.bf16.msra.mxu0 0
  %2321 = vmatprep.subr.bf16.mxu0 0
  %2322 = vmatpush1.bf16.msra.mxu0 0
  %2323 = vmatprep.subr.bf16.mxu0 0
  %2324 = vmatpush1.bf16.msra.mxu0 0
  %2325 = vmatprep.subr.bf16.mxu0 0
  %2326 = vmatpush1.bf16.msra.mxu0 0
  %2327 = vmatprep.subr.bf16.mxu0 0
  %2328 = vmatpush1.bf16.msra.mxu0 0
  %2329 = vmatprep.subr.bf16.mxu0 0
  %2330 = vmatpush1.bf16.msra.mxu0 0
  %2331 = vmatprep.subr.bf16.mxu0 0
  %2332 = vmatpush1.bf16.msra.mxu0 0
  %2333 = vmatprep.subr.bf16.mxu0 0
  %2334 = vmatpush1.bf16.msra.mxu0 0
  %2335 = vmatprep.subr.bf16.mxu0 0
  %2336 = vmatpush1.bf16.msra.mxu0 0
  %2337 = vmatprep.subr.bf16.mxu0 0
  %2338 = vmatpush1.bf16.msra.mxu0 0
  %2339 = vmatprep.subr.bf16.mxu0 0
  %2340 = vmatpush1.bf16.msra.mxu0 0
  %2341 = vmatprep.subr.bf16.mxu0 0
  %2342 = vmatpush1.bf16.msra.mxu0 0
  %2343 = vmatprep.mubr.bf16.mxu0 0
  %2344 = vmatmul.mubr.bf16.gmra.mrb[0].mxu0 %v2253
  %v2345 = vpop.f32.mrb[0].mxu0
  %v2346 = vadd.f32 %v2293, %v2345
  %v2347 = vpop.f32.mrb[0].mxu0
  %v2348 = vadd.f32 %v2295, %v2347
  %v2349 = vpop.f32.mrb[0].mxu0
  %v2350 = vadd.f32 %v2297, %v2349
  %v2351 = vpop.f32.mrb[0].mxu0
  %v2352 = vadd.f32 %v2299, %v2351
  %2353 = vmatprep.mubr.bf16.mxu0 0
  %2354 = vmatmul.mubr.bf16.gmra.mrb[0].mxu0 %v2256
  %v2355 = vpop.f32.mrb[0].mxu0
  %v2356 = vadd.f32 %v2303, %v2355
  %v2357 = vpop.f32.mrb[0].mxu0
  %v2358 = vadd.f32 %v2305, %v2357
  %v2359 = vpop.f32.mrb[0].mxu0
  %v2360 = vadd.f32 %v2307, %v2359
  %v2361 = vpop.f32.mrb[0].mxu0
  %v2362 = vadd.f32 %v2309, %v2361
  %2363 = vdwg.mxu0
  %2364 = vmatprep.subr.bf16.mxu0 %v2074
  %2365 = vmatpush1.bf16.msra.mxu0 %v2073
  %2366 = vmatprep.subr.bf16.mxu0 %v2079
  %2367 = vmatpush1.bf16.msra.mxu0 %v2078
  %2368 = vmatprep.subr.bf16.mxu0 %v2084
  %2369 = vmatpush1.bf16.msra.mxu0 %v2083
  %2370 = vmatprep.subr.bf16.mxu0 %v2089
  %2371 = vmatpush1.bf16.msra.mxu0 %v2088
  %2372 = vmatprep.subr.bf16.mxu0 %v2094
  %2373 = vmatpush1.bf16.msra.mxu0 %v2093
  %2374 = vmatprep.subr.bf16.mxu0 %v2099
  %2375 = vmatpush1.bf16.msra.mxu0 %v2098
  %2376 = vmatprep.subr.bf16.mxu0 %v2104
  %2377 = vmatpush1.bf16.msra.mxu0 %v2103
  %2378 = vmatprep.subr.bf16.mxu0 %v2109
  %2379 = vmatpush1.bf16.msra.mxu0 %v2108
  %2380 = vmatprep.subr.bf16.mxu0 %v2114
  %2381 = vmatpush1.bf16.msra.mxu0 %v2113
  %2382 = vmatprep.subr.bf16.mxu0 %v2119
  %2383 = vmatpush1.bf16.msra.mxu0 %v2118
  %2384 = vmatprep.subr.bf16.mxu0 %v2124
  %2385 = vmatpush1.bf16.msra.mxu0 %v2123
  %2386 = vmatprep.subr.bf16.mxu0 %v2129
  %2387 = vmatpush1.bf16.msra.mxu0 %v2128
  %2388 = vmatprep.subr.bf16.mxu0 %v2134
  %2389 = vmatpush1.bf16.msra.mxu0 %v2133
  %2390 = vmatprep.subr.bf16.mxu0 %v2139
  %2391 = vmatpush1.bf16.msra.mxu0 %v2138
  %2392 = vmatprep.subr.bf16.mxu0 %v2144
  %2393 = vmatpush1.bf16.msra.mxu0 %v2143
  %2394 = vmatprep.subr.bf16.mxu0 %v2149
  %2395 = vmatpush1.bf16.msra.mxu0 %v2148
  %2396 = vmatprep.mubr.bf16.mxu0 %v1846
  %2397 = vmatmul.mubr.bf16.gmra.mrb[0].mxu0 %v1845
  %v2398 = vpop.f32.mrb[0].mxu0
  %v2399 = vadd.f32 0.0, %v2398
  %v2400 = vpop.f32.mrb[0].mxu0
  %v2401 = vadd.f32 0.0, %v2400
  %v2402 = vpop.f32.mrb[0].mxu0
  %v2403 = vadd.f32 0.0, %v2402
  %v2404 = vpop.f32.mrb[0].mxu0
  %v2405 = vadd.f32 0.0, %v2404
  %2406 = vmatprep.mubr.bf16.mxu0 %v1849
  %2407 = vmatmul.mubr.bf16.gmra.mrb[0].mxu0 %v1848
  %v2408 = vpop.f32.mrb[0].mxu0
  %v2409 = vadd.f32 0.0, %v2408
  %v2410 = vpop.f32.mrb[0].mxu0
  %v2411 = vadd.f32 0.0, %v2410
  %v2412 = vpop.f32.mrb[0].mxu0
  %v2413 = vadd.f32 0.0, %v2412
  %v2414 = vpop.f32.mrb[0].mxu0
  %v2415 = vadd.f32 0.0, %v2414
  %2416 = vdwg.mxu0
  %2417 = vmatprep.subr.bf16.mxu0 %v2154
  %2418 = vmatpush1.bf16.msra.mxu0 %v2153
  %2419 = vmatprep.subr.bf16.mxu0 %v2159
  %2420 = vmatpush1.bf16.msra.mxu0 %v2158
  %2421 = vmatprep.subr.bf16.mxu0 0
  %2422 = vmatpush1.bf16.msra.mxu0 0
  %2423 = vmatprep.subr.bf16.mxu0 0
  %2424 = vmatpush1.bf16.msra.mxu0 0
  %2425 = vmatprep.subr.bf16.mxu0 0
  %2426 = vmatpush1.bf16.msra.mxu0 0
  %2427 = vmatprep.subr.bf16.mxu0 0
  %2428 = vmatpush1.bf16.msra.mxu0 0
  %2429 = vmatprep.subr.bf16.mxu0 0
  %2430 = vmatpush1.bf16.msra.mxu0 0
  %2431 = vmatprep.subr.bf16.mxu0 0
  %2432 = vmatpush1.bf16.msra.mxu0 0
  %2433 = vmatprep.subr.bf16.mxu0 0
  %2434 = vmatpush1.bf16.msra.mxu0 0
  %2435 = vmatprep.subr.bf16.mxu0 0
  %2436 = vmatpush1.bf16.msra.mxu0 0
  %2437 = vmatprep.subr.bf16.mxu0 0
  %2438 = vmatpush1.bf16.msra.mxu0 0
  %2439 = vmatprep.subr.bf16.mxu0 0
  %2440 = vmatpush1.bf16.msra.mxu0 0
  %2441 = vmatprep.subr.bf16.mxu0 0
  %2442 = vmatpush1.bf16.msra.mxu0 0
  %2443 = vmatprep.subr.bf16.mxu0 0
  %2444 = vmatpush1.bf16.msra.mxu0 0
  %2445 = vmatprep.subr.bf16.mxu0 0
  %2446 = vmatpush1.bf16.msra.mxu0 0
  %2447 = vmatprep.subr.bf16.mxu0 0
  %2448 = vmatpush1.bf16.msra.mxu0 0
  %2449 = vmatprep.mubr.bf16.mxu0 0
  %2450 = vmatmul.mubr.bf16.gmra.mrb[0].mxu0 %v2253
  %v2451 = vpop.f32.mrb[0].mxu0
  %v2452 = vadd.f32 %v2399, %v2451
  %v2453 = vpop.f32.mrb[0].mxu0
  %v2454 = vadd.f32 %v2401, %v2453
  %v2455 = vpop.f32.mrb[0].mxu0
  %v2456 = vadd.f32 %v2403, %v2455
  %v2457 = vpop.f32.mrb[0].mxu0
  %v2458 = vadd.f32 %v2405, %v2457
  %2459 = vmatprep.mubr.bf16.mxu0 0
  %2460 = vmatmul.mubr.bf16.gmra.mrb[0].mxu0 %v2256
  %v2461 = vpop.f32.mrb[0].mxu0
  %v2462 = vadd.f32 %v2409, %v2461
  %v2463 = vpop.f32.mrb[0].mxu0
  %v2464 = vadd.f32 %v2411, %v2463
  %v2465 = vpop.f32.mrb[0].mxu0
  %v2466 = vadd.f32 %v2413, %v2465
  %v2467 = vpop.f32.mrb[0].mxu0
  %v2468 = vadd.f32 %v2415, %v2467
  %2469 = vdwg.mxu0
  %2470 = vmatprep.subr.bf16.mxu0 0
  %2471 = vmatpush1.bf16.msra.mxu0 %v2075
  %2472 = vmatprep.subr.bf16.mxu0 0
  %2473 = vmatpush1.bf16.msra.mxu0 %v2080
  %2474 = vmatprep.subr.bf16.mxu0 0
  %2475 = vmatpush1.bf16.msra.mxu0 %v2085
  %2476 = vmatprep.subr.bf16.mxu0 0
  %2477 = vmatpush1.bf16.msra.mxu0 %v2090
  %2478 = vmatprep.subr.bf16.mxu0 0
  %2479 = vmatpush1.bf16.msra.mxu0 %v2095
  %2480 = vmatprep.subr.bf16.mxu0 0
  %2481 = vmatpush1.bf16.msra.mxu0 %v2100
  %2482 = vmatprep.subr.bf16.mxu0 0
  %2483 = vmatpush1.bf16.msra.mxu0 %v2105
  %2484 = vmatprep.subr.bf16.mxu0 0
  %2485 = vmatpush1.bf16.msra.mxu0 %v2110
  %2486 = vmatprep.subr.bf16.mxu0 0
  %2487 = vmatpush1.bf16.msra.mxu0 %v2115
  %2488 = vmatprep.subr.bf16.mxu0 0
  %2489 = vmatpush1.bf16.msra.mxu0 %v2120
  %2490 = vmatprep.subr.bf16.mxu0 0
  %2491 = vmatpush1.bf16.msra.mxu0 %v2125
  %2492 = vmatprep.subr.bf16.mxu0 0
  %2493 = vmatpush1.bf16.msra.mxu0 %v2130
  %2494 = vmatprep.subr.bf16.mxu0 0
  %2495 = vmatpush1.bf16.msra.mxu0 %v2135
  %2496 = vmatprep.subr.bf16.mxu0 0
  %2497 = vmatpush1.bf16.msra.mxu0 %v2140
  %2498 = vmatprep.subr.bf16.mxu0 0
  %2499 = vmatpush1.bf16.msra.mxu0 %v2145
  %2500 = vmatprep.subr.bf16.mxu0 0
  %2501 = vmatpush1.bf16.msra.mxu0 %v2150
  %2502 = vmatprep.mubr.bf16.mxu0 %v1846
  %2503 = vmatmul.mubr.bf16.gmra.mrb[0].mxu0 %v1845
  %v2504 = vpop.f32.mrb[0].mxu0
  %v2505 = vadd.f32 0.0, %v2504
  %v2506 = vpop.f32.mrb[0].mxu0
  %v2507 = vpop.f32.mrb[0].mxu0
  %v2508 = vadd.f32 0.0, %v2507
  %v2509 = vpop.f32.mrb[0].mxu0
  %2510 = vmatprep.mubr.bf16.mxu0 %v1849
  %2511 = vmatmul.mubr.bf16.gmra.mrb[0].mxu0 %v1848
  %v2512 = vpop.f32.mrb[0].mxu0
  %v2513 = vadd.f32 0.0, %v2512
  %v2514 = vpop.f32.mrb[0].mxu0
  %v2515 = vpop.f32.mrb[0].mxu0
  %v2516 = vadd.f32 0.0, %v2515
  %v2517 = vpop.f32.mrb[0].mxu0
  %2518 = vdwg.mxu0
  %2519 = vmatprep.subr.bf16.mxu0 0
  %2520 = vmatpush1.bf16.msra.mxu0 %v2155
  %2521 = vmatprep.subr.bf16.mxu0 0
  %2522 = vmatpush1.bf16.msra.mxu0 %v2160
  %2523 = vmatprep.subr.bf16.mxu0 0
  %2524 = vmatpush1.bf16.msra.mxu0 0
  %2525 = vmatprep.subr.bf16.mxu0 0
  %2526 = vmatpush1.bf16.msra.mxu0 0
  %2527 = vmatprep.subr.bf16.mxu0 0
  %2528 = vmatpush1.bf16.msra.mxu0 0
  %2529 = vmatprep.subr.bf16.mxu0 0
  %2530 = vmatpush1.bf16.msra.mxu0 0
  %2531 = vmatprep.subr.bf16.mxu0 0
  %2532 = vmatpush1.bf16.msra.mxu0 0
  %2533 = vmatprep.subr.bf16.mxu0 0
  %2534 = vmatpush1.bf16.msra.mxu0 0
  %2535 = vmatprep.subr.bf16.mxu0 0
  %2536 = vmatpush1.bf16.msra.mxu0 0
  %2537 = vmatprep.subr.bf16.mxu0 0
  %2538 = vmatpush1.bf16.msra.mxu0 0
  %2539 = vmatprep.subr.bf16.mxu0 0
  %2540 = vmatpush1.bf16.msra.mxu0 0
  %2541 = vmatprep.subr.bf16.mxu0 0
  %2542 = vmatpush1.bf16.msra.mxu0 0
  %2543 = vmatprep.subr.bf16.mxu0 0
  %2544 = vmatpush1.bf16.msra.mxu0 0
  %2545 = vmatprep.subr.bf16.mxu0 0
  %2546 = vmatpush1.bf16.msra.mxu0 0
  %2547 = vmatprep.subr.bf16.mxu0 0
  %2548 = vmatpush1.bf16.msra.mxu0 0
  %2549 = vmatprep.subr.bf16.mxu0 0
  %2550 = vmatpush1.bf16.msra.mxu0 0
  %2551 = vmatprep.mubr.bf16.mxu0 0
  %2552 = vmatmul.mubr.bf16.gmra.mrb[0].mxu0 %v2253
  %v2553 = vpop.f32.mrb[0].mxu0
  %v2554 = vadd.f32 %v2505, %v2553
  %v2555 = vpop.f32.mrb[0].mxu0
  %v2556 = vpop.f32.mrb[0].mxu0
  %v2557 = vadd.f32 %v2508, %v2556
  %v2558 = vpop.f32.mrb[0].mxu0
  %2559 = vmatprep.mubr.bf16.mxu0 0
  %2560 = vmatmul.mubr.bf16.gmra.mrb[0].mxu0 %v2256
  %v2561 = vpop.f32.mrb[0].mxu0
  %v2562 = vadd.f32 %v2513, %v2561
  %v2563 = vpop.f32.mrb[0].mxu0
  %v2564 = vpop.f32.mrb[0].mxu0
  %v2565 = vadd.f32 %v2516, %v2564
  %v2566 = vpop.f32.mrb[0].mxu0
  %2567 = vdwg.mxu0
  %2568 = vmatprep.subr.mxu0 0.0
  %2569 = vmatpush1.msra.mxu0 %v58
  %2570 = vmatprep.subr.mxu0 0.0
  %2571 = vmatpush1.msra.mxu0 %v59
  %2572 = vmatprep.subr.mxu0 0.0
  %2573 = vmatpush1.msra.mxu0 %v60
  %2574 = vmatprep.subr.mxu0 0.0
  %2575 = vmatpush1.msra.mxu0 %v61
  %2576 = vmatprep.subr.mxu0 0.0
  %2577 = vmatpush1.msra.mxu0 %v62
  %2578 = vmatprep.subr.mxu0 0.0
  %2579 = vmatpush1.msra.mxu0 %v63
  %2580 = vmatprep.subr.mxu0 0.0
  %2581 = vmatpush1.msra.mxu0 %v64
  %2582 = vmatprep.subr.mxu0 0.0
  %2583 = vmatpush1.msra.mxu0 %v65
  %2584 = vmatprep.subr.mxu0 0.0
  %2585 = vmatpush1.msra.mxu0 %v66
  %2586 = vmatprep.subr.mxu0 0.0
  %2587 = vmatpush1.msra.mxu0 %v67
  %2588 = vmatprep.subr.mxu0 0.0
  %2589 = vmatpush1.msra.mxu0 %v68
  %2590 = vmatprep.subr.mxu0 0.0
  %2591 = vmatpush1.msra.mxu0 %v69
  %2592 = vmatprep.subr.mxu0 0.0
  %2593 = vmatpush1.msra.mxu0 %v70
  %2594 = vmatprep.subr.mxu0 0.0
  %2595 = vmatpush1.msra.mxu0 %v71
  %2596 = vmatprep.subr.mxu0 0.0
  %2597 = vmatpush1.msra.mxu0 %v72
  %2598 = vmatprep.subr.mxu0 0.0
  %2599 = vmatpush1.msra.mxu0 %v73
  %2600 = vmatprep.subr.mxu0 0.0
  %2601 = vmatpush1.msra.mxu0 %v74
  %2602 = vmatprep.subr.mxu0 0.0
  %2603 = vmatpush1.msra.mxu0 %v75
  %2604 = vmatprep.subr.mxu0 0.0
  %2605 = vmatpush1.msra.mxu0 %v76
  %2606 = vmatprep.subr.mxu0 0.0
  %2607 = vmatpush1.msra.mxu0 %v77
  %2608 = vmatprep.subr.mxu0 0.0
  %2609 = vmatpush1.msra.mxu0 %v78
  %2610 = vmatprep.subr.mxu0 0.0
  %2611 = vmatpush1.msra.mxu0 %v79
  %2612 = vmatprep.subr.mxu0 0.0
  %2613 = vmatpush1.msra.mxu0 %v80
  %2614 = vmatprep.subr.mxu0 0.0
  %2615 = vmatpush1.msra.mxu0 %v81
  %2616 = vmatprep.subr.mxu0 0.0
  %2617 = vmatpush1.msra.mxu0 %v82
  %2618 = vmatprep.subr.mxu0 0.0
  %2619 = vmatpush1.msra.mxu0 %v83
  %2620 = vmatprep.subr.mxu0 0.0
  %2621 = vmatpush1.msra.mxu0 %v84
  %2622 = vmatprep.subr.mxu0 0.0
  %2623 = vmatpush1.msra.mxu0 %v85
  %2624 = vmatprep.subr.mxu0 0.0
  %2625 = vmatpush1.msra.mxu0 %v86
  %2626 = vmatprep.subr.mxu0 0.0
  %2627 = vmatpush1.msra.mxu0 %v87
  %2628 = vmatprep.subr.mxu0 0.0
  %2629 = vmatpush1.msra.mxu0 %v88
  %2630 = vmatprep.subr.mxu0 0.0
  %2631 = vmatpush1.msra.mxu0 %v89
  %2632 = vmatprep.mubr.f32.mxu0 %v2348
  %2633 = vmatmul.mubr.f32.gmra.mrb[0].mxu0 %v2346
  %v2634 = vpop.f32.mrb[0].mxu0
  %v2635 = vadd.f32 0.0, %v2634
  %v2636 = vpop.f32.mrb[0].mxu0
  %2637 = vmatprep.mubr.f32.mxu0 %v2352
  %2638 = vmatmul.mubr.f32.gmra.mrb[0].mxu0 %v2350
  %v2639 = vpop.f32.mrb[0].mxu0
  %v2640 = vadd.f32 0.0, %v2639
  %v2641 = vpop.f32.mrb[0].mxu0
  %2642 = vmatprep.mubr.f32.mxu0 %v2358
  %2643 = vmatmul.mubr.f32.gmra.mrb[0].mxu0 %v2356
  %v2644 = vpop.f32.mrb[0].mxu0
  %v2645 = vadd.f32 0.0, %v2644
  %v2646 = vpop.f32.mrb[0].mxu0
  %2647 = vmatprep.mubr.f32.mxu0 %v2362
  %2648 = vmatmul.mubr.f32.gmra.mrb[0].mxu0 %v2360
  %v2649 = vpop.f32.mrb[0].mxu0
  %v2650 = vadd.f32 0.0, %v2649
  %v2651 = vpop.f32.mrb[0].mxu0
  %2652 = vdwg.mxu0
  %2653 = vmatprep.subr.mxu0 0.0
  %2654 = vmatpush1.msra.mxu0 %v90
  %2655 = vmatprep.subr.mxu0 0.0
  %2656 = vmatpush1.msra.mxu0 %v91
  %2657 = vmatprep.subr.mxu0 0.0
  %2658 = vmatpush1.msra.mxu0 %v92
  %2659 = vmatprep.subr.mxu0 0.0
  %2660 = vmatpush1.msra.mxu0 %v93
  %2661 = vmatprep.subr.mxu0 0.0
  %2662 = vmatpush1.msra.mxu0 %v94
  %2663 = vmatprep.subr.mxu0 0.0
  %2664 = vmatpush1.msra.mxu0 %v95
  %2665 = vmatprep.subr.mxu0 0.0
  %2666 = vmatpush1.msra.mxu0 %v96
  %2667 = vmatprep.subr.mxu0 0.0
  %2668 = vmatpush1.msra.mxu0 %v97
  %2669 = vmatprep.subr.mxu0 0.0
  %2670 = vmatpush1.msra.mxu0 %v98
  %2671 = vmatprep.subr.mxu0 0.0
  %2672 = vmatpush1.msra.mxu0 %v99
  %2673 = vmatprep.subr.mxu0 0.0
  %2674 = vmatpush1.msra.mxu0 %v100
  %2675 = vmatprep.subr.mxu0 0.0
  %2676 = vmatpush1.msra.mxu0 %v101
  %2677 = vmatprep.subr.mxu0 0.0
  %2678 = vmatpush1.msra.mxu0 %v102
  %2679 = vmatprep.subr.mxu0 0.0
  %2680 = vmatpush1.msra.mxu0 %v103
  %2681 = vmatprep.subr.mxu0 0.0
  %2682 = vmatpush1.msra.mxu0 %v104
  %2683 = vmatprep.subr.mxu0 0.0
  %2684 = vmatpush1.msra.mxu0 %v105
  %2685 = vmatprep.subr.mxu0 0.0
  %2686 = vmatpush1.msra.mxu0 %v106
  %2687 = vmatprep.subr.mxu0 0.0
  %2688 = vmatpush1.msra.mxu0 %v107
  %2689 = vmatprep.subr.mxu0 0.0
  %2690 = vmatpush1.msra.mxu0 %v108
  %2691 = vmatprep.subr.mxu0 0.0
  %2692 = vmatpush1.msra.mxu0 %v109
  %2693 = vmatprep.subr.mxu0 0.0
  %2694 = vmatpush1.msra.mxu0 %v110
  %2695 = vmatprep.subr.mxu0 0.0
  %2696 = vmatpush1.msra.mxu0 %v111
  %2697 = vmatprep.subr.mxu0 0.0
  %2698 = vmatpush1.msra.mxu0 %v112
  %2699 = vmatprep.subr.mxu0 0.0
  %2700 = vmatpush1.msra.mxu0 %v113
  %2701 = vmatprep.subr.mxu0 0.0
  %2702 = vmatpush1.msra.mxu0 %v114
  %2703 = vmatprep.subr.mxu0 0.0
  %2704 = vmatpush1.msra.mxu0 %v115
  %2705 = vmatprep.subr.mxu0 0.0
  %2706 = vmatpush1.msra.mxu0 %v116
  %2707 = vmatprep.subr.mxu0 0.0
  %2708 = vmatpush1.msra.mxu0 %v117
  %2709 = vmatprep.subr.mxu0 0.0
  %2710 = vmatpush1.msra.mxu0 %v118
  %2711 = vmatprep.subr.mxu0 0.0
  %2712 = vmatpush1.msra.mxu0 %v119
  %2713 = vmatprep.subr.mxu0 0.0
  %2714 = vmatpush1.msra.mxu0 %v120
  %2715 = vmatprep.subr.mxu0 0.0
  %2716 = vmatpush1.msra.mxu0 %v121
  %2717 = vmatprep.mubr.f32.mxu0 %v2454
  %2718 = vmatmul.mubr.f32.gmra.mrb[0].mxu0 %v2452
  %v2719 = vpop.f32.mrb[0].mxu0
  %v2720 = vadd.f32 %v2635, %v2719
  %v2721 = vpop.f32.mrb[0].mxu0
  %2722 = vmatprep.mubr.f32.mxu0 %v2458
  %2723 = vmatmul.mubr.f32.gmra.mrb[0].mxu0 %v2456
  %v2724 = vpop.f32.mrb[0].mxu0
  %v2725 = vadd.f32 %v2640, %v2724
  %v2726 = vpop.f32.mrb[0].mxu0
  %2727 = vmatprep.mubr.f32.mxu0 %v2464
  %2728 = vmatmul.mubr.f32.gmra.mrb[0].mxu0 %v2462
  %v2729 = vpop.f32.mrb[0].mxu0
  %v2730 = vadd.f32 %v2645, %v2729
  %v2731 = vpop.f32.mrb[0].mxu0
  %2732 = vmatprep.mubr.f32.mxu0 %v2468
  %2733 = vmatmul.mubr.f32.gmra.mrb[0].mxu0 %v2466
  %v2734 = vpop.f32.mrb[0].mxu0
  %v2735 = vadd.f32 %v2650, %v2734
  %v2736 = vpop.f32.mrb[0].mxu0
  %2737 = vdwg.mxu0
  %2738 = vmatprep.subr.mxu0 0.0
  %2739 = vmatpush1.msra.mxu0 %v122
  %2740 = vmatprep.subr.mxu0 0.0
  %2741 = vmatpush1.msra.mxu0 %v123
  %2742 = vmatprep.subr.mxu0 0.0
  %2743 = vmatpush1.msra.mxu0 %v124
  %2744 = vmatprep.subr.mxu0 0.0
  %2745 = vmatpush1.msra.mxu0 %v125
  %2746 = vmatprep.subr.mxu0 0.0
  %2747 = vmatpush1.msra.mxu0 %v126
  %2748 = vmatprep.subr.mxu0 0.0
  %2749 = vmatpush1.msra.mxu0 %v127
  %2750 = vmatprep.subr.mxu0 0.0
  %2751 = vmatpush1.msra.mxu0 %v128
  %2752 = vmatprep.subr.mxu0 0.0
  %2753 = vmatpush1.msra.mxu0 %v129
  %2754 = vmatprep.subr.mxu0 0.0
  %2755 = vmatpush1.msra.mxu0 %v130
  %2756 = vmatprep.subr.mxu0 0.0
  %2757 = vmatpush1.msra.mxu0 %v131
  %2758 = vmatprep.subr.mxu0 0.0
  %2759 = vmatpush1.msra.mxu0 %v132
  %2760 = vmatprep.subr.mxu0 0.0
  %2761 = vmatpush1.msra.mxu0 %v133
  %2762 = vmatprep.subr.mxu0 0.0
  %2763 = vmatpush1.msra.mxu0 %v134
  %2764 = vmatprep.subr.mxu0 0.0
  %2765 = vmatpush1.msra.mxu0 %v135
  %2766 = vmatprep.subr.mxu0 0.0
  %2767 = vmatpush1.msra.mxu0 %v136
  %2768 = vmatprep.subr.mxu0 0.0
  %2769 = vmatpush1.msra.mxu0 %v137
  %2770 = vmatprep.subr.mxu0 0.0
  %2771 = vmatpush1.msra.mxu0 0.0
  %2772 = vmatprep.subr.mxu0 0.0
  %2773 = vmatpush1.msra.mxu0 0.0
  %2774 = vmatprep.subr.mxu0 0.0
  %2775 = vmatpush1.msra.mxu0 0.0
  %2776 = vmatprep.subr.mxu0 0.0
  %2777 = vmatpush1.msra.mxu0 0.0
  %2778 = vmatprep.subr.mxu0 0.0
  %2779 = vmatpush1.msra.mxu0 0.0
  %2780 = vmatprep.subr.mxu0 0.0
  %2781 = vmatpush1.msra.mxu0 0.0
  %2782 = vmatprep.subr.mxu0 0.0
  %2783 = vmatpush1.msra.mxu0 0.0
  %2784 = vmatprep.subr.mxu0 0.0
  %2785 = vmatpush1.msra.mxu0 0.0
  %2786 = vmatprep.subr.mxu0 0.0
  %2787 = vmatpush1.msra.mxu0 0.0
  %2788 = vmatprep.subr.mxu0 0.0
  %2789 = vmatpush1.msra.mxu0 0.0
  %2790 = vmatprep.subr.mxu0 0.0
  %2791 = vmatpush1.msra.mxu0 0.0
  %2792 = vmatprep.subr.mxu0 0.0
  %2793 = vmatpush1.msra.mxu0 0.0
  %2794 = vmatprep.subr.mxu0 0.0
  %2795 = vmatpush1.msra.mxu0 0.0
  %2796 = vmatprep.subr.mxu0 0.0
  %2797 = vmatpush1.msra.mxu0 0.0
  %2798 = vmatprep.subr.mxu0 0.0
  %2799 = vmatpush1.msra.mxu0 0.0
  %2800 = vmatprep.subr.mxu0 0.0
  %2801 = vmatpush1.msra.mxu0 0.0
  %2802 = vmatprep.mubr.f32.mxu0 0.0
  %2803 = vmatmul.mubr.f32.gmra.mrb[0].mxu0 %v2554
  %v2804 = vpop.f32.mrb[0].mxu0
  %v2805 = vadd.f32 %v2720, %v2804
  %v2806 = vpop.f32.mrb[0].mxu0
  %2807 = vmatprep.mubr.f32.mxu0 0.0
  %2808 = vmatmul.mubr.f32.gmra.mrb[0].mxu0 %v2557
  %v2809 = vpop.f32.mrb[0].mxu0
  %v2810 = vadd.f32 %v2725, %v2809
  %v2811 = vpop.f32.mrb[0].mxu0
  %2812 = vmatprep.mubr.f32.mxu0 0.0
  %2813 = vmatmul.mubr.f32.gmra.mrb[0].mxu0 %v2562
  %v2814 = vpop.f32.mrb[0].mxu0
  %v2815 = vadd.f32 %v2730, %v2814
  %v2816 = vpop.f32.mrb[0].mxu0
  %2817 = vmatprep.mubr.f32.mxu0 0.0
  %2818 = vmatmul.mubr.f32.gmra.mrb[0].mxu0 %v2565
  %v2819 = vpop.f32.mrb[0].mxu0
  %v2820 = vadd.f32 %v2735, %v2819
  %v2821 = vpop.f32.mrb[0].mxu0
  %2822 = vdwg.mxu0
  %v2823 = vmul.f32 %v2805, 0.001953125
  %v2824 = vmul.f32 %v2810, 0.001953125
  %v2825 = vmul.f32 %v2815, 0.001953125
  %v2826 = vmul.f32 %v2820, 0.001953125
  %2828 = vset.pattern.permute.xlu0 0
  %2829 = vperm.xlu0 %2828, %v2823
  %v2830 = vpop.permute.xlu0 %2829
  %2833 = vset.pattern.permute.xlu0 0
  %2834 = vperm.xlu0 %2833, %v2824
  %v2835 = vpop.permute.xlu0 %2834
  %2838 = vset.pattern.permute.xlu0 0
  %2839 = vperm.xlu0 %2838, %v2825
  %v2840 = vpop.permute.xlu0 %2839
  %2843 = vset.pattern.permute.xlu0 0
  %2844 = vperm.xlu0 %2843, %v2826
  %v2845 = vpop.permute.xlu0 %2844
  %v2847 = vsub.f32 %v2346, %v2830
  %v2848 = vsub.f32 %v2348, %v2830
  %v2849 = vsub.f32 %v2452, %v2830
  %v2850 = vsub.f32 %v2454, %v2830
  %v2851 = vsub.f32 %v2554, %v2830
  %v2852 = vsub.f32 %v2350, %v2835
  %v2853 = vsub.f32 %v2352, %v2835
  %v2854 = vsub.f32 %v2456, %v2835
  %v2855 = vsub.f32 %v2458, %v2835
  %v2856 = vsub.f32 %v2557, %v2835
  %v2857 = vsub.f32 %v2356, %v2840
  %v2858 = vsub.f32 %v2358, %v2840
  %v2859 = vsub.f32 %v2462, %v2840
  %v2860 = vsub.f32 %v2464, %v2840
  %v2861 = vsub.f32 %v2562, %v2840
  %v2862 = vsub.f32 %v2360, %v2845
  %v2863 = vsub.f32 %v2362, %v2845
  %v2864 = vsub.f32 %v2466, %v2845
  %v2865 = vsub.f32 %v2468, %v2845
  %v2866 = vsub.f32 %v2565, %v2845
  %v2867 = vmul.f32 %v2847, %v1006
  %v2868 = vmul.f32 %v2848, %v1010
  %v2869 = vmul.f32 %v2849, %v1014
  %v2870 = vmul.f32 %v2850, %v1018
  %v2871 = vmul.f32 %v2851, %v1022
  %v2872 = vmul.f32 %v2852, %v1006
  %v2873 = vmul.f32 %v2853, %v1010
  %v2874 = vmul.f32 %v2854, %v1014
  %v2875 = vmul.f32 %v2855, %v1018
  %v2876 = vmul.f32 %v2856, %v1022
  %v2877 = vmul.f32 %v2857, %v1006
  %v2878 = vmul.f32 %v2858, %v1010
  %v2879 = vmul.f32 %v2859, %v1014
  %v2880 = vmul.f32 %v2860, %v1018
  %v2881 = vmul.f32 %v2861, %v1022
  %v2882 = vmul.f32 %v2862, %v1006
  %v2883 = vmul.f32 %v2863, %v1010
  %v2884 = vmul.f32 %v2864, %v1014
  %v2885 = vmul.f32 %v2865, %v1018
  %v2886 = vmul.f32 %v2866, %v1022
  %v2887 = vmul.f32 %v2867, %v2867
  %v2888 = vmul.f32 %v2868, %v2868
  %v2889 = vmul.f32 %v2869, %v2869
  %v2890 = vmul.f32 %v2870, %v2870
  %v2891 = vmul.f32 %v2871, %v2871
  %v2892 = vmul.f32 %v2872, %v2872
  %v2893 = vmul.f32 %v2873, %v2873
  %v2894 = vmul.f32 %v2874, %v2874
  %v2895 = vmul.f32 %v2875, %v2875
  %v2896 = vmul.f32 %v2876, %v2876
  %v2897 = vmul.f32 %v2877, %v2877
  %v2898 = vmul.f32 %v2878, %v2878
  %v2899 = vmul.f32 %v2879, %v2879
  %v2900 = vmul.f32 %v2880, %v2880
  %v2901 = vmul.f32 %v2881, %v2881
  %v2902 = vmul.f32 %v2882, %v2882
  %v2903 = vmul.f32 %v2883, %v2883
  %v2904 = vmul.f32 %v2884, %v2884
  %v2905 = vmul.f32 %v2885, %v2885
  %v2906 = vmul.f32 %v2886, %v2886
  %2907 = vmatprep.subr.mxu0 0.0
  %2908 = vmatpush1.msra.mxu0 %v58
  %2909 = vmatprep.subr.mxu0 0.0
  %2910 = vmatpush1.msra.mxu0 %v59
  %2911 = vmatprep.subr.mxu0 0.0
  %2912 = vmatpush1.msra.mxu0 %v60
  %2913 = vmatprep.subr.mxu0 0.0
  %2914 = vmatpush1.msra.mxu0 %v61
  %2915 = vmatprep.subr.mxu0 0.0
  %2916 = vmatpush1.msra.mxu0 %v62
  %2917 = vmatprep.subr.mxu0 0.0
  %2918 = vmatpush1.msra.mxu0 %v63
  %2919 = vmatprep.subr.mxu0 0.0
  %2920 = vmatpush1.msra.mxu0 %v64
  %2921 = vmatprep.subr.mxu0 0.0
  %2922 = vmatpush1.msra.mxu0 %v65
  %2923 = vmatprep.subr.mxu0 0.0
  %2924 = vmatpush1.msra.mxu0 %v66
  %2925 = vmatprep.subr.mxu0 0.0
  %2926 = vmatpush1.msra.mxu0 %v67
  %2927 = vmatprep.subr.mxu0 0.0
  %2928 = vmatpush1.msra.mxu0 %v68
  %2929 = vmatprep.subr.mxu0 0.0
  %2930 = vmatpush1.msra.mxu0 %v69
  %2931 = vmatprep.subr.mxu0 0.0
  %2932 = vmatpush1.msra.mxu0 %v70
  %2933 = vmatprep.subr.mxu0 0.0
  %2934 = vmatpush1.msra.mxu0 %v71
  %2935 = vmatprep.subr.mxu0 0.0
  %2936 = vmatpush1.msra.mxu0 %v72
  %2937 = vmatprep.subr.mxu0 0.0
  %2938 = vmatpush1.msra.mxu0 %v73
  %2939 = vmatprep.subr.mxu0 0.0
  %2940 = vmatpush1.msra.mxu0 %v74
  %2941 = vmatprep.subr.mxu0 0.0
  %2942 = vmatpush1.msra.mxu0 %v75
  %2943 = vmatprep.subr.mxu0 0.0
  %2944 = vmatpush1.msra.mxu0 %v76
  %2945 = vmatprep.subr.mxu0 0.0
  %2946 = vmatpush1.msra.mxu0 %v77
  %2947 = vmatprep.subr.mxu0 0.0
  %2948 = vmatpush1.msra.mxu0 %v78
  %2949 = vmatprep.subr.mxu0 0.0
  %2950 = vmatpush1.msra.mxu0 %v79
  %2951 = vmatprep.subr.mxu0 0.0
  %2952 = vmatpush1.msra.mxu0 %v80
  %2953 = vmatprep.subr.mxu0 0.0
  %2954 = vmatpush1.msra.mxu0 %v81
  %2955 = vmatprep.subr.mxu0 0.0
  %2956 = vmatpush1.msra.mxu0 %v82
  %2957 = vmatprep.subr.mxu0 0.0
  %2958 = vmatpush1.msra.mxu0 %v83
  %2959 = vmatprep.subr.mxu0 0.0
  %2960 = vmatpush1.msra.mxu0 %v84
  %2961 = vmatprep.subr.mxu0 0.0
  %2962 = vmatpush1.msra.mxu0 %v85
  %2963 = vmatprep.subr.mxu0 0.0
  %2964 = vmatpush1.msra.mxu0 %v86
  %2965 = vmatprep.subr.mxu0 0.0
  %2966 = vmatpush1.msra.mxu0 %v87
  %2967 = vmatprep.subr.mxu0 0.0
  %2968 = vmatpush1.msra.mxu0 %v88
  %2969 = vmatprep.subr.mxu0 0.0
  %2970 = vmatpush1.msra.mxu0 %v89
  %2971 = vmatprep.mubr.f32.mxu0 %v2888
  %2972 = vmatmul.mubr.f32.gmra.mrb[0].mxu0 %v2887
  %v2973 = vpop.f32.mrb[0].mxu0
  %v2974 = vadd.f32 0.0, %v2973
  %v2975 = vpop.f32.mrb[0].mxu0
  %2976 = vmatprep.mubr.f32.mxu0 %v2893
  %2977 = vmatmul.mubr.f32.gmra.mrb[0].mxu0 %v2892
  %v2978 = vpop.f32.mrb[0].mxu0
  %v2979 = vadd.f32 0.0, %v2978
  %v2980 = vpop.f32.mrb[0].mxu0
  %2981 = vmatprep.mubr.f32.mxu0 %v2898
  %2982 = vmatmul.mubr.f32.gmra.mrb[0].mxu0 %v2897
  %v2983 = vpop.f32.mrb[0].mxu0
  %v2984 = vadd.f32 0.0, %v2983
  %v2985 = vpop.f32.mrb[0].mxu0
  %2986 = vmatprep.mubr.f32.mxu0 %v2903
  %2987 = vmatmul.mubr.f32.gmra.mrb[0].mxu0 %v2902
  %v2988 = vpop.f32.mrb[0].mxu0
  %v2989 = vadd.f32 0.0, %v2988
  %v2990 = vpop.f32.mrb[0].mxu0
  %2991 = vdwg.mxu0
  %2992 = vmatprep.subr.mxu0 0.0
  %2993 = vmatpush1.msra.mxu0 %v90
  %2994 = vmatprep.subr.mxu0 0.0
  %2995 = vmatpush1.msra.mxu0 %v91
  %2996 = vmatprep.subr.mxu0 0.0
  %2997 = vmatpush1.msra.mxu0 %v92
  %2998 = vmatprep.subr.mxu0 0.0
  %2999 = vmatpush1.msra.mxu0 %v93
  %3000 = vmatprep.subr.mxu0 0.0
  %3001 = vmatpush1.msra.mxu0 %v94
  %3002 = vmatprep.subr.mxu0 0.0
  %3003 = vmatpush1.msra.mxu0 %v95
  %3004 = vmatprep.subr.mxu0 0.0
  %3005 = vmatpush1.msra.mxu0 %v96
  %3006 = vmatprep.subr.mxu0 0.0
  %3007 = vmatpush1.msra.mxu0 %v97
  %3008 = vmatprep.subr.mxu0 0.0
  %3009 = vmatpush1.msra.mxu0 %v98
  %3010 = vmatprep.subr.mxu0 0.0
  %3011 = vmatpush1.msra.mxu0 %v99
  %3012 = vmatprep.subr.mxu0 0.0
  %3013 = vmatpush1.msra.mxu0 %v100
  %3014 = vmatprep.subr.mxu0 0.0
  %3015 = vmatpush1.msra.mxu0 %v101
  %3016 = vmatprep.subr.mxu0 0.0
  %3017 = vmatpush1.msra.mxu0 %v102
  %3018 = vmatprep.subr.mxu0 0.0
  %3019 = vmatpush1.msra.mxu0 %v103
  %3020 = vmatprep.subr.mxu0 0.0
  %3021 = vmatpush1.msra.mxu0 %v104
  %3022 = vmatprep.subr.mxu0 0.0
  %3023 = vmatpush1.msra.mxu0 %v105
  %3024 = vmatprep.subr.mxu0 0.0
  %3025 = vmatpush1.msra.mxu0 %v106
  %3026 = vmatprep.subr.mxu0 0.0
  %3027 = vmatpush1.msra.mxu0 %v107
  %3028 = vmatprep.subr.mxu0 0.0
  %3029 = vmatpush1.msra.mxu0 %v108
  %3030 = vmatprep.subr.mxu0 0.0
  %3031 = vmatpush1.msra.mxu0 %v109
  %3032 = vmatprep.subr.mxu0 0.0
  %3033 = vmatpush1.msra.mxu0 %v110
  %3034 = vmatprep.subr.mxu0 0.0
  %3035 = vmatpush1.msra.mxu0 %v111
  %3036 = vmatprep.subr.mxu0 0.0
  %3037 = vmatpush1.msra.mxu0 %v112
  %3038 = vmatprep.subr.mxu0 0.0
  %3039 = vmatpush1.msra.mxu0 %v113
  %3040 = vmatprep.subr.mxu0 0.0
  %3041 = vmatpush1.msra.mxu0 %v114
  %3042 = vmatprep.subr.mxu0 0.0
  %3043 = vmatpush1.msra.mxu0 %v115
  %3044 = vmatprep.subr.mxu0 0.0
  %3045 = vmatpush1.msra.mxu0 %v116
  %3046 = vmatprep.subr.mxu0 0.0
  %3047 = vmatpush1.msra.mxu0 %v117
  %3048 = vmatprep.subr.mxu0 0.0
  %3049 = vmatpush1.msra.mxu0 %v118
  %3050 = vmatprep.subr.mxu0 0.0
  %3051 = vmatpush1.msra.mxu0 %v119
  %3052 = vmatprep.subr.mxu0 0.0
  %3053 = vmatpush1.msra.mxu0 %v120
  %3054 = vmatprep.subr.mxu0 0.0
  %3055 = vmatpush1.msra.mxu0 %v121
  %3056 = vmatprep.mubr.f32.mxu0 %v2890
  %3057 = vmatmul.mubr.f32.gmra.mrb[0].mxu0 %v2889
  %v3058 = vpop.f32.mrb[0].mxu0
  %v3059 = vadd.f32 %v2974, %v3058
  %v3060 = vpop.f32.mrb[0].mxu0
  %3061 = vmatprep.mubr.f32.mxu0 %v2895
  %3062 = vmatmul.mubr.f32.gmra.mrb[0].mxu0 %v2894
  %v3063 = vpop.f32.mrb[0].mxu0
  %v3064 = vadd.f32 %v2979, %v3063
  %v3065 = vpop.f32.mrb[0].mxu0
  %3066 = vmatprep.mubr.f32.mxu0 %v2900
  %3067 = vmatmul.mubr.f32.gmra.mrb[0].mxu0 %v2899
  %v3068 = vpop.f32.mrb[0].mxu0
  %v3069 = vadd.f32 %v2984, %v3068
  %v3070 = vpop.f32.mrb[0].mxu0
  %3071 = vmatprep.mubr.f32.mxu0 %v2905
  %3072 = vmatmul.mubr.f32.gmra.mrb[0].mxu0 %v2904
  %v3073 = vpop.f32.mrb[0].mxu0
  %v3074 = vadd.f32 %v2989, %v3073
  %v3075 = vpop.f32.mrb[0].mxu0
  %3076 = vdwg.mxu0
  %3077 = vmatprep.subr.mxu0 0.0
  %3078 = vmatpush1.msra.mxu0 %v122
  %3079 = vmatprep.subr.mxu0 0.0
  %3080 = vmatpush1.msra.mxu0 %v123
  %3081 = vmatprep.subr.mxu0 0.0
  %3082 = vmatpush1.msra.mxu0 %v124
  %3083 = vmatprep.subr.mxu0 0.0
  %3084 = vmatpush1.msra.mxu0 %v125
  %3085 = vmatprep.subr.mxu0 0.0
  %3086 = vmatpush1.msra.mxu0 %v126
  %3087 = vmatprep.subr.mxu0 0.0
  %3088 = vmatpush1.msra.mxu0 %v127
  %3089 = vmatprep.subr.mxu0 0.0
  %3090 = vmatpush1.msra.mxu0 %v128
  %3091 = vmatprep.subr.mxu0 0.0
  %3092 = vmatpush1.msra.mxu0 %v129
  %3093 = vmatprep.subr.mxu0 0.0
  %3094 = vmatpush1.msra.mxu0 %v130
  %3095 = vmatprep.subr.mxu0 0.0
  %3096 = vmatpush1.msra.mxu0 %v131
  %3097 = vmatprep.subr.mxu0 0.0
  %3098 = vmatpush1.msra.mxu0 %v132
  %3099 = vmatprep.subr.mxu0 0.0
  %3100 = vmatpush1.msra.mxu0 %v133
  %3101 = vmatprep.subr.mxu0 0.0
  %3102 = vmatpush1.msra.mxu0 %v134
  %3103 = vmatprep.subr.mxu0 0.0
  %3104 = vmatpush1.msra.mxu0 %v135
  %3105 = vmatprep.subr.mxu0 0.0
  %3106 = vmatpush1.msra.mxu0 %v136
  %3107 = vmatprep.subr.mxu0 0.0
  %3108 = vmatpush1.msra.mxu0 %v137
  %3109 = vmatprep.subr.mxu0 0.0
  %3110 = vmatpush1.msra.mxu0 0.0
  %3111 = vmatprep.subr.mxu0 0.0
  %3112 = vmatpush1.msra.mxu0 0.0
  %3113 = vmatprep.subr.mxu0 0.0
  %3114 = vmatpush1.msra.mxu0 0.0
  %3115 = vmatprep.subr.mxu0 0.0
  %3116 = vmatpush1.msra.mxu0 0.0
  %3117 = vmatprep.subr.mxu0 0.0
  %3118 = vmatpush1.msra.mxu0 0.0
  %3119 = vmatprep.subr.mxu0 0.0
  %3120 = vmatpush1.msra.mxu0 0.0
  %3121 = vmatprep.subr.mxu0 0.0
  %3122 = vmatpush1.msra.mxu0 0.0
  %3123 = vmatprep.subr.mxu0 0.0
  %3124 = vmatpush1.msra.mxu0 0.0
  %3125 = vmatprep.subr.mxu0 0.0
  %3126 = vmatpush1.msra.mxu0 0.0
  %3127 = vmatprep.subr.mxu0 0.0
  %3128 = vmatpush1.msra.mxu0 0.0
  %3129 = vmatprep.subr.mxu0 0.0
  %3130 = vmatpush1.msra.mxu0 0.0
  %3131 = vmatprep.subr.mxu0 0.0
  %3132 = vmatpush1.msra.mxu0 0.0
  %3133 = vmatprep.subr.mxu0 0.0
  %3134 = vmatpush1.msra.mxu0 0.0
  %3135 = vmatprep.subr.mxu0 0.0
  %3136 = vmatpush1.msra.mxu0 0.0
  %3137 = vmatprep.subr.mxu0 0.0
  %3138 = vmatpush1.msra.mxu0 0.0
  %3139 = vmatprep.subr.mxu0 0.0
  %3140 = vmatpush1.msra.mxu0 0.0
  %3141 = vmatprep.mubr.f32.mxu0 0.0
  %3142 = vmatmul.mubr.f32.gmra.mrb[0].mxu0 %v2891
  %v3143 = vpop.f32.mrb[0].mxu0
  %v3144 = vadd.f32 %v3059, %v3143
  %v3145 = vpop.f32.mrb[0].mxu0
  %3146 = vmatprep.mubr.f32.mxu0 0.0
  %3147 = vmatmul.mubr.f32.gmra.mrb[0].mxu0 %v2896
  %v3148 = vpop.f32.mrb[0].mxu0
  %v3149 = vadd.f32 %v3064, %v3148
  %v3150 = vpop.f32.mrb[0].mxu0
  %3151 = vmatprep.mubr.f32.mxu0 0.0
  %3152 = vmatmul.mubr.f32.gmra.mrb[0].mxu0 %v2901
  %v3153 = vpop.f32.mrb[0].mxu0
  %v3154 = vadd.f32 %v3069, %v3153
  %v3155 = vpop.f32.mrb[0].mxu0
  %3156 = vmatprep.mubr.f32.mxu0 0.0
  %3157 = vmatmul.mubr.f32.gmra.mrb[0].mxu0 %v2906
  %v3158 = vpop.f32.mrb[0].mxu0
  %v3159 = vadd.f32 %v3074, %v3158
  %v3160 = vpop.f32.mrb[0].mxu0
  %3161 = vdwg.mxu0
  %v3162 = vmul.f32 %v3144, 0.001953125
  %v3163 = vmul.f32 %v3149, 0.001953125
  %v3164 = vmul.f32 %v3154, 0.001953125
  %v3165 = vmul.f32 %v3159, 0.001953125
  %v3166 = vadd.f32 %v3162, 1e-05
  %v3167 = vadd.f32 %v3163, 1e-05
  %v3168 = vadd.f32 %v3164, 1e-05
  %v3169 = vadd.f32 %v3165, 1e-05
  %v3170 = vrsqrt.pop %v3166
  %v3171 = vrsqrt.pop %v3167
  %v3172 = vrsqrt.pop %v3168
  %v3173 = vrsqrt.pop %v3169
  %3175 = vset.pattern.permute.xlu0 0
  %3176 = vperm.xlu0 %3175, %v3170
  %v3177 = vpop.permute.xlu0 %3176
  %3180 = vset.pattern.permute.xlu0 0
  %3181 = vperm.xlu0 %3180, %v3171
  %v3182 = vpop.permute.xlu0 %3181
  %3185 = vset.pattern.permute.xlu0 0
  %3186 = vperm.xlu0 %3185, %v3172
  %v3187 = vpop.permute.xlu0 %3186
  %3190 = vset.pattern.permute.xlu0 0
  %3191 = vperm.xlu0 %3190, %v3173
  %v3192 = vpop.permute.xlu0 %3191
  %v3194 = vmul.f32 %v2867, %v3177
  %v3195 = vmul.f32 %v2868, %v3177
  %v3196 = vmul.f32 %v2869, %v3177
  %v3197 = vmul.f32 %v2870, %v3177
  %v3198 = vmul.f32 %v2871, %v3177
  %v3199 = vmul.f32 %v2872, %v3182
  %v3200 = vmul.f32 %v2873, %v3182
  %v3201 = vmul.f32 %v2874, %v3182
  %v3202 = vmul.f32 %v2875, %v3182
  %v3203 = vmul.f32 %v2876, %v3182
  %v3204 = vmul.f32 %v2877, %v3187
  %v3205 = vmul.f32 %v2878, %v3187
  %v3206 = vmul.f32 %v2879, %v3187
  %v3207 = vmul.f32 %v2880, %v3187
  %v3208 = vmul.f32 %v2881, %v3187
  %v3209 = vmul.f32 %v2882, %v3192
  %v3210 = vmul.f32 %v2883, %v3192
  %v3211 = vmul.f32 %v2884, %v3192
  %v3212 = vmul.f32 %v2885, %v3192
  %v3213 = vmul.f32 %v2886, %v3192
  %v3214 = vld [vmem:[%s7] sm:$0xff]
  %v3215 = vld [vmem:[%s7 + $0x8] sm:$0xff]
  %v3216 = vld [vmem:[%s7 + $0x10] sm:$0xff]
  %v3217 = vld [vmem:[%s7 + $0x18] sm:$0xff]
  %3219 = vset.pattern.permute.xlu0 0
  %3220 = vperm.xlu0 %3219, %v3214
  %v3221 = vpop.permute.xlu0 %3220
  %3224 = vset.pattern.permute.xlu0 0
  %3225 = vperm.xlu0 %3224, %v3215
  %v3226 = vpop.permute.xlu0 %3225
  %3229 = vset.pattern.permute.xlu0 0
  %3230 = vperm.xlu0 %3229, %v3216
  %v3231 = vpop.permute.xlu0 %3230
  %3234 = vset.pattern.permute.xlu0 0
  %3235 = vperm.xlu0 %3234, %v3217
  %v3236 = vpop.permute.xlu0 %3235
  %v3238 = vmul.f32 %v3194, %v3221
  %v3239 = vmul.f32 %v3195, %v3221
  %v3240 = vmul.f32 %v3196, %v3221
  %v3241 = vmul.f32 %v3197, %v3221
  %v3242 = vmul.f32 %v3198, %v3221
  %v3243 = vmul.f32 %v3199, %v3226
  %v3244 = vmul.f32 %v3200, %v3226
  %v3245 = vmul.f32 %v3201, %v3226
  %v3246 = vmul.f32 %v3202, %v3226
  %v3247 = vmul.f32 %v3203, %v3226
  %v3248 = vmul.f32 %v3204, %v3231
  %v3249 = vmul.f32 %v3205, %v3231
  %v3250 = vmul.f32 %v3206, %v3231
  %v3251 = vmul.f32 %v3207, %v3231
  %v3252 = vmul.f32 %v3208, %v3231
  %v3253 = vmul.f32 %v3209, %v3236
  %v3254 = vmul.f32 %v3210, %v3236
  %v3255 = vmul.f32 %v3211, %v3236
  %v3256 = vmul.f32 %v3212, %v3236
  %v3257 = vmul.f32 %v3213, %v3236
  %v3258 = vld [vmem:[%s8] sm:$0xff]
  %v3259 = vld [vmem:[%s8 + $0x8] sm:$0xff]
  %v3260 = vld [vmem:[%s8 + $0x10] sm:$0xff]
  %v3261 = vld [vmem:[%s8 + $0x18] sm:$0xff]
  %3263 = vset.pattern.permute.xlu0 0
  %3264 = vperm.xlu0 %3263, %v3258
  %v3265 = vpop.permute.xlu0 %3264
  %3268 = vset.pattern.permute.xlu0 0
  %3269 = vperm.xlu0 %3268, %v3259
  %v3270 = vpop.permute.xlu0 %3269
  %3273 = vset.pattern.permute.xlu0 0
  %3274 = vperm.xlu0 %3273, %v3260
  %v3275 = vpop.permute.xlu0 %3274
  %3278 = vset.pattern.permute.xlu0 0
  %3279 = vperm.xlu0 %3278, %v3261
  %v3280 = vpop.permute.xlu0 %3279
  %v3282 = vadd.f32 %v3238, %v3265
  %v3283 = vadd.f32 %v3239, %v3265
  %v3284 = vadd.f32 %v3240, %v3265
  %v3285 = vadd.f32 %v3241, %v3265
  %v3286 = vadd.f32 %v3242, %v3265
  %v3287 = vadd.f32 %v3243, %v3270
  %v3288 = vadd.f32 %v3244, %v3270
  %v3289 = vadd.f32 %v3245, %v3270
  %v3290 = vadd.f32 %v3246, %v3270
  %v3291 = vadd.f32 %v3247, %v3270
  %v3292 = vadd.f32 %v3248, %v3275
  %v3293 = vadd.f32 %v3249, %v3275
  %v3294 = vadd.f32 %v3250, %v3275
  %v3295 = vadd.f32 %v3251, %v3275
  %v3296 = vadd.f32 %v3252, %v3275
  %v3297 = vadd.f32 %v3253, %v3280
  %v3298 = vadd.f32 %v3254, %v3280
  %v3299 = vadd.f32 %v3255, %v3280
  %v3300 = vadd.f32 %v3256, %v3280
  %v3301 = vadd.f32 %v3257, %v3280
  %v3302 = vmax.f32 %v3282, 0.0
  %v3303 = vmax.f32 %v3283, 0.0
  %v3304 = vmax.f32 %v3284, 0.0
  %v3305 = vmax.f32 %v3285, 0.0
  %v3306 = vmax.f32 %v3286, 0.0
  %v3307 = vmax.f32 %v3287, 0.0
  %v3308 = vmax.f32 %v3288, 0.0
  %v3309 = vmax.f32 %v3289, 0.0
  %v3310 = vmax.f32 %v3290, 0.0
  %v3311 = vmax.f32 %v3291, 0.0
  %v3312 = vmax.f32 %v3292, 0.0
  %v3313 = vmax.f32 %v3293, 0.0
  %v3314 = vmax.f32 %v3294, 0.0
  %v3315 = vmax.f32 %v3295, 0.0
  %v3316 = vmax.f32 %v3296, 0.0
  %v3317 = vmax.f32 %v3297, 0.0
  %v3318 = vmax.f32 %v3298, 0.0
  %v3319 = vmax.f32 %v3299, 0.0
  %v3320 = vmax.f32 %v3300, 0.0
  %v3321 = vmax.f32 %v3301, 0.0
  %v3322 = vmul.f32 %v3302, %v1006
  %v3323 = vmul.f32 %v3303, %v1010
  %v3324 = vmul.f32 %v3304, %v1014
  %v3325 = vmul.f32 %v3305, %v1018
  %v3326 = vmul.f32 %v3306, %v1022
  %v3327 = vmul.f32 %v3307, %v1006
  %v3328 = vmul.f32 %v3308, %v1010
  %v3329 = vmul.f32 %v3309, %v1014
  %v3330 = vmul.f32 %v3310, %v1018
  %v3331 = vmul.f32 %v3311, %v1022
  %v3332 = vmul.f32 %v3312, %v1006
  %v3333 = vmul.f32 %v3313, %v1010
  %v3334 = vmul.f32 %v3314, %v1014
  %v3335 = vmul.f32 %v3315, %v1018
  %v3336 = vmul.f32 %v3316, %v1022
  %v3337 = vmul.f32 %v3317, %v1006
  %v3338 = vmul.f32 %v3318, %v1010
  %v3339 = vmul.f32 %v3319, %v1014
  %v3340 = vmul.f32 %v3320, %v1018
  %v3341 = vmul.f32 %v3321, %v1022
  %v3342 = vpack.c.bf16 %v3327, %v3322
  %v3343 = vpack.c.bf16 %v3328, %v3323
  %v3344 = vpack.c.bf16 %v3329, %v3324
  %v3345 = vpack.c.bf16 %v3330, %v3325
  %v3346 = vpack.c.bf16 %v3331, %v3326
  %v3347 = vpack.c.bf16 %v3337, %v3332
  %v3348 = vpack.c.bf16 %v3338, %v3333
  %v3349 = vpack.c.bf16 %v3339, %v3334
  %v3350 = vpack.c.bf16 %v3340, %v3335
  %v3351 = vpack.c.bf16 %v3341, %v3336
  %3352 = vst [vmem:[#allocation2 + $0x8] sm:$0xff] %v3342
  %3353 = vst [vmem:[#allocation2 + $0x10] sm:$0xff] %v3343
  %3354 = vst [vmem:[#allocation2 + $0x18] sm:$0xff] %v3344
  %3355 = vst [vmem:[#allocation2 + $0x20] sm:$0xff] %v3345
  %3356 = vst [vmem:[#allocation2 + $0x28] sm:$0xff] %v3346
  %3357 = vst [vmem:[#allocation2 + $0x40] sm:$0xff] %v3347
  %3358 = vst [vmem:[#allocation2 + $0x48] sm:$0xff] %v3348
  %3359 = vst [vmem:[#allocation2 + $0x50] sm:$0xff] %v3349
  %3360 = vst [vmem:[#allocation2 + $0x58] sm:$0xff] %v3350
  %3361 = vst [vmem:[#allocation2 + $0x60] sm:$0xff] %v3351
  %v3362 = vld [vmem:[#allocation2] sm:$0xff]
  %v3363 = vld [vmem:[#allocation2 + $0x8] sm:$0xff]
  %v3364 = vld [vmem:[#allocation2 + $0x10] sm:$0xff]
  %v3365 = vld [vmem:[#allocation2 + $0x18] sm:$0xff]
  %v3366 = vld [vmem:[#allocation2 + $0x20] sm:$0xff]
  %v3367 = vld [vmem:[#allocation2 + $0x28] sm:$0xff]
  %v3368 = vld [vmem:[#allocation2 + $0x30] sm:$0xff]
  %v3369 = vld [vmem:[#allocation2 + $0x38] sm:$0xff]
  %v3370 = vld [vmem:[#allocation2 + $0x40] sm:$0xff]
  %v3371 = vld [vmem:[#allocation2 + $0x48] sm:$0xff]
  %v3372 = vld [vmem:[#allocation2 + $0x50] sm:$0xff]
  %v3373 = vld [vmem:[#allocation2 + $0x58] sm:$0xff]
  %v3374 = vld [vmem:[#allocation2 + $0x60] sm:$0xff]
  %v3375 = vld [vmem:[#allocation2 + $0x68] sm:$0xff]
  %3388 = vrot.lane.b32.xlu0 %v3362, 127
  %v3389 = vpop.permute.xlu0 %3388
  %3390 = vrot.lane.b32.xlu0 %v3363, 127
  %v3391 = vpop.permute.xlu0 %3390
  %3392 = vrot.lane.b32.xlu0 %v3364, 127
  %v3393 = vpop.permute.xlu0 %3392
  %3394 = vrot.lane.b32.xlu0 %v3365, 127
  %v3395 = vpop.permute.xlu0 %3394
  %3396 = vrot.lane.b32.xlu0 %v3366, 127
  %v3397 = vpop.permute.xlu0 %3396
  %3398 = vrot.lane.b32.xlu0 %v3367, 127
  %v3399 = vpop.permute.xlu0 %3398
  %3400 = vrot.lane.b32.xlu0 %v3369, 127
  %v3401 = vpop.permute.xlu0 %3400
  %3402 = vrot.lane.b32.xlu0 %v3370, 127
  %v3403 = vpop.permute.xlu0 %3402
  %3404 = vrot.lane.b32.xlu0 %v3371, 127
  %v3405 = vpop.permute.xlu0 %3404
  %3406 = vrot.lane.b32.xlu0 %v3372, 127
  %v3407 = vpop.permute.xlu0 %3406
  %3408 = vrot.lane.b32.xlu0 %v3373, 127
  %v3409 = vpop.permute.xlu0 %3408
  %3410 = vrot.lane.b32.xlu0 %v3374, 127
  %v3411 = vpop.permute.xlu0 %3410
  %v3412 = vsel %vm186, %v3389, %v3391
  %v3413 = vsel %vm186, %v3391, %v3393
  %v3414 = vsel %vm186, %v3393, %v3395
  %v3415 = vsel %vm186, %v3395, %v3397
  %v3416 = vsel %vm186, %v3397, %v3399
  %v3417 = vsel %vm186, %v3401, %v3403
  %v3418 = vsel %vm186, %v3403, %v3405
  %v3419 = vsel %vm186, %v3405, %v3407
  %v3420 = vsel %vm186, %v3407, %v3409
  %v3421 = vsel %vm186, %v3409, %v3411
  %3422 = vrot.lane.b32.xlu0 %v3362, 126
  %v3423 = vpop.permute.xlu0 %3422
  %3424 = vrot.lane.b32.xlu0 %v3363, 126
  %v3425 = vpop.permute.xlu0 %3424
  %3426 = vrot.lane.b32.xlu0 %v3364, 126
  %v3427 = vpop.permute.xlu0 %3426
  %3428 = vrot.lane.b32.xlu0 %v3365, 126
  %v3429 = vpop.permute.xlu0 %3428
  %3430 = vrot.lane.b32.xlu0 %v3366, 126
  %v3431 = vpop.permute.xlu0 %3430
  %3432 = vrot.lane.b32.xlu0 %v3367, 126
  %v3433 = vpop.permute.xlu0 %3432
  %3434 = vrot.lane.b32.xlu0 %v3369, 126
  %v3435 = vpop.permute.xlu0 %3434
  %3436 = vrot.lane.b32.xlu0 %v3370, 126
  %v3437 = vpop.permute.xlu0 %3436
  %3438 = vrot.lane.b32.xlu0 %v3371, 126
  %v3439 = vpop.permute.xlu0 %3438
  %3440 = vrot.lane.b32.xlu0 %v3372, 126
  %v3441 = vpop.permute.xlu0 %3440
  %3442 = vrot.lane.b32.xlu0 %v3373, 126
  %v3443 = vpop.permute.xlu0 %3442
  %3444 = vrot.lane.b32.xlu0 %v3374, 126
  %v3445 = vpop.permute.xlu0 %3444
  %v3446 = vsel %vm204, %v3423, %v3425
  %v3447 = vsel %vm204, %v3425, %v3427
  %v3448 = vsel %vm204, %v3427, %v3429
  %v3449 = vsel %vm204, %v3429, %v3431
  %v3450 = vsel %vm204, %v3431, %v3433
  %v3451 = vsel %vm204, %v3435, %v3437
  %v3452 = vsel %vm204, %v3437, %v3439
  %v3453 = vsel %vm204, %v3439, %v3441
  %v3454 = vsel %vm204, %v3441, %v3443
  %v3455 = vsel %vm204, %v3443, %v3445
  %3456 = vrot.lane.b32.xlu0 %v3362, 111
  %v3457 = vpop.permute.xlu0 %3456
  %3458 = vrot.lane.b32.xlu0 %v3363, 111
  %v3459 = vpop.permute.xlu0 %3458
  %3460 = vrot.lane.b32.xlu0 %v3364, 111
  %v3461 = vpop.permute.xlu0 %3460
  %3462 = vrot.lane.b32.xlu0 %v3365, 111
  %v3463 = vpop.permute.xlu0 %3462
  %3464 = vrot.lane.b32.xlu0 %v3366, 111
  %v3465 = vpop.permute.xlu0 %3464
  %3466 = vrot.lane.b32.xlu0 %v3367, 111
  %v3467 = vpop.permute.xlu0 %3466
  %3468 = vrot.lane.b32.xlu0 %v3369, 111
  %v3469 = vpop.permute.xlu0 %3468
  %3470 = vrot.lane.b32.xlu0 %v3370, 111
  %v3471 = vpop.permute.xlu0 %3470
  %3472 = vrot.lane.b32.xlu0 %v3371, 111
  %v3473 = vpop.permute.xlu0 %3472
  %3474 = vrot.lane.b32.xlu0 %v3372, 111
  %v3475 = vpop.permute.xlu0 %3474
  %3476 = vrot.lane.b32.xlu0 %v3373, 111
  %v3477 = vpop.permute.xlu0 %3476
  %3478 = vrot.lane.b32.xlu0 %v3374, 111
  %v3479 = vpop.permute.xlu0 %3478
  %v3480 = vsel %vm222, %v3457, %v3459
  %v3481 = vsel %vm222, %v3459, %v3461
  %v3482 = vsel %vm222, %v3461, %v3463
  %v3483 = vsel %vm222, %v3463, %v3465
  %v3484 = vsel %vm222, %v3465, %v3467
  %v3485 = vsel %vm222, %v3469, %v3471
  %v3486 = vsel %vm222, %v3471, %v3473
  %v3487 = vsel %vm222, %v3473, %v3475
  %v3488 = vsel %vm222, %v3475, %v3477
  %v3489 = vsel %vm222, %v3477, %v3479
  %3490 = vrot.lane.b32.xlu0 %v3363, 110
  %v3491 = vpop.permute.xlu0 %3490
  %3492 = vrot.lane.b32.xlu0 %v3364, 110
  %v3493 = vpop.permute.xlu0 %3492
  %3494 = vrot.lane.b32.xlu0 %v3365, 110
  %v3495 = vpop.permute.xlu0 %3494
  %3496 = vrot.lane.b32.xlu0 %v3366, 110
  %v3497 = vpop.permute.xlu0 %3496
  %3498 = vrot.lane.b32.xlu0 %v3367, 110
  %v3499 = vpop.permute.xlu0 %3498
  %3500 = vrot.lane.b32.xlu0 %v3370, 110
  %v3501 = vpop.permute.xlu0 %3500
  %3502 = vrot.lane.b32.xlu0 %v3371, 110
  %v3503 = vpop.permute.xlu0 %3502
  %3504 = vrot.lane.b32.xlu0 %v3372, 110
  %v3505 = vpop.permute.xlu0 %3504
  %3506 = vrot.lane.b32.xlu0 %v3373, 110
  %v3507 = vpop.permute.xlu0 %3506
  %3508 = vrot.lane.b32.xlu0 %v3374, 110
  %v3509 = vpop.permute.xlu0 %3508
  %v3510 = vsel %vm238, %v3491, %v3493
  %v3511 = vsel %vm238, %v3493, %v3495
  %v3512 = vsel %vm238, %v3495, %v3497
  %v3513 = vsel %vm238, %v3497, %v3499
  %v3514 = vsel %vm238, %v3501, %v3503
  %v3515 = vsel %vm238, %v3503, %v3505
  %v3516 = vsel %vm238, %v3505, %v3507
  %v3517 = vsel %vm238, %v3507, %v3509
  %3520 = vrot.lane.b32.xlu0 %v3363, 109
  %v3521 = vpop.permute.xlu0 %3520
  %3522 = vrot.lane.b32.xlu0 %v3364, 109
  %v3523 = vpop.permute.xlu0 %3522
  %3524 = vrot.lane.b32.xlu0 %v3365, 109
  %v3525 = vpop.permute.xlu0 %3524
  %3526 = vrot.lane.b32.xlu0 %v3366, 109
  %v3527 = vpop.permute.xlu0 %3526
  %3528 = vrot.lane.b32.xlu0 %v3367, 109
  %v3529 = vpop.permute.xlu0 %3528
  %3530 = vrot.lane.b32.xlu0 %v3368, 109
  %v3531 = vpop.permute.xlu0 %3530
  %3532 = vrot.lane.b32.xlu0 %v3370, 109
  %v3533 = vpop.permute.xlu0 %3532
  %3534 = vrot.lane.b32.xlu0 %v3371, 109
  %v3535 = vpop.permute.xlu0 %3534
  %3536 = vrot.lane.b32.xlu0 %v3372, 109
  %v3537 = vpop.permute.xlu0 %3536
  %3538 = vrot.lane.b32.xlu0 %v3373, 109
  %v3539 = vpop.permute.xlu0 %3538
  %3540 = vrot.lane.b32.xlu0 %v3374, 109
  %v3541 = vpop.permute.xlu0 %3540
  %3542 = vrot.lane.b32.xlu0 %v3375, 109
  %v3543 = vpop.permute.xlu0 %3542
  %v3544 = vsel %vm260, %v3521, %v3523
  %v3545 = vsel %vm260, %v3523, %v3525
  %v3546 = vsel %vm260, %v3525, %v3527
  %v3547 = vsel %vm260, %v3527, %v3529
  %v3548 = vsel %vm260, %v3529, %v3531
  %v3549 = vsel %vm260, %v3533, %v3535
  %v3550 = vsel %vm260, %v3535, %v3537
  %v3551 = vsel %vm260, %v3537, %v3539
  %v3552 = vsel %vm260, %v3539, %v3541
  %v3553 = vsel %vm260, %v3541, %v3543
  %3554 = vrot.lane.b32.xlu0 %v3363, 94
  %v3555 = vpop.permute.xlu0 %3554
  %3556 = vrot.lane.b32.xlu0 %v3364, 94
  %v3557 = vpop.permute.xlu0 %3556
  %3558 = vrot.lane.b32.xlu0 %v3365, 94
  %v3559 = vpop.permute.xlu0 %3558
  %3560 = vrot.lane.b32.xlu0 %v3366, 94
  %v3561 = vpop.permute.xlu0 %3560
  %3562 = vrot.lane.b32.xlu0 %v3367, 94
  %v3563 = vpop.permute.xlu0 %3562
  %3564 = vrot.lane.b32.xlu0 %v3368, 94
  %v3565 = vpop.permute.xlu0 %3564
  %3566 = vrot.lane.b32.xlu0 %v3370, 94
  %v3567 = vpop.permute.xlu0 %3566
  %3568 = vrot.lane.b32.xlu0 %v3371, 94
  %v3569 = vpop.permute.xlu0 %3568
  %3570 = vrot.lane.b32.xlu0 %v3372, 94
  %v3571 = vpop.permute.xlu0 %3570
  %3572 = vrot.lane.b32.xlu0 %v3373, 94
  %v3573 = vpop.permute.xlu0 %3572
  %3574 = vrot.lane.b32.xlu0 %v3374, 94
  %v3575 = vpop.permute.xlu0 %3574
  %3576 = vrot.lane.b32.xlu0 %v3375, 94
  %v3577 = vpop.permute.xlu0 %3576
  %v3578 = vsel %vm278, %v3555, %v3557
  %v3579 = vsel %vm278, %v3557, %v3559
  %v3580 = vsel %vm278, %v3559, %v3561
  %v3581 = vsel %vm278, %v3561, %v3563
  %v3582 = vsel %vm278, %v3563, %v3565
  %v3583 = vsel %vm278, %v3567, %v3569
  %v3584 = vsel %vm278, %v3569, %v3571
  %v3585 = vsel %vm278, %v3571, %v3573
  %v3586 = vsel %vm278, %v3573, %v3575
  %v3587 = vsel %vm278, %v3575, %v3577
  %3588 = vrot.lane.b32.xlu0 %v3363, 93
  %v3589 = vpop.permute.xlu0 %3588
  %3590 = vrot.lane.b32.xlu0 %v3364, 93
  %v3591 = vpop.permute.xlu0 %3590
  %3592 = vrot.lane.b32.xlu0 %v3365, 93
  %v3593 = vpop.permute.xlu0 %3592
  %3594 = vrot.lane.b32.xlu0 %v3366, 93
  %v3595 = vpop.permute.xlu0 %3594
  %3596 = vrot.lane.b32.xlu0 %v3367, 93
  %v3597 = vpop.permute.xlu0 %3596
  %3598 = vrot.lane.b32.xlu0 %v3368, 93
  %v3599 = vpop.permute.xlu0 %3598
  %3600 = vrot.lane.b32.xlu0 %v3370, 93
  %v3601 = vpop.permute.xlu0 %3600
  %3602 = vrot.lane.b32.xlu0 %v3371, 93
  %v3603 = vpop.permute.xlu0 %3602
  %3604 = vrot.lane.b32.xlu0 %v3372, 93
  %v3605 = vpop.permute.xlu0 %3604
  %3606 = vrot.lane.b32.xlu0 %v3373, 93
  %v3607 = vpop.permute.xlu0 %3606
  %3608 = vrot.lane.b32.xlu0 %v3374, 93
  %v3609 = vpop.permute.xlu0 %3608
  %3610 = vrot.lane.b32.xlu0 %v3375, 93
  %v3611 = vpop.permute.xlu0 %3610
  %v3612 = vsel %vm296, %v3589, %v3591
  %v3613 = vsel %vm296, %v3591, %v3593
  %v3614 = vsel %vm296, %v3593, %v3595
  %v3615 = vsel %vm296, %v3595, %v3597
  %v3616 = vsel %vm296, %v3597, %v3599
  %v3617 = vsel %vm296, %v3601, %v3603
  %v3618 = vsel %vm296, %v3603, %v3605
  %v3619 = vsel %vm296, %v3605, %v3607
  %v3620 = vsel %vm296, %v3607, %v3609
  %v3621 = vsel %vm296, %v3609, %v3611
  %3622 = vrot.lane.b32.xlu0 %v3363, 92
  %v3623 = vpop.permute.xlu0 %3622
  %3624 = vrot.lane.b32.xlu0 %v3364, 92
  %v3625 = vpop.permute.xlu0 %3624
  %3626 = vrot.lane.b32.xlu0 %v3365, 92
  %v3627 = vpop.permute.xlu0 %3626
  %3628 = vrot.lane.b32.xlu0 %v3366, 92
  %v3629 = vpop.permute.xlu0 %3628
  %3630 = vrot.lane.b32.xlu0 %v3367, 92
  %v3631 = vpop.permute.xlu0 %3630
  %3632 = vrot.lane.b32.xlu0 %v3368, 92
  %v3633 = vpop.permute.xlu0 %3632
  %3634 = vrot.lane.b32.xlu0 %v3370, 92
  %v3635 = vpop.permute.xlu0 %3634
  %3636 = vrot.lane.b32.xlu0 %v3371, 92
  %v3637 = vpop.permute.xlu0 %3636
  %3638 = vrot.lane.b32.xlu0 %v3372, 92
  %v3639 = vpop.permute.xlu0 %3638
  %3640 = vrot.lane.b32.xlu0 %v3373, 92
  %v3641 = vpop.permute.xlu0 %3640
  %3642 = vrot.lane.b32.xlu0 %v3374, 92
  %v3643 = vpop.permute.xlu0 %3642
  %3644 = vrot.lane.b32.xlu0 %v3375, 92
  %v3645 = vpop.permute.xlu0 %3644
  %v3646 = vsel %vm314, %v3623, %v3625
  %v3647 = vsel %vm314, %v3625, %v3627
  %v3648 = vsel %vm314, %v3627, %v3629
  %v3649 = vsel %vm314, %v3629, %v3631
  %v3650 = vsel %vm314, %v3631, %v3633
  %v3651 = vsel %vm314, %v3635, %v3637
  %v3652 = vsel %vm314, %v3637, %v3639
  %v3653 = vsel %vm314, %v3639, %v3641
  %v3654 = vsel %vm314, %v3641, %v3643
  %v3655 = vsel %vm314, %v3643, %v3645
  %v3656 = vld [vmem:[%s9] sm:$0xff]
  %v3657 = vld [vmem:[%s9 + $0x8] sm:$0xf]
  %v3658 = vld [vmem:[%s9 + $0xc] sm:$0xff]
  %v3659 = vld [vmem:[%s9 + $0x14] sm:$0xf]
  %v3660 = vld [vmem:[%s9 + $0x18] sm:$0xff]
  %v3661 = vld [vmem:[%s9 + $0x20] sm:$0xf]
  %v3662 = vld [vmem:[%s9 + $0x24] sm:$0xff]
  %v3663 = vld [vmem:[%s9 + $0x2c] sm:$0xf]
  %v3672 = vunpack.c.l.b16 %v3656
  %v3673 = vunpack.c.h.b16 %v3656
  %v3674 = vunpack.c.l.b16 %v3657
  %v3675 = vunpack.c.l.b16 %v3658
  %v3676 = vunpack.c.h.b16 %v3658
  %v3677 = vunpack.c.l.b16 %v3659
  %v3678 = vunpack.c.l.b16 %v3660
  %v3679 = vunpack.c.h.b16 %v3660
  %v3680 = vunpack.c.l.b16 %v3661
  %v3681 = vunpack.c.l.b16 %v3662
  %v3682 = vunpack.c.h.b16 %v3662
  %v3683 = vunpack.c.l.b16 %v3663
  %v3684 = vpack.c.b16 %v3675, %v3672
  %v3685 = vpack.c.b16 %v3676, %v3673
  %v3686 = vpack.c.b16 %v3677, %v3674
  %v3687 = vpack.c.b16 %v3681, %v3678
  %v3688 = vpack.c.b16 %v3682, %v3679
  %v3689 = vpack.c.b16 %v3683, %v3680
  %3694 = vrot.lane.b32.xlu0 %v3362, 18
  %v3695 = vpop.permute.xlu0 %3694
  %3696 = vrot.lane.b32.xlu0 %v3363, 18
  %v3697 = vpop.permute.xlu0 %3696
  %3698 = vrot.lane.b32.xlu0 %v3364, 18
  %v3699 = vpop.permute.xlu0 %3698
  %3700 = vrot.lane.b32.xlu0 %v3365, 18
  %v3701 = vpop.permute.xlu0 %3700
  %3702 = vrot.lane.b32.xlu0 %v3366, 18
  %v3703 = vpop.permute.xlu0 %3702
  %3704 = vrot.lane.b32.xlu0 %v3367, 18
  %v3705 = vpop.permute.xlu0 %3704
  %3706 = vrot.lane.b32.xlu0 %v3369, 18
  %v3707 = vpop.permute.xlu0 %3706
  %3708 = vrot.lane.b32.xlu0 %v3370, 18
  %v3709 = vpop.permute.xlu0 %3708
  %3710 = vrot.lane.b32.xlu0 %v3371, 18
  %v3711 = vpop.permute.xlu0 %3710
  %3712 = vrot.lane.b32.xlu0 %v3372, 18
  %v3713 = vpop.permute.xlu0 %3712
  %3714 = vrot.lane.b32.xlu0 %v3373, 18
  %v3715 = vpop.permute.xlu0 %3714
  %3716 = vrot.lane.b32.xlu0 %v3374, 18
  %v3717 = vpop.permute.xlu0 %3716
  %3718 = vrot.lane.b32.xlu0 %v3412, 18
  %v3719 = vpop.permute.xlu0 %3718
  %3720 = vrot.lane.b32.xlu0 %v3413, 18
  %v3721 = vpop.permute.xlu0 %3720
  %3722 = vrot.lane.b32.xlu0 %v3414, 18
  %v3723 = vpop.permute.xlu0 %3722
  %3724 = vrot.lane.b32.xlu0 %v3415, 18
  %v3725 = vpop.permute.xlu0 %3724
  %3726 = vrot.lane.b32.xlu0 %v3416, 18
  %v3727 = vpop.permute.xlu0 %3726
  %3728 = vrot.lane.b32.xlu0 %v3399, 18
  %v3729 = vpop.permute.xlu0 %3728
  %3730 = vrot.lane.b32.xlu0 %v3417, 18
  %v3731 = vpop.permute.xlu0 %3730
  %3732 = vrot.lane.b32.xlu0 %v3418, 18
  %v3733 = vpop.permute.xlu0 %3732
  %3734 = vrot.lane.b32.xlu0 %v3419, 18
  %v3735 = vpop.permute.xlu0 %3734
  %3736 = vrot.lane.b32.xlu0 %v3420, 18
  %v3737 = vpop.permute.xlu0 %3736
  %3738 = vrot.lane.b32.xlu0 %v3421, 18
  %v3739 = vpop.permute.xlu0 %3738
  %3740 = vrot.lane.b32.xlu0 %v3411, 18
  %v3741 = vpop.permute.xlu0 %3740
  %3742 = vrot.lane.b32.xlu0 %v3446, 18
  %v3743 = vpop.permute.xlu0 %3742
  %3744 = vrot.lane.b32.xlu0 %v3447, 18
  %v3745 = vpop.permute.xlu0 %3744
  %3746 = vrot.lane.b32.xlu0 %v3448, 18
  %v3747 = vpop.permute.xlu0 %3746
  %3748 = vrot.lane.b32.xlu0 %v3449, 18
  %v3749 = vpop.permute.xlu0 %3748
  %3750 = vrot.lane.b32.xlu0 %v3450, 18
  %v3751 = vpop.permute.xlu0 %3750
  %3752 = vrot.lane.b32.xlu0 %v3433, 18
  %v3753 = vpop.permute.xlu0 %3752
  %3754 = vrot.lane.b32.xlu0 %v3451, 18
  %v3755 = vpop.permute.xlu0 %3754
  %3756 = vrot.lane.b32.xlu0 %v3452, 18
  %v3757 = vpop.permute.xlu0 %3756
  %3758 = vrot.lane.b32.xlu0 %v3453, 18
  %v3759 = vpop.permute.xlu0 %3758
  %3760 = vrot.lane.b32.xlu0 %v3454, 18
  %v3761 = vpop.permute.xlu0 %3760
  %3762 = vrot.lane.b32.xlu0 %v3455, 18
  %v3763 = vpop.permute.xlu0 %3762
  %3764 = vrot.lane.b32.xlu0 %v3445, 18
  %v3765 = vpop.permute.xlu0 %3764
  %3766 = vrot.lane.b32.xlu0 %v3480, 18
  %v3767 = vpop.permute.xlu0 %3766
  %3768 = vrot.lane.b32.xlu0 %v3481, 18
  %v3769 = vpop.permute.xlu0 %3768
  %3770 = vrot.lane.b32.xlu0 %v3482, 18
  %v3771 = vpop.permute.xlu0 %3770
  %3772 = vrot.lane.b32.xlu0 %v3483, 18
  %v3773 = vpop.permute.xlu0 %3772
  %3774 = vrot.lane.b32.xlu0 %v3484, 18
  %v3775 = vpop.permute.xlu0 %3774
  %3776 = vrot.lane.b32.xlu0 %v3467, 18
  %v3777 = vpop.permute.xlu0 %3776
  %3778 = vrot.lane.b32.xlu0 %v3485, 18
  %v3779 = vpop.permute.xlu0 %3778
  %3780 = vrot.lane.b32.xlu0 %v3486, 18
  %v3781 = vpop.permute.xlu0 %3780
  %3782 = vrot.lane.b32.xlu0 %v3487, 18
  %v3783 = vpop.permute.xlu0 %3782
  %3784 = vrot.lane.b32.xlu0 %v3488, 18
  %v3785 = vpop.permute.xlu0 %3784
  %3786 = vrot.lane.b32.xlu0 %v3489, 18
  %v3787 = vpop.permute.xlu0 %3786
  %3788 = vrot.lane.b32.xlu0 %v3479, 18
  %v3789 = vpop.permute.xlu0 %3788
  %3790 = vrot.lane.b32.xlu0 %v3491, 18
  %v3791 = vpop.permute.xlu0 %3790
  %3792 = vrot.lane.b32.xlu0 %v3510, 18
  %v3793 = vpop.permute.xlu0 %3792
  %3794 = vrot.lane.b32.xlu0 %v3511, 18
  %v3795 = vpop.permute.xlu0 %3794
  %3796 = vrot.lane.b32.xlu0 %v3512, 18
  %v3797 = vpop.permute.xlu0 %3796
  %3798 = vrot.lane.b32.xlu0 %v3513, 18
  %v3799 = vpop.permute.xlu0 %3798
  %3800 = vrot.lane.b32.xlu0 %v3499, 18
  %v3801 = vpop.permute.xlu0 %3800
  %3802 = vrot.lane.b32.xlu0 %v3501, 18
  %v3803 = vpop.permute.xlu0 %3802
  %3804 = vrot.lane.b32.xlu0 %v3514, 18
  %v3805 = vpop.permute.xlu0 %3804
  %3806 = vrot.lane.b32.xlu0 %v3515, 18
  %v3807 = vpop.permute.xlu0 %3806
  %3808 = vrot.lane.b32.xlu0 %v3516, 18
  %v3809 = vpop.permute.xlu0 %3808
  %3810 = vrot.lane.b32.xlu0 %v3517, 18
  %v3811 = vpop.permute.xlu0 %3810
  %3812 = vrot.lane.b32.xlu0 %v3509, 18
  %v3813 = vpop.permute.xlu0 %3812
  %3814 = vrot.lane.b32.xlu0 %v3521, 18
  %v3815 = vpop.permute.xlu0 %3814
  %3816 = vrot.lane.b32.xlu0 %v3544, 18
  %v3817 = vpop.permute.xlu0 %3816
  %3818 = vrot.lane.b32.xlu0 %v3545, 18
  %v3819 = vpop.permute.xlu0 %3818
  %3820 = vrot.lane.b32.xlu0 %v3546, 18
  %v3821 = vpop.permute.xlu0 %3820
  %3822 = vrot.lane.b32.xlu0 %v3547, 18
  %v3823 = vpop.permute.xlu0 %3822
  %3824 = vrot.lane.b32.xlu0 %v3548, 18
  %v3825 = vpop.permute.xlu0 %3824
  %3826 = vrot.lane.b32.xlu0 %v3533, 18
  %v3827 = vpop.permute.xlu0 %3826
  %3828 = vrot.lane.b32.xlu0 %v3549, 18
  %v3829 = vpop.permute.xlu0 %3828
  %3830 = vrot.lane.b32.xlu0 %v3550, 18
  %v3831 = vpop.permute.xlu0 %3830
  %3832 = vrot.lane.b32.xlu0 %v3551, 18
  %v3833 = vpop.permute.xlu0 %3832
  %3834 = vrot.lane.b32.xlu0 %v3552, 18
  %v3835 = vpop.permute.xlu0 %3834
  %3836 = vrot.lane.b32.xlu0 %v3553, 18
  %v3837 = vpop.permute.xlu0 %3836
  %3838 = vrot.lane.b32.xlu0 %v3555, 18
  %v3839 = vpop.permute.xlu0 %3838
  %3840 = vrot.lane.b32.xlu0 %v3578, 18
  %v3841 = vpop.permute.xlu0 %3840
  %3842 = vrot.lane.b32.xlu0 %v3579, 18
  %v3843 = vpop.permute.xlu0 %3842
  %3844 = vrot.lane.b32.xlu0 %v3580, 18
  %v3845 = vpop.permute.xlu0 %3844
  %3846 = vrot.lane.b32.xlu0 %v3581, 18
  %v3847 = vpop.permute.xlu0 %3846
  %3848 = vrot.lane.b32.xlu0 %v3582, 18
  %v3849 = vpop.permute.xlu0 %3848
  %3850 = vrot.lane.b32.xlu0 %v3567, 18
  %v3851 = vpop.permute.xlu0 %3850
  %3852 = vrot.lane.b32.xlu0 %v3583, 18
  %v3853 = vpop.permute.xlu0 %3852
  %3854 = vrot.lane.b32.xlu0 %v3584, 18
  %v3855 = vpop.permute.xlu0 %3854
  %3856 = vrot.lane.b32.xlu0 %v3585, 18
  %v3857 = vpop.permute.xlu0 %3856
  %3858 = vrot.lane.b32.xlu0 %v3586, 18
  %v3859 = vpop.permute.xlu0 %3858
  %3860 = vrot.lane.b32.xlu0 %v3587, 18
  %v3861 = vpop.permute.xlu0 %3860
  %3862 = vrot.lane.b32.xlu0 %v3589, 18
  %v3863 = vpop.permute.xlu0 %3862
  %3864 = vrot.lane.b32.xlu0 %v3612, 18
  %v3865 = vpop.permute.xlu0 %3864
  %3866 = vrot.lane.b32.xlu0 %v3613, 18
  %v3867 = vpop.permute.xlu0 %3866
  %3868 = vrot.lane.b32.xlu0 %v3614, 18
  %v3869 = vpop.permute.xlu0 %3868
  %3870 = vrot.lane.b32.xlu0 %v3615, 18
  %v3871 = vpop.permute.xlu0 %3870
  %3872 = vrot.lane.b32.xlu0 %v3616, 18
  %v3873 = vpop.permute.xlu0 %3872
  %3874 = vrot.lane.b32.xlu0 %v3601, 18
  %v3875 = vpop.permute.xlu0 %3874
  %3876 = vrot.lane.b32.xlu0 %v3617, 18
  %v3877 = vpop.permute.xlu0 %3876
  %3878 = vrot.lane.b32.xlu0 %v3618, 18
  %v3879 = vpop.permute.xlu0 %3878
  %3880 = vrot.lane.b32.xlu0 %v3619, 18
  %v3881 = vpop.permute.xlu0 %3880
  %3882 = vrot.lane.b32.xlu0 %v3620, 18
  %v3883 = vpop.permute.xlu0 %3882
  %3884 = vrot.lane.b32.xlu0 %v3621, 18
  %v3885 = vpop.permute.xlu0 %3884
  %3886 = vrot.lane.b32.xlu0 %v3623, 18
  %v3887 = vpop.permute.xlu0 %3886
  %3888 = vrot.lane.b32.xlu0 %v3646, 18
  %v3889 = vpop.permute.xlu0 %3888
  %3890 = vrot.lane.b32.xlu0 %v3647, 18
  %v3891 = vpop.permute.xlu0 %3890
  %3892 = vrot.lane.b32.xlu0 %v3648, 18
  %v3893 = vpop.permute.xlu0 %3892
  %3894 = vrot.lane.b32.xlu0 %v3649, 18
  %v3895 = vpop.permute.xlu0 %3894
  %3896 = vrot.lane.b32.xlu0 %v3650, 18
  %v3897 = vpop.permute.xlu0 %3896
  %3898 = vrot.lane.b32.xlu0 %v3635, 18
  %v3899 = vpop.permute.xlu0 %3898
  %3900 = vrot.lane.b32.xlu0 %v3651, 18
  %v3901 = vpop.permute.xlu0 %3900
  %3902 = vrot.lane.b32.xlu0 %v3652, 18
  %v3903 = vpop.permute.xlu0 %3902
  %3904 = vrot.lane.b32.xlu0 %v3653, 18
  %v3905 = vpop.permute.xlu0 %3904
  %3906 = vrot.lane.b32.xlu0 %v3654, 18
  %v3907 = vpop.permute.xlu0 %3906
  %3908 = vrot.lane.b32.xlu0 %v3655, 18
  %v3909 = vpop.permute.xlu0 %3908
  %v3910 = vsel %vm450, %v3695, %v3697
  %v3911 = vsel %vm450, %v3697, %v3699
  %v3912 = vsel %vm450, %v3699, %v3701
  %v3913 = vsel %vm450, %v3701, %v3703
  %v3914 = vsel %vm450, %v3703, %v3705
  %v3915 = vsel %vm450, %v3707, %v3709
  %v3916 = vsel %vm450, %v3709, %v3711
  %v3917 = vsel %vm450, %v3711, %v3713
  %v3918 = vsel %vm450, %v3713, %v3715
  %v3919 = vsel %vm450, %v3715, %v3717
  %v3920 = vsel %vm450, %v3719, %v3721
  %v3921 = vsel %vm450, %v3721, %v3723
  %v3922 = vsel %vm450, %v3723, %v3725
  %v3923 = vsel %vm450, %v3725, %v3727
  %v3924 = vsel %vm450, %v3727, %v3729
  %v3925 = vsel %vm450, %v3731, %v3733
  %v3926 = vsel %vm450, %v3733, %v3735
  %v3927 = vsel %vm450, %v3735, %v3737
  %v3928 = vsel %vm450, %v3737, %v3739
  %v3929 = vsel %vm450, %v3739, %v3741
  %v3930 = vsel %vm450, %v3743, %v3745
  %v3931 = vsel %vm450, %v3745, %v3747
  %v3932 = vsel %vm450, %v3747, %v3749
  %v3933 = vsel %vm450, %v3749, %v3751
  %v3934 = vsel %vm450, %v3751, %v3753
  %v3935 = vsel %vm450, %v3755, %v3757
  %v3936 = vsel %vm450, %v3757, %v3759
  %v3937 = vsel %vm450, %v3759, %v3761
  %v3938 = vsel %vm450, %v3761, %v3763
  %v3939 = vsel %vm450, %v3763, %v3765
  %v3940 = vsel %vm450, %v3767, %v3769
  %v3941 = vsel %vm450, %v3769, %v3771
  %v3942 = vsel %vm450, %v3771, %v3773
  %v3943 = vsel %vm450, %v3773, %v3775
  %v3944 = vsel %vm450, %v3775, %v3777
  %v3945 = vsel %vm450, %v3779, %v3781
  %v3946 = vsel %vm450, %v3781, %v3783
  %v3947 = vsel %vm450, %v3783, %v3785
  %v3948 = vsel %vm450, %v3785, %v3787
  %v3949 = vsel %vm450, %v3787, %v3789
  %v3950 = vsel %vm450, %v3791, %v3793
  %v3951 = vsel %vm450, %v3793, %v3795
  %v3952 = vsel %vm450, %v3795, %v3797
  %v3953 = vsel %vm450, %v3797, %v3799
  %v3954 = vsel %vm450, %v3799, %v3801
  %v3955 = vsel %vm450, %v3803, %v3805
  %v3956 = vsel %vm450, %v3805, %v3807
  %v3957 = vsel %vm450, %v3807, %v3809
  %v3958 = vsel %vm450, %v3809, %v3811
  %v3959 = vsel %vm450, %v3811, %v3813
  %v3960 = vsel %vm450, %v3815, %v3817
  %v3961 = vsel %vm450, %v3817, %v3819
  %v3962 = vsel %vm450, %v3819, %v3821
  %v3963 = vsel %vm450, %v3821, %v3823
  %v3964 = vsel %vm450, %v3823, %v3825
  %v3965 = vsel %vm450, %v3827, %v3829
  %v3966 = vsel %vm450, %v3829, %v3831
  %v3967 = vsel %vm450, %v3831, %v3833
  %v3968 = vsel %vm450, %v3833, %v3835
  %v3969 = vsel %vm450, %v3835, %v3837
  %v3970 = vsel %vm450, %v3839, %v3841
  %v3971 = vsel %vm450, %v3841, %v3843
  %v3972 = vsel %vm450, %v3843, %v3845
  %v3973 = vsel %vm450, %v3845, %v3847
  %v3974 = vsel %vm450, %v3847, %v3849
  %v3975 = vsel %vm450, %v3851, %v3853
  %v3976 = vsel %vm450, %v3853, %v3855
  %v3977 = vsel %vm450, %v3855, %v3857
  %v3978 = vsel %vm450, %v3857, %v3859
  %v3979 = vsel %vm450, %v3859, %v3861
  %v3980 = vsel %vm450, %v3863, %v3865
  %v3981 = vsel %vm450, %v3865, %v3867
  %v3982 = vsel %vm450, %v3867, %v3869
  %v3983 = vsel %vm450, %v3869, %v3871
  %v3984 = vsel %vm450, %v3871, %v3873
  %v3985 = vsel %vm450, %v3875, %v3877
  %v3986 = vsel %vm450, %v3877, %v3879
  %v3987 = vsel %vm450, %v3879, %v3881
  %v3988 = vsel %vm450, %v3881, %v3883
  %v3989 = vsel %vm450, %v3883, %v3885
  %v3990 = vsel %vm450, %v3887, %v3889
  %v3991 = vsel %vm450, %v3889, %v3891
  %v3992 = vsel %vm450, %v3891, %v3893
  %v3993 = vsel %vm450, %v3893, %v3895
  %v3994 = vsel %vm450, %v3895, %v3897
  %v3995 = vsel %vm450, %v3899, %v3901
  %v3996 = vsel %vm450, %v3901, %v3903
  %v3997 = vsel %vm450, %v3903, %v3905
  %v3998 = vsel %vm450, %v3905, %v3907
  %v3999 = vsel %vm450, %v3907, %v3909
  %v4091 = vsel %vm2251, %v3686, 0
  %v4094 = vsel %vm2251, %v3689, 0
  %4096 = vmatprep.subr.bf16.mxu0 %v3911
  %4097 = vmatpush1.bf16.msra.mxu0 %v3910
  %4098 = vmatprep.subr.bf16.mxu0 %v3916
  %4099 = vmatpush1.bf16.msra.mxu0 %v3915
  %4100 = vmatprep.subr.bf16.mxu0 %v3921
  %4101 = vmatpush1.bf16.msra.mxu0 %v3920
  %4102 = vmatprep.subr.bf16.mxu0 %v3926
  %4103 = vmatpush1.bf16.msra.mxu0 %v3925
  %4104 = vmatprep.subr.bf16.mxu0 %v3931
  %4105 = vmatpush1.bf16.msra.mxu0 %v3930
  %4106 = vmatprep.subr.bf16.mxu0 %v3936
  %4107 = vmatpush1.bf16.msra.mxu0 %v3935
  %4108 = vmatprep.subr.bf16.mxu0 %v3941
  %4109 = vmatpush1.bf16.msra.mxu0 %v3940
  %4110 = vmatprep.subr.bf16.mxu0 %v3946
  %4111 = vmatpush1.bf16.msra.mxu0 %v3945
  %4112 = vmatprep.subr.bf16.mxu0 %v3951
  %4113 = vmatpush1.bf16.msra.mxu0 %v3950
  %4114 = vmatprep.subr.bf16.mxu0 %v3956
  %4115 = vmatpush1.bf16.msra.mxu0 %v3955
  %4116 = vmatprep.subr.bf16.mxu0 %v3961
  %4117 = vmatpush1.bf16.msra.mxu0 %v3960
  %4118 = vmatprep.subr.bf16.mxu0 %v3966
  %4119 = vmatpush1.bf16.msra.mxu0 %v3965
  %4120 = vmatprep.subr.bf16.mxu0 %v3971
  %4121 = vmatpush1.bf16.msra.mxu0 %v3970
  %4122 = vmatprep.subr.bf16.mxu0 %v3976
  %4123 = vmatpush1.bf16.msra.mxu0 %v3975
  %4124 = vmatprep.subr.bf16.mxu0 %v3981
  %4125 = vmatpush1.bf16.msra.mxu0 %v3980
  %4126 = vmatprep.subr.bf16.mxu0 %v3986
  %4127 = vmatpush1.bf16.msra.mxu0 %v3985
  %4128 = vmatprep.mubr.bf16.mxu0 %v3685
  %4129 = vmatmul.mubr.bf16.gmra.mrb[0].mxu0 %v3684
  %v4130 = vpop.f32.mrb[0].mxu0
  %v4131 = vadd.f32 0.0, %v4130
  %v4132 = vpop.f32.mrb[0].mxu0
  %v4133 = vadd.f32 0.0, %v4132
  %v4134 = vpop.f32.mrb[0].mxu0
  %v4135 = vadd.f32 0.0, %v4134
  %v4136 = vpop.f32.mrb[0].mxu0
  %v4137 = vadd.f32 0.0, %v4136
  %4138 = vmatprep.mubr.bf16.mxu0 %v3688
  %4139 = vmatmul.mubr.bf16.gmra.mrb[0].mxu0 %v3687
  %v4140 = vpop.f32.mrb[0].mxu0
  %v4141 = vadd.f32 0.0, %v4140
  %v4142 = vpop.f32.mrb[0].mxu0
  %v4143 = vadd.f32 0.0, %v4142
  %v4144 = vpop.f32.mrb[0].mxu0
  %v4145 = vadd.f32 0.0, %v4144
  %v4146 = vpop.f32.mrb[0].mxu0
  %v4147 = vadd.f32 0.0, %v4146
  %4148 = vdwg.mxu0
  %4149 = vmatprep.subr.bf16.mxu0 %v3991
  %4150 = vmatpush1.bf16.msra.mxu0 %v3990
  %4151 = vmatprep.subr.bf16.mxu0 %v3996
  %4152 = vmatpush1.bf16.msra.mxu0 %v3995
  %4153 = vmatprep.subr.bf16.mxu0 0
  %4154 = vmatpush1.bf16.msra.mxu0 0
  %4155 = vmatprep.subr.bf16.mxu0 0
  %4156 = vmatpush1.bf16.msra.mxu0 0
  %4157 = vmatprep.subr.bf16.mxu0 0
  %4158 = vmatpush1.bf16.msra.mxu0 0
  %4159 = vmatprep.subr.bf16.mxu0 0
  %4160 = vmatpush1.bf16.msra.mxu0 0
  %4161 = vmatprep.subr.bf16.mxu0 0
  %4162 = vmatpush1.bf16.msra.mxu0 0
  %4163 = vmatprep.subr.bf16.mxu0 0
  %4164 = vmatpush1.bf16.msra.mxu0 0
  %4165 = vmatprep.subr.bf16.mxu0 0
  %4166 = vmatpush1.bf16.msra.mxu0 0
  %4167 = vmatprep.subr.bf16.mxu0 0
  %4168 = vmatpush1.bf16.msra.mxu0 0
  %4169 = vmatprep.subr.bf16.mxu0 0
  %4170 = vmatpush1.bf16.msra.mxu0 0
  %4171 = vmatprep.subr.bf16.mxu0 0
  %4172 = vmatpush1.bf16.msra.mxu0 0
  %4173 = vmatprep.subr.bf16.mxu0 0
  %4174 = vmatpush1.bf16.msra.mxu0 0
  %4175 = vmatprep.subr.bf16.mxu0 0
  %4176 = vmatpush1.bf16.msra.mxu0 0
  %4177 = vmatprep.subr.bf16.mxu0 0
  %4178 = vmatpush1.bf16.msra.mxu0 0
  %4179 = vmatprep.subr.bf16.mxu0 0
  %4180 = vmatpush1.bf16.msra.mxu0 0
  %4181 = vmatprep.mubr.bf16.mxu0 0
  %4182 = vmatmul.mubr.bf16.gmra.mrb[0].mxu0 %v4091
  %v4183 = vpop.f32.mrb[0].mxu0
  %v4184 = vadd.f32 %v4131, %v4183
  %v4185 = vpop.f32.mrb[0].mxu0
  %v4186 = vadd.f32 %v4133, %v4185
  %v4187 = vpop.f32.mrb[0].mxu0
  %v4188 = vadd.f32 %v4135, %v4187
  %v4189 = vpop.f32.mrb[0].mxu0
  %v4190 = vadd.f32 %v4137, %v4189
  %4191 = vmatprep.mubr.bf16.mxu0 0
  %4192 = vmatmul.mubr.bf16.gmra.mrb[0].mxu0 %v4094
  %v4193 = vpop.f32.mrb[0].mxu0
  %v4194 = vadd.f32 %v4141, %v4193
  %v4195 = vpop.f32.mrb[0].mxu0
  %v4196 = vadd.f32 %v4143, %v4195
  %v4197 = vpop.f32.mrb[0].mxu0
  %v4198 = vadd.f32 %v4145, %v4197
  %v4199 = vpop.f32.mrb[0].mxu0
  %v4200 = vadd.f32 %v4147, %v4199
  %4201 = vdwg.mxu0
  %4202 = vmatprep.subr.bf16.mxu0 %v3913
  %4203 = vmatpush1.bf16.msra.mxu0 %v3912
  %4204 = vmatprep.subr.bf16.mxu0 %v3918
  %4205 = vmatpush1.bf16.msra.mxu0 %v3917
  %4206 = vmatprep.subr.bf16.mxu0 %v3923
  %4207 = vmatpush1.bf16.msra.mxu0 %v3922
  %4208 = vmatprep.subr.bf16.mxu0 %v3928
  %4209 = vmatpush1.bf16.msra.mxu0 %v3927
  %4210 = vmatprep.subr.bf16.mxu0 %v3933
  %4211 = vmatpush1.bf16.msra.mxu0 %v3932
  %4212 = vmatprep.subr.bf16.mxu0 %v3938
  %4213 = vmatpush1.bf16.msra.mxu0 %v3937
  %4214 = vmatprep.subr.bf16.mxu0 %v3943
  %4215 = vmatpush1.bf16.msra.mxu0 %v3942
  %4216 = vmatprep.subr.bf16.mxu0 %v3948
  %4217 = vmatpush1.bf16.msra.mxu0 %v3947
  %4218 = vmatprep.subr.bf16.mxu0 %v3953
  %4219 = vmatpush1.bf16.msra.mxu0 %v3952
  %4220 = vmatprep.subr.bf16.mxu0 %v3958
  %4221 = vmatpush1.bf16.msra.mxu0 %v3957
  %4222 = vmatprep.subr.bf16.mxu0 %v3963
  %4223 = vmatpush1.bf16.msra.mxu0 %v3962
  %4224 = vmatprep.subr.bf16.mxu0 %v3968
  %4225 = vmatpush1.bf16.msra.mxu0 %v3967
  %4226 = vmatprep.subr.bf16.mxu0 %v3973
  %4227 = vmatpush1.bf16.msra.mxu0 %v3972
  %4228 = vmatprep.subr.bf16.mxu0 %v3978
  %4229 = vmatpush1.bf16.msra.mxu0 %v3977
  %4230 = vmatprep.subr.bf16.mxu0 %v3983
  %4231 = vmatpush1.bf16.msra.mxu0 %v3982
  %4232 = vmatprep.subr.bf16.mxu0 %v3988
  %4233 = vmatpush1.bf16.msra.mxu0 %v3987
  %4234 = vmatprep.mubr.bf16.mxu0 %v3685
  %4235 = vmatmul.mubr.bf16.gmra.mrb[0].mxu0 %v3684
  %v4236 = vpop.f32.mrb[0].mxu0
  %v4237 = vadd.f32 0.0, %v4236
  %v4238 = vpop.f32.mrb[0].mxu0
  %v4239 = vadd.f32 0.0, %v4238
  %v4240 = vpop.f32.mrb[0].mxu0
  %v4241 = vadd.f32 0.0, %v4240
  %v4242 = vpop.f32.mrb[0].mxu0
  %v4243 = vadd.f32 0.0, %v4242
  %4244 = vmatprep.mubr.bf16.mxu0 %v3688
  %4245 = vmatmul.mubr.bf16.gmra.mrb[0].mxu0 %v3687
  %v4246 = vpop.f32.mrb[0].mxu0
  %v4247 = vadd.f32 0.0, %v4246
  %v4248 = vpop.f32.mrb[0].mxu0
  %v4249 = vadd.f32 0.0, %v4248
  %v4250 = vpop.f32.mrb[0].mxu0
  %v4251 = vadd.f32 0.0, %v4250
  %v4252 = vpop.f32.mrb[0].mxu0
  %v4253 = vadd.f32 0.0, %v4252
  %4254 = vdwg.mxu0
  %4255 = vmatprep.subr.bf16.mxu0 %v3993
  %4256 = vmatpush1.bf16.msra.mxu0 %v3992
  %4257 = vmatprep.subr.bf16.mxu0 %v3998
  %4258 = vmatpush1.bf16.msra.mxu0 %v3997
  %4259 = vmatprep.subr.bf16.mxu0 0
  %4260 = vmatpush1.bf16.msra.mxu0 0
  %4261 = vmatprep.subr.bf16.mxu0 0
  %4262 = vmatpush1.bf16.msra.mxu0 0
  %4263 = vmatprep.subr.bf16.mxu0 0
  %4264 = vmatpush1.bf16.msra.mxu0 0
  %4265 = vmatprep.subr.bf16.mxu0 0
  %4266 = vmatpush1.bf16.msra.mxu0 0
  %4267 = vmatprep.subr.bf16.mxu0 0
  %4268 = vmatpush1.bf16.msra.mxu0 0
  %4269 = vmatprep.subr.bf16.mxu0 0
  %4270 = vmatpush1.bf16.msra.mxu0 0
  %4271 = vmatprep.subr.bf16.mxu0 0
  %4272 = vmatpush1.bf16.msra.mxu0 0
  %4273 = vmatprep.subr.bf16.mxu0 0
  %4274 = vmatpush1.bf16.msra.mxu0 0
  %4275 = vmatprep.subr.bf16.mxu0 0
  %4276 = vmatpush1.bf16.msra.mxu0 0
  %4277 = vmatprep.subr.bf16.mxu0 0
  %4278 = vmatpush1.bf16.msra.mxu0 0
  %4279 = vmatprep.subr.bf16.mxu0 0
  %4280 = vmatpush1.bf16.msra.mxu0 0
  %4281 = vmatprep.subr.bf16.mxu0 0
  %4282 = vmatpush1.bf16.msra.mxu0 0
  %4283 = vmatprep.subr.bf16.mxu0 0
  %4284 = vmatpush1.bf16.msra.mxu0 0
  %4285 = vmatprep.subr.bf16.mxu0 0
  %4286 = vmatpush1.bf16.msra.mxu0 0
  %4287 = vmatprep.mubr.bf16.mxu0 0
  %4288 = vmatmul.mubr.bf16.gmra.mrb[0].mxu0 %v4091
  %v4289 = vpop.f32.mrb[0].mxu0
  %v4290 = vadd.f32 %v4237, %v4289
  %v4291 = vpop.f32.mrb[0].mxu0
  %v4292 = vadd.f32 %v4239, %v4291
  %v4293 = vpop.f32.mrb[0].mxu0
  %v4294 = vadd.f32 %v4241, %v4293
  %v4295 = vpop.f32.mrb[0].mxu0
  %v4296 = vadd.f32 %v4243, %v4295
  %4297 = vmatprep.mubr.bf16.mxu0 0
  %4298 = vmatmul.mubr.bf16.gmra.mrb[0].mxu0 %v4094
  %v4299 = vpop.f32.mrb[0].mxu0
  %v4300 = vadd.f32 %v4247, %v4299
  %v4301 = vpop.f32.mrb[0].mxu0
  %v4302 = vadd.f32 %v4249, %v4301
  %v4303 = vpop.f32.mrb[0].mxu0
  %v4304 = vadd.f32 %v4251, %v4303
  %v4305 = vpop.f32.mrb[0].mxu0
  %v4306 = vadd.f32 %v4253, %v4305
  %4307 = vdwg.mxu0
  %4308 = vmatprep.subr.bf16.mxu0 0
  %4309 = vmatpush1.bf16.msra.mxu0 %v3914
  %4310 = vmatprep.subr.bf16.mxu0 0
  %4311 = vmatpush1.bf16.msra.mxu0 %v3919
  %4312 = vmatprep.subr.bf16.mxu0 0
  %4313 = vmatpush1.bf16.msra.mxu0 %v3924
  %4314 = vmatprep.subr.bf16.mxu0 0
  %4315 = vmatpush1.bf16.msra.mxu0 %v3929
  %4316 = vmatprep.subr.bf16.mxu0 0
  %4317 = vmatpush1.bf16.msra.mxu0 %v3934
  %4318 = vmatprep.subr.bf16.mxu0 0
  %4319 = vmatpush1.bf16.msra.mxu0 %v3939
  %4320 = vmatprep.subr.bf16.mxu0 0
  %4321 = vmatpush1.bf16.msra.mxu0 %v3944
  %4322 = vmatprep.subr.bf16.mxu0 0
  %4323 = vmatpush1.bf16.msra.mxu0 %v3949
  %4324 = vmatprep.subr.bf16.mxu0 0
  %4325 = vmatpush1.bf16.msra.mxu0 %v3954
  %4326 = vmatprep.subr.bf16.mxu0 0
  %4327 = vmatpush1.bf16.msra.mxu0 %v3959
  %4328 = vmatprep.subr.bf16.mxu0 0
  %4329 = vmatpush1.bf16.msra.mxu0 %v3964
  %4330 = vmatprep.subr.bf16.mxu0 0
  %4331 = vmatpush1.bf16.msra.mxu0 %v3969
  %4332 = vmatprep.subr.bf16.mxu0 0
  %4333 = vmatpush1.bf16.msra.mxu0 %v3974
  %4334 = vmatprep.subr.bf16.mxu0 0
  %4335 = vmatpush1.bf16.msra.mxu0 %v3979
  %4336 = vmatprep.subr.bf16.mxu0 0
  %4337 = vmatpush1.bf16.msra.mxu0 %v3984
  %4338 = vmatprep.subr.bf16.mxu0 0
  %4339 = vmatpush1.bf16.msra.mxu0 %v3989
  %4340 = vmatprep.mubr.bf16.mxu0 %v3685
  %4341 = vmatmul.mubr.bf16.gmra.mrb[0].mxu0 %v3684
  %v4342 = vpop.f32.mrb[0].mxu0
  %v4343 = vadd.f32 0.0, %v4342
  %v4344 = vpop.f32.mrb[0].mxu0
  %v4345 = vpop.f32.mrb[0].mxu0
  %v4346 = vadd.f32 0.0, %v4345
  %v4347 = vpop.f32.mrb[0].mxu0
  %4348 = vmatprep.mubr.bf16.mxu0 %v3688
  %4349 = vmatmul.mubr.bf16.gmra.mrb[0].mxu0 %v3687
  %v4350 = vpop.f32.mrb[0].mxu0
  %v4351 = vadd.f32 0.0, %v4350
  %v4352 = vpop.f32.mrb[0].mxu0
  %v4353 = vpop.f32.mrb[0].mxu0
  %v4354 = vadd.f32 0.0, %v4353
  %v4355 = vpop.f32.mrb[0].mxu0
  %4356 = vdwg.mxu0
  %4357 = vmatprep.subr.bf16.mxu0 0
  %4358 = vmatpush1.bf16.msra.mxu0 %v3994
  %4359 = vmatprep.subr.bf16.mxu0 0
  %4360 = vmatpush1.bf16.msra.mxu0 %v3999
  %4361 = vmatprep.subr.bf16.mxu0 0
  %4362 = vmatpush1.bf16.msra.mxu0 0
  %4363 = vmatprep.subr.bf16.mxu0 0
  %4364 = vmatpush1.bf16.msra.mxu0 0
  %4365 = vmatprep.subr.bf16.mxu0 0
  %4366 = vmatpush1.bf16.msra.mxu0 0
  %4367 = vmatprep.subr.bf16.mxu0 0
  %4368 = vmatpush1.bf16.msra.mxu0 0
  %4369 = vmatprep.subr.bf16.mxu0 0
  %4370 = vmatpush1.bf16.msra.mxu0 0
  %4371 = vmatprep.subr.bf16.mxu0 0
  %4372 = vmatpush1.bf16.msra.mxu0 0
  %4373 = vmatprep.subr.bf16.mxu0 0
  %4374 = vmatpush1.bf16.msra.mxu0 0
  %4375 = vmatprep.subr.bf16.mxu0 0
  %4376 = vmatpush1.bf16.msra.mxu0 0
  %4377 = vmatprep.subr.bf16.mxu0 0
  %4378 = vmatpush1.bf16.msra.mxu0 0
  %4379 = vmatprep.subr.bf16.mxu0 0
  %4380 = vmatpush1.bf16.msra.mxu0 0
  %4381 = vmatprep.subr.bf16.mxu0 0
  %4382 = vmatpush1.bf16.msra.mxu0 0
  %4383 = vmatprep.subr.bf16.mxu0 0
  %4384 = vmatpush1.bf16.msra.mxu0 0
  %4385 = vmatprep.subr.bf16.mxu0 0
  %4386 = vmatpush1.bf16.msra.mxu0 0
  %4387 = vmatprep.subr.bf16.mxu0 0
  %4388 = vmatpush1.bf16.msra.mxu0 0
  %4389 = vmatprep.mubr.bf16.mxu0 0
  %4390 = vmatmul.mubr.bf16.gmra.mrb[0].mxu0 %v4091
  %v4391 = vpop.f32.mrb[0].mxu0
  %v4392 = vadd.f32 %v4343, %v4391
  %v4393 = vpop.f32.mrb[0].mxu0
  %v4394 = vpop.f32.mrb[0].mxu0
  %v4395 = vadd.f32 %v4346, %v4394
  %v4396 = vpop.f32.mrb[0].mxu0
  %4397 = vmatprep.mubr.bf16.mxu0 0
  %4398 = vmatmul.mubr.bf16.gmra.mrb[0].mxu0 %v4094
  %v4399 = vpop.f32.mrb[0].mxu0
  %v4400 = vadd.f32 %v4351, %v4399
  %v4401 = vpop.f32.mrb[0].mxu0
  %v4402 = vpop.f32.mrb[0].mxu0
  %v4403 = vadd.f32 %v4354, %v4402
  %v4404 = vpop.f32.mrb[0].mxu0
  %4405 = vdwg.mxu0
  %4406 = vmatprep.subr.mxu0 0.0
  %4407 = vmatpush1.msra.mxu0 %v58
  %4408 = vmatprep.subr.mxu0 0.0
  %4409 = vmatpush1.msra.mxu0 %v59
  %4410 = vmatprep.subr.mxu0 0.0
  %4411 = vmatpush1.msra.mxu0 %v60
  %4412 = vmatprep.subr.mxu0 0.0
  %4413 = vmatpush1.msra.mxu0 %v61
  %4414 = vmatprep.subr.mxu0 0.0
  %4415 = vmatpush1.msra.mxu0 %v62
  %4416 = vmatprep.subr.mxu0 0.0
  %4417 = vmatpush1.msra.mxu0 %v63
  %4418 = vmatprep.subr.mxu0 0.0
  %4419 = vmatpush1.msra.mxu0 %v64
  %4420 = vmatprep.subr.mxu0 0.0
  %4421 = vmatpush1.msra.mxu0 %v65
  %4422 = vmatprep.subr.mxu0 0.0
  %4423 = vmatpush1.msra.mxu0 %v66
  %4424 = vmatprep.subr.mxu0 0.0
  %4425 = vmatpush1.msra.mxu0 %v67
  %4426 = vmatprep.subr.mxu0 0.0
  %4427 = vmatpush1.msra.mxu0 %v68
  %4428 = vmatprep.subr.mxu0 0.0
  %4429 = vmatpush1.msra.mxu0 %v69
  %4430 = vmatprep.subr.mxu0 0.0
  %4431 = vmatpush1.msra.mxu0 %v70
  %4432 = vmatprep.subr.mxu0 0.0
  %4433 = vmatpush1.msra.mxu0 %v71
  %4434 = vmatprep.subr.mxu0 0.0
  %4435 = vmatpush1.msra.mxu0 %v72
  %4436 = vmatprep.subr.mxu0 0.0
  %4437 = vmatpush1.msra.mxu0 %v73
  %4438 = vmatprep.subr.mxu0 0.0
  %4439 = vmatpush1.msra.mxu0 %v74
  %4440 = vmatprep.subr.mxu0 0.0
  %4441 = vmatpush1.msra.mxu0 %v75
  %4442 = vmatprep.subr.mxu0 0.0
  %4443 = vmatpush1.msra.mxu0 %v76
  %4444 = vmatprep.subr.mxu0 0.0
  %4445 = vmatpush1.msra.mxu0 %v77
  %4446 = vmatprep.subr.mxu0 0.0
  %4447 = vmatpush1.msra.mxu0 %v78
  %4448 = vmatprep.subr.mxu0 0.0
  %4449 = vmatpush1.msra.mxu0 %v79
  %4450 = vmatprep.subr.mxu0 0.0
  %4451 = vmatpush1.msra.mxu0 %v80
  %4452 = vmatprep.subr.mxu0 0.0
  %4453 = vmatpush1.msra.mxu0 %v81
  %4454 = vmatprep.subr.mxu0 0.0
  %4455 = vmatpush1.msra.mxu0 %v82
  %4456 = vmatprep.subr.mxu0 0.0
  %4457 = vmatpush1.msra.mxu0 %v83
  %4458 = vmatprep.subr.mxu0 0.0
  %4459 = vmatpush1.msra.mxu0 %v84
  %4460 = vmatprep.subr.mxu0 0.0
  %4461 = vmatpush1.msra.mxu0 %v85
  %4462 = vmatprep.subr.mxu0 0.0
  %4463 = vmatpush1.msra.mxu0 %v86
  %4464 = vmatprep.subr.mxu0 0.0
  %4465 = vmatpush1.msra.mxu0 %v87
  %4466 = vmatprep.subr.mxu0 0.0
  %4467 = vmatpush1.msra.mxu0 %v88
  %4468 = vmatprep.subr.mxu0 0.0
  %4469 = vmatpush1.msra.mxu0 %v89
  %4470 = vmatprep.mubr.f32.mxu0 %v4186
  %4471 = vmatmul.mubr.f32.gmra.mrb[0].mxu0 %v4184
  %v4472 = vpop.f32.mrb[0].mxu0
  %v4473 = vadd.f32 0.0, %v4472
  %v4474 = vpop.f32.mrb[0].mxu0
  %4475 = vmatprep.mubr.f32.mxu0 %v4190
  %4476 = vmatmul.mubr.f32.gmra.mrb[0].mxu0 %v4188
  %v4477 = vpop.f32.mrb[0].mxu0
  %v4478 = vadd.f32 0.0, %v4477
  %v4479 = vpop.f32.mrb[0].mxu0
  %4480 = vmatprep.mubr.f32.mxu0 %v4196
  %4481 = vmatmul.mubr.f32.gmra.mrb[0].mxu0 %v4194
  %v4482 = vpop.f32.mrb[0].mxu0
  %v4483 = vadd.f32 0.0, %v4482
  %v4484 = vpop.f32.mrb[0].mxu0
  %4485 = vmatprep.mubr.f32.mxu0 %v4200
  %4486 = vmatmul.mubr.f32.gmra.mrb[0].mxu0 %v4198
  %v4487 = vpop.f32.mrb[0].mxu0
  %v4488 = vadd.f32 0.0, %v4487
  %v4489 = vpop.f32.mrb[0].mxu0
  %4490 = vdwg.mxu0
  %4491 = vmatprep.subr.mxu0 0.0
  %4492 = vmatpush1.msra.mxu0 %v90
  %4493 = vmatprep.subr.mxu0 0.0
  %4494 = vmatpush1.msra.mxu0 %v91
  %4495 = vmatprep.subr.mxu0 0.0
  %4496 = vmatpush1.msra.mxu0 %v92
  %4497 = vmatprep.subr.mxu0 0.0
  %4498 = vmatpush1.msra.mxu0 %v93
  %4499 = vmatprep.subr.mxu0 0.0
  %4500 = vmatpush1.msra.mxu0 %v94
  %4501 = vmatprep.subr.mxu0 0.0
  %4502 = vmatpush1.msra.mxu0 %v95
  %4503 = vmatprep.subr.mxu0 0.0
  %4504 = vmatpush1.msra.mxu0 %v96
  %4505 = vmatprep.subr.mxu0 0.0
  %4506 = vmatpush1.msra.mxu0 %v97
  %4507 = vmatprep.subr.mxu0 0.0
  %4508 = vmatpush1.msra.mxu0 %v98
  %4509 = vmatprep.subr.mxu0 0.0
  %4510 = vmatpush1.msra.mxu0 %v99
  %4511 = vmatprep.subr.mxu0 0.0
  %4512 = vmatpush1.msra.mxu0 %v100
  %4513 = vmatprep.subr.mxu0 0.0
  %4514 = vmatpush1.msra.mxu0 %v101
  %4515 = vmatprep.subr.mxu0 0.0
  %4516 = vmatpush1.msra.mxu0 %v102
  %4517 = vmatprep.subr.mxu0 0.0
  %4518 = vmatpush1.msra.mxu0 %v103
  %4519 = vmatprep.subr.mxu0 0.0
  %4520 = vmatpush1.msra.mxu0 %v104
  %4521 = vmatprep.subr.mxu0 0.0
  %4522 = vmatpush1.msra.mxu0 %v105
  %4523 = vmatprep.subr.mxu0 0.0
  %4524 = vmatpush1.msra.mxu0 %v106
  %4525 = vmatprep.subr.mxu0 0.0
  %4526 = vmatpush1.msra.mxu0 %v107
  %4527 = vmatprep.subr.mxu0 0.0
  %4528 = vmatpush1.msra.mxu0 %v108
  %4529 = vmatprep.subr.mxu0 0.0
  %4530 = vmatpush1.msra.mxu0 %v109
  %4531 = vmatprep.subr.mxu0 0.0
  %4532 = vmatpush1.msra.mxu0 %v110
  %4533 = vmatprep.subr.mxu0 0.0
  %4534 = vmatpush1.msra.mxu0 %v111
  %4535 = vmatprep.subr.mxu0 0.0
  %4536 = vmatpush1.msra.mxu0 %v112
  %4537 = vmatprep.subr.mxu0 0.0
  %4538 = vmatpush1.msra.mxu0 %v113
  %4539 = vmatprep.subr.mxu0 0.0
  %4540 = vmatpush1.msra.mxu0 %v114
  %4541 = vmatprep.subr.mxu0 0.0
  %4542 = vmatpush1.msra.mxu0 %v115
  %4543 = vmatprep.subr.mxu0 0.0
  %4544 = vmatpush1.msra.mxu0 %v116
  %4545 = vmatprep.subr.mxu0 0.0
  %4546 = vmatpush1.msra.mxu0 %v117
  %4547 = vmatprep.subr.mxu0 0.0
  %4548 = vmatpush1.msra.mxu0 %v118
  %4549 = vmatprep.subr.mxu0 0.0
  %4550 = vmatpush1.msra.mxu0 %v119
  %4551 = vmatprep.subr.mxu0 0.0
  %4552 = vmatpush1.msra.mxu0 %v120
  %4553 = vmatprep.subr.mxu0 0.0
  %4554 = vmatpush1.msra.mxu0 %v121
  %4555 = vmatprep.mubr.f32.mxu0 %v4292
  %4556 = vmatmul.mubr.f32.gmra.mrb[0].mxu0 %v4290
  %v4557 = vpop.f32.mrb[0].mxu0
  %v4558 = vadd.f32 %v4473, %v4557
  %v4559 = vpop.f32.mrb[0].mxu0
  %4560 = vmatprep.mubr.f32.mxu0 %v4296
  %4561 = vmatmul.mubr.f32.gmra.mrb[0].mxu0 %v4294
  %v4562 = vpop.f32.mrb[0].mxu0
  %v4563 = vadd.f32 %v4478, %v4562
  %v4564 = vpop.f32.mrb[0].mxu0
  %4565 = vmatprep.mubr.f32.mxu0 %v4302
  %4566 = vmatmul.mubr.f32.gmra.mrb[0].mxu0 %v4300
  %v4567 = vpop.f32.mrb[0].mxu0
  %v4568 = vadd.f32 %v4483, %v4567
  %v4569 = vpop.f32.mrb[0].mxu0
  %4570 = vmatprep.mubr.f32.mxu0 %v4306
  %4571 = vmatmul.mubr.f32.gmra.mrb[0].mxu0 %v4304
  %v4572 = vpop.f32.mrb[0].mxu0
  %v4573 = vadd.f32 %v4488, %v4572
  %v4574 = vpop.f32.mrb[0].mxu0
  %4575 = vdwg.mxu0
  %4576 = vmatprep.subr.mxu0 0.0
  %4577 = vmatpush1.msra.mxu0 %v122
  %4578 = vmatprep.subr.mxu0 0.0
  %4579 = vmatpush1.msra.mxu0 %v123
  %4580 = vmatprep.subr.mxu0 0.0
  %4581 = vmatpush1.msra.mxu0 %v124
  %4582 = vmatprep.subr.mxu0 0.0
  %4583 = vmatpush1.msra.mxu0 %v125
  %4584 = vmatprep.subr.mxu0 0.0
  %4585 = vmatpush1.msra.mxu0 %v126
  %4586 = vmatprep.subr.mxu0 0.0
  %4587 = vmatpush1.msra.mxu0 %v127
  %4588 = vmatprep.subr.mxu0 0.0
  %4589 = vmatpush1.msra.mxu0 %v128
  %4590 = vmatprep.subr.mxu0 0.0
  %4591 = vmatpush1.msra.mxu0 %v129
  %4592 = vmatprep.subr.mxu0 0.0
  %4593 = vmatpush1.msra.mxu0 %v130
  %4594 = vmatprep.subr.mxu0 0.0
  %4595 = vmatpush1.msra.mxu0 %v131
  %4596 = vmatprep.subr.mxu0 0.0
  %4597 = vmatpush1.msra.mxu0 %v132
  %4598 = vmatprep.subr.mxu0 0.0
  %4599 = vmatpush1.msra.mxu0 %v133
  %4600 = vmatprep.subr.mxu0 0.0
  %4601 = vmatpush1.msra.mxu0 %v134
  %4602 = vmatprep.subr.mxu0 0.0
  %4603 = vmatpush1.msra.mxu0 %v135
  %4604 = vmatprep.subr.mxu0 0.0
  %4605 = vmatpush1.msra.mxu0 %v136
  %4606 = vmatprep.subr.mxu0 0.0
  %4607 = vmatpush1.msra.mxu0 %v137
  %4608 = vmatprep.subr.mxu0 0.0
  %4609 = vmatpush1.msra.mxu0 0.0
  %4610 = vmatprep.subr.mxu0 0.0
  %4611 = vmatpush1.msra.mxu0 0.0
  %4612 = vmatprep.subr.mxu0 0.0
  %4613 = vmatpush1.msra.mxu0 0.0
  %4614 = vmatprep.subr.mxu0 0.0
  %4615 = vmatpush1.msra.mxu0 0.0
  %4616 = vmatprep.subr.mxu0 0.0
  %4617 = vmatpush1.msra.mxu0 0.0
  %4618 = vmatprep.subr.mxu0 0.0
  %4619 = vmatpush1.msra.mxu0 0.0
  %4620 = vmatprep.subr.mxu0 0.0
  %4621 = vmatpush1.msra.mxu0 0.0
  %4622 = vmatprep.subr.mxu0 0.0
  %4623 = vmatpush1.msra.mxu0 0.0
  %4624 = vmatprep.subr.mxu0 0.0
  %4625 = vmatpush1.msra.mxu0 0.0
  %4626 = vmatprep.subr.mxu0 0.0
  %4627 = vmatpush1.msra.mxu0 0.0
  %4628 = vmatprep.subr.mxu0 0.0
  %4629 = vmatpush1.msra.mxu0 0.0
  %4630 = vmatprep.subr.mxu0 0.0
  %4631 = vmatpush1.msra.mxu0 0.0
  %4632 = vmatprep.subr.mxu0 0.0
  %4633 = vmatpush1.msra.mxu0 0.0
  %4634 = vmatprep.subr.mxu0 0.0
  %4635 = vmatpush1.msra.mxu0 0.0
  %4636 = vmatprep.subr.mxu0 0.0
  %4637 = vmatpush1.msra.mxu0 0.0
  %4638 = vmatprep.subr.mxu0 0.0
  %4639 = vmatpush1.msra.mxu0 0.0
  %4640 = vmatprep.mubr.f32.mxu0 0.0
  %4641 = vmatmul.mubr.f32.gmra.mrb[0].mxu0 %v4392
  %v4642 = vpop.f32.mrb[0].mxu0
  %v4643 = vadd.f32 %v4558, %v4642
  %v4644 = vpop.f32.mrb[0].mxu0
  %4645 = vmatprep.mubr.f32.mxu0 0.0
  %4646 = vmatmul.mubr.f32.gmra.mrb[0].mxu0 %v4395
  %v4647 = vpop.f32.mrb[0].mxu0
  %v4648 = vadd.f32 %v4563, %v4647
  %v4649 = vpop.f32.mrb[0].mxu0
  %4650 = vmatprep.mubr.f32.mxu0 0.0
  %4651 = vmatmul.mubr.f32.gmra.mrb[0].mxu0 %v4400
  %v4652 = vpop.f32.mrb[0].mxu0
  %v4653 = vadd.f32 %v4568, %v4652
  %v4654 = vpop.f32.mrb[0].mxu0
  %4655 = vmatprep.mubr.f32.mxu0 0.0
  %4656 = vmatmul.mubr.f32.gmra.mrb[0].mxu0 %v4403
  %v4657 = vpop.f32.mrb[0].mxu0
  %v4658 = vadd.f32 %v4573, %v4657
  %v4659 = vpop.f32.mrb[0].mxu0
  %4660 = vdwg.mxu0
  %v4661 = vmul.f32 %v4643, 0.001953125
  %v4662 = vmul.f32 %v4648, 0.001953125
  %v4663 = vmul.f32 %v4653, 0.001953125
  %v4664 = vmul.f32 %v4658, 0.001953125
  %4666 = vset.pattern.permute.xlu0 0
  %4667 = vperm.xlu0 %4666, %v4661
  %v4668 = vpop.permute.xlu0 %4667
  %4671 = vset.pattern.permute.xlu0 0
  %4672 = vperm.xlu0 %4671, %v4662
  %v4673 = vpop.permute.xlu0 %4672
  %4676 = vset.pattern.permute.xlu0 0
  %4677 = vperm.xlu0 %4676, %v4663
  %v4678 = vpop.permute.xlu0 %4677
  %4681 = vset.pattern.permute.xlu0 0
  %4682 = vperm.xlu0 %4681, %v4664
  %v4683 = vpop.permute.xlu0 %4682
  %v4685 = vsub.f32 %v4184, %v4668
  %v4686 = vsub.f32 %v4186, %v4668
  %v4687 = vsub.f32 %v4290, %v4668
  %v4688 = vsub.f32 %v4292, %v4668
  %v4689 = vsub.f32 %v4392, %v4668
  %v4690 = vsub.f32 %v4188, %v4673
  %v4691 = vsub.f32 %v4190, %v4673
  %v4692 = vsub.f32 %v4294, %v4673
  %v4693 = vsub.f32 %v4296, %v4673
  %v4694 = vsub.f32 %v4395, %v4673
  %v4695 = vsub.f32 %v4194, %v4678
  %v4696 = vsub.f32 %v4196, %v4678
  %v4697 = vsub.f32 %v4300, %v4678
  %v4698 = vsub.f32 %v4302, %v4678
  %v4699 = vsub.f32 %v4400, %v4678
  %v4700 = vsub.f32 %v4198, %v4683
  %v4701 = vsub.f32 %v4200, %v4683
  %v4702 = vsub.f32 %v4304, %v4683
  %v4703 = vsub.f32 %v4306, %v4683
  %v4704 = vsub.f32 %v4403, %v4683
  %v4705 = vmul.f32 %v4685, %v1006
  %v4706 = vmul.f32 %v4686, %v1010
  %v4707 = vmul.f32 %v4687, %v1014
  %v4708 = vmul.f32 %v4688, %v1018
  %v4709 = vmul.f32 %v4689, %v1022
  %v4710 = vmul.f32 %v4690, %v1006
  %v4711 = vmul.f32 %v4691, %v1010
  %v4712 = vmul.f32 %v4692, %v1014
  %v4713 = vmul.f32 %v4693, %v1018
  %v4714 = vmul.f32 %v4694, %v1022
  %v4715 = vmul.f32 %v4695, %v1006
  %v4716 = vmul.f32 %v4696, %v1010
  %v4717 = vmul.f32 %v4697, %v1014
  %v4718 = vmul.f32 %v4698, %v1018
  %v4719 = vmul.f32 %v4699, %v1022
  %v4720 = vmul.f32 %v4700, %v1006
  %v4721 = vmul.f32 %v4701, %v1010
  %v4722 = vmul.f32 %v4702, %v1014
  %v4723 = vmul.f32 %v4703, %v1018
  %v4724 = vmul.f32 %v4704, %v1022
  %v4725 = vmul.f32 %v4705, %v4705
  %v4726 = vmul.f32 %v4706, %v4706
  %v4727 = vmul.f32 %v4707, %v4707
  %v4728 = vmul.f32 %v4708, %v4708
  %v4729 = vmul.f32 %v4709, %v4709
  %v4730 = vmul.f32 %v4710, %v4710
  %v4731 = vmul.f32 %v4711, %v4711
  %v4732 = vmul.f32 %v4712, %v4712
  %v4733 = vmul.f32 %v4713, %v4713
  %v4734 = vmul.f32 %v4714, %v4714
  %v4735 = vmul.f32 %v4715, %v4715
  %v4736 = vmul.f32 %v4716, %v4716
  %v4737 = vmul.f32 %v4717, %v4717
  %v4738 = vmul.f32 %v4718, %v4718
  %v4739 = vmul.f32 %v4719, %v4719
  %v4740 = vmul.f32 %v4720, %v4720
  %v4741 = vmul.f32 %v4721, %v4721
  %v4742 = vmul.f32 %v4722, %v4722
  %v4743 = vmul.f32 %v4723, %v4723
  %v4744 = vmul.f32 %v4724, %v4724
  %4745 = vmatprep.subr.mxu0 0.0
  %4746 = vmatpush1.msra.mxu0 %v58
  %4747 = vmatprep.subr.mxu0 0.0
  %4748 = vmatpush1.msra.mxu0 %v59
  %4749 = vmatprep.subr.mxu0 0.0
  %4750 = vmatpush1.msra.mxu0 %v60
  %4751 = vmatprep.subr.mxu0 0.0
  %4752 = vmatpush1.msra.mxu0 %v61
  %4753 = vmatprep.subr.mxu0 0.0
  %4754 = vmatpush1.msra.mxu0 %v62
  %4755 = vmatprep.subr.mxu0 0.0
  %4756 = vmatpush1.msra.mxu0 %v63
  %4757 = vmatprep.subr.mxu0 0.0
  %4758 = vmatpush1.msra.mxu0 %v64
  %4759 = vmatprep.subr.mxu0 0.0
  %4760 = vmatpush1.msra.mxu0 %v65
  %4761 = vmatprep.subr.mxu0 0.0
  %4762 = vmatpush1.msra.mxu0 %v66
  %4763 = vmatprep.subr.mxu0 0.0
  %4764 = vmatpush1.msra.mxu0 %v67
  %4765 = vmatprep.subr.mxu0 0.0
  %4766 = vmatpush1.msra.mxu0 %v68
  %4767 = vmatprep.subr.mxu0 0.0
  %4768 = vmatpush1.msra.mxu0 %v69
  %4769 = vmatprep.subr.mxu0 0.0
  %4770 = vmatpush1.msra.mxu0 %v70
  %4771 = vmatprep.subr.mxu0 0.0
  %4772 = vmatpush1.msra.mxu0 %v71
  %4773 = vmatprep.subr.mxu0 0.0
  %4774 = vmatpush1.msra.mxu0 %v72
  %4775 = vmatprep.subr.mxu0 0.0
  %4776 = vmatpush1.msra.mxu0 %v73
  %4777 = vmatprep.subr.mxu0 0.0
  %4778 = vmatpush1.msra.mxu0 %v74
  %4779 = vmatprep.subr.mxu0 0.0
  %4780 = vmatpush1.msra.mxu0 %v75
  %4781 = vmatprep.subr.mxu0 0.0
  %4782 = vmatpush1.msra.mxu0 %v76
  %4783 = vmatprep.subr.mxu0 0.0
  %4784 = vmatpush1.msra.mxu0 %v77
  %4785 = vmatprep.subr.mxu0 0.0
  %4786 = vmatpush1.msra.mxu0 %v78
  %4787 = vmatprep.subr.mxu0 0.0
  %4788 = vmatpush1.msra.mxu0 %v79
  %4789 = vmatprep.subr.mxu0 0.0
  %4790 = vmatpush1.msra.mxu0 %v80
  %4791 = vmatprep.subr.mxu0 0.0
  %4792 = vmatpush1.msra.mxu0 %v81
  %4793 = vmatprep.subr.mxu0 0.0
  %4794 = vmatpush1.msra.mxu0 %v82
  %4795 = vmatprep.subr.mxu0 0.0
  %4796 = vmatpush1.msra.mxu0 %v83
  %4797 = vmatprep.subr.mxu0 0.0
  %4798 = vmatpush1.msra.mxu0 %v84
  %4799 = vmatprep.subr.mxu0 0.0
  %4800 = vmatpush1.msra.mxu0 %v85
  %4801 = vmatprep.subr.mxu0 0.0
  %4802 = vmatpush1.msra.mxu0 %v86
  %4803 = vmatprep.subr.mxu0 0.0
  %4804 = vmatpush1.msra.mxu0 %v87
  %4805 = vmatprep.subr.mxu0 0.0
  %4806 = vmatpush1.msra.mxu0 %v88
  %4807 = vmatprep.subr.mxu0 0.0
  %4808 = vmatpush1.msra.mxu0 %v89
  %4809 = vmatprep.mubr.f32.mxu0 %v4726
  %4810 = vmatmul.mubr.f32.gmra.mrb[0].mxu0 %v4725
  %v4811 = vpop.f32.mrb[0].mxu0
  %v4812 = vadd.f32 0.0, %v4811
  %v4813 = vpop.f32.mrb[0].mxu0
  %4814 = vmatprep.mubr.f32.mxu0 %v4731
  %4815 = vmatmul.mubr.f32.gmra.mrb[0].mxu0 %v4730
  %v4816 = vpop.f32.mrb[0].mxu0
  %v4817 = vadd.f32 0.0, %v4816
  %v4818 = vpop.f32.mrb[0].mxu0
  %4819 = vmatprep.mubr.f32.mxu0 %v4736
  %4820 = vmatmul.mubr.f32.gmra.mrb[0].mxu0 %v4735
  %v4821 = vpop.f32.mrb[0].mxu0
  %v4822 = vadd.f32 0.0, %v4821
  %v4823 = vpop.f32.mrb[0].mxu0
  %4824 = vmatprep.mubr.f32.mxu0 %v4741
  %4825 = vmatmul.mubr.f32.gmra.mrb[0].mxu0 %v4740
  %v4826 = vpop.f32.mrb[0].mxu0
  %v4827 = vadd.f32 0.0, %v4826
  %v4828 = vpop.f32.mrb[0].mxu0
  %4829 = vdwg.mxu0
  %4830 = vmatprep.subr.mxu0 0.0
  %4831 = vmatpush1.msra.mxu0 %v90
  %4832 = vmatprep.subr.mxu0 0.0
  %4833 = vmatpush1.msra.mxu0 %v91
  %4834 = vmatprep.subr.mxu0 0.0
  %4835 = vmatpush1.msra.mxu0 %v92
  %4836 = vmatprep.subr.mxu0 0.0
  %4837 = vmatpush1.msra.mxu0 %v93
  %4838 = vmatprep.subr.mxu0 0.0
  %4839 = vmatpush1.msra.mxu0 %v94
  %4840 = vmatprep.subr.mxu0 0.0
  %4841 = vmatpush1.msra.mxu0 %v95
  %4842 = vmatprep.subr.mxu0 0.0
  %4843 = vmatpush1.msra.mxu0 %v96
  %4844 = vmatprep.subr.mxu0 0.0
  %4845 = vmatpush1.msra.mxu0 %v97
  %4846 = vmatprep.subr.mxu0 0.0
  %4847 = vmatpush1.msra.mxu0 %v98
  %4848 = vmatprep.subr.mxu0 0.0
  %4849 = vmatpush1.msra.mxu0 %v99
  %4850 = vmatprep.subr.mxu0 0.0
  %4851 = vmatpush1.msra.mxu0 %v100
  %4852 = vmatprep.subr.mxu0 0.0
  %4853 = vmatpush1.msra.mxu0 %v101
  %4854 = vmatprep.subr.mxu0 0.0
  %4855 = vmatpush1.msra.mxu0 %v102
  %4856 = vmatprep.subr.mxu0 0.0
  %4857 = vmatpush1.msra.mxu0 %v103
  %4858 = vmatprep.subr.mxu0 0.0
  %4859 = vmatpush1.msra.mxu0 %v104
  %4860 = vmatprep.subr.mxu0 0.0
  %4861 = vmatpush1.msra.mxu0 %v105
  %4862 = vmatprep.subr.mxu0 0.0
  %4863 = vmatpush1.msra.mxu0 %v106
  %4864 = vmatprep.subr.mxu0 0.0
  %4865 = vmatpush1.msra.mxu0 %v107
  %4866 = vmatprep.subr.mxu0 0.0
  %4867 = vmatpush1.msra.mxu0 %v108
  %4868 = vmatprep.subr.mxu0 0.0
  %4869 = vmatpush1.msra.mxu0 %v109
  %4870 = vmatprep.subr.mxu0 0.0
  %4871 = vmatpush1.msra.mxu0 %v110
  %4872 = vmatprep.subr.mxu0 0.0
  %4873 = vmatpush1.msra.mxu0 %v111
  %4874 = vmatprep.subr.mxu0 0.0
  %4875 = vmatpush1.msra.mxu0 %v112
  %4876 = vmatprep.subr.mxu0 0.0
  %4877 = vmatpush1.msra.mxu0 %v113
  %4878 = vmatprep.subr.mxu0 0.0
  %4879 = vmatpush1.msra.mxu0 %v114
  %4880 = vmatprep.subr.mxu0 0.0
  %4881 = vmatpush1.msra.mxu0 %v115
  %4882 = vmatprep.subr.mxu0 0.0
  %4883 = vmatpush1.msra.mxu0 %v116
  %4884 = vmatprep.subr.mxu0 0.0
  %4885 = vmatpush1.msra.mxu0 %v117
  %4886 = vmatprep.subr.mxu0 0.0
  %4887 = vmatpush1.msra.mxu0 %v118
  %4888 = vmatprep.subr.mxu0 0.0
  %4889 = vmatpush1.msra.mxu0 %v119
  %4890 = vmatprep.subr.mxu0 0.0
  %4891 = vmatpush1.msra.mxu0 %v120
  %4892 = vmatprep.subr.mxu0 0.0
  %4893 = vmatpush1.msra.mxu0 %v121
  %4894 = vmatprep.mubr.f32.mxu0 %v4728
  %4895 = vmatmul.mubr.f32.gmra.mrb[0].mxu0 %v4727
  %v4896 = vpop.f32.mrb[0].mxu0
  %v4897 = vadd.f32 %v4812, %v4896
  %v4898 = vpop.f32.mrb[0].mxu0
  %4899 = vmatprep.mubr.f32.mxu0 %v4733
  %4900 = vmatmul.mubr.f32.gmra.mrb[0].mxu0 %v4732
  %v4901 = vpop.f32.mrb[0].mxu0
  %v4902 = vadd.f32 %v4817, %v4901
  %v4903 = vpop.f32.mrb[0].mxu0
  %4904 = vmatprep.mubr.f32.mxu0 %v4738
  %4905 = vmatmul.mubr.f32.gmra.mrb[0].mxu0 %v4737
  %v4906 = vpop.f32.mrb[0].mxu0
  %v4907 = vadd.f32 %v4822, %v4906
  %v4908 = vpop.f32.mrb[0].mxu0
  %4909 = vmatprep.mubr.f32.mxu0 %v4743
  %4910 = vmatmul.mubr.f32.gmra.mrb[0].mxu0 %v4742
  %v4911 = vpop.f32.mrb[0].mxu0
  %v4912 = vadd.f32 %v4827, %v4911
  %v4913 = vpop.f32.mrb[0].mxu0
  %4914 = vdwg.mxu0
  %4915 = vmatprep.subr.mxu0 0.0
  %4916 = vmatpush1.msra.mxu0 %v122
  %4917 = vmatprep.subr.mxu0 0.0
  %4918 = vmatpush1.msra.mxu0 %v123
  %4919 = vmatprep.subr.mxu0 0.0
  %4920 = vmatpush1.msra.mxu0 %v124
  %4921 = vmatprep.subr.mxu0 0.0
  %4922 = vmatpush1.msra.mxu0 %v125
  %4923 = vmatprep.subr.mxu0 0.0
  %4924 = vmatpush1.msra.mxu0 %v126
  %4925 = vmatprep.subr.mxu0 0.0
  %4926 = vmatpush1.msra.mxu0 %v127
  %4927 = vmatprep.subr.mxu0 0.0
  %4928 = vmatpush1.msra.mxu0 %v128
  %4929 = vmatprep.subr.mxu0 0.0
  %4930 = vmatpush1.msra.mxu0 %v129
  %4931 = vmatprep.subr.mxu0 0.0
  %4932 = vmatpush1.msra.mxu0 %v130
  %4933 = vmatprep.subr.mxu0 0.0
  %4934 = vmatpush1.msra.mxu0 %v131
  %4935 = vmatprep.subr.mxu0 0.0
  %4936 = vmatpush1.msra.mxu0 %v132
  %4937 = vmatprep.subr.mxu0 0.0
  %4938 = vmatpush1.msra.mxu0 %v133
  %4939 = vmatprep.subr.mxu0 0.0
  %4940 = vmatpush1.msra.mxu0 %v134
  %4941 = vmatprep.subr.mxu0 0.0
  %4942 = vmatpush1.msra.mxu0 %v135
  %4943 = vmatprep.subr.mxu0 0.0
  %4944 = vmatpush1.msra.mxu0 %v136
  %4945 = vmatprep.subr.mxu0 0.0
  %4946 = vmatpush1.msra.mxu0 %v137
  %4947 = vmatprep.subr.mxu0 0.0
  %4948 = vmatpush1.msra.mxu0 0.0
  %4949 = vmatprep.subr.mxu0 0.0
  %4950 = vmatpush1.msra.mxu0 0.0
  %4951 = vmatprep.subr.mxu0 0.0
  %4952 = vmatpush1.msra.mxu0 0.0
  %4953 = vmatprep.subr.mxu0 0.0
  %4954 = vmatpush1.msra.mxu0 0.0
  %4955 = vmatprep.subr.mxu0 0.0
  %4956 = vmatpush1.msra.mxu0 0.0
  %4957 = vmatprep.subr.mxu0 0.0
  %4958 = vmatpush1.msra.mxu0 0.0
  %4959 = vmatprep.subr.mxu0 0.0
  %4960 = vmatpush1.msra.mxu0 0.0
  %4961 = vmatprep.subr.mxu0 0.0
  %4962 = vmatpush1.msra.mxu0 0.0
  %4963 = vmatprep.subr.mxu0 0.0
  %4964 = vmatpush1.msra.mxu0 0.0
  %4965 = vmatprep.subr.mxu0 0.0
  %4966 = vmatpush1.msra.mxu0 0.0
  %4967 = vmatprep.subr.mxu0 0.0
  %4968 = vmatpush1.msra.mxu0 0.0
  %4969 = vmatprep.subr.mxu0 0.0
  %4970 = vmatpush1.msra.mxu0 0.0
  %4971 = vmatprep.subr.mxu0 0.0
  %4972 = vmatpush1.msra.mxu0 0.0
  %4973 = vmatprep.subr.mxu0 0.0
  %4974 = vmatpush1.msra.mxu0 0.0
  %4975 = vmatprep.subr.mxu0 0.0
  %4976 = vmatpush1.msra.mxu0 0.0
  %4977 = vmatprep.subr.mxu0 0.0
  %4978 = vmatpush1.msra.mxu0 0.0
  %4979 = vmatprep.mubr.f32.mxu0 0.0
  %4980 = vmatmul.mubr.f32.gmra.mrb[0].mxu0 %v4729
  %v4981 = vpop.f32.mrb[0].mxu0
  %v4982 = vadd.f32 %v4897, %v4981
  %v4983 = vpop.f32.mrb[0].mxu0
  %4984 = vmatprep.mubr.f32.mxu0 0.0
  %4985 = vmatmul.mubr.f32.gmra.mrb[0].mxu0 %v4734
  %v4986 = vpop.f32.mrb[0].mxu0
  %v4987 = vadd.f32 %v4902, %v4986
  %v4988 = vpop.f32.mrb[0].mxu0
  %4989 = vmatprep.mubr.f32.mxu0 0.0
  %4990 = vmatmul.mubr.f32.gmra.mrb[0].mxu0 %v4739
  %v4991 = vpop.f32.mrb[0].mxu0
  %v4992 = vadd.f32 %v4907, %v4991
  %v4993 = vpop.f32.mrb[0].mxu0
  %4994 = vmatprep.mubr.f32.mxu0 0.0
  %4995 = vmatmul.mubr.f32.gmra.mrb[0].mxu0 %v4744
  %v4996 = vpop.f32.mrb[0].mxu0
  %v4997 = vadd.f32 %v4912, %v4996
  %v4998 = vpop.f32.mrb[0].mxu0
  %4999 = vdwg.mxu0
  %v5000 = vmul.f32 %v4982, 0.001953125
  %v5001 = vmul.f32 %v4987, 0.001953125
  %v5002 = vmul.f32 %v4992, 0.001953125
  %v5003 = vmul.f32 %v4997, 0.001953125
  %v5004 = vadd.f32 %v5000, 1e-05
  %v5005 = vadd.f32 %v5001, 1e-05
  %v5006 = vadd.f32 %v5002, 1e-05
  %v5007 = vadd.f32 %v5003, 1e-05
  %v5008 = vrsqrt.pop %v5004
  %v5009 = vrsqrt.pop %v5005
  %v5010 = vrsqrt.pop %v5006
  %v5011 = vrsqrt.pop %v5007
  %5013 = vset.pattern.permute.xlu0 0
  %5014 = vperm.xlu0 %5013, %v5008
  %v5015 = vpop.permute.xlu0 %5014
  %5018 = vset.pattern.permute.xlu0 0
  %5019 = vperm.xlu0 %5018, %v5009
  %v5020 = vpop.permute.xlu0 %5019
  %5023 = vset.pattern.permute.xlu0 0
  %5024 = vperm.xlu0 %5023, %v5010
  %v5025 = vpop.permute.xlu0 %5024
  %5028 = vset.pattern.permute.xlu0 0
  %5029 = vperm.xlu0 %5028, %v5011
  %v5030 = vpop.permute.xlu0 %5029
  %v5032 = vmul.f32 %v4705, %v5015
  %v5033 = vmul.f32 %v4706, %v5015
  %v5034 = vmul.f32 %v4707, %v5015
  %v5035 = vmul.f32 %v4708, %v5015
  %v5036 = vmul.f32 %v4709, %v5015
  %v5037 = vmul.f32 %v4710, %v5020
  %v5038 = vmul.f32 %v4711, %v5020
  %v5039 = vmul.f32 %v4712, %v5020
  %v5040 = vmul.f32 %v4713, %v5020
  %v5041 = vmul.f32 %v4714, %v5020
  %v5042 = vmul.f32 %v4715, %v5025
  %v5043 = vmul.f32 %v4716, %v5025
  %v5044 = vmul.f32 %v4717, %v5025
  %v5045 = vmul.f32 %v4718, %v5025
  %v5046 = vmul.f32 %v4719, %v5025
  %v5047 = vmul.f32 %v4720, %v5030
  %v5048 = vmul.f32 %v4721, %v5030
  %v5049 = vmul.f32 %v4722, %v5030
  %v5050 = vmul.f32 %v4723, %v5030
  %v5051 = vmul.f32 %v4724, %v5030
  %v5052 = vld [vmem:[%s10] sm:$0xff]
  %v5053 = vld [vmem:[%s10 + $0x8] sm:$0xff]
  %v5054 = vld [vmem:[%s10 + $0x10] sm:$0xff]
  %v5055 = vld [vmem:[%s10 + $0x18] sm:$0xff]
  %5057 = vset.pattern.permute.xlu0 0
  %5058 = vperm.xlu0 %5057, %v5052
  %v5059 = vpop.permute.xlu0 %5058
  %5062 = vset.pattern.permute.xlu0 0
  %5063 = vperm.xlu0 %5062, %v5053
  %v5064 = vpop.permute.xlu0 %5063
  %5067 = vset.pattern.permute.xlu0 0
  %5068 = vperm.xlu0 %5067, %v5054
  %v5069 = vpop.permute.xlu0 %5068
  %5072 = vset.pattern.permute.xlu0 0
  %5073 = vperm.xlu0 %5072, %v5055
  %v5074 = vpop.permute.xlu0 %5073
  %v5076 = vmul.f32 %v5032, %v5059
  %v5077 = vmul.f32 %v5033, %v5059
  %v5078 = vmul.f32 %v5034, %v5059
  %v5079 = vmul.f32 %v5035, %v5059
  %v5080 = vmul.f32 %v5036, %v5059
  %v5081 = vmul.f32 %v5037, %v5064
  %v5082 = vmul.f32 %v5038, %v5064
  %v5083 = vmul.f32 %v5039, %v5064
  %v5084 = vmul.f32 %v5040, %v5064
  %v5085 = vmul.f32 %v5041, %v5064
  %v5086 = vmul.f32 %v5042, %v5069
  %v5087 = vmul.f32 %v5043, %v5069
  %v5088 = vmul.f32 %v5044, %v5069
  %v5089 = vmul.f32 %v5045, %v5069
  %v5090 = vmul.f32 %v5046, %v5069
  %v5091 = vmul.f32 %v5047, %v5074
  %v5092 = vmul.f32 %v5048, %v5074
  %v5093 = vmul.f32 %v5049, %v5074
  %v5094 = vmul.f32 %v5050, %v5074
  %v5095 = vmul.f32 %v5051, %v5074
  %v5096 = vld [vmem:[%s11] sm:$0xff]
  %v5097 = vld [vmem:[%s11 + $0x8] sm:$0xff]
  %v5098 = vld [vmem:[%s11 + $0x10] sm:$0xff]
  %v5099 = vld [vmem:[%s11 + $0x18] sm:$0xff]
  %5101 = vset.pattern.permute.xlu0 0
  %5102 = vperm.xlu0 %5101, %v5096
  %v5103 = vpop.permute.xlu0 %5102
  %5106 = vset.pattern.permute.xlu0 0
  %5107 = vperm.xlu0 %5106, %v5097
  %v5108 = vpop.permute.xlu0 %5107
  %5111 = vset.pattern.permute.xlu0 0
  %5112 = vperm.xlu0 %5111, %v5098
  %v5113 = vpop.permute.xlu0 %5112
  %5116 = vset.pattern.permute.xlu0 0
  %5117 = vperm.xlu0 %5116, %v5099
  %v5118 = vpop.permute.xlu0 %5117
  %v5120 = vadd.f32 %v5076, %v5103
  %v5121 = vadd.f32 %v5077, %v5103
  %v5122 = vadd.f32 %v5078, %v5103
  %v5123 = vadd.f32 %v5079, %v5103
  %v5124 = vadd.f32 %v5080, %v5103
  %v5125 = vadd.f32 %v5081, %v5108
  %v5126 = vadd.f32 %v5082, %v5108
  %v5127 = vadd.f32 %v5083, %v5108
  %v5128 = vadd.f32 %v5084, %v5108
  %v5129 = vadd.f32 %v5085, %v5108
  %v5130 = vadd.f32 %v5086, %v5113
  %v5131 = vadd.f32 %v5087, %v5113
  %v5132 = vadd.f32 %v5088, %v5113
  %v5133 = vadd.f32 %v5089, %v5113
  %v5134 = vadd.f32 %v5090, %v5113
  %v5135 = vadd.f32 %v5091, %v5118
  %v5136 = vadd.f32 %v5092, %v5118
  %v5137 = vadd.f32 %v5093, %v5118
  %v5138 = vadd.f32 %v5094, %v5118
  %v5139 = vadd.f32 %v5095, %v5118
  %v5140 = vmax.f32 %v5120, 0.0
  %v5141 = vmax.f32 %v5121, 0.0
  %v5142 = vmax.f32 %v5122, 0.0
  %v5143 = vmax.f32 %v5123, 0.0
  %v5144 = vmax.f32 %v5124, 0.0
  %v5145 = vmax.f32 %v5125, 0.0
  %v5146 = vmax.f32 %v5126, 0.0
  %v5147 = vmax.f32 %v5127, 0.0
  %v5148 = vmax.f32 %v5128, 0.0
  %v5149 = vmax.f32 %v5129, 0.0
  %v5150 = vmax.f32 %v5130, 0.0
  %v5151 = vmax.f32 %v5131, 0.0
  %v5152 = vmax.f32 %v5132, 0.0
  %v5153 = vmax.f32 %v5133, 0.0
  %v5154 = vmax.f32 %v5134, 0.0
  %v5155 = vmax.f32 %v5135, 0.0
  %v5156 = vmax.f32 %v5136, 0.0
  %v5157 = vmax.f32 %v5137, 0.0
  %v5158 = vmax.f32 %v5138, 0.0
  %v5159 = vmax.f32 %v5139, 0.0
  %v5160 = vmul.f32 %v5140, %v1006
  %v5161 = vmul.f32 %v5141, %v1010
  %v5162 = vmul.f32 %v5142, %v1014
  %v5163 = vmul.f32 %v5143, %v1018
  %v5164 = vmul.f32 %v5144, %v1022
  %v5165 = vmul.f32 %v5145, %v1006
  %v5166 = vmul.f32 %v5146, %v1010
  %v5167 = vmul.f32 %v5147, %v1014
  %v5168 = vmul.f32 %v5148, %v1018
  %v5169 = vmul.f32 %v5149, %v1022
  %v5170 = vmul.f32 %v5150, %v1006
  %v5171 = vmul.f32 %v5151, %v1010
  %v5172 = vmul.f32 %v5152, %v1014
  %v5173 = vmul.f32 %v5153, %v1018
  %v5174 = vmul.f32 %v5154, %v1022
  %v5175 = vmul.f32 %v5155, %v1006
  %v5176 = vmul.f32 %v5156, %v1010
  %v5177 = vmul.f32 %v5157, %v1014
  %v5178 = vmul.f32 %v5158, %v1018
  %v5179 = vmul.f32 %v5159, %v1022
  %v5180 = vpack.c.bf16 %v5165, %v5160
  %v5181 = vpack.c.bf16 %v5166, %v5161
  %v5182 = vpack.c.bf16 %v5167, %v5162
  %v5183 = vpack.c.bf16 %v5168, %v5163
  %v5184 = vpack.c.bf16 %v5169, %v5164
  %v5185 = vpack.c.bf16 %v5175, %v5170
  %v5186 = vpack.c.bf16 %v5176, %v5171
  %v5187 = vpack.c.bf16 %v5177, %v5172
  %v5188 = vpack.c.bf16 %v5178, %v5173
  %v5189 = vpack.c.bf16 %v5179, %v5174
  %5190 = vst [vmem:[#allocation2 + $0x8] sm:$0xff] %v5180
  %5191 = vst [vmem:[#allocation2 + $0x10] sm:$0xff] %v5181
  %5192 = vst [vmem:[#allocation2 + $0x18] sm:$0xff] %v5182
  %5193 = vst [vmem:[#allocation2 + $0x20] sm:$0xff] %v5183
  %5194 = vst [vmem:[#allocation2 + $0x28] sm:$0xff] %v5184
  %5195 = vst [vmem:[#allocation2 + $0x40] sm:$0xff] %v5185
  %5196 = vst [vmem:[#allocation2 + $0x48] sm:$0xff] %v5186
  %5197 = vst [vmem:[#allocation2 + $0x50] sm:$0xff] %v5187
  %5198 = vst [vmem:[#allocation2 + $0x58] sm:$0xff] %v5188
  %5199 = vst [vmem:[#allocation2 + $0x60] sm:$0xff] %v5189
  %v5200 = vld [vmem:[#allocation2] sm:$0xff]
  %v5201 = vld [vmem:[#allocation2 + $0x8] sm:$0xff]
  %v5202 = vld [vmem:[#allocation2 + $0x10] sm:$0xff]
  %v5203 = vld [vmem:[#allocation2 + $0x18] sm:$0xff]
  %v5204 = vld [vmem:[#allocation2 + $0x20] sm:$0xff]
  %v5205 = vld [vmem:[#allocation2 + $0x28] sm:$0xff]
  %v5206 = vld [vmem:[#allocation2 + $0x30] sm:$0xff]
  %v5207 = vld [vmem:[#allocation2 + $0x38] sm:$0xff]
  %v5208 = vld [vmem:[#allocation2 + $0x40] sm:$0xff]
  %v5209 = vld [vmem:[#allocation2 + $0x48] sm:$0xff]
  %v5210 = vld [vmem:[#allocation2 + $0x50] sm:$0xff]
  %v5211 = vld [vmem:[#allocation2 + $0x58] sm:$0xff]
  %v5212 = vld [vmem:[#allocation2 + $0x60] sm:$0xff]
  %v5213 = vld [vmem:[#allocation2 + $0x68] sm:$0xff]
  %5226 = vrot.lane.b32.xlu0 %v5200, 127
  %v5227 = vpop.permute.xlu0 %5226
  %5228 = vrot.lane.b32.xlu0 %v5201, 127
  %v5229 = vpop.permute.xlu0 %5228
  %5230 = vrot.lane.b32.xlu0 %v5202, 127
  %v5231 = vpop.permute.xlu0 %5230
  %5232 = vrot.lane.b32.xlu0 %v5203, 127
  %v5233 = vpop.permute.xlu0 %5232
  %5234 = vrot.lane.b32.xlu0 %v5204, 127
  %v5235 = vpop.permute.xlu0 %5234
  %5236 = vrot.lane.b32.xlu0 %v5205, 127
  %v5237 = vpop.permute.xlu0 %5236
  %5238 = vrot.lane.b32.xlu0 %v5207, 127
  %v5239 = vpop.permute.xlu0 %5238
  %5240 = vrot.lane.b32.xlu0 %v5208, 127
  %v5241 = vpop.permute.xlu0 %5240
  %5242 = vrot.lane.b32.xlu0 %v5209, 127
  %v5243 = vpop.permute.xlu0 %5242
  %5244 = vrot.lane.b32.xlu0 %v5210, 127
  %v5245 = vpop.permute.xlu0 %5244
  %5246 = vrot.lane.b32.xlu0 %v5211, 127
  %v5247 = vpop.permute.xlu0 %5246
  %5248 = vrot.lane.b32.xlu0 %v5212, 127
  %v5249 = vpop.permute.xlu0 %5248
  %v5250 = vsel %vm186, %v5227, %v5229
  %v5251 = vsel %vm186, %v5229, %v5231
  %v5252 = vsel %vm186, %v5231, %v5233
  %v5253 = vsel %vm186, %v5233, %v5235
  %v5254 = vsel %vm186, %v5235, %v5237
  %v5255 = vsel %vm186, %v5239, %v5241
  %v5256 = vsel %vm186, %v5241, %v5243
  %v5257 = vsel %vm186, %v5243, %v5245
  %v5258 = vsel %vm186, %v5245, %v5247
  %v5259 = vsel %vm186, %v5247, %v5249
  %5260 = vrot.lane.b32.xlu0 %v5200, 126
  %v5261 = vpop.permute.xlu0 %5260
  %5262 = vrot.lane.b32.xlu0 %v5201, 126
  %v5263 = vpop.permute.xlu0 %5262
  %5264 = vrot.lane.b32.xlu0 %v5202, 126
  %v5265 = vpop.permute.xlu0 %5264
  %5266 = vrot.lane.b32.xlu0 %v5203, 126
  %v5267 = vpop.permute.xlu0 %5266
  %5268 = vrot.lane.b32.xlu0 %v5204, 126
  %v5269 = vpop.permute.xlu0 %5268
  %5270 = vrot.lane.b32.xlu0 %v5205, 126
  %v5271 = vpop.permute.xlu0 %5270
  %5272 = vrot.lane.b32.xlu0 %v5207, 126
  %v5273 = vpop.permute.xlu0 %5272
  %5274 = vrot.lane.b32.xlu0 %v5208, 126
  %v5275 = vpop.permute.xlu0 %5274
  %5276 = vrot.lane.b32.xlu0 %v5209, 126
  %v5277 = vpop.permute.xlu0 %5276
  %5278 = vrot.lane.b32.xlu0 %v5210, 126
  %v5279 = vpop.permute.xlu0 %5278
  %5280 = vrot.lane.b32.xlu0 %v5211, 126
  %v5281 = vpop.permute.xlu0 %5280
  %5282 = vrot.lane.b32.xlu0 %v5212, 126
  %v5283 = vpop.permute.xlu0 %5282
  %v5284 = vsel %vm204, %v5261, %v5263
  %v5285 = vsel %vm204, %v5263, %v5265
  %v5286 = vsel %vm204, %v5265, %v5267
  %v5287 = vsel %vm204, %v5267, %v5269
  %v5288 = vsel %vm204, %v5269, %v5271
  %v5289 = vsel %vm204, %v5273, %v5275
  %v5290 = vsel %vm204, %v5275, %v5277
  %v5291 = vsel %vm204, %v5277, %v5279
  %v5292 = vsel %vm204, %v5279, %v5281
  %v5293 = vsel %vm204, %v5281, %v5283
  %5294 = vrot.lane.b32.xlu0 %v5200, 111
  %v5295 = vpop.permute.xlu0 %5294
  %5296 = vrot.lane.b32.xlu0 %v5201, 111
  %v5297 = vpop.permute.xlu0 %5296
  %5298 = vrot.lane.b32.xlu0 %v5202, 111
  %v5299 = vpop.permute.xlu0 %5298
  %5300 = vrot.lane.b32.xlu0 %v5203, 111
  %v5301 = vpop.permute.xlu0 %5300
  %5302 = vrot.lane.b32.xlu0 %v5204, 111
  %v5303 = vpop.permute.xlu0 %5302
  %5304 = vrot.lane.b32.xlu0 %v5205, 111
  %v5305 = vpop.permute.xlu0 %5304
  %5306 = vrot.lane.b32.xlu0 %v5207, 111
  %v5307 = vpop.permute.xlu0 %5306
  %5308 = vrot.lane.b32.xlu0 %v5208, 111
  %v5309 = vpop.permute.xlu0 %5308
  %5310 = vrot.lane.b32.xlu0 %v5209, 111
  %v5311 = vpop.permute.xlu0 %5310
  %5312 = vrot.lane.b32.xlu0 %v5210, 111
  %v5313 = vpop.permute.xlu0 %5312
  %5314 = vrot.lane.b32.xlu0 %v5211, 111
  %v5315 = vpop.permute.xlu0 %5314
  %5316 = vrot.lane.b32.xlu0 %v5212, 111
  %v5317 = vpop.permute.xlu0 %5316
  %v5318 = vsel %vm222, %v5295, %v5297
  %v5319 = vsel %vm222, %v5297, %v5299
  %v5320 = vsel %vm222, %v5299, %v5301
  %v5321 = vsel %vm222, %v5301, %v5303
  %v5322 = vsel %vm222, %v5303, %v5305
  %v5323 = vsel %vm222, %v5307, %v5309
  %v5324 = vsel %vm222, %v5309, %v5311
  %v5325 = vsel %vm222, %v5311, %v5313
  %v5326 = vsel %vm222, %v5313, %v5315
  %v5327 = vsel %vm222, %v5315, %v5317
  %5328 = vrot.lane.b32.xlu0 %v5201, 110
  %v5329 = vpop.permute.xlu0 %5328
  %5330 = vrot.lane.b32.xlu0 %v5202, 110
  %v5331 = vpop.permute.xlu0 %5330
  %5332 = vrot.lane.b32.xlu0 %v5203, 110
  %v5333 = vpop.permute.xlu0 %5332
  %5334 = vrot.lane.b32.xlu0 %v5204, 110
  %v5335 = vpop.permute.xlu0 %5334
  %5336 = vrot.lane.b32.xlu0 %v5205, 110
  %v5337 = vpop.permute.xlu0 %5336
  %5338 = vrot.lane.b32.xlu0 %v5208, 110
  %v5339 = vpop.permute.xlu0 %5338
  %5340 = vrot.lane.b32.xlu0 %v5209, 110
  %v5341 = vpop.permute.xlu0 %5340
  %5342 = vrot.lane.b32.xlu0 %v5210, 110
  %v5343 = vpop.permute.xlu0 %5342
  %5344 = vrot.lane.b32.xlu0 %v5211, 110
  %v5345 = vpop.permute.xlu0 %5344
  %5346 = vrot.lane.b32.xlu0 %v5212, 110
  %v5347 = vpop.permute.xlu0 %5346
  %v5348 = vsel %vm238, %v5329, %v5331
  %v5349 = vsel %vm238, %v5331, %v5333
  %v5350 = vsel %vm238, %v5333, %v5335
  %v5351 = vsel %vm238, %v5335, %v5337
  %v5352 = vsel %vm238, %v5339, %v5341
  %v5353 = vsel %vm238, %v5341, %v5343
  %v5354 = vsel %vm238, %v5343, %v5345
  %v5355 = vsel %vm238, %v5345, %v5347
  %5358 = vrot.lane.b32.xlu0 %v5201, 109
  %v5359 = vpop.permute.xlu0 %5358
  %5360 = vrot.lane.b32.xlu0 %v5202, 109
  %v5361 = vpop.permute.xlu0 %5360
  %5362 = vrot.lane.b32.xlu0 %v5203, 109
  %v5363 = vpop.permute.xlu0 %5362
  %5364 = vrot.lane.b32.xlu0 %v5204, 109
  %v5365 = vpop.permute.xlu0 %5364
  %5366 = vrot.lane.b32.xlu0 %v5205, 109
  %v5367 = vpop.permute.xlu0 %5366
  %5368 = vrot.lane.b32.xlu0 %v5206, 109
  %v5369 = vpop.permute.xlu0 %5368
  %5370 = vrot.lane.b32.xlu0 %v5208, 109
  %v5371 = vpop.permute.xlu0 %5370
  %5372 = vrot.lane.b32.xlu0 %v5209, 109
  %v5373 = vpop.permute.xlu0 %5372
  %5374 = vrot.lane.b32.xlu0 %v5210, 109
  %v5375 = vpop.permute.xlu0 %5374
  %5376 = vrot.lane.b32.xlu0 %v5211, 109
  %v5377 = vpop.permute.xlu0 %5376
  %5378 = vrot.lane.b32.xlu0 %v5212, 109
  %v5379 = vpop.permute.xlu0 %5378
  %5380 = vrot.lane.b32.xlu0 %v5213, 109
  %v5381 = vpop.permute.xlu0 %5380
  %v5382 = vsel %vm260, %v5359, %v5361
  %v5383 = vsel %vm260, %v5361, %v5363
  %v5384 = vsel %vm260, %v5363, %v5365
  %v5385 = vsel %vm260, %v5365, %v5367
  %v5386 = vsel %vm260, %v5367, %v5369
  %v5387 = vsel %vm260, %v5371, %v5373
  %v5388 = vsel %vm260, %v5373, %v5375
  %v5389 = vsel %vm260, %v5375, %v5377
  %v5390 = vsel %vm260, %v5377, %v5379
  %v5391 = vsel %vm260, %v5379, %v5381
  %5392 = vrot.lane.b32.xlu0 %v5201, 94
  %v5393 = vpop.permute.xlu0 %5392
  %5394 = vrot.lane.b32.xlu0 %v5202, 94
  %v5395 = vpop.permute.xlu0 %5394
  %5396 = vrot.lane.b32.xlu0 %v5203, 94
  %v5397 = vpop.permute.xlu0 %5396
  %5398 = vrot.lane.b32.xlu0 %v5204, 94
  %v5399 = vpop.permute.xlu0 %5398
  %5400 = vrot.lane.b32.xlu0 %v5205, 94
  %v5401 = vpop.permute.xlu0 %5400
  %5402 = vrot.lane.b32.xlu0 %v5206, 94
  %v5403 = vpop.permute.xlu0 %5402
  %5404 = vrot.lane.b32.xlu0 %v5208, 94
  %v5405 = vpop.permute.xlu0 %5404
  %5406 = vrot.lane.b32.xlu0 %v5209, 94
  %v5407 = vpop.permute.xlu0 %5406
  %5408 = vrot.lane.b32.xlu0 %v5210, 94
  %v5409 = vpop.permute.xlu0 %5408
  %5410 = vrot.lane.b32.xlu0 %v5211, 94
  %v5411 = vpop.permute.xlu0 %5410
  %5412 = vrot.lane.b32.xlu0 %v5212, 94
  %v5413 = vpop.permute.xlu0 %5412
  %5414 = vrot.lane.b32.xlu0 %v5213, 94
  %v5415 = vpop.permute.xlu0 %5414
  %v5416 = vsel %vm278, %v5393, %v5395
  %v5417 = vsel %vm278, %v5395, %v5397
  %v5418 = vsel %vm278, %v5397, %v5399
  %v5419 = vsel %vm278, %v5399, %v5401
  %v5420 = vsel %vm278, %v5401, %v5403
  %v5421 = vsel %vm278, %v5405, %v5407
  %v5422 = vsel %vm278, %v5407, %v5409
  %v5423 = vsel %vm278, %v5409, %v5411
  %v5424 = vsel %vm278, %v5411, %v5413
  %v5425 = vsel %vm278, %v5413, %v5415
  %5426 = vrot.lane.b32.xlu0 %v5201, 93
  %v5427 = vpop.permute.xlu0 %5426
  %5428 = vrot.lane.b32.xlu0 %v5202, 93
  %v5429 = vpop.permute.xlu0 %5428
  %5430 = vrot.lane.b32.xlu0 %v5203, 93
  %v5431 = vpop.permute.xlu0 %5430
  %5432 = vrot.lane.b32.xlu0 %v5204, 93
  %v5433 = vpop.permute.xlu0 %5432
  %5434 = vrot.lane.b32.xlu0 %v5205, 93
  %v5435 = vpop.permute.xlu0 %5434
  %5436 = vrot.lane.b32.xlu0 %v5206, 93
  %v5437 = vpop.permute.xlu0 %5436
  %5438 = vrot.lane.b32.xlu0 %v5208, 93
  %v5439 = vpop.permute.xlu0 %5438
  %5440 = vrot.lane.b32.xlu0 %v5209, 93
  %v5441 = vpop.permute.xlu0 %5440
  %5442 = vrot.lane.b32.xlu0 %v5210, 93
  %v5443 = vpop.permute.xlu0 %5442
  %5444 = vrot.lane.b32.xlu0 %v5211, 93
  %v5445 = vpop.permute.xlu0 %5444
  %5446 = vrot.lane.b32.xlu0 %v5212, 93
  %v5447 = vpop.permute.xlu0 %5446
  %5448 = vrot.lane.b32.xlu0 %v5213, 93
  %v5449 = vpop.permute.xlu0 %5448
  %v5450 = vsel %vm296, %v5427, %v5429
  %v5451 = vsel %vm296, %v5429, %v5431
  %v5452 = vsel %vm296, %v5431, %v5433
  %v5453 = vsel %vm296, %v5433, %v5435
  %v5454 = vsel %vm296, %v5435, %v5437
  %v5455 = vsel %vm296, %v5439, %v5441
  %v5456 = vsel %vm296, %v5441, %v5443
  %v5457 = vsel %vm296, %v5443, %v5445
  %v5458 = vsel %vm296, %v5445, %v5447
  %v5459 = vsel %vm296, %v5447, %v5449
  %5460 = vrot.lane.b32.xlu0 %v5201, 92
  %v5461 = vpop.permute.xlu0 %5460
  %5462 = vrot.lane.b32.xlu0 %v5202, 92
  %v5463 = vpop.permute.xlu0 %5462
  %5464 = vrot.lane.b32.xlu0 %v5203, 92
  %v5465 = vpop.permute.xlu0 %5464
  %5466 = vrot.lane.b32.xlu0 %v5204, 92
  %v5467 = vpop.permute.xlu0 %5466
  %5468 = vrot.lane.b32.xlu0 %v5205, 92
  %v5469 = vpop.permute.xlu0 %5468
  %5470 = vrot.lane.b32.xlu0 %v5206, 92
  %v5471 = vpop.permute.xlu0 %5470
  %5472 = vrot.lane.b32.xlu0 %v5208, 92
  %v5473 = vpop.permute.xlu0 %5472
  %5474 = vrot.lane.b32.xlu0 %v5209, 92
  %v5475 = vpop.permute.xlu0 %5474
  %5476 = vrot.lane.b32.xlu0 %v5210, 92
  %v5477 = vpop.permute.xlu0 %5476
  %5478 = vrot.lane.b32.xlu0 %v5211, 92
  %v5479 = vpop.permute.xlu0 %5478
  %5480 = vrot.lane.b32.xlu0 %v5212, 92
  %v5481 = vpop.permute.xlu0 %5480
  %5482 = vrot.lane.b32.xlu0 %v5213, 92
  %v5483 = vpop.permute.xlu0 %5482
  %v5484 = vsel %vm314, %v5461, %v5463
  %v5485 = vsel %vm314, %v5463, %v5465
  %v5486 = vsel %vm314, %v5465, %v5467
  %v5487 = vsel %vm314, %v5467, %v5469
  %v5488 = vsel %vm314, %v5469, %v5471
  %v5489 = vsel %vm314, %v5473, %v5475
  %v5490 = vsel %vm314, %v5475, %v5477
  %v5491 = vsel %vm314, %v5477, %v5479
  %v5492 = vsel %vm314, %v5479, %v5481
  %v5493 = vsel %vm314, %v5481, %v5483
  %v5494 = vld [vmem:[%s12] sm:$0xff]
  %v5495 = vld [vmem:[%s12 + $0x8] sm:$0xf]
  %v5496 = vld [vmem:[%s12 + $0xc] sm:$0xff]
  %v5497 = vld [vmem:[%s12 + $0x14] sm:$0xf]
  %v5498 = vld [vmem:[%s12 + $0x18] sm:$0xff]
  %v5499 = vld [vmem:[%s12 + $0x20] sm:$0xf]
  %v5500 = vld [vmem:[%s12 + $0x24] sm:$0xff]
  %v5501 = vld [vmem:[%s12 + $0x2c] sm:$0xf]
  %v5510 = vunpack.c.l.b16 %v5494
  %v5511 = vunpack.c.h.b16 %v5494
  %v5512 = vunpack.c.l.b16 %v5495
  %v5513 = vunpack.c.l.b16 %v5496
  %v5514 = vunpack.c.h.b16 %v5496
  %v5515 = vunpack.c.l.b16 %v5497
  %v5516 = vunpack.c.l.b16 %v5498
  %v5517 = vunpack.c.h.b16 %v5498
  %v5518 = vunpack.c.l.b16 %v5499
  %v5519 = vunpack.c.l.b16 %v5500
  %v5520 = vunpack.c.h.b16 %v5500
  %v5521 = vunpack.c.l.b16 %v5501
  %v5522 = vpack.c.b16 %v5513, %v5510
  %v5523 = vpack.c.b16 %v5514, %v5511
  %v5524 = vpack.c.b16 %v5515, %v5512
  %v5525 = vpack.c.b16 %v5519, %v5516
  %v5526 = vpack.c.b16 %v5520, %v5517
  %v5527 = vpack.c.b16 %v5521, %v5518
  %5532 = vrot.lane.b32.xlu0 %v5200, 18
  %v5533 = vpop.permute.xlu0 %5532
  %5534 = vrot.lane.b32.xlu0 %v5201, 18
  %v5535 = vpop.permute.xlu0 %5534
  %5536 = vrot.lane.b32.xlu0 %v5202, 18
  %v5537 = vpop.permute.xlu0 %5536
  %5538 = vrot.lane.b32.xlu0 %v5203, 18
  %v5539 = vpop.permute.xlu0 %5538
  %5540 = vrot.lane.b32.xlu0 %v5204, 18
  %v5541 = vpop.permute.xlu0 %5540
  %5542 = vrot.lane.b32.xlu0 %v5205, 18
  %v5543 = vpop.permute.xlu0 %5542
  %5544 = vrot.lane.b32.xlu0 %v5207, 18
  %v5545 = vpop.permute.xlu0 %5544
  %5546 = vrot.lane.b32.xlu0 %v5208, 18
  %v5547 = vpop.permute.xlu0 %5546
  %5548 = vrot.lane.b32.xlu0 %v5209, 18
  %v5549 = vpop.permute.xlu0 %5548
  %5550 = vrot.lane.b32.xlu0 %v5210, 18
  %v5551 = vpop.permute.xlu0 %5550
  %5552 = vrot.lane.b32.xlu0 %v5211, 18
  %v5553 = vpop.permute.xlu0 %5552
  %5554 = vrot.lane.b32.xlu0 %v5212, 18
  %v5555 = vpop.permute.xlu0 %5554
  %5556 = vrot.lane.b32.xlu0 %v5250, 18
  %v5557 = vpop.permute.xlu0 %5556
  %5558 = vrot.lane.b32.xlu0 %v5251, 18
  %v5559 = vpop.permute.xlu0 %5558
  %5560 = vrot.lane.b32.xlu0 %v5252, 18
  %v5561 = vpop.permute.xlu0 %5560
  %5562 = vrot.lane.b32.xlu0 %v5253, 18
  %v5563 = vpop.permute.xlu0 %5562
  %5564 = vrot.lane.b32.xlu0 %v5254, 18
  %v5565 = vpop.permute.xlu0 %5564
  %5566 = vrot.lane.b32.xlu0 %v5237, 18
  %v5567 = vpop.permute.xlu0 %5566
  %5568 = vrot.lane.b32.xlu0 %v5255, 18
  %v5569 = vpop.permute.xlu0 %5568
  %5570 = vrot.lane.b32.xlu0 %v5256, 18
  %v5571 = vpop.permute.xlu0 %5570
  %5572 = vrot.lane.b32.xlu0 %v5257, 18
  %v5573 = vpop.permute.xlu0 %5572
  %5574 = vrot.lane.b32.xlu0 %v5258, 18
  %v5575 = vpop.permute.xlu0 %5574
  %5576 = vrot.lane.b32.xlu0 %v5259, 18
  %v5577 = vpop.permute.xlu0 %5576
  %5578 = vrot.lane.b32.xlu0 %v5249, 18
  %v5579 = vpop.permute.xlu0 %5578
  %5580 = vrot.lane.b32.xlu0 %v5284, 18
  %v5581 = vpop.permute.xlu0 %5580
  %5582 = vrot.lane.b32.xlu0 %v5285, 18
  %v5583 = vpop.permute.xlu0 %5582
  %5584 = vrot.lane.b32.xlu0 %v5286, 18
  %v5585 = vpop.permute.xlu0 %5584
  %5586 = vrot.lane.b32.xlu0 %v5287, 18
  %v5587 = vpop.permute.xlu0 %5586
  %5588 = vrot.lane.b32.xlu0 %v5288, 18
  %v5589 = vpop.permute.xlu0 %5588
  %5590 = vrot.lane.b32.xlu0 %v5271, 18
  %v5591 = vpop.permute.xlu0 %5590
  %5592 = vrot.lane.b32.xlu0 %v5289, 18
  %v5593 = vpop.permute.xlu0 %5592
  %5594 = vrot.lane.b32.xlu0 %v5290, 18
  %v5595 = vpop.permute.xlu0 %5594
  %5596 = vrot.lane.b32.xlu0 %v5291, 18
  %v5597 = vpop.permute.xlu0 %5596
  %5598 = vrot.lane.b32.xlu0 %v5292, 18
  %v5599 = vpop.permute.xlu0 %5598
  %5600 = vrot.lane.b32.xlu0 %v5293, 18
  %v5601 = vpop.permute.xlu0 %5600
  %5602 = vrot.lane.b32.xlu0 %v5283, 18
  %v5603 = vpop.permute.xlu0 %5602
  %5604 = vrot.lane.b32.xlu0 %v5318, 18
  %v5605 = vpop.permute.xlu0 %5604
  %5606 = vrot.lane.b32.xlu0 %v5319, 18
  %v5607 = vpop.permute.xlu0 %5606
  %5608 = vrot.lane.b32.xlu0 %v5320, 18
  %v5609 = vpop.permute.xlu0 %5608
  %5610 = vrot.lane.b32.xlu0 %v5321, 18
  %v5611 = vpop.permute.xlu0 %5610
  %5612 = vrot.lane.b32.xlu0 %v5322, 18
  %v5613 = vpop.permute.xlu0 %5612
  %5614 = vrot.lane.b32.xlu0 %v5305, 18
  %v5615 = vpop.permute.xlu0 %5614
  %5616 = vrot.lane.b32.xlu0 %v5323, 18
  %v5617 = vpop.permute.xlu0 %5616
  %5618 = vrot.lane.b32.xlu0 %v5324, 18
  %v5619 = vpop.permute.xlu0 %5618
  %5620 = vrot.lane.b32.xlu0 %v5325, 18
  %v5621 = vpop.permute.xlu0 %5620
  %5622 = vrot.lane.b32.xlu0 %v5326, 18
  %v5623 = vpop.permute.xlu0 %5622
  %5624 = vrot.lane.b32.xlu0 %v5327, 18
  %v5625 = vpop.permute.xlu0 %5624
  %5626 = vrot.lane.b32.xlu0 %v5317, 18
  %v5627 = vpop.permute.xlu0 %5626
  %5628 = vrot.lane.b32.xlu0 %v5329, 18
  %v5629 = vpop.permute.xlu0 %5628
  %5630 = vrot.lane.b32.xlu0 %v5348, 18
  %v5631 = vpop.permute.xlu0 %5630
  %5632 = vrot.lane.b32.xlu0 %v5349, 18
  %v5633 = vpop.permute.xlu0 %5632
  %5634 = vrot.lane.b32.xlu0 %v5350, 18
  %v5635 = vpop.permute.xlu0 %5634
  %5636 = vrot.lane.b32.xlu0 %v5351, 18
  %v5637 = vpop.permute.xlu0 %5636
  %5638 = vrot.lane.b32.xlu0 %v5337, 18
  %v5639 = vpop.permute.xlu0 %5638
  %5640 = vrot.lane.b32.xlu0 %v5339, 18
  %v5641 = vpop.permute.xlu0 %5640
  %5642 = vrot.lane.b32.xlu0 %v5352, 18
  %v5643 = vpop.permute.xlu0 %5642
  %5644 = vrot.lane.b32.xlu0 %v5353, 18
  %v5645 = vpop.permute.xlu0 %5644
  %5646 = vrot.lane.b32.xlu0 %v5354, 18
  %v5647 = vpop.permute.xlu0 %5646
  %5648 = vrot.lane.b32.xlu0 %v5355, 18
  %v5649 = vpop.permute.xlu0 %5648
  %5650 = vrot.lane.b32.xlu0 %v5347, 18
  %v5651 = vpop.permute.xlu0 %5650
  %5652 = vrot.lane.b32.xlu0 %v5359, 18
  %v5653 = vpop.permute.xlu0 %5652
  %5654 = vrot.lane.b32.xlu0 %v5382, 18
  %v5655 = vpop.permute.xlu0 %5654
  %5656 = vrot.lane.b32.xlu0 %v5383, 18
  %v5657 = vpop.permute.xlu0 %5656
  %5658 = vrot.lane.b32.xlu0 %v5384, 18
  %v5659 = vpop.permute.xlu0 %5658
  %5660 = vrot.lane.b32.xlu0 %v5385, 18
  %v5661 = vpop.permute.xlu0 %5660
  %5662 = vrot.lane.b32.xlu0 %v5386, 18
  %v5663 = vpop.permute.xlu0 %5662
  %5664 = vrot.lane.b32.xlu0 %v5371, 18
  %v5665 = vpop.permute.xlu0 %5664
  %5666 = vrot.lane.b32.xlu0 %v5387, 18
  %v5667 = vpop.permute.xlu0 %5666
  %5668 = vrot.lane.b32.xlu0 %v5388, 18
  %v5669 = vpop.permute.xlu0 %5668
  %5670 = vrot.lane.b32.xlu0 %v5389, 18
  %v5671 = vpop.permute.xlu0 %5670
  %5672 = vrot.lane.b32.xlu0 %v5390, 18
  %v5673 = vpop.permute.xlu0 %5672
  %5674 = vrot.lane.b32.xlu0 %v5391, 18
  %v5675 = vpop.permute.xlu0 %5674
  %5676 = vrot.lane.b32.xlu0 %v5393, 18
  %v5677 = vpop.permute.xlu0 %5676
  %5678 = vrot.lane.b32.xlu0 %v5416, 18
  %v5679 = vpop.permute.xlu0 %5678
  %5680 = vrot.lane.b32.xlu0 %v5417, 18
  %v5681 = vpop.permute.xlu0 %5680
  %5682 = vrot.lane.b32.xlu0 %v5418, 18
  %v5683 = vpop.permute.xlu0 %5682
  %5684 = vrot.lane.b32.xlu0 %v5419, 18
  %v5685 = vpop.permute.xlu0 %5684
  %5686 = vrot.lane.b32.xlu0 %v5420, 18
  %v5687 = vpop.permute.xlu0 %5686
  %5688 = vrot.lane.b32.xlu0 %v5405, 18
  %v5689 = vpop.permute.xlu0 %5688
  %5690 = vrot.lane.b32.xlu0 %v5421, 18
  %v5691 = vpop.permute.xlu0 %5690
  %5692 = vrot.lane.b32.xlu0 %v5422, 18
  %v5693 = vpop.permute.xlu0 %5692
  %5694 = vrot.lane.b32.xlu0 %v5423, 18
  %v5695 = vpop.permute.xlu0 %5694
  %5696 = vrot.lane.b32.xlu0 %v5424, 18
  %v5697 = vpop.permute.xlu0 %5696
  %5698 = vrot.lane.b32.xlu0 %v5425, 18
  %v5699 = vpop.permute.xlu0 %5698
  %5700 = vrot.lane.b32.xlu0 %v5427, 18
  %v5701 = vpop.permute.xlu0 %5700
  %5702 = vrot.lane.b32.xlu0 %v5450, 18
  %v5703 = vpop.permute.xlu0 %5702
  %5704 = vrot.lane.b32.xlu0 %v5451, 18
  %v5705 = vpop.permute.xlu0 %5704
  %5706 = vrot.lane.b32.xlu0 %v5452, 18
  %v5707 = vpop.permute.xlu0 %5706
  %5708 = vrot.lane.b32.xlu0 %v5453, 18
  %v5709 = vpop.permute.xlu0 %5708
  %5710 = vrot.lane.b32.xlu0 %v5454, 18
  %v5711 = vpop.permute.xlu0 %5710
  %5712 = vrot.lane.b32.xlu0 %v5439, 18
  %v5713 = vpop.permute.xlu0 %5712
  %5714 = vrot.lane.b32.xlu0 %v5455, 18
  %v5715 = vpop.permute.xlu0 %5714
  %5716 = vrot.lane.b32.xlu0 %v5456, 18
  %v5717 = vpop.permute.xlu0 %5716
  %5718 = vrot.lane.b32.xlu0 %v5457, 18
  %v5719 = vpop.permute.xlu0 %5718
  %5720 = vrot.lane.b32.xlu0 %v5458, 18
  %v5721 = vpop.permute.xlu0 %5720
  %5722 = vrot.lane.b32.xlu0 %v5459, 18
  %v5723 = vpop.permute.xlu0 %5722
  %5724 = vrot.lane.b32.xlu0 %v5461, 18
  %v5725 = vpop.permute.xlu0 %5724
  %5726 = vrot.lane.b32.xlu0 %v5484, 18
  %v5727 = vpop.permute.xlu0 %5726
  %5728 = vrot.lane.b32.xlu0 %v5485, 18
  %v5729 = vpop.permute.xlu0 %5728
  %5730 = vrot.lane.b32.xlu0 %v5486, 18
  %v5731 = vpop.permute.xlu0 %5730
  %5732 = vrot.lane.b32.xlu0 %v5487, 18
  %v5733 = vpop.permute.xlu0 %5732
  %5734 = vrot.lane.b32.xlu0 %v5488, 18
  %v5735 = vpop.permute.xlu0 %5734
  %5736 = vrot.lane.b32.xlu0 %v5473, 18
  %v5737 = vpop.permute.xlu0 %5736
  %5738 = vrot.lane.b32.xlu0 %v5489, 18
  %v5739 = vpop.permute.xlu0 %5738
  %5740 = vrot.lane.b32.xlu0 %v5490, 18
  %v5741 = vpop.permute.xlu0 %5740
  %5742 = vrot.lane.b32.xlu0 %v5491, 18
  %v5743 = vpop.permute.xlu0 %5742
  %5744 = vrot.lane.b32.xlu0 %v5492, 18
  %v5745 = vpop.permute.xlu0 %5744
  %5746 = vrot.lane.b32.xlu0 %v5493, 18
  %v5747 = vpop.permute.xlu0 %5746
  %v5748 = vsel %vm450, %v5533, %v5535
  %v5749 = vsel %vm450, %v5535, %v5537
  %v5750 = vsel %vm450, %v5537, %v5539
  %v5751 = vsel %vm450, %v5539, %v5541
  %v5752 = vsel %vm450, %v5541, %v5543
  %v5753 = vsel %vm450, %v5545, %v5547
  %v5754 = vsel %vm450, %v5547, %v5549
  %v5755 = vsel %vm450, %v5549, %v5551
  %v5756 = vsel %vm450, %v5551, %v5553
  %v5757 = vsel %vm450, %v5553, %v5555
  %v5758 = vsel %vm450, %v5557, %v5559
  %v5759 = vsel %vm450, %v5559, %v5561
  %v5760 = vsel %vm450, %v5561, %v5563
  %v5761 = vsel %vm450, %v5563, %v5565
  %v5762 = vsel %vm450, %v5565, %v5567
  %v5763 = vsel %vm450, %v5569, %v5571
  %v5764 = vsel %vm450, %v5571, %v5573
  %v5765 = vsel %vm450, %v5573, %v5575
  %v5766 = vsel %vm450, %v5575, %v5577
  %v5767 = vsel %vm450, %v5577, %v5579
  %v5768 = vsel %vm450, %v5581, %v5583
  %v5769 = vsel %vm450, %v5583, %v5585
  %v5770 = vsel %vm450, %v5585, %v5587
  %v5771 = vsel %vm450, %v5587, %v5589
  %v5772 = vsel %vm450, %v5589, %v5591
  %v5773 = vsel %vm450, %v5593, %v5595
  %v5774 = vsel %vm450, %v5595, %v5597
  %v5775 = vsel %vm450, %v5597, %v5599
  %v5776 = vsel %vm450, %v5599, %v5601
  %v5777 = vsel %vm450, %v5601, %v5603
  %v5778 = vsel %vm450, %v5605, %v5607
  %v5779 = vsel %vm450, %v5607, %v5609
  %v5780 = vsel %vm450, %v5609, %v5611
  %v5781 = vsel %vm450, %v5611, %v5613
  %v5782 = vsel %vm450, %v5613, %v5615
  %v5783 = vsel %vm450, %v5617, %v5619
  %v5784 = vsel %vm450, %v5619, %v5621
  %v5785 = vsel %vm450, %v5621, %v5623
  %v5786 = vsel %vm450, %v5623, %v5625
  %v5787 = vsel %vm450, %v5625, %v5627
  %v5788 = vsel %vm450, %v5629, %v5631
  %v5789 = vsel %vm450, %v5631, %v5633
  %v5790 = vsel %vm450, %v5633, %v5635
  %v5791 = vsel %vm450, %v5635, %v5637
  %v5792 = vsel %vm450, %v5637, %v5639
  %v5793 = vsel %vm450, %v5641, %v5643
  %v5794 = vsel %vm450, %v5643, %v5645
  %v5795 = vsel %vm450, %v5645, %v5647
  %v5796 = vsel %vm450, %v5647, %v5649
  %v5797 = vsel %vm450, %v5649, %v5651
  %v5798 = vsel %vm450, %v5653, %v5655
  %v5799 = vsel %vm450, %v5655, %v5657
  %v5800 = vsel %vm450, %v5657, %v5659
  %v5801 = vsel %vm450, %v5659, %v5661
  %v5802 = vsel %vm450, %v5661, %v5663
  %v5803 = vsel %vm450, %v5665, %v5667
  %v5804 = vsel %vm450, %v5667, %v5669
  %v5805 = vsel %vm450, %v5669, %v5671
  %v5806 = vsel %vm450, %v5671, %v5673
  %v5807 = vsel %vm450, %v5673, %v5675
  %v5808 = vsel %vm450, %v5677, %v5679
  %v5809 = vsel %vm450, %v5679, %v5681
  %v5810 = vsel %vm450, %v5681, %v5683
  %v5811 = vsel %vm450, %v5683, %v5685
  %v5812 = vsel %vm450, %v5685, %v5687
  %v5813 = vsel %vm450, %v5689, %v5691
  %v5814 = vsel %vm450, %v5691, %v5693
  %v5815 = vsel %vm450, %v5693, %v5695
  %v5816 = vsel %vm450, %v5695, %v5697
  %v5817 = vsel %vm450, %v5697, %v5699
  %v5818 = vsel %vm450, %v5701, %v5703
  %v5819 = vsel %vm450, %v5703, %v5705
  %v5820 = vsel %vm450, %v5705, %v5707
  %v5821 = vsel %vm450, %v5707, %v5709
  %v5822 = vsel %vm450, %v5709, %v5711
  %v5823 = vsel %vm450, %v5713, %v5715
  %v5824 = vsel %vm450, %v5715, %v5717
  %v5825 = vsel %vm450, %v5717, %v5719
  %v5826 = vsel %vm450, %v5719, %v5721
  %v5827 = vsel %vm450, %v5721, %v5723
  %v5828 = vsel %vm450, %v5725, %v5727
  %v5829 = vsel %vm450, %v5727, %v5729
  %v5830 = vsel %vm450, %v5729, %v5731
  %v5831 = vsel %vm450, %v5731, %v5733
  %v5832 = vsel %vm450, %v5733, %v5735
  %v5833 = vsel %vm450, %v5737, %v5739
  %v5834 = vsel %vm450, %v5739, %v5741
  %v5835 = vsel %vm450, %v5741, %v5743
  %v5836 = vsel %vm450, %v5743, %v5745
  %v5837 = vsel %vm450, %v5745, %v5747
  %v5929 = vsel %vm2251, %v5524, 0
  %v5932 = vsel %vm2251, %v5527, 0
  %5934 = vmatprep.subr.bf16.mxu0 %v5749
  %5935 = vmatpush1.bf16.msra.mxu0 %v5748
  %5936 = vmatprep.subr.bf16.mxu0 %v5754
  %5937 = vmatpush1.bf16.msra.mxu0 %v5753
  %5938 = vmatprep.subr.bf16.mxu0 %v5759
  %5939 = vmatpush1.bf16.msra.mxu0 %v5758
  %5940 = vmatprep.subr.bf16.mxu0 %v5764
  %5941 = vmatpush1.bf16.msra.mxu0 %v5763
  %5942 = vmatprep.subr.bf16.mxu0 %v5769
  %5943 = vmatpush1.bf16.msra.mxu0 %v5768
  %5944 = vmatprep.subr.bf16.mxu0 %v5774
  %5945 = vmatpush1.bf16.msra.mxu0 %v5773
  %5946 = vmatprep.subr.bf16.mxu0 %v5779
  %5947 = vmatpush1.bf16.msra.mxu0 %v5778
  %5948 = vmatprep.subr.bf16.mxu0 %v5784
  %5949 = vmatpush1.bf16.msra.mxu0 %v5783
  %5950 = vmatprep.subr.bf16.mxu0 %v5789
  %5951 = vmatpush1.bf16.msra.mxu0 %v5788
  %5952 = vmatprep.subr.bf16.mxu0 %v5794
  %5953 = vmatpush1.bf16.msra.mxu0 %v5793
  %5954 = vmatprep.subr.bf16.mxu0 %v5799
  %5955 = vmatpush1.bf16.msra.mxu0 %v5798
  %5956 = vmatprep.subr.bf16.mxu0 %v5804
  %5957 = vmatpush1.bf16.msra.mxu0 %v5803
  %5958 = vmatprep.subr.bf16.mxu0 %v5809
  %5959 = vmatpush1.bf16.msra.mxu0 %v5808
  %5960 = vmatprep.subr.bf16.mxu0 %v5814
  %5961 = vmatpush1.bf16.msra.mxu0 %v5813
  %5962 = vmatprep.subr.bf16.mxu0 %v5819
  %5963 = vmatpush1.bf16.msra.mxu0 %v5818
  %5964 = vmatprep.subr.bf16.mxu0 %v5824
  %5965 = vmatpush1.bf16.msra.mxu0 %v5823
  %5966 = vmatprep.mubr.bf16.mxu0 %v5523
  %5967 = vmatmul.mubr.bf16.gmra.mrb[0].mxu0 %v5522
  %v5968 = vpop.f32.mrb[0].mxu0
  %v5969 = vadd.f32 0.0, %v5968
  %v5970 = vpop.f32.mrb[0].mxu0
  %v5971 = vadd.f32 0.0, %v5970
  %v5972 = vpop.f32.mrb[0].mxu0
  %v5973 = vadd.f32 0.0, %v5972
  %v5974 = vpop.f32.mrb[0].mxu0
  %v5975 = vadd.f32 0.0, %v5974
  %5976 = vmatprep.mubr.bf16.mxu0 %v5526
  %5977 = vmatmul.mubr.bf16.gmra.mrb[0].mxu0 %v5525
  %v5978 = vpop.f32.mrb[0].mxu0
  %v5979 = vadd.f32 0.0, %v5978
  %v5980 = vpop.f32.mrb[0].mxu0
  %v5981 = vadd.f32 0.0, %v5980
  %v5982 = vpop.f32.mrb[0].mxu0
  %v5983 = vadd.f32 0.0, %v5982
  %v5984 = vpop.f32.mrb[0].mxu0
  %v5985 = vadd.f32 0.0, %v5984
  %5986 = vdwg.mxu0
  %5987 = vmatprep.subr.bf16.mxu0 %v5829
  %5988 = vmatpush1.bf16.msra.mxu0 %v5828
  %5989 = vmatprep.subr.bf16.mxu0 %v5834
  %5990 = vmatpush1.bf16.msra.mxu0 %v5833
  %5991 = vmatprep.subr.bf16.mxu0 0
  %5992 = vmatpush1.bf16.msra.mxu0 0
  %5993 = vmatprep.subr.bf16.mxu0 0
  %5994 = vmatpush1.bf16.msra.mxu0 0
  %5995 = vmatprep.subr.bf16.mxu0 0
  %5996 = vmatpush1.bf16.msra.mxu0 0
  %5997 = vmatprep.subr.bf16.mxu0 0
  %5998 = vmatpush1.bf16.msra.mxu0 0
  %5999 = vmatprep.subr.bf16.mxu0 0
  %6000 = vmatpush1.bf16.msra.mxu0 0
  %6001 = vmatprep.subr.bf16.mxu0 0
  %6002 = vmatpush1.bf16.msra.mxu0 0
  %6003 = vmatprep.subr.bf16.mxu0 0
  %6004 = vmatpush1.bf16.msra.mxu0 0
  %6005 = vmatprep.subr.bf16.mxu0 0
  %6006 = vmatpush1.bf16.msra.mxu0 0
  %6007 = vmatprep.subr.bf16.mxu0 0
  %6008 = vmatpush1.bf16.msra.mxu0 0
  %6009 = vmatprep.subr.bf16.mxu0 0
  %6010 = vmatpush1.bf16.msra.mxu0 0
  %6011 = vmatprep.subr.bf16.mxu0 0
  %6012 = vmatpush1.bf16.msra.mxu0 0
  %6013 = vmatprep.subr.bf16.mxu0 0
  %6014 = vmatpush1.bf16.msra.mxu0 0
  %6015 = vmatprep.subr.bf16.mxu0 0
  %6016 = vmatpush1.bf16.msra.mxu0 0
  %6017 = vmatprep.subr.bf16.mxu0 0
  %6018 = vmatpush1.bf16.msra.mxu0 0
  %6019 = vmatprep.mubr.bf16.mxu0 0
  %6020 = vmatmul.mubr.bf16.gmra.mrb[0].mxu0 %v5929
  %v6021 = vpop.f32.mrb[0].mxu0
  %v6022 = vadd.f32 %v5969, %v6021
  %v6023 = vpop.f32.mrb[0].mxu0
  %v6024 = vadd.f32 %v5971, %v6023
  %v6025 = vpop.f32.mrb[0].mxu0
  %v6026 = vadd.f32 %v5973, %v6025
  %v6027 = vpop.f32.mrb[0].mxu0
  %v6028 = vadd.f32 %v5975, %v6027
  %6029 = vmatprep.mubr.bf16.mxu0 0
  %6030 = vmatmul.mubr.bf16.gmra.mrb[0].mxu0 %v5932
  %v6031 = vpop.f32.mrb[0].mxu0
  %v6032 = vadd.f32 %v5979, %v6031
  %v6033 = vpop.f32.mrb[0].mxu0
  %v6034 = vadd.f32 %v5981, %v6033
  %v6035 = vpop.f32.mrb[0].mxu0
  %v6036 = vadd.f32 %v5983, %v6035
  %v6037 = vpop.f32.mrb[0].mxu0
  %v6038 = vadd.f32 %v5985, %v6037
  %6039 = vdwg.mxu0
  %6040 = vmatprep.subr.bf16.mxu0 %v5751
  %6041 = vmatpush1.bf16.msra.mxu0 %v5750
  %6042 = vmatprep.subr.bf16.mxu0 %v5756
  %6043 = vmatpush1.bf16.msra.mxu0 %v5755
  %6044 = vmatprep.subr.bf16.mxu0 %v5761
  %6045 = vmatpush1.bf16.msra.mxu0 %v5760
  %6046 = vmatprep.subr.bf16.mxu0 %v5766
  %6047 = vmatpush1.bf16.msra.mxu0 %v5765
  %6048 = vmatprep.subr.bf16.mxu0 %v5771
  %6049 = vmatpush1.bf16.msra.mxu0 %v5770
  %6050 = vmatprep.subr.bf16.mxu0 %v5776
  %6051 = vmatpush1.bf16.msra.mxu0 %v5775
  %6052 = vmatprep.subr.bf16.mxu0 %v5781
  %6053 = vmatpush1.bf16.msra.mxu0 %v5780
  %6054 = vmatprep.subr.bf16.mxu0 %v5786
  %6055 = vmatpush1.bf16.msra.mxu0 %v5785
  %6056 = vmatprep.subr.bf16.mxu0 %v5791
  %6057 = vmatpush1.bf16.msra.mxu0 %v5790
  %6058 = vmatprep.subr.bf16.mxu0 %v5796
  %6059 = vmatpush1.bf16.msra.mxu0 %v5795
  %6060 = vmatprep.subr.bf16.mxu0 %v5801
  %6061 = vmatpush1.bf16.msra.mxu0 %v5800
  %6062 = vmatprep.subr.bf16.mxu0 %v5806
  %6063 = vmatpush1.bf16.msra.mxu0 %v5805
  %6064 = vmatprep.subr.bf16.mxu0 %v5811
  %6065 = vmatpush1.bf16.msra.mxu0 %v5810
  %6066 = vmatprep.subr.bf16.mxu0 %v5816
  %6067 = vmatpush1.bf16.msra.mxu0 %v5815
  %6068 = vmatprep.subr.bf16.mxu0 %v5821
  %6069 = vmatpush1.bf16.msra.mxu0 %v5820
  %6070 = vmatprep.subr.bf16.mxu0 %v5826
  %6071 = vmatpush1.bf16.msra.mxu0 %v5825
  %6072 = vmatprep.mubr.bf16.mxu0 %v5523
  %6073 = vmatmul.mubr.bf16.gmra.mrb[0].mxu0 %v5522
  %v6074 = vpop.f32.mrb[0].mxu0
  %v6075 = vadd.f32 0.0, %v6074
  %v6076 = vpop.f32.mrb[0].mxu0
  %v6077 = vadd.f32 0.0, %v6076
  %v6078 = vpop.f32.mrb[0].mxu0
  %v6079 = vadd.f32 0.0, %v6078
  %v6080 = vpop.f32.mrb[0].mxu0
  %v6081 = vadd.f32 0.0, %v6080
  %6082 = vmatprep.mubr.bf16.mxu0 %v5526
  %6083 = vmatmul.mubr.bf16.gmra.mrb[0].mxu0 %v5525
  %v6084 = vpop.f32.mrb[0].mxu0
  %v6085 = vadd.f32 0.0, %v6084
  %v6086 = vpop.f32.mrb[0].mxu0
  %v6087 = vadd.f32 0.0, %v6086
  %v6088 = vpop.f32.mrb[0].mxu0
  %v6089 = vadd.f32 0.0, %v6088
  %v6090 = vpop.f32.mrb[0].mxu0
  %v6091 = vadd.f32 0.0, %v6090
  %6092 = vdwg.mxu0
  %6093 = vmatprep.subr.bf16.mxu0 %v5831
  %6094 = vmatpush1.bf16.msra.mxu0 %v5830
  %6095 = vmatprep.subr.bf16.mxu0 %v5836
  %6096 = vmatpush1.bf16.msra.mxu0 %v5835
  %6097 = vmatprep.subr.bf16.mxu0 0
  %6098 = vmatpush1.bf16.msra.mxu0 0
  %6099 = vmatprep.subr.bf16.mxu0 0
  %6100 = vmatpush1.bf16.msra.mxu0 0
  %6101 = vmatprep.subr.bf16.mxu0 0
  %6102 = vmatpush1.bf16.msra.mxu0 0
  %6103 = vmatprep.subr.bf16.mxu0 0
  %6104 = vmatpush1.bf16.msra.mxu0 0
  %6105 = vmatprep.subr.bf16.mxu0 0
  %6106 = vmatpush1.bf16.msra.mxu0 0
  %6107 = vmatprep.subr.bf16.mxu0 0
  %6108 = vmatpush1.bf16.msra.mxu0 0
  %6109 = vmatprep.subr.bf16.mxu0 0
  %6110 = vmatpush1.bf16.msra.mxu0 0
  %6111 = vmatprep.subr.bf16.mxu0 0
  %6112 = vmatpush1.bf16.msra.mxu0 0
  %6113 = vmatprep.subr.bf16.mxu0 0
  %6114 = vmatpush1.bf16.msra.mxu0 0
  %6115 = vmatprep.subr.bf16.mxu0 0
  %6116 = vmatpush1.bf16.msra.mxu0 0
  %6117 = vmatprep.subr.bf16.mxu0 0
  %6118 = vmatpush1.bf16.msra.mxu0 0
  %6119 = vmatprep.subr.bf16.mxu0 0
  %6120 = vmatpush1.bf16.msra.mxu0 0
  %6121 = vmatprep.subr.bf16.mxu0 0
  %6122 = vmatpush1.bf16.msra.mxu0 0
  %6123 = vmatprep.subr.bf16.mxu0 0
  %6124 = vmatpush1.bf16.msra.mxu0 0
  %6125 = vmatprep.mubr.bf16.mxu0 0
  %6126 = vmatmul.mubr.bf16.gmra.mrb[0].mxu0 %v5929
  %v6127 = vpop.f32.mrb[0].mxu0
  %v6128 = vadd.f32 %v6075, %v6127
  %v6129 = vpop.f32.mrb[0].mxu0
  %v6130 = vadd.f32 %v6077, %v6129
  %v6131 = vpop.f32.mrb[0].mxu0
  %v6132 = vadd.f32 %v6079, %v6131
  %v6133 = vpop.f32.mrb[0].mxu0
  %v6134 = vadd.f32 %v6081, %v6133
  %6135 = vmatprep.mubr.bf16.mxu0 0
  %6136 = vmatmul.mubr.bf16.gmra.mrb[0].mxu0 %v5932
  %v6137 = vpop.f32.mrb[0].mxu0
  %v6138 = vadd.f32 %v6085, %v6137
  %v6139 = vpop.f32.mrb[0].mxu0
  %v6140 = vadd.f32 %v6087, %v6139
  %v6141 = vpop.f32.mrb[0].mxu0
  %v6142 = vadd.f32 %v6089, %v6141
  %v6143 = vpop.f32.mrb[0].mxu0
  %v6144 = vadd.f32 %v6091, %v6143
  %6145 = vdwg.mxu0
  %6146 = vmatprep.subr.bf16.mxu0 0
  %6147 = vmatpush1.bf16.msra.mxu0 %v5752
  %6148 = vmatprep.subr.bf16.mxu0 0
  %6149 = vmatpush1.bf16.msra.mxu0 %v5757
  %6150 = vmatprep.subr.bf16.mxu0 0
  %6151 = vmatpush1.bf16.msra.mxu0 %v5762
  %6152 = vmatprep.subr.bf16.mxu0 0
  %6153 = vmatpush1.bf16.msra.mxu0 %v5767
  %6154 = vmatprep.subr.bf16.mxu0 0
  %6155 = vmatpush1.bf16.msra.mxu0 %v5772
  %6156 = vmatprep.subr.bf16.mxu0 0
  %6157 = vmatpush1.bf16.msra.mxu0 %v5777
  %6158 = vmatprep.subr.bf16.mxu0 0
  %6159 = vmatpush1.bf16.msra.mxu0 %v5782
  %6160 = vmatprep.subr.bf16.mxu0 0
  %6161 = vmatpush1.bf16.msra.mxu0 %v5787
  %6162 = vmatprep.subr.bf16.mxu0 0
  %6163 = vmatpush1.bf16.msra.mxu0 %v5792
  %6164 = vmatprep.subr.bf16.mxu0 0
  %6165 = vmatpush1.bf16.msra.mxu0 %v5797
  %6166 = vmatprep.subr.bf16.mxu0 0
  %6167 = vmatpush1.bf16.msra.mxu0 %v5802
  %6168 = vmatprep.subr.bf16.mxu0 0
  %6169 = vmatpush1.bf16.msra.mxu0 %v5807
  %6170 = vmatprep.subr.bf16.mxu0 0
  %6171 = vmatpush1.bf16.msra.mxu0 %v5812
  %6172 = vmatprep.subr.bf16.mxu0 0
  %6173 = vmatpush1.bf16.msra.mxu0 %v5817
  %6174 = vmatprep.subr.bf16.mxu0 0
  %6175 = vmatpush1.bf16.msra.mxu0 %v5822
  %6176 = vmatprep.subr.bf16.mxu0 0
  %6177 = vmatpush1.bf16.msra.mxu0 %v5827
  %6178 = vmatprep.mubr.bf16.mxu0 %v5523
  %6179 = vmatmul.mubr.bf16.gmra.mrb[0].mxu0 %v5522
  %v6180 = vpop.f32.mrb[0].mxu0
  %v6181 = vadd.f32 0.0, %v6180
  %v6182 = vpop.f32.mrb[0].mxu0
  %v6183 = vpop.f32.mrb[0].mxu0
  %v6184 = vadd.f32 0.0, %v6183
  %v6185 = vpop.f32.mrb[0].mxu0
  %6186 = vmatprep.mubr.bf16.mxu0 %v5526
  %6187 = vmatmul.mubr.bf16.gmra.mrb[0].mxu0 %v5525
  %v6188 = vpop.f32.mrb[0].mxu0
  %v6189 = vadd.f32 0.0, %v6188
  %v6190 = vpop.f32.mrb[0].mxu0
  %v6191 = vpop.f32.mrb[0].mxu0
  %v6192 = vadd.f32 0.0, %v6191
  %v6193 = vpop.f32.mrb[0].mxu0
  %6194 = vdwg.mxu0
  %6195 = vmatprep.subr.bf16.mxu0 0
  %6196 = vmatpush1.bf16.msra.mxu0 %v5832
  %6197 = vmatprep.subr.bf16.mxu0 0
  %6198 = vmatpush1.bf16.msra.mxu0 %v5837
  %6199 = vmatprep.subr.bf16.mxu0 0
  %6200 = vmatpush1.bf16.msra.mxu0 0
  %6201 = vmatprep.subr.bf16.mxu0 0
  %6202 = vmatpush1.bf16.msra.mxu0 0
  %6203 = vmatprep.subr.bf16.mxu0 0
  %6204 = vmatpush1.bf16.msra.mxu0 0
  %6205 = vmatprep.subr.bf16.mxu0 0
  %6206 = vmatpush1.bf16.msra.mxu0 0
  %6207 = vmatprep.subr.bf16.mxu0 0
  %6208 = vmatpush1.bf16.msra.mxu0 0
  %6209 = vmatprep.subr.bf16.mxu0 0
  %6210 = vmatpush1.bf16.msra.mxu0 0
  %6211 = vmatprep.subr.bf16.mxu0 0
  %6212 = vmatpush1.bf16.msra.mxu0 0
  %6213 = vmatprep.subr.bf16.mxu0 0
  %6214 = vmatpush1.bf16.msra.mxu0 0
  %6215 = vmatprep.subr.bf16.mxu0 0
  %6216 = vmatpush1.bf16.msra.mxu0 0
  %6217 = vmatprep.subr.bf16.mxu0 0
  %6218 = vmatpush1.bf16.msra.mxu0 0
  %6219 = vmatprep.subr.bf16.mxu0 0
  %6220 = vmatpush1.bf16.msra.mxu0 0
  %6221 = vmatprep.subr.bf16.mxu0 0
  %6222 = vmatpush1.bf16.msra.mxu0 0
  %6223 = vmatprep.subr.bf16.mxu0 0
  %6224 = vmatpush1.bf16.msra.mxu0 0
  %6225 = vmatprep.subr.bf16.mxu0 0
  %6226 = vmatpush1.bf16.msra.mxu0 0
  %6227 = vmatprep.mubr.bf16.mxu0 0
  %6228 = vmatmul.mubr.bf16.gmra.mrb[0].mxu0 %v5929
  %v6229 = vpop.f32.mrb[0].mxu0
  %v6230 = vadd.f32 %v6181, %v6229
  %v6231 = vpop.f32.mrb[0].mxu0
  %v6232 = vpop.f32.mrb[0].mxu0
  %v6233 = vadd.f32 %v6184, %v6232
  %v6234 = vpop.f32.mrb[0].mxu0
  %6235 = vmatprep.mubr.bf16.mxu0 0
  %6236 = vmatmul.mubr.bf16.gmra.mrb[0].mxu0 %v5932
  %v6237 = vpop.f32.mrb[0].mxu0
  %v6238 = vadd.f32 %v6189, %v6237
  %v6239 = vpop.f32.mrb[0].mxu0
  %v6240 = vpop.f32.mrb[0].mxu0
  %v6241 = vadd.f32 %v6192, %v6240
  %v6242 = vpop.f32.mrb[0].mxu0
  %6243 = vdwg.mxu0
  %6244 = vmatprep.subr.mxu0 0.0
  %6245 = vmatpush1.msra.mxu0 %v58
  %6246 = vmatprep.subr.mxu0 0.0
  %6247 = vmatpush1.msra.mxu0 %v59
  %6248 = vmatprep.subr.mxu0 0.0
  %6249 = vmatpush1.msra.mxu0 %v60
  %6250 = vmatprep.subr.mxu0 0.0
  %6251 = vmatpush1.msra.mxu0 %v61
  %6252 = vmatprep.subr.mxu0 0.0
  %6253 = vmatpush1.msra.mxu0 %v62
  %6254 = vmatprep.subr.mxu0 0.0
  %6255 = vmatpush1.msra.mxu0 %v63
  %6256 = vmatprep.subr.mxu0 0.0
  %6257 = vmatpush1.msra.mxu0 %v64
  %6258 = vmatprep.subr.mxu0 0.0
  %6259 = vmatpush1.msra.mxu0 %v65
  %6260 = vmatprep.subr.mxu0 0.0
  %6261 = vmatpush1.msra.mxu0 %v66
  %6262 = vmatprep.subr.mxu0 0.0
  %6263 = vmatpush1.msra.mxu0 %v67
  %6264 = vmatprep.subr.mxu0 0.0
  %6265 = vmatpush1.msra.mxu0 %v68
  %6266 = vmatprep.subr.mxu0 0.0
  %6267 = vmatpush1.msra.mxu0 %v69
  %6268 = vmatprep.subr.mxu0 0.0
  %6269 = vmatpush1.msra.mxu0 %v70
  %6270 = vmatprep.subr.mxu0 0.0
  %6271 = vmatpush1.msra.mxu0 %v71
  %6272 = vmatprep.subr.mxu0 0.0
  %6273 = vmatpush1.msra.mxu0 %v72
  %6274 = vmatprep.subr.mxu0 0.0
  %6275 = vmatpush1.msra.mxu0 %v73
  %6276 = vmatprep.subr.mxu0 0.0
  %6277 = vmatpush1.msra.mxu0 %v74
  %6278 = vmatprep.subr.mxu0 0.0
  %6279 = vmatpush1.msra.mxu0 %v75
  %6280 = vmatprep.subr.mxu0 0.0
  %6281 = vmatpush1.msra.mxu0 %v76
  %6282 = vmatprep.subr.mxu0 0.0
  %6283 = vmatpush1.msra.mxu0 %v77
  %6284 = vmatprep.subr.mxu0 0.0
  %6285 = vmatpush1.msra.mxu0 %v78
  %6286 = vmatprep.subr.mxu0 0.0
  %6287 = vmatpush1.msra.mxu0 %v79
  %6288 = vmatprep.subr.mxu0 0.0
  %6289 = vmatpush1.msra.mxu0 %v80
  %6290 = vmatprep.subr.mxu0 0.0
  %6291 = vmatpush1.msra.mxu0 %v81
  %6292 = vmatprep.subr.mxu0 0.0
  %6293 = vmatpush1.msra.mxu0 %v82
  %6294 = vmatprep.subr.mxu0 0.0
  %6295 = vmatpush1.msra.mxu0 %v83
  %6296 = vmatprep.subr.mxu0 0.0
  %6297 = vmatpush1.msra.mxu0 %v84
  %6298 = vmatprep.subr.mxu0 0.0
  %6299 = vmatpush1.msra.mxu0 %v85
  %6300 = vmatprep.subr.mxu0 0.0
  %6301 = vmatpush1.msra.mxu0 %v86
  %6302 = vmatprep.subr.mxu0 0.0
  %6303 = vmatpush1.msra.mxu0 %v87
  %6304 = vmatprep.subr.mxu0 0.0
  %6305 = vmatpush1.msra.mxu0 %v88
  %6306 = vmatprep.subr.mxu0 0.0
  %6307 = vmatpush1.msra.mxu0 %v89
  %6308 = vmatprep.mubr.f32.mxu0 %v6024
  %6309 = vmatmul.mubr.f32.gmra.mrb[0].mxu0 %v6022
  %v6310 = vpop.f32.mrb[0].mxu0
  %v6311 = vadd.f32 0.0, %v6310
  %v6312 = vpop.f32.mrb[0].mxu0
  %6313 = vmatprep.mubr.f32.mxu0 %v6028
  %6314 = vmatmul.mubr.f32.gmra.mrb[0].mxu0 %v6026
  %v6315 = vpop.f32.mrb[0].mxu0
  %v6316 = vadd.f32 0.0, %v6315
  %v6317 = vpop.f32.mrb[0].mxu0
  %6318 = vmatprep.mubr.f32.mxu0 %v6034
  %6319 = vmatmul.mubr.f32.gmra.mrb[0].mxu0 %v6032
  %v6320 = vpop.f32.mrb[0].mxu0
  %v6321 = vadd.f32 0.0, %v6320
  %v6322 = vpop.f32.mrb[0].mxu0
  %6323 = vmatprep.mubr.f32.mxu0 %v6038
  %6324 = vmatmul.mubr.f32.gmra.mrb[0].mxu0 %v6036
  %v6325 = vpop.f32.mrb[0].mxu0
  %v6326 = vadd.f32 0.0, %v6325
  %v6327 = vpop.f32.mrb[0].mxu0
  %6328 = vdwg.mxu0
  %6329 = vmatprep.subr.mxu0 0.0
  %6330 = vmatpush1.msra.mxu0 %v90
  %6331 = vmatprep.subr.mxu0 0.0
  %6332 = vmatpush1.msra.mxu0 %v91
  %6333 = vmatprep.subr.mxu0 0.0
  %6334 = vmatpush1.msra.mxu0 %v92
  %6335 = vmatprep.subr.mxu0 0.0
  %6336 = vmatpush1.msra.mxu0 %v93
  %6337 = vmatprep.subr.mxu0 0.0
  %6338 = vmatpush1.msra.mxu0 %v94
  %6339 = vmatprep.subr.mxu0 0.0
  %6340 = vmatpush1.msra.mxu0 %v95
  %6341 = vmatprep.subr.mxu0 0.0
  %6342 = vmatpush1.msra.mxu0 %v96
  %6343 = vmatprep.subr.mxu0 0.0
  %6344 = vmatpush1.msra.mxu0 %v97
  %6345 = vmatprep.subr.mxu0 0.0
  %6346 = vmatpush1.msra.mxu0 %v98
  %6347 = vmatprep.subr.mxu0 0.0
  %6348 = vmatpush1.msra.mxu0 %v99
  %6349 = vmatprep.subr.mxu0 0.0
  %6350 = vmatpush1.msra.mxu0 %v100
  %6351 = vmatprep.subr.mxu0 0.0
  %6352 = vmatpush1.msra.mxu0 %v101
  %6353 = vmatprep.subr.mxu0 0.0
  %6354 = vmatpush1.msra.mxu0 %v102
  %6355 = vmatprep.subr.mxu0 0.0
  %6356 = vmatpush1.msra.mxu0 %v103
  %6357 = vmatprep.subr.mxu0 0.0
  %6358 = vmatpush1.msra.mxu0 %v104
  %6359 = vmatprep.subr.mxu0 0.0
  %6360 = vmatpush1.msra.mxu0 %v105
  %6361 = vmatprep.subr.mxu0 0.0
  %6362 = vmatpush1.msra.mxu0 %v106
  %6363 = vmatprep.subr.mxu0 0.0
  %6364 = vmatpush1.msra.mxu0 %v107
  %6365 = vmatprep.subr.mxu0 0.0
  %6366 = vmatpush1.msra.mxu0 %v108
  %6367 = vmatprep.subr.mxu0 0.0
  %6368 = vmatpush1.msra.mxu0 %v109
  %6369 = vmatprep.subr.mxu0 0.0
  %6370 = vmatpush1.msra.mxu0 %v110
  %6371 = vmatprep.subr.mxu0 0.0
  %6372 = vmatpush1.msra.mxu0 %v111
  %6373 = vmatprep.subr.mxu0 0.0
  %6374 = vmatpush1.msra.mxu0 %v112
  %6375 = vmatprep.subr.mxu0 0.0
  %6376 = vmatpush1.msra.mxu0 %v113
  %6377 = vmatprep.subr.mxu0 0.0
  %6378 = vmatpush1.msra.mxu0 %v114
  %6379 = vmatprep.subr.mxu0 0.0
  %6380 = vmatpush1.msra.mxu0 %v115
  %6381 = vmatprep.subr.mxu0 0.0
  %6382 = vmatpush1.msra.mxu0 %v116
  %6383 = vmatprep.subr.mxu0 0.0
  %6384 = vmatpush1.msra.mxu0 %v117
  %6385 = vmatprep.subr.mxu0 0.0
  %6386 = vmatpush1.msra.mxu0 %v118
  %6387 = vmatprep.subr.mxu0 0.0
  %6388 = vmatpush1.msra.mxu0 %v119
  %6389 = vmatprep.subr.mxu0 0.0
  %6390 = vmatpush1.msra.mxu0 %v120
  %6391 = vmatprep.subr.mxu0 0.0
  %6392 = vmatpush1.msra.mxu0 %v121
  %6393 = vmatprep.mubr.f32.mxu0 %v6130
  %6394 = vmatmul.mubr.f32.gmra.mrb[0].mxu0 %v6128
  %v6395 = vpop.f32.mrb[0].mxu0
  %v6396 = vadd.f32 %v6311, %v6395
  %v6397 = vpop.f32.mrb[0].mxu0
  %6398 = vmatprep.mubr.f32.mxu0 %v6134
  %6399 = vmatmul.mubr.f32.gmra.mrb[0].mxu0 %v6132
  %v6400 = vpop.f32.mrb[0].mxu0
  %v6401 = vadd.f32 %v6316, %v6400
  %v6402 = vpop.f32.mrb[0].mxu0
  %6403 = vmatprep.mubr.f32.mxu0 %v6140
  %6404 = vmatmul.mubr.f32.gmra.mrb[0].mxu0 %v6138
  %v6405 = vpop.f32.mrb[0].mxu0
  %v6406 = vadd.f32 %v6321, %v6405
  %v6407 = vpop.f32.mrb[0].mxu0
  %6408 = vmatprep.mubr.f32.mxu0 %v6144
  %6409 = vmatmul.mubr.f32.gmra.mrb[0].mxu0 %v6142
  %v6410 = vpop.f32.mrb[0].mxu0
  %v6411 = vadd.f32 %v6326, %v6410
  %v6412 = vpop.f32.mrb[0].mxu0
  %6413 = vdwg.mxu0
  %6414 = vmatprep.subr.mxu0 0.0
  %6415 = vmatpush1.msra.mxu0 %v122
  %6416 = vmatprep.subr.mxu0 0.0
  %6417 = vmatpush1.msra.mxu0 %v123
  %6418 = vmatprep.subr.mxu0 0.0
  %6419 = vmatpush1.msra.mxu0 %v124
  %6420 = vmatprep.subr.mxu0 0.0
  %6421 = vmatpush1.msra.mxu0 %v125
  %6422 = vmatprep.subr.mxu0 0.0
  %6423 = vmatpush1.msra.mxu0 %v126
  %6424 = vmatprep.subr.mxu0 0.0
  %6425 = vmatpush1.msra.mxu0 %v127
  %6426 = vmatprep.subr.mxu0 0.0
  %6427 = vmatpush1.msra.mxu0 %v128
  %6428 = vmatprep.subr.mxu0 0.0
  %6429 = vmatpush1.msra.mxu0 %v129
  %6430 = vmatprep.subr.mxu0 0.0
  %6431 = vmatpush1.msra.mxu0 %v130
  %6432 = vmatprep.subr.mxu0 0.0
  %6433 = vmatpush1.msra.mxu0 %v131
  %6434 = vmatprep.subr.mxu0 0.0
  %6435 = vmatpush1.msra.mxu0 %v132
  %6436 = vmatprep.subr.mxu0 0.0
  %6437 = vmatpush1.msra.mxu0 %v133
  %6438 = vmatprep.subr.mxu0 0.0
  %6439 = vmatpush1.msra.mxu0 %v134
  %6440 = vmatprep.subr.mxu0 0.0
  %6441 = vmatpush1.msra.mxu0 %v135
  %6442 = vmatprep.subr.mxu0 0.0
  %6443 = vmatpush1.msra.mxu0 %v136
  %6444 = vmatprep.subr.mxu0 0.0
  %6445 = vmatpush1.msra.mxu0 %v137
  %6446 = vmatprep.subr.mxu0 0.0
  %6447 = vmatpush1.msra.mxu0 0.0
  %6448 = vmatprep.subr.mxu0 0.0
  %6449 = vmatpush1.msra.mxu0 0.0
  %6450 = vmatprep.subr.mxu0 0.0
  %6451 = vmatpush1.msra.mxu0 0.0
  %6452 = vmatprep.subr.mxu0 0.0
  %6453 = vmatpush1.msra.mxu0 0.0
  %6454 = vmatprep.subr.mxu0 0.0
  %6455 = vmatpush1.msra.mxu0 0.0
  %6456 = vmatprep.subr.mxu0 0.0
  %6457 = vmatpush1.msra.mxu0 0.0
  %6458 = vmatprep.subr.mxu0 0.0
  %6459 = vmatpush1.msra.mxu0 0.0
  %6460 = vmatprep.subr.mxu0 0.0
  %6461 = vmatpush1.msra.mxu0 0.0
  %6462 = vmatprep.subr.mxu0 0.0
  %6463 = vmatpush1.msra.mxu0 0.0
  %6464 = vmatprep.subr.mxu0 0.0
  %6465 = vmatpush1.msra.mxu0 0.0
  %6466 = vmatprep.subr.mxu0 0.0
  %6467 = vmatpush1.msra.mxu0 0.0
  %6468 = vmatprep.subr.mxu0 0.0
  %6469 = vmatpush1.msra.mxu0 0.0
  %6470 = vmatprep.subr.mxu0 0.0
  %6471 = vmatpush1.msra.mxu0 0.0
  %6472 = vmatprep.subr.mxu0 0.0
  %6473 = vmatpush1.msra.mxu0 0.0
  %6474 = vmatprep.subr.mxu0 0.0
  %6475 = vmatpush1.msra.mxu0 0.0
  %6476 = vmatprep.subr.mxu0 0.0
  %6477 = vmatpush1.msra.mxu0 0.0
  %6478 = vmatprep.mubr.f32.mxu0 0.0
  %6479 = vmatmul.mubr.f32.gmra.mrb[0].mxu0 %v6230
  %v6480 = vpop.f32.mrb[0].mxu0
  %v6481 = vadd.f32 %v6396, %v6480
  %v6482 = vpop.f32.mrb[0].mxu0
  %6483 = vmatprep.mubr.f32.mxu0 0.0
  %6484 = vmatmul.mubr.f32.gmra.mrb[0].mxu0 %v6233
  %v6485 = vpop.f32.mrb[0].mxu0
  %v6486 = vadd.f32 %v6401, %v6485
  %v6487 = vpop.f32.mrb[0].mxu0
  %6488 = vmatprep.mubr.f32.mxu0 0.0
  %6489 = vmatmul.mubr.f32.gmra.mrb[0].mxu0 %v6238
  %v6490 = vpop.f32.mrb[0].mxu0
  %v6491 = vadd.f32 %v6406, %v6490
  %v6492 = vpop.f32.mrb[0].mxu0
  %6493 = vmatprep.mubr.f32.mxu0 0.0
  %6494 = vmatmul.mubr.f32.gmra.mrb[0].mxu0 %v6241
  %v6495 = vpop.f32.mrb[0].mxu0
  %v6496 = vadd.f32 %v6411, %v6495
  %v6497 = vpop.f32.mrb[0].mxu0
  %6498 = vdwg.mxu0
  %v6499 = vmul.f32 %v6481, 0.001953125
  %v6500 = vmul.f32 %v6486, 0.001953125
  %v6501 = vmul.f32 %v6491, 0.001953125
  %v6502 = vmul.f32 %v6496, 0.001953125
  %6504 = vset.pattern.permute.xlu0 0
  %6505 = vperm.xlu0 %6504, %v6499
  %v6506 = vpop.permute.xlu0 %6505
  %6509 = vset.pattern.permute.xlu0 0
  %6510 = vperm.xlu0 %6509, %v6500
  %v6511 = vpop.permute.xlu0 %6510
  %6514 = vset.pattern.permute.xlu0 0
  %6515 = vperm.xlu0 %6514, %v6501
  %v6516 = vpop.permute.xlu0 %6515
  %6519 = vset.pattern.permute.xlu0 0
  %6520 = vperm.xlu0 %6519, %v6502
  %v6521 = vpop.permute.xlu0 %6520
  %v6523 = vsub.f32 %v6022, %v6506
  %v6524 = vsub.f32 %v6024, %v6506
  %v6525 = vsub.f32 %v6128, %v6506
  %v6526 = vsub.f32 %v6130, %v6506
  %v6527 = vsub.f32 %v6230, %v6506
  %v6528 = vsub.f32 %v6026, %v6511
  %v6529 = vsub.f32 %v6028, %v6511
  %v6530 = vsub.f32 %v6132, %v6511
  %v6531 = vsub.f32 %v6134, %v6511
  %v6532 = vsub.f32 %v6233, %v6511
  %v6533 = vsub.f32 %v6032, %v6516
  %v6534 = vsub.f32 %v6034, %v6516
  %v6535 = vsub.f32 %v6138, %v6516
  %v6536 = vsub.f32 %v6140, %v6516
  %v6537 = vsub.f32 %v6238, %v6516
  %v6538 = vsub.f32 %v6036, %v6521
  %v6539 = vsub.f32 %v6038, %v6521
  %v6540 = vsub.f32 %v6142, %v6521
  %v6541 = vsub.f32 %v6144, %v6521
  %v6542 = vsub.f32 %v6241, %v6521
  %v6543 = vmul.f32 %v6523, %v1006
  %v6544 = vmul.f32 %v6524, %v1010
  %v6545 = vmul.f32 %v6525, %v1014
  %v6546 = vmul.f32 %v6526, %v1018
  %v6547 = vmul.f32 %v6527, %v1022
  %v6548 = vmul.f32 %v6528, %v1006
  %v6549 = vmul.f32 %v6529, %v1010
  %v6550 = vmul.f32 %v6530, %v1014
  %v6551 = vmul.f32 %v6531, %v1018
  %v6552 = vmul.f32 %v6532, %v1022
  %v6553 = vmul.f32 %v6533, %v1006
  %v6554 = vmul.f32 %v6534, %v1010
  %v6555 = vmul.f32 %v6535, %v1014
  %v6556 = vmul.f32 %v6536, %v1018
  %v6557 = vmul.f32 %v6537, %v1022
  %v6558 = vmul.f32 %v6538, %v1006
  %v6559 = vmul.f32 %v6539, %v1010
  %v6560 = vmul.f32 %v6540, %v1014
  %v6561 = vmul.f32 %v6541, %v1018
  %v6562 = vmul.f32 %v6542, %v1022
  %v6563 = vmul.f32 %v6543, %v6543
  %v6564 = vmul.f32 %v6544, %v6544
  %v6565 = vmul.f32 %v6545, %v6545
  %v6566 = vmul.f32 %v6546, %v6546
  %v6567 = vmul.f32 %v6547, %v6547
  %v6568 = vmul.f32 %v6548, %v6548
  %v6569 = vmul.f32 %v6549, %v6549
  %v6570 = vmul.f32 %v6550, %v6550
  %v6571 = vmul.f32 %v6551, %v6551
  %v6572 = vmul.f32 %v6552, %v6552
  %v6573 = vmul.f32 %v6553, %v6553
  %v6574 = vmul.f32 %v6554, %v6554
  %v6575 = vmul.f32 %v6555, %v6555
  %v6576 = vmul.f32 %v6556, %v6556
  %v6577 = vmul.f32 %v6557, %v6557
  %v6578 = vmul.f32 %v6558, %v6558
  %v6579 = vmul.f32 %v6559, %v6559
  %v6580 = vmul.f32 %v6560, %v6560
  %v6581 = vmul.f32 %v6561, %v6561
  %v6582 = vmul.f32 %v6562, %v6562
  %6583 = vmatprep.subr.mxu0 0.0
  %6584 = vmatpush1.msra.mxu0 %v58
  %6585 = vmatprep.subr.mxu0 0.0
  %6586 = vmatpush1.msra.mxu0 %v59
  %6587 = vmatprep.subr.mxu0 0.0
  %6588 = vmatpush1.msra.mxu0 %v60
  %6589 = vmatprep.subr.mxu0 0.0
  %6590 = vmatpush1.msra.mxu0 %v61
  %6591 = vmatprep.subr.mxu0 0.0
  %6592 = vmatpush1.msra.mxu0 %v62
  %6593 = vmatprep.subr.mxu0 0.0
  %6594 = vmatpush1.msra.mxu0 %v63
  %6595 = vmatprep.subr.mxu0 0.0
  %6596 = vmatpush1.msra.mxu0 %v64
  %6597 = vmatprep.subr.mxu0 0.0
  %6598 = vmatpush1.msra.mxu0 %v65
  %6599 = vmatprep.subr.mxu0 0.0
  %6600 = vmatpush1.msra.mxu0 %v66
  %6601 = vmatprep.subr.mxu0 0.0
  %6602 = vmatpush1.msra.mxu0 %v67
  %6603 = vmatprep.subr.mxu0 0.0
  %6604 = vmatpush1.msra.mxu0 %v68
  %6605 = vmatprep.subr.mxu0 0.0
  %6606 = vmatpush1.msra.mxu0 %v69
  %6607 = vmatprep.subr.mxu0 0.0
  %6608 = vmatpush1.msra.mxu0 %v70
  %6609 = vmatprep.subr.mxu0 0.0
  %6610 = vmatpush1.msra.mxu0 %v71
  %6611 = vmatprep.subr.mxu0 0.0
  %6612 = vmatpush1.msra.mxu0 %v72
  %6613 = vmatprep.subr.mxu0 0.0
  %6614 = vmatpush1.msra.mxu0 %v73
  %6615 = vmatprep.subr.mxu0 0.0
  %6616 = vmatpush1.msra.mxu0 %v74
  %6617 = vmatprep.subr.mxu0 0.0
  %6618 = vmatpush1.msra.mxu0 %v75
  %6619 = vmatprep.subr.mxu0 0.0
  %6620 = vmatpush1.msra.mxu0 %v76
  %6621 = vmatprep.subr.mxu0 0.0
  %6622 = vmatpush1.msra.mxu0 %v77
  %6623 = vmatprep.subr.mxu0 0.0
  %6624 = vmatpush1.msra.mxu0 %v78
  %6625 = vmatprep.subr.mxu0 0.0
  %6626 = vmatpush1.msra.mxu0 %v79
  %6627 = vmatprep.subr.mxu0 0.0
  %6628 = vmatpush1.msra.mxu0 %v80
  %6629 = vmatprep.subr.mxu0 0.0
  %6630 = vmatpush1.msra.mxu0 %v81
  %6631 = vmatprep.subr.mxu0 0.0
  %6632 = vmatpush1.msra.mxu0 %v82
  %6633 = vmatprep.subr.mxu0 0.0
  %6634 = vmatpush1.msra.mxu0 %v83
  %6635 = vmatprep.subr.mxu0 0.0
  %6636 = vmatpush1.msra.mxu0 %v84
  %6637 = vmatprep.subr.mxu0 0.0
  %6638 = vmatpush1.msra.mxu0 %v85
  %6639 = vmatprep.subr.mxu0 0.0
  %6640 = vmatpush1.msra.mxu0 %v86
  %6641 = vmatprep.subr.mxu0 0.0
  %6642 = vmatpush1.msra.mxu0 %v87
  %6643 = vmatprep.subr.mxu0 0.0
  %6644 = vmatpush1.msra.mxu0 %v88
  %6645 = vmatprep.subr.mxu0 0.0
  %6646 = vmatpush1.msra.mxu0 %v89
  %6647 = vmatprep.mubr.f32.mxu0 %v6564
  %6648 = vmatmul.mubr.f32.gmra.mrb[0].mxu0 %v6563
  %v6649 = vpop.f32.mrb[0].mxu0
  %v6650 = vadd.f32 0.0, %v6649
  %v6651 = vpop.f32.mrb[0].mxu0
  %6652 = vmatprep.mubr.f32.mxu0 %v6569
  %6653 = vmatmul.mubr.f32.gmra.mrb[0].mxu0 %v6568
  %v6654 = vpop.f32.mrb[0].mxu0
  %v6655 = vadd.f32 0.0, %v6654
  %v6656 = vpop.f32.mrb[0].mxu0
  %6657 = vmatprep.mubr.f32.mxu0 %v6574
  %6658 = vmatmul.mubr.f32.gmra.mrb[0].mxu0 %v6573
  %v6659 = vpop.f32.mrb[0].mxu0
  %v6660 = vadd.f32 0.0, %v6659
  %v6661 = vpop.f32.mrb[0].mxu0
  %6662 = vmatprep.mubr.f32.mxu0 %v6579
  %6663 = vmatmul.mubr.f32.gmra.mrb[0].mxu0 %v6578
  %v6664 = vpop.f32.mrb[0].mxu0
  %v6665 = vadd.f32 0.0, %v6664
  %v6666 = vpop.f32.mrb[0].mxu0
  %6667 = vdwg.mxu0
  %6668 = vmatprep.subr.mxu0 0.0
  %6669 = vmatpush1.msra.mxu0 %v90
  %6670 = vmatprep.subr.mxu0 0.0
  %6671 = vmatpush1.msra.mxu0 %v91
  %6672 = vmatprep.subr.mxu0 0.0
  %6673 = vmatpush1.msra.mxu0 %v92
  %6674 = vmatprep.subr.mxu0 0.0
  %6675 = vmatpush1.msra.mxu0 %v93
  %6676 = vmatprep.subr.mxu0 0.0
  %6677 = vmatpush1.msra.mxu0 %v94
  %6678 = vmatprep.subr.mxu0 0.0
  %6679 = vmatpush1.msra.mxu0 %v95
  %6680 = vmatprep.subr.mxu0 0.0
  %6681 = vmatpush1.msra.mxu0 %v96
  %6682 = vmatprep.subr.mxu0 0.0
  %6683 = vmatpush1.msra.mxu0 %v97
  %6684 = vmatprep.subr.mxu0 0.0
  %6685 = vmatpush1.msra.mxu0 %v98
  %6686 = vmatprep.subr.mxu0 0.0
  %6687 = vmatpush1.msra.mxu0 %v99
  %6688 = vmatprep.subr.mxu0 0.0
  %6689 = vmatpush1.msra.mxu0 %v100
  %6690 = vmatprep.subr.mxu0 0.0
  %6691 = vmatpush1.msra.mxu0 %v101
  %6692 = vmatprep.subr.mxu0 0.0
  %6693 = vmatpush1.msra.mxu0 %v102
  %6694 = vmatprep.subr.mxu0 0.0
  %6695 = vmatpush1.msra.mxu0 %v103
  %6696 = vmatprep.subr.mxu0 0.0
  %6697 = vmatpush1.msra.mxu0 %v104
  %6698 = vmatprep.subr.mxu0 0.0
  %6699 = vmatpush1.msra.mxu0 %v105
  %6700 = vmatprep.subr.mxu0 0.0
  %6701 = vmatpush1.msra.mxu0 %v106
  %6702 = vmatprep.subr.mxu0 0.0
  %6703 = vmatpush1.msra.mxu0 %v107
  %6704 = vmatprep.subr.mxu0 0.0
  %6705 = vmatpush1.msra.mxu0 %v108
  %6706 = vmatprep.subr.mxu0 0.0
  %6707 = vmatpush1.msra.mxu0 %v109
  %6708 = vmatprep.subr.mxu0 0.0
  %6709 = vmatpush1.msra.mxu0 %v110
  %6710 = vmatprep.subr.mxu0 0.0
  %6711 = vmatpush1.msra.mxu0 %v111
  %6712 = vmatprep.subr.mxu0 0.0
  %6713 = vmatpush1.msra.mxu0 %v112
  %6714 = vmatprep.subr.mxu0 0.0
  %6715 = vmatpush1.msra.mxu0 %v113
  %6716 = vmatprep.subr.mxu0 0.0
  %6717 = vmatpush1.msra.mxu0 %v114
  %6718 = vmatprep.subr.mxu0 0.0
  %6719 = vmatpush1.msra.mxu0 %v115
  %6720 = vmatprep.subr.mxu0 0.0
  %6721 = vmatpush1.msra.mxu0 %v116
  %6722 = vmatprep.subr.mxu0 0.0
  %6723 = vmatpush1.msra.mxu0 %v117
  %6724 = vmatprep.subr.mxu0 0.0
  %6725 = vmatpush1.msra.mxu0 %v118
  %6726 = vmatprep.subr.mxu0 0.0
  %6727 = vmatpush1.msra.mxu0 %v119
  %6728 = vmatprep.subr.mxu0 0.0
  %6729 = vmatpush1.msra.mxu0 %v120
  %6730 = vmatprep.subr.mxu0 0.0
  %6731 = vmatpush1.msra.mxu0 %v121
  %6732 = vmatprep.mubr.f32.mxu0 %v6566
  %6733 = vmatmul.mubr.f32.gmra.mrb[0].mxu0 %v6565
  %v6734 = vpop.f32.mrb[0].mxu0
  %v6735 = vadd.f32 %v6650, %v6734
  %v6736 = vpop.f32.mrb[0].mxu0
  %6737 = vmatprep.mubr.f32.mxu0 %v6571
  %6738 = vmatmul.mubr.f32.gmra.mrb[0].mxu0 %v6570
  %v6739 = vpop.f32.mrb[0].mxu0
  %v6740 = vadd.f32 %v6655, %v6739
  %v6741 = vpop.f32.mrb[0].mxu0
  %6742 = vmatprep.mubr.f32.mxu0 %v6576
  %6743 = vmatmul.mubr.f32.gmra.mrb[0].mxu0 %v6575
  %v6744 = vpop.f32.mrb[0].mxu0
  %v6745 = vadd.f32 %v6660, %v6744
  %v6746 = vpop.f32.mrb[0].mxu0
  %6747 = vmatprep.mubr.f32.mxu0 %v6581
  %6748 = vmatmul.mubr.f32.gmra.mrb[0].mxu0 %v6580
  %v6749 = vpop.f32.mrb[0].mxu0
  %v6750 = vadd.f32 %v6665, %v6749
  %v6751 = vpop.f32.mrb[0].mxu0
  %6752 = vdwg.mxu0
  %6753 = vmatprep.subr.mxu0 0.0
  %6754 = vmatpush1.msra.mxu0 %v122
  %6755 = vmatprep.subr.mxu0 0.0
  %6756 = vmatpush1.msra.mxu0 %v123
  %6757 = vmatprep.subr.mxu0 0.0
  %6758 = vmatpush1.msra.mxu0 %v124
  %6759 = vmatprep.subr.mxu0 0.0
  %6760 = vmatpush1.msra.mxu0 %v125
  %6761 = vmatprep.subr.mxu0 0.0
  %6762 = vmatpush1.msra.mxu0 %v126
  %6763 = vmatprep.subr.mxu0 0.0
  %6764 = vmatpush1.msra.mxu0 %v127
  %6765 = vmatprep.subr.mxu0 0.0
  %6766 = vmatpush1.msra.mxu0 %v128
  %6767 = vmatprep.subr.mxu0 0.0
  %6768 = vmatpush1.msra.mxu0 %v129
  %6769 = vmatprep.subr.mxu0 0.0
  %6770 = vmatpush1.msra.mxu0 %v130
  %6771 = vmatprep.subr.mxu0 0.0
  %6772 = vmatpush1.msra.mxu0 %v131
  %6773 = vmatprep.subr.mxu0 0.0
  %6774 = vmatpush1.msra.mxu0 %v132
  %6775 = vmatprep.subr.mxu0 0.0
  %6776 = vmatpush1.msra.mxu0 %v133
  %6777 = vmatprep.subr.mxu0 0.0
  %6778 = vmatpush1.msra.mxu0 %v134
  %6779 = vmatprep.subr.mxu0 0.0
  %6780 = vmatpush1.msra.mxu0 %v135
  %6781 = vmatprep.subr.mxu0 0.0
  %6782 = vmatpush1.msra.mxu0 %v136
  %6783 = vmatprep.subr.mxu0 0.0
  %6784 = vmatpush1.msra.mxu0 %v137
  %6785 = vmatprep.subr.mxu0 0.0
  %6786 = vmatpush1.msra.mxu0 0.0
  %6787 = vmatprep.subr.mxu0 0.0
  %6788 = vmatpush1.msra.mxu0 0.0
  %6789 = vmatprep.subr.mxu0 0.0
  %6790 = vmatpush1.msra.mxu0 0.0
  %6791 = vmatprep.subr.mxu0 0.0
  %6792 = vmatpush1.msra.mxu0 0.0
  %6793 = vmatprep.subr.mxu0 0.0
  %6794 = vmatpush1.msra.mxu0 0.0
  %6795 = vmatprep.subr.mxu0 0.0
  %6796 = vmatpush1.msra.mxu0 0.0
  %6797 = vmatprep.subr.mxu0 0.0
  %6798 = vmatpush1.msra.mxu0 0.0
  %6799 = vmatprep.subr.mxu0 0.0
  %6800 = vmatpush1.msra.mxu0 0.0
  %6801 = vmatprep.subr.mxu0 0.0
  %6802 = vmatpush1.msra.mxu0 0.0
  %6803 = vmatprep.subr.mxu0 0.0
  %6804 = vmatpush1.msra.mxu0 0.0
  %6805 = vmatprep.subr.mxu0 0.0
  %6806 = vmatpush1.msra.mxu0 0.0
  %6807 = vmatprep.subr.mxu0 0.0
  %6808 = vmatpush1.msra.mxu0 0.0
  %6809 = vmatprep.subr.mxu0 0.0
  %6810 = vmatpush1.msra.mxu0 0.0
  %6811 = vmatprep.subr.mxu0 0.0
  %6812 = vmatpush1.msra.mxu0 0.0
  %6813 = vmatprep.subr.mxu0 0.0
  %6814 = vmatpush1.msra.mxu0 0.0
  %6815 = vmatprep.subr.mxu0 0.0
  %6816 = vmatpush1.msra.mxu0 0.0
  %6817 = vmatprep.mubr.f32.mxu0 0.0
  %6818 = vmatmul.mubr.f32.gmra.mrb[0].mxu0 %v6567
  %v6819 = vpop.f32.mrb[0].mxu0
  %v6820 = vadd.f32 %v6735, %v6819
  %v6821 = vpop.f32.mrb[0].mxu0
  %6822 = vmatprep.mubr.f32.mxu0 0.0
  %6823 = vmatmul.mubr.f32.gmra.mrb[0].mxu0 %v6572
  %v6824 = vpop.f32.mrb[0].mxu0
  %v6825 = vadd.f32 %v6740, %v6824
  %v6826 = vpop.f32.mrb[0].mxu0
  %6827 = vmatprep.mubr.f32.mxu0 0.0
  %6828 = vmatmul.mubr.f32.gmra.mrb[0].mxu0 %v6577
  %v6829 = vpop.f32.mrb[0].mxu0
  %v6830 = vadd.f32 %v6745, %v6829
  %v6831 = vpop.f32.mrb[0].mxu0
  %6832 = vmatprep.mubr.f32.mxu0 0.0
  %6833 = vmatmul.mubr.f32.gmra.mrb[0].mxu0 %v6582
  %v6834 = vpop.f32.mrb[0].mxu0
  %v6835 = vadd.f32 %v6750, %v6834
  %v6836 = vpop.f32.mrb[0].mxu0
  %6837 = vdwg.mxu0
  %v6838 = vmul.f32 %v6820, 0.001953125
  %v6839 = vmul.f32 %v6825, 0.001953125
  %v6840 = vmul.f32 %v6830, 0.001953125
  %v6841 = vmul.f32 %v6835, 0.001953125
  %v6842 = vadd.f32 %v6838, 1e-05
  %v6843 = vadd.f32 %v6839, 1e-05
  %v6844 = vadd.f32 %v6840, 1e-05
  %v6845 = vadd.f32 %v6841, 1e-05
  %v6846 = vrsqrt.pop %v6842
  %v6847 = vrsqrt.pop %v6843
  %v6848 = vrsqrt.pop %v6844
  %v6849 = vrsqrt.pop %v6845
  %6851 = vset.pattern.permute.xlu0 0
  %6852 = vperm.xlu0 %6851, %v6846
  %v6853 = vpop.permute.xlu0 %6852
  %6856 = vset.pattern.permute.xlu0 0
  %6857 = vperm.xlu0 %6856, %v6847
  %v6858 = vpop.permute.xlu0 %6857
  %6861 = vset.pattern.permute.xlu0 0
  %6862 = vperm.xlu0 %6861, %v6848
  %v6863 = vpop.permute.xlu0 %6862
  %6866 = vset.pattern.permute.xlu0 0
  %6867 = vperm.xlu0 %6866, %v6849
  %v6868 = vpop.permute.xlu0 %6867
  %v6870 = vmul.f32 %v6543, %v6853
  %v6871 = vmul.f32 %v6544, %v6853
  %v6872 = vmul.f32 %v6545, %v6853
  %v6873 = vmul.f32 %v6546, %v6853
  %v6874 = vmul.f32 %v6547, %v6853
  %v6875 = vmul.f32 %v6548, %v6858
  %v6876 = vmul.f32 %v6549, %v6858
  %v6877 = vmul.f32 %v6550, %v6858
  %v6878 = vmul.f32 %v6551, %v6858
  %v6879 = vmul.f32 %v6552, %v6858
  %v6880 = vmul.f32 %v6553, %v6863
  %v6881 = vmul.f32 %v6554, %v6863
  %v6882 = vmul.f32 %v6555, %v6863
  %v6883 = vmul.f32 %v6556, %v6863
  %v6884 = vmul.f32 %v6557, %v6863
  %v6885 = vmul.f32 %v6558, %v6868
  %v6886 = vmul.f32 %v6559, %v6868
  %v6887 = vmul.f32 %v6560, %v6868
  %v6888 = vmul.f32 %v6561, %v6868
  %v6889 = vmul.f32 %v6562, %v6868
  %v6890 = vld [vmem:[%s13] sm:$0xff]
  %v6891 = vld [vmem:[%s13 + $0x8] sm:$0xff]
  %v6892 = vld [vmem:[%s13 + $0x10] sm:$0xff]
  %v6893 = vld [vmem:[%s13 + $0x18] sm:$0xff]
  %6895 = vset.pattern.permute.xlu0 0
  %6896 = vperm.xlu0 %6895, %v6890
  %v6897 = vpop.permute.xlu0 %6896
  %6900 = vset.pattern.permute.xlu0 0
  %6901 = vperm.xlu0 %6900, %v6891
  %v6902 = vpop.permute.xlu0 %6901
  %6905 = vset.pattern.permute.xlu0 0
  %6906 = vperm.xlu0 %6905, %v6892
  %v6907 = vpop.permute.xlu0 %6906
  %6910 = vset.pattern.permute.xlu0 0
  %6911 = vperm.xlu0 %6910, %v6893
  %v6912 = vpop.permute.xlu0 %6911
  %v6914 = vmul.f32 %v6870, %v6897
  %v6915 = vmul.f32 %v6871, %v6897
  %v6916 = vmul.f32 %v6872, %v6897
  %v6917 = vmul.f32 %v6873, %v6897
  %v6918 = vmul.f32 %v6874, %v6897
  %v6919 = vmul.f32 %v6875, %v6902
  %v6920 = vmul.f32 %v6876, %v6902
  %v6921 = vmul.f32 %v6877, %v6902
  %v6922 = vmul.f32 %v6878, %v6902
  %v6923 = vmul.f32 %v6879, %v6902
  %v6924 = vmul.f32 %v6880, %v6907
  %v6925 = vmul.f32 %v6881, %v6907
  %v6926 = vmul.f32 %v6882, %v6907
  %v6927 = vmul.f32 %v6883, %v6907
  %v6928 = vmul.f32 %v6884, %v6907
  %v6929 = vmul.f32 %v6885, %v6912
  %v6930 = vmul.f32 %v6886, %v6912
  %v6931 = vmul.f32 %v6887, %v6912
  %v6932 = vmul.f32 %v6888, %v6912
  %v6933 = vmul.f32 %v6889, %v6912
  %v6934 = vld [vmem:[%s14] sm:$0xff]
  %v6935 = vld [vmem:[%s14 + $0x8] sm:$0xff]
  %v6936 = vld [vmem:[%s14 + $0x10] sm:$0xff]
  %v6937 = vld [vmem:[%s14 + $0x18] sm:$0xff]
  %6939 = vset.pattern.permute.xlu0 0
  %6940 = vperm.xlu0 %6939, %v6934
  %v6941 = vpop.permute.xlu0 %6940
  %6944 = vset.pattern.permute.xlu0 0
  %6945 = vperm.xlu0 %6944, %v6935
  %v6946 = vpop.permute.xlu0 %6945
  %6949 = vset.pattern.permute.xlu0 0
  %6950 = vperm.xlu0 %6949, %v6936
  %v6951 = vpop.permute.xlu0 %6950
  %6954 = vset.pattern.permute.xlu0 0
  %6955 = vperm.xlu0 %6954, %v6937
  %v6956 = vpop.permute.xlu0 %6955
  %v6958 = vadd.f32 %v6914, %v6941
  %v6959 = vadd.f32 %v6915, %v6941
  %v6960 = vadd.f32 %v6916, %v6941
  %v6961 = vadd.f32 %v6917, %v6941
  %v6962 = vadd.f32 %v6918, %v6941
  %v6963 = vadd.f32 %v6919, %v6946
  %v6964 = vadd.f32 %v6920, %v6946
  %v6965 = vadd.f32 %v6921, %v6946
  %v6966 = vadd.f32 %v6922, %v6946
  %v6967 = vadd.f32 %v6923, %v6946
  %v6968 = vadd.f32 %v6924, %v6951
  %v6969 = vadd.f32 %v6925, %v6951
  %v6970 = vadd.f32 %v6926, %v6951
  %v6971 = vadd.f32 %v6927, %v6951
  %v6972 = vadd.f32 %v6928, %v6951
  %v6973 = vadd.f32 %v6929, %v6956
  %v6974 = vadd.f32 %v6930, %v6956
  %v6975 = vadd.f32 %v6931, %v6956
  %v6976 = vadd.f32 %v6932, %v6956
  %v6977 = vadd.f32 %v6933, %v6956
  %v6978 = vmax.f32 %v6958, 0.0
  %v6979 = vmax.f32 %v6959, 0.0
  %v6980 = vmax.f32 %v6960, 0.0
  %v6981 = vmax.f32 %v6961, 0.0
  %v6982 = vmax.f32 %v6962, 0.0
  %v6983 = vmax.f32 %v6963, 0.0
  %v6984 = vmax.f32 %v6964, 0.0
  %v6985 = vmax.f32 %v6965, 0.0
  %v6986 = vmax.f32 %v6966, 0.0
  %v6987 = vmax.f32 %v6967, 0.0
  %v6988 = vmax.f32 %v6968, 0.0
  %v6989 = vmax.f32 %v6969, 0.0
  %v6990 = vmax.f32 %v6970, 0.0
  %v6991 = vmax.f32 %v6971, 0.0
  %v6992 = vmax.f32 %v6972, 0.0
  %v6993 = vmax.f32 %v6973, 0.0
  %v6994 = vmax.f32 %v6974, 0.0
  %v6995 = vmax.f32 %v6975, 0.0
  %v6996 = vmax.f32 %v6976, 0.0
  %v6997 = vmax.f32 %v6977, 0.0
  %v6998 = vmul.f32 %v6978, %v1006
  %v6999 = vmul.f32 %v6979, %v1010
  %v7000 = vmul.f32 %v6980, %v1014
  %v7001 = vmul.f32 %v6981, %v1018
  %v7002 = vmul.f32 %v6982, %v1022
  %v7003 = vmul.f32 %v6983, %v1006
  %v7004 = vmul.f32 %v6984, %v1010
  %v7005 = vmul.f32 %v6985, %v1014
  %v7006 = vmul.f32 %v6986, %v1018
  %v7007 = vmul.f32 %v6987, %v1022
  %v7008 = vmul.f32 %v6988, %v1006
  %v7009 = vmul.f32 %v6989, %v1010
  %v7010 = vmul.f32 %v6990, %v1014
  %v7011 = vmul.f32 %v6991, %v1018
  %v7012 = vmul.f32 %v6992, %v1022
  %v7013 = vmul.f32 %v6993, %v1006
  %v7014 = vmul.f32 %v6994, %v1010
  %v7015 = vmul.f32 %v6995, %v1014
  %v7016 = vmul.f32 %v6996, %v1018
  %v7017 = vmul.f32 %v6997, %v1022
  %v7018 = vpack.c.bf16 %v7003, %v6998
  %v7019 = vpack.c.bf16 %v7004, %v6999
  %v7020 = vpack.c.bf16 %v7005, %v7000
  %v7021 = vpack.c.bf16 %v7006, %v7001
  %v7022 = vpack.c.bf16 %v7007, %v7002
  %v7023 = vpack.c.bf16 %v7013, %v7008
  %v7024 = vpack.c.bf16 %v7014, %v7009
  %v7025 = vpack.c.bf16 %v7015, %v7010
  %v7026 = vpack.c.bf16 %v7016, %v7011
  %v7027 = vpack.c.bf16 %v7017, %v7012
  %7028 = vst [vmem:[#allocation2 + $0x8] sm:$0xff] %v7018
  %7029 = vst [vmem:[#allocation2 + $0x10] sm:$0xff] %v7019
  %7030 = vst [vmem:[#allocation2 + $0x18] sm:$0xff] %v7020
  %7031 = vst [vmem:[#allocation2 + $0x20] sm:$0xff] %v7021
  %7032 = vst [vmem:[#allocation2 + $0x28] sm:$0xff] %v7022
  %7033 = vst [vmem:[#allocation2 + $0x40] sm:$0xff] %v7023
  %7034 = vst [vmem:[#allocation2 + $0x48] sm:$0xff] %v7024
  %7035 = vst [vmem:[#allocation2 + $0x50] sm:$0xff] %v7025
  %7036 = vst [vmem:[#allocation2 + $0x58] sm:$0xff] %v7026
  %7037 = vst [vmem:[#allocation2 + $0x60] sm:$0xff] %v7027
  %v7038 = vld [vmem:[#allocation2 + $0x8] sm:$0xff]
  %v7039 = vld [vmem:[#allocation2 + $0x10] sm:$0xff]
  %v7040 = vld [vmem:[#allocation2 + $0x18] sm:$0xff]
  %v7041 = vld [vmem:[#allocation2 + $0x20] sm:$0xff]
  %v7042 = vld [vmem:[#allocation2 + $0x28] sm:$0xff]
  %v7043 = vld [vmem:[#allocation2 + $0x40] sm:$0xff]
  %v7044 = vld [vmem:[#allocation2 + $0x48] sm:$0xff]
  %v7045 = vld [vmem:[#allocation2 + $0x50] sm:$0xff]
  %v7046 = vld [vmem:[#allocation2 + $0x58] sm:$0xff]
  %v7047 = vld [vmem:[#allocation2 + $0x60] sm:$0xff]
  %v7048 = vld [vmem:[%s15] sm:$0xf]
  %v7049 = vld [vmem:[%s16] sm:$0xff]
  %7051 = vset.pattern.permute.xlu0 0
  %7052 = vperm.xlu0 %7051, %v7049
  %v7053 = vpop.permute.xlu0 %7052
  %v7056 = vsel %vm2251, %v7048, 0
  %7058 = vmatprep.subr.bf16.mxu0 %v7039
  %7059 = vmatpush1.bf16.msra.mxu0 %v7038
  %7060 = vmatprep.subr.bf16.mxu0 %v7044
  %7061 = vmatpush1.bf16.msra.mxu0 %v7043
  %7062 = vmatprep.subr.bf16.mxu0 0
  %7063 = vmatpush1.bf16.msra.mxu0 0
  %7064 = vmatprep.subr.bf16.mxu0 0
  %7065 = vmatpush1.bf16.msra.mxu0 0
  %7066 = vmatprep.subr.bf16.mxu0 0
  %7067 = vmatpush1.bf16.msra.mxu0 0
  %7068 = vmatprep.subr.bf16.mxu0 0
  %7069 = vmatpush1.bf16.msra.mxu0 0
  %7070 = vmatprep.subr.bf16.mxu0 0
  %7071 = vmatpush1.bf16.msra.mxu0 0
  %7072 = vmatprep.subr.bf16.mxu0 0
  %7073 = vmatpush1.bf16.msra.mxu0 0
  %7074 = vmatprep.subr.bf16.mxu0 0
  %7075 = vmatpush1.bf16.msra.mxu0 0
  %7076 = vmatprep.subr.bf16.mxu0 0
  %7077 = vmatpush1.bf16.msra.mxu0 0
  %7078 = vmatprep.subr.bf16.mxu0 0
  %7079 = vmatpush1.bf16.msra.mxu0 0
  %7080 = vmatprep.subr.bf16.mxu0 0
  %7081 = vmatpush1.bf16.msra.mxu0 0
  %7082 = vmatprep.subr.bf16.mxu0 0
  %7083 = vmatpush1.bf16.msra.mxu0 0
  %7084 = vmatprep.subr.bf16.mxu0 0
  %7085 = vmatpush1.bf16.msra.mxu0 0
  %7086 = vmatprep.subr.bf16.mxu0 0
  %7087 = vmatpush1.bf16.msra.mxu0 0
  %7088 = vmatprep.subr.bf16.mxu0 0
  %7089 = vmatpush1.bf16.msra.mxu0 0
  %7090 = vmatprep.mubr.bf16.mxu0 0
  %7091 = vmatmul.mubr.bf16.gmra.mrb[0].mxu0 %v7056
  %v7092 = vpop.f32.mrb[0].mxu0
  %v7093 = vadd.f32 %v7053, %v7092
  %v7094 = vpop.f32.mrb[0].mxu0
  %v7095 = vadd.f32 %v7053, %v7094
  %v7096 = vpop.f32.mrb[0].mxu0
  %v7097 = vpop.f32.mrb[0].mxu0
  %7098 = vdwg.mxu0
  %7099 = vmatprep.subr.bf16.mxu0 %v7041
  %7100 = vmatpush1.bf16.msra.mxu0 %v7040
  %7101 = vmatprep.subr.bf16.mxu0 %v7046
  %7102 = vmatpush1.bf16.msra.mxu0 %v7045
  %7103 = vmatprep.subr.bf16.mxu0 0
  %7104 = vmatpush1.bf16.msra.mxu0 0
  %7105 = vmatprep.subr.bf16.mxu0 0
  %7106 = vmatpush1.bf16.msra.mxu0 0
  %7107 = vmatprep.subr.bf16.mxu0 0
  %7108 = vmatpush1.bf16.msra.mxu0 0
  %7109 = vmatprep.subr.bf16.mxu0 0
  %7110 = vmatpush1.bf16.msra.mxu0 0
  %7111 = vmatprep.subr.bf16.mxu0 0
  %7112 = vmatpush1.bf16.msra.mxu0 0
  %7113 = vmatprep.subr.bf16.mxu0 0
  %7114 = vmatpush1.bf16.msra.mxu0 0
  %7115 = vmatprep.subr.bf16.mxu0 0
  %7116 = vmatpush1.bf16.msra.mxu0 0
  %7117 = vmatprep.subr.bf16.mxu0 0
  %7118 = vmatpush1.bf16.msra.mxu0 0
  %7119 = vmatprep.subr.bf16.mxu0 0
  %7120 = vmatpush1.bf16.msra.mxu0 0
  %7121 = vmatprep.subr.bf16.mxu0 0
  %7122 = vmatpush1.bf16.msra.mxu0 0
  %7123 = vmatprep.subr.bf16.mxu0 0
  %7124 = vmatpush1.bf16.msra.mxu0 0
  %7125 = vmatprep.subr.bf16.mxu0 0
  %7126 = vmatpush1.bf16.msra.mxu0 0
  %7127 = vmatprep.subr.bf16.mxu0 0
  %7128 = vmatpush1.bf16.msra.mxu0 0
  %7129 = vmatprep.subr.bf16.mxu0 0
  %7130 = vmatpush1.bf16.msra.mxu0 0
  %7131 = vmatprep.mubr.bf16.mxu0 0
  %7132 = vmatmul.mubr.bf16.gmra.mrb[0].mxu0 %v7056
  %v7133 = vpop.f32.mrb[0].mxu0
  %v7134 = vadd.f32 %v7053, %v7133
  %v7135 = vpop.f32.mrb[0].mxu0
  %v7136 = vadd.f32 %v7053, %v7135
  %v7137 = vpop.f32.mrb[0].mxu0
  %v7138 = vpop.f32.mrb[0].mxu0
  %7139 = vdwg.mxu0
  %7140 = vmatprep.subr.bf16.mxu0 0
  %7141 = vmatpush1.bf16.msra.mxu0 %v7042
  %7142 = vmatprep.subr.bf16.mxu0 0
  %7143 = vmatpush1.bf16.msra.mxu0 %v7047
  %7144 = vmatprep.subr.bf16.mxu0 0
  %7145 = vmatpush1.bf16.msra.mxu0 0
  %7146 = vmatprep.subr.bf16.mxu0 0
  %7147 = vmatpush1.bf16.msra.mxu0 0
  %7148 = vmatprep.subr.bf16.mxu0 0
  %7149 = vmatpush1.bf16.msra.mxu0 0
  %7150 = vmatprep.subr.bf16.mxu0 0
  %7151 = vmatpush1.bf16.msra.mxu0 0
  %7152 = vmatprep.subr.bf16.mxu0 0
  %7153 = vmatpush1.bf16.msra.mxu0 0
  %7154 = vmatprep.subr.bf16.mxu0 0
  %7155 = vmatpush1.bf16.msra.mxu0 0
  %7156 = vmatprep.subr.bf16.mxu0 0
  %7157 = vmatpush1.bf16.msra.mxu0 0
  %7158 = vmatprep.subr.bf16.mxu0 0
  %7159 = vmatpush1.bf16.msra.mxu0 0
  %7160 = vmatprep.subr.bf16.mxu0 0
  %7161 = vmatpush1.bf16.msra.mxu0 0
  %7162 = vmatprep.subr.bf16.mxu0 0
  %7163 = vmatpush1.bf16.msra.mxu0 0
  %7164 = vmatprep.subr.bf16.mxu0 0
  %7165 = vmatpush1.bf16.msra.mxu0 0
  %7166 = vmatprep.subr.bf16.mxu0 0
  %7167 = vmatpush1.bf16.msra.mxu0 0
  %7168 = vmatprep.subr.bf16.mxu0 0
  %7169 = vmatpush1.bf16.msra.mxu0 0
  %7170 = vmatprep.subr.bf16.mxu0 0
  %7171 = vmatpush1.bf16.msra.mxu0 0
  %7172 = vmatprep.mubr.bf16.mxu0 0
  %7173 = vmatmul.mubr.bf16.gmra.mrb[0].mxu0 %v7056
  %v7174 = vpop.f32.mrb[0].mxu0
  %v7175 = vadd.f32 %v7053, %v7174
  %v7176 = vpop.f32.mrb[0].mxu0
  %v7177 = vpop.f32.mrb[0].mxu0
  %v7178 = vpop.f32.mrb[0].mxu0
  %7179 = vdwg.mxu0
  %7180 = vst [vmem:[%s17] sm:$0xff] %v7093
  %7181 = vst [vmem:[%s17 + $0x8] sm:$0xff] %v7095
  %7182 = vst [vmem:[%s17 + $0x10] sm:$0xff] %v7134
  %7183 = vst [vmem:[%s17 + $0x18] sm:$0xff] %v7136
  %7184 = vst [vmem:[%s17 + $0x20] sm:$0xff] %v7175
  // Predicated region
  $region70: #{enhanced_mask_predictor.1} parent=0 // pred_check
    _
  $region71: #{enhanced_mask_predictor.1} parent=0 // pred_check_branch
    %7186 = sbr.rel (0) target = $region73
  $region72: #{enhanced_mask_predictor.1} parent=0 // pred_region
    _
  $region73: #{enhanced_mask_predictor.1} parent=0 // pred_fallthru
    _
  // Predicated region
  $region74: #{enhanced_mask_predictor.1} parent=0 // pred_check
    _
  $region75: #{enhanced_mask_predictor.1} parent=0 // pred_check_branch
    %7188 = sbr.rel (0) target = $region77
  $region76: #{enhanced_mask_predictor.1} parent=0 // pred_region
    _
  $region77: #{enhanced_mask_predictor.1} parent=0 // pred_fallthru
    _

</llo_original>
